<compile_context>
chip_gen: v7x
topology: tpu7x:2x2x1
jax: 0.10.0
libtpu: 0.0.40
codegen_flags: <defaults>
</compile_context>

<pallas_src>
import math

import jax
import jax.numpy as jnp
from jax import lax
from jax.experimental import pallas as pl
from jax.experimental.pallas import tpu as pltpu

# ----------------------------- configuration -----------------------------
BATCH = 2
CHANNELS = 32
LAYERS = 2
N_FRAMES = 32
N_SAMPLES = 512
N_HARMONICS = 16
N_NOTES = 16                 # len(MusicalScale()) -- synthetic stand-in
START_SIZE = 8               # ConvUpsample start_size
FREQ_CHANGE_FACTOR = 0.05
NOISE_FILTER_SIZE = 64
N_BANDS = N_HARMONICS + 1    # 17
BANDS_PAD = 24               # padded to a sublane multiple (feedback)
N_HEADS = 4                  # f0_change, amp, decay, mix
HC = N_HEADS * CHANNELS      # 128 -> one full MXU/sublane-stacked tile
LEAKY = 0.2
PI = math.pi

assert N_FRAMES == START_SIZE * 4, "kernel hard-codes two x2 upsample levels"


def _leaky(x):
    return jnp.where(x >= 0, x, LEAKY * x)


def _clamp01(x):
    return jnp.clip(x, 0.0, 1.0)


# ----------------------------- hoisted constants -----------------------------
def _nearest_up(n):
    # (n, 2n) 0/1 nearest-neighbour x2 upsample matrix (right-multiplication)
    r = jnp.arange(n)[:, None]
    c = jnp.arange(2 * n)[None, :]
    return (c // 2 == r).astype(jnp.float32)


def _shift_triple(n):
    # [prev, identity, next] for right-multiplication:
    #   (x @ prev)[:, t] = x[:, t-1]  (0 at t=0)      -> Conv1d tap 0
    #   (x @ id  )[:, t] = x[:, t]                    -> Conv1d tap 1
    #   (x @ next)[:, t] = x[:, t+1]  (0 at t=n-1)    -> Conv1d tap 2
    return jnp.stack(
        [jnp.eye(n, k=1), jnp.eye(n), jnp.eye(n, k=-1)]).astype(jnp.float32)


def _linear_interp_matrix(n_in, n_out):
    # matches F.interpolate(mode='linear', align_corners=False)
    t = (jnp.arange(n_out, dtype=jnp.float32) + 0.5) * (n_in / n_out) - 0.5
    t = jnp.clip(t, 0.0, float(n_in - 1))
    lo = jnp.floor(t).astype(jnp.int32)
    hi = jnp.minimum(lo + 1, n_in - 1)
    frac = t - lo.astype(jnp.float32)
    cols = jnp.arange(n_out)
    m = jnp.zeros((n_in, n_out), jnp.float32)
    m = m.at[lo, cols].add(1.0 - frac)
    m = m.at[hi, cols].add(frac)
    return m


# nearest-upsample matrices with the conv's +-1 shift folded in: U @ [prev|id|next]
UP0 = jnp.einsum("ij,tjk->tik", _nearest_up(START_SIZE),
                 _shift_triple(2 * START_SIZE))                       # (3, 8, 16)
UP1 = jnp.einsum("ij,tjk->tik", _nearest_up(2 * START_SIZE),
                 _shift_triple(4 * START_SIZE))                       # (3, 16, 32)
SH32 = _shift_triple(N_FRAMES)                                        # (3, 32, 32)
INTERP = _linear_interp_matrix(N_FRAMES, N_SAMPLES)                   # (32, 512)
TRI = jnp.triu(jnp.ones((N_SAMPLES, N_SAMPLES), jnp.float32))         # cumsum matrix
TONE_MULT = jnp.concatenate(
    [jnp.ones((1, 1), jnp.float32),
     jnp.linspace(1.0, N_HARMONICS + 1.0, N_HARMONICS,
                  dtype=jnp.float32)[:, None],
     jnp.zeros((BANDS_PAD - N_BANDS, 1), jnp.float32)], axis=0)       # (24, 1)

# Toeplitz shift indices for the 64-tap FIR (built once, used under jit)
_K = jnp.arange(NOISE_FILTER_SIZE)[:, None]
_T = jnp.arange(N_SAMPLES)[None, :]
_SRC = _T - _K                                                        # (64, 512)
SRC_VALID = _SRC >= 0
SRC_CLIP = jnp.clip(_SRC, 0, N_SAMPLES - 1)


# ----------------------------- kernel 1: fused front-end -----------------------------
def frontend_kernel(x_ref,
                    f0w_ref, f0b_ref, f0wo_ref, f0bo_ref,
                    spw_ref, spb_ref, spwo_ref, spbo_ref,
                    bw_ref, bb_ref, cf_ref,
                    f0_out, spec_out, begin_out):
    x = x_ref[...]                                         # (N, C)

    def stack(ws_ref, bs_ref, wo_ref, bo_ref):
        # LinearOutputStack: layers x [Linear(C,C) + leaky(0.2)] + Linear(C,out)
        h = x
        for i in range(LAYERS):
            h = _leaky(jnp.dot(h, ws_ref[i],
                               preferred_element_type=jnp.float32) + bs_ref[i])
        return jnp.dot(h, wo_ref[...],
                       preferred_element_type=jnp.float32) + bo_ref[...]

    # f0: hard one-hot over notes -> center frequency
    # TODO(synk): `hard_softmax` is undefined in the source; forward taken as
    # one-hot(argmax) (straight-through), without gumbel noise.
    logits = stack(f0w_ref, f0b_ref, f0wo_ref, f0bo_ref)   # (N, N_NOTES)
    cols = lax.broadcasted_iota(jnp.int32, logits.shape, 1)
    mx = jnp.max(logits, axis=-1, keepdims=True)
    first = jnp.min(jnp.where(logits >= mx, cols, N_NOTES),
                    axis=-1, keepdims=True)                # first-max == argmax
    onehot = (cols == first).astype(jnp.float32)
    f0_out[...] = jnp.sum(onehot * cf_ref[...], axis=-1, keepdims=True)  # (N, 1)

    # spectral shape logits
    spec_out[...] = stack(spw_ref, spb_ref, spwo_ref, spbo_ref)          # (N, 16)

    # fused "begin" Linear of all 4 ConvUpsample heads
    begin_out[...] = (jnp.dot(x, bw_ref[...],
                              preferred_element_type=jnp.float32) + bb_ref[...])


def frontend(x, p):
    n = x.shape[0]
    return pl.pallas_call(
        frontend_kernel,
        out_shape=(jax.ShapeDtypeStruct((n, 1), jnp.float32),
                   jax.ShapeDtypeStruct((n, N_HARMONICS), jnp.float32),
                   jax.ShapeDtypeStruct((n, HC * START_SIZE), jnp.float32)),
    )(x, *p["f0_stack"], *p["spec_stack"],
      p["begin_w"], p["begin_b"], p["center_freqs"])


# ------------------- kernel 2: fused ConvUpsample heads + synthesis -------------------
def heads_synth_kernel(z_ref, f0_ref, spec_ref, noise_ref,
                       up0_ref, up1_ref, sh_ref,
                       w0_ref, b0_ref, w1_ref, b1_ref, wf_ref, bf_ref,
                       tm_ref, interp_ref, tri_ref, o_ref):
    f32 = jnp.float32

    def up_conv(x, up_ref, w_ref, b):
        # nearest x2 upsample + Conv1d(k=3, pad=1): the +-1 shifts are folded into
        # the precomputed upsample matrices, so everything is matmuls on the MXU.
        y = b
        for t in range(3):
            xt = jnp.dot(x, up_ref[t], preferred_element_type=f32)
            y = y + jnp.dot(w_ref[t], xt, preferred_element_type=f32)
        return y

    # --- 4 ConvUpsample heads fused on the sublane axis (128 rows) ---
    x = z_ref[0]                                                   # (128, 8)
    x = _leaky(up_conv(x, up0_ref, w0_ref, b0_ref[...]))           # (128, 16)
    x = _leaky(up_conv(x, up1_ref, w1_ref, b1_ref[...]))           # (128, 32)
    # final Conv1d(C, 1, 3) per head -> 4 rows
    xp = jnp.dot(x, sh_ref[0], preferred_element_type=f32)         # x[:, t-1]
    xn = jnp.dot(x, sh_ref[2], preferred_element_type=f32)         # x[:, t+1]
    heads = (jnp.dot(wf_ref[0], xp, preferred_element_type=f32)
             + jnp.dot(wf_ref[1], x, preferred_element_type=f32)
             + jnp.dot(wf_ref[2], xn, preferred_element_type=f32)
             + bf_ref[...])                                        # (4, 32)

    f0c = heads[0:1]                                               # f0_change (pre-tanh)
    amp = jnp.maximum(heads[1:2], 0.0)                             # relu
    dec = 0.8 + 0.2 * _clamp01(heads[2:3])
    mix = _clamp01(heads[3:4])

    # --- frequency trajectory + harmonics (bands padded 17 -> 24) ---
    f0 = f0_ref[0]                                                 # (1, 1)
    freq = f0 + f0 * FREQ_CHANGE_FACTOR * jnp.tanh(f0c)            # (1, 32)
    tones = tm_ref[...] * freq                                     # (24, 32)
    tones = jnp.where(tones >= 1.0, 0.0, tones)                    # zero aliased bands

    # --- amplitude envelope with spectral shape and one-step decay ---
    spec = _clamp01(spec_ref[0])                                   # (16, 1)
    amp_full = jnp.concatenate(
        [amp, spec * amp,
         jnp.zeros((BANDS_PAD - N_BANDS, N_FRAMES), f32)], axis=0)  # (24, 32)
    amp_prev = jnp.dot(amp_full, sh_ref[0],
                       preferred_element_type=f32)                 # amp[:, t-1], 0 at t=0
    awd = amp_full + amp_prev * dec                                # (24, 32)

    # --- one fused frame->sample interpolation matmul for tones / awd / mix ---
    big = jnp.concatenate([tones, awd, mix], axis=0)               # (49, 32)
    big_s = jnp.dot(big, interp_ref[...], preferred_element_type=f32)   # (49, 512)
    tones_s = big_s[:BANDS_PAD]
    awd_s = big_s[BANDS_PAD:2 * BANDS_PAD]
    mix_s = big_s[2 * BANDS_PAD:2 * BANDS_PAD + 1]

    # --- oscillator: sin(cumsum(tones * pi)); cumsum as triangular matmul ---
    # TODO(synk): MXU f32 matmul is multi-pass bf16; phase reaches O(1e3) before
    # sin(), so tolerance vs the torch reference should be verified.
    phase = jnp.dot(tones_s * f32(PI), tri_ref[...], preferred_element_type=f32)
    osc = jnp.sin(phase)                                           # (24, 512)

    # --- band-limited noise: 64-tap FIR == fft_convolve with the 64-tap filter ---
    bl_noise = jnp.dot(osc[:, :NOISE_FILTER_SIZE], noise_ref[0],
                       preferred_element_type=f32)                 # (24, 512)

    sig = osc * awd_s * mix_s + bl_noise * awd_s * (1.0 - mix_s)   # (24, 512)
    # band mean rides the MXU; padded rows are exactly zero, divisor is 17
    mean_row = jnp.full((1, BANDS_PAD), 1.0 / N_BANDS, f32)
    o_ref[0] = jnp.dot(mean_row, sig, preferred_element_type=f32)  # (1, 512)


def _batch_spec(shape):
    nd = len(shape)
    return pl.BlockSpec(shape, lambda b: (b,) + (0,) * (nd - 1))


def _shared_spec(shape):
    nd = len(shape)
    return pl.BlockSpec(shape, lambda b: (0,) * nd)


def heads_synth(z, f0, spec, shifted_noise, p):
    n = z.shape[0]
    consts = (UP0, UP1, SH32,
              p["w0"], p["b0"], p["w1"], p["b1"], p["wf"], p["bf"],
              TONE_MULT, INTERP, TRI)
    in_specs = ([_batch_spec((1, HC, START_SIZE)),
                 _batch_spec((1, 1, 1)),
                 _batch_spec((1, N_HARMONICS, 1)),
                 _batch_spec((1, NOISE_FILTER_SIZE, N_SAMPLES))]
                + [_shared_spec(tuple(c.shape)) for c in consts])
    return pl.pallas_call(
        heads_synth_kernel,
        out_shape=jax.ShapeDtypeStruct((n, 1, N_SAMPLES), jnp.float32),
        grid=(n,),
        in_specs=in_specs,
        out_specs=_batch_spec((1, 1, N_SAMPLES)),
        # batch stays on the grid so v7x uses both TensorCores; on single-TC
        # v5e/v6e this is a 2-step serial loop with negligible overhead.
        compiler_params=pltpu.CompilerParams(dimension_semantics=("parallel",)),
    )(z, f0, spec, shifted_noise, *consts)


# ----------------------------- parameters -----------------------------
def init_params(key):
    ks = jax.random.split(key, 32)

    def w(k, shape, scale=0.05):
        return jax.random.normal(k, shape, jnp.float32) * scale

    p = {}
    p["f0_stack"] = (
        w(ks[0], (LAYERS, CHANNELS, CHANNELS)),
        jnp.zeros((LAYERS, 1, CHANNELS), jnp.float32),
        w(ks[1], (CHANNELS, N_NOTES)),
        jnp.zeros((1, N_NOTES), jnp.float32),
    )
    p["spec_stack"] = (
        w(ks[2], (LAYERS, CHANNELS, CHANNELS)),
        jnp.zeros((LAYERS, 1, CHANNELS), jnp.float32),
        w(ks[3], (CHANNELS, N_HARMONICS)),
        jnp.zeros((1, N_HARMONICS), jnp.float32),
    )
    # fused begin Linear of the 4 heads (order: f0_change, amp, decay, mix)
    p["begin_w"] = w(ks[4], (CHANNELS, HC * START_SIZE))
    p["begin_b"] = jnp.zeros((1, HC * START_SIZE), jnp.float32)

    # per-head Conv1d weights assembled once into tap-major block-diagonal form
    def block_diag_taps(per_head):            # list of 4 x (C, C, 3)
        out = jnp.zeros((3, HC, HC), jnp.float32)
        for h, wh in enumerate(per_head):
            out = out.at[:, h * CHANNELS:(h + 1) * CHANNELS,
                         h * CHANNELS:(h + 1) * CHANNELS].set(
                jnp.transpose(wh, (2, 0, 1)))
        return out

    kidx = 5
    lvl = []
    for _ in range(2):                        # two upsample levels: 8->16->32
        per_head = []
        for _h in range(N_HEADS):
            per_head.append(w(ks[kidx], (CHANNELS, CHANNELS, 3)))
            kidx += 1
        lvl.append(block_diag_taps(per_head))
    p["w0"], p["w1"] = lvl
    p["b0"] = jnp.zeros((HC, 1), jnp.float32)
    p["b1"] = jnp.zeros((HC, 1), jnp.float32)

    wf = jnp.zeros((3, N_HEADS, HC), jnp.float32)
    for h in range(N_HEADS):
        whf = w(ks[kidx], (1, CHANNELS, 3))   # final Conv1d(C, 1, 3) of head h
        kidx += 1
        wf = wf.at[:, h, h * CHANNELS:(h + 1) * CHANNELS].set(
            jnp.transpose(whf, (2, 0, 1))[:, 0, :])
    p["wf"] = wf
    p["bf"] = jnp.zeros((N_HEADS, 1), jnp.float32)

    # synthetic MusicalScale center frequencies normalized by nyquist (22050/2)
    p["center_freqs"] = (
        jnp.geomspace(40.0, 8000.0, N_NOTES).astype(jnp.float32) / 11025.0)[None, :]
    return p


# ----------------------------- full forward -----------------------------
def atoms_forward(x, params, noise_key):
    n = x.shape[0]
    x = x.reshape(-1, CHANNELS)

    # kernel 1: fused front-end
    f0_val, spec, begin = frontend(x, params)

    # metadata-only reshapes into the layouts the fused kernel expects
    z = begin.reshape(n, HC, START_SIZE)        # (N, 128, 8), heads stacked on sublanes
    f0_val = f0_val.reshape(n, 1, 1)
    spec = spec.reshape(n, N_HARMONICS, 1)

    # noise ~ U(-1, 1); Toeplitz rows for the 64-tap FIR matmul, built from the
    # hoisted constant index matrices right next to the synth call (under jit).
    # TODO(synk): `fft_convolve` assumed equivalent to zero-padded (linear)
    # convolution; if it is circular, SRC should wrap (mod N_SAMPLES) instead.
    noise = jax.random.uniform(noise_key, (n, 1, N_SAMPLES), jnp.float32, -1.0, 1.0)
    shifted_noise = jnp.where(SRC_VALID, noise[:, 0, SRC_CLIP], 0.0)  # (N, 64, 512)

    # kernel 2: fused 4x ConvUpsample heads + synthesis
    return heads_synth(z, f0_val, spec, shifted_noise, params)       # (N, 1, 512)


if __name__ == "__main__":
    key = jax.random.PRNGKey(0)
    pkey, xkey, nkey = jax.random.split(key, 3)
    params = init_params(pkey)
    x = jax.random.normal(xkey, (BATCH, CHANNELS), jnp.float32)
    fwd = jax.jit(atoms_forward)
    out = fwd(x, params, nkey)
    jax.block_until_ready(out)
    assert out.shape == (BATCH, 1, N_SAMPLES)
    assert bool(jnp.all(jnp.isfinite(out)))
    print("KERNEL_OK")
</pallas_src>

<mosaic_0001>
module attributes {stable_mosaic.version = 11 : i64} {
  func.func @frontend_kernel(%arg0: memref<2x32xf32, #tpu.memory_space<vmem>>, %arg1: memref<2x32x32xf32, #tpu.memory_space<vmem>>, %arg2: memref<2x1x32xf32, #tpu.memory_space<vmem>>, %arg3: memref<32x16xf32, #tpu.memory_space<vmem>>, %arg4: memref<1x16xf32, #tpu.memory_space<vmem>>, %arg5: memref<2x32x32xf32, #tpu.memory_space<vmem>>, %arg6: memref<2x1x32xf32, #tpu.memory_space<vmem>>, %arg7: memref<32x16xf32, #tpu.memory_space<vmem>>, %arg8: memref<1x16xf32, #tpu.memory_space<vmem>>, %arg9: memref<32x1024xf32, #tpu.memory_space<vmem>>, %arg10: memref<1x1024xf32, #tpu.memory_space<vmem>>, %arg11: memref<1x16xf32, #tpu.memory_space<vmem>>, %arg12: memref<2x1xf32, #tpu.memory_space<vmem>>, %arg13: memref<2x16xf32, #tpu.memory_space<vmem>>, %arg14: memref<2x1024xf32, #tpu.memory_space<vmem>>) attributes {dimension_semantics = [], scalar_prefetch = 0 : i64, scratch_operands = 0 : i64, tpu.core_type = #tpu.core_type<tc>} {
    %c0 = arith.constant 0 : index
    %c0_0 = arith.constant 0 : index
    %0 = vector.load %arg0[%c0, %c0_0] : memref<2x32xf32, #tpu.memory_space<vmem>>, vector<2x32xf32>
    %c0_1 = arith.constant 0 : index
    %c0_2 = arith.constant 0 : index
    %c0_3 = arith.constant 0 : index
    %1 = vector.load %arg1[%c0_1, %c0_2, %c0_3] : memref<2x32x32xf32, #tpu.memory_space<vmem>>, vector<1x32x32xf32>
    %2 = vector.shape_cast %1 : vector<1x32x32xf32> to vector<32x32xf32>
    %cst = arith.constant dense<0.000000e+00> : vector<2x32xf32>
    %3 = tpu.matmul %0, %2, %cst {dimension_numbers = #tpu.dot_dimension_numbers<[1], [0], [0], [1], [0, 0, 1, 1], [], []>} : vector<2x32xf32>, vector<32x32xf32>, vector<2x32xf32> -> vector<2x32xf32>
    %c0_4 = arith.constant 0 : index
    %c0_5 = arith.constant 0 : index
    %c0_6 = arith.constant 0 : index
    %4 = vector.load %arg2[%c0_4, %c0_5, %c0_6] : memref<2x1x32xf32, #tpu.memory_space<vmem>>, vector<1x1x32xf32>
    %5 = vector.shape_cast %4 : vector<1x1x32xf32> to vector<1x32xf32>
    %6 = vector.broadcast %5 : vector<1x32xf32> to vector<2x32xf32>
    %7 = arith.addf %3, %6 : vector<2x32xf32>
    %cst_7 = arith.constant 0.000000e+00 : f32
    %8 = vector.broadcast %cst_7 : f32 to vector<2x32xf32>
    %9 = arith.cmpf oge, %7, %8 : vector<2x32xf32>
    %cst_8 = arith.constant 2.000000e-01 : f32
    %10 = vector.broadcast %cst_8 : f32 to vector<2x32xf32>
    %11 = arith.mulf %10, %7 : vector<2x32xf32>
    %12 = arith.select %9, %7, %11 : vector<2x32xi1>, vector<2x32xf32>
    %c1 = arith.constant 1 : index
    %c0_9 = arith.constant 0 : index
    %c0_10 = arith.constant 0 : index
    %13 = vector.load %arg1[%c1, %c0_9, %c0_10] : memref<2x32x32xf32, #tpu.memory_space<vmem>>, vector<1x32x32xf32>
    %14 = vector.shape_cast %13 : vector<1x32x32xf32> to vector<32x32xf32>
    %cst_11 = arith.constant dense<0.000000e+00> : vector<2x32xf32>
    %15 = tpu.matmul %12, %14, %cst_11 {dimension_numbers = #tpu.dot_dimension_numbers<[1], [0], [0], [1], [0, 0, 1, 1], [], []>} : vector<2x32xf32>, vector<32x32xf32>, vector<2x32xf32> -> vector<2x32xf32>
    %c1_12 = arith.constant 1 : index
    %c0_13 = arith.constant 0 : index
    %c0_14 = arith.constant 0 : index
    %16 = vector.load %arg2[%c1_12, %c0_13, %c0_14] : memref<2x1x32xf32, #tpu.memory_space<vmem>>, vector<1x1x32xf32>
    %17 = vector.shape_cast %16 : vector<1x1x32xf32> to vector<1x32xf32>
    %18 = vector.broadcast %17 : vector<1x32xf32> to vector<2x32xf32>
    %19 = arith.addf %15, %18 : vector<2x32xf32>
    %cst_15 = arith.constant 0.000000e+00 : f32
    %20 = vector.broadcast %cst_15 : f32 to vector<2x32xf32>
    %21 = arith.cmpf oge, %19, %20 : vector<2x32xf32>
    %cst_16 = arith.constant 2.000000e-01 : f32
    %22 = vector.broadcast %cst_16 : f32 to vector<2x32xf32>
    %23 = arith.mulf %22, %19 : vector<2x32xf32>
    %24 = arith.select %21, %19, %23 : vector<2x32xi1>, vector<2x32xf32>
    %c0_17 = arith.constant 0 : index
    %c0_18 = arith.constant 0 : index
    %25 = vector.load %arg3[%c0_17, %c0_18] : memref<32x16xf32, #tpu.memory_space<vmem>>, vector<32x16xf32>
    %cst_19 = arith.constant dense<0.000000e+00> : vector<2x16xf32>
    %26 = tpu.matmul %24, %25, %cst_19 {dimension_numbers = #tpu.dot_dimension_numbers<[1], [0], [0], [1], [0, 0, 1, 1], [], []>} : vector<2x32xf32>, vector<32x16xf32>, vector<2x16xf32> -> vector<2x16xf32>
    %c0_20 = arith.constant 0 : index
    %c0_21 = arith.constant 0 : index
    %27 = vector.load %arg4[%c0_20, %c0_21] : memref<1x16xf32, #tpu.memory_space<vmem>>, vector<1x16xf32>
    %28 = vector.broadcast %27 : vector<1x16xf32> to vector<2x16xf32>
    %29 = arith.addf %26, %28 : vector<2x16xf32>
    %30 = tpu.iota {dimensions = array<i32: 1>} : vector<2x16xi32>
    %cst_22 = arith.constant dense<0xFF800000> : vector<2xf32>
    %31 = vector.multi_reduction <maximumf>, %29, %cst_22 [1] : vector<2x16xf32> to vector<2xf32>
    %32 = vector.shape_cast %31 : vector<2xf32> to vector<2x1xf32>
    %33 = vector.broadcast %32 : vector<2x1xf32> to vector<2x16xf32>
    %34 = arith.cmpf oge, %29, %33 : vector<2x16xf32>
    %c16_i32 = arith.constant 16 : i32
    %35 = vector.broadcast %c16_i32 : i32 to vector<2x16xi32>
    %36 = arith.select %34, %30, %35 : vector<2x16xi1>, vector<2x16xi32>
    %cst_23 = arith.constant dense<2147483647> : vector<2xi32>
    %37 = vector.multi_reduction <minsi>, %36, %cst_23 [1] : vector<2x16xi32> to vector<2xi32>
    %38 = vector.shape_cast %37 : vector<2xi32> to vector<2x1xi32>
    %39 = vector.broadcast %38 : vector<2x1xi32> to vector<2x16xi32>
    %40 = arith.cmpi eq, %30, %39 : vector<2x16xi32>
    %41 = arith.extui %40 : vector<2x16xi1> to vector<2x16xi32>
    %42 = arith.sitofp %41 : vector<2x16xi32> to vector<2x16xf32>
    %c0_24 = arith.constant 0 : index
    %c0_25 = arith.constant 0 : index
    %43 = vector.load %arg11[%c0_24, %c0_25] : memref<1x16xf32, #tpu.memory_space<vmem>>, vector<1x16xf32>
    %44 = vector.broadcast %43 : vector<1x16xf32> to vector<2x16xf32>
    %45 = arith.mulf %42, %44 : vector<2x16xf32>
    %cst_26 = arith.constant dense<0.000000e+00> : vector<2xf32>
    %46 = vector.multi_reduction <add>, %45, %cst_26 [1] : vector<2x16xf32> to vector<2xf32>
    %47 = vector.shape_cast %46 : vector<2xf32> to vector<2x1xf32>
    %c0_27 = arith.constant 0 : index
    %c0_28 = arith.constant 0 : index
    %48 = vector.load %arg12[%c0_27, %c0_28] : memref<2x1xf32, #tpu.memory_space<vmem>>, vector<2x1xf32>
    tpu.vector_store %arg12[%c0_27, %c0_28], %47 {strides = array<i32>} : memref<2x1xf32, #tpu.memory_space<vmem>>, vector<2x1xf32>,
    %c0_29 = arith.constant 0 : index
    %c0_30 = arith.constant 0 : index
    %c0_31 = arith.constant 0 : index
    %49 = vector.load %arg5[%c0_29, %c0_30, %c0_31] : memref<2x32x32xf32, #tpu.memory_space<vmem>>, vector<1x32x32xf32>
    %50 = vector.shape_cast %49 : vector<1x32x32xf32> to vector<32x32xf32>
    %cst_32 = arith.constant dense<0.000000e+00> : vector<2x32xf32>
    %51 = tpu.matmul %0, %50, %cst_32 {dimension_numbers = #tpu.dot_dimension_numbers<[1], [0], [0], [1], [0, 0, 1, 1], [], []>} : vector<2x32xf32>, vector<32x32xf32>, vector<2x32xf32> -> vector<2x32xf32>
    %c0_33 = arith.constant 0 : index
    %c0_34 = arith.constant 0 : index
    %c0_35 = arith.constant 0 : index
    %52 = vector.load %arg6[%c0_33, %c0_34, %c0_35] : memref<2x1x32xf32, #tpu.memory_space<vmem>>, vector<1x1x32xf32>
    %53 = vector.shape_cast %52 : vector<1x1x32xf32> to vector<1x32xf32>
    %54 = vector.broadcast %53 : vector<1x32xf32> to vector<2x32xf32>
    %55 = arith.addf %51, %54 : vector<2x32xf32>
    %cst_36 = arith.constant 0.000000e+00 : f32
    %56 = vector.broadcast %cst_36 : f32 to vector<2x32xf32>
    %57 = arith.cmpf oge, %55, %56 : vector<2x32xf32>
    %cst_37 = arith.constant 2.000000e-01 : f32
    %58 = vector.broadcast %cst_37 : f32 to vector<2x32xf32>
    %59 = arith.mulf %58, %55 : vector<2x32xf32>
    %60 = arith.select %57, %55, %59 : vector<2x32xi1>, vector<2x32xf32>
    %c1_38 = arith.constant 1 : index
    %c0_39 = arith.constant 0 : index
    %c0_40 = arith.constant 0 : index
    %61 = vector.load %arg5[%c1_38, %c0_39, %c0_40] : memref<2x32x32xf32, #tpu.memory_space<vmem>>, vector<1x32x32xf32>
    %62 = vector.shape_cast %61 : vector<1x32x32xf32> to vector<32x32xf32>
    %cst_41 = arith.constant dense<0.000000e+00> : vector<2x32xf32>
    %63 = tpu.matmul %60, %62, %cst_41 {dimension_numbers = #tpu.dot_dimension_numbers<[1], [0], [0], [1], [0, 0, 1, 1], [], []>} : vector<2x32xf32>, vector<32x32xf32>, vector<2x32xf32> -> vector<2x32xf32>
    %c1_42 = arith.constant 1 : index
    %c0_43 = arith.constant 0 : index
    %c0_44 = arith.constant 0 : index
    %64 = vector.load %arg6[%c1_42, %c0_43, %c0_44] : memref<2x1x32xf32, #tpu.memory_space<vmem>>, vector<1x1x32xf32>
    %65 = vector.shape_cast %64 : vector<1x1x32xf32> to vector<1x32xf32>
    %66 = vector.broadcast %65 : vector<1x32xf32> to vector<2x32xf32>
    %67 = arith.addf %63, %66 : vector<2x32xf32>
    %cst_45 = arith.constant 0.000000e+00 : f32
    %68 = vector.broadcast %cst_45 : f32 to vector<2x32xf32>
    %69 = arith.cmpf oge, %67, %68 : vector<2x32xf32>
    %cst_46 = arith.constant 2.000000e-01 : f32
    %70 = vector.broadcast %cst_46 : f32 to vector<2x32xf32>
    %71 = arith.mulf %70, %67 : vector<2x32xf32>
    %72 = arith.select %69, %67, %71 : vector<2x32xi1>, vector<2x32xf32>
    %c0_47 = arith.constant 0 : index
    %c0_48 = arith.constant 0 : index
    %73 = vector.load %arg7[%c0_47, %c0_48] : memref<32x16xf32, #tpu.memory_space<vmem>>, vector<32x16xf32>
    %cst_49 = arith.constant dense<0.000000e+00> : vector<2x16xf32>
    %74 = tpu.matmul %72, %73, %cst_49 {dimension_numbers = #tpu.dot_dimension_numbers<[1], [0], [0], [1], [0, 0, 1, 1], [], []>} : vector<2x32xf32>, vector<32x16xf32>, vector<2x16xf32> -> vector<2x16xf32>
    %c0_50 = arith.constant 0 : index
    %c0_51 = arith.constant 0 : index
    %75 = vector.load %arg8[%c0_50, %c0_51] : memref<1x16xf32, #tpu.memory_space<vmem>>, vector<1x16xf32>
    %76 = vector.broadcast %75 : vector<1x16xf32> to vector<2x16xf32>
    %77 = arith.addf %74, %76 : vector<2x16xf32>
    %c0_52 = arith.constant 0 : index
    %c0_53 = arith.constant 0 : index
    %78 = vector.load %arg13[%c0_52, %c0_53] : memref<2x16xf32, #tpu.memory_space<vmem>>, vector<2x16xf32>
    tpu.vector_store %arg13[%c0_52, %c0_53], %77 {strides = array<i32>} : memref<2x16xf32, #tpu.memory_space<vmem>>, vector<2x16xf32>,
    %c0_54 = arith.constant 0 : index
    %c0_55 = arith.constant 0 : index
    %79 = vector.load %arg9[%c0_54, %c0_55] : memref<32x1024xf32, #tpu.memory_space<vmem>>, vector<32x1024xf32>
    %cst_56 = arith.constant dense<0.000000e+00> : vector<2x1024xf32>
    %80 = tpu.matmul %0, %79, %cst_56 {dimension_numbers = #tpu.dot_dimension_numbers<[1], [0], [0], [1], [0, 0, 1, 1], [], []>} : vector<2x32xf32>, vector<32x1024xf32>, vector<2x1024xf32> -> vector<2x1024xf32>
    %c0_57 = arith.constant 0 : index
    %c0_58 = arith.constant 0 : index
    %81 = vector.load %arg10[%c0_57, %c0_58] : memref<1x1024xf32, #tpu.memory_space<vmem>>, vector<1x1024xf32>
    %82 = vector.broadcast %81 : vector<1x1024xf32> to vector<2x1024xf32>
    %83 = arith.addf %80, %82 : vector<2x1024xf32>
    %c0_59 = arith.constant 0 : index
    %c0_60 = arith.constant 0 : index
    %84 = vector.load %arg14[%c0_59, %c0_60] : memref<2x1024xf32, #tpu.memory_space<vmem>>, vector<2x1024xf32>
    tpu.vector_store %arg14[%c0_59, %c0_60], %83 {strides = array<i32>} : memref<2x1024xf32, #tpu.memory_space<vmem>>, vector<2x1024xf32>,
    return
  }
}

module attributes {stable_mosaic.version = 11 : i64} {
  func.func @heads_synth_kernel(%arg0: i32, %arg1: memref<1x128x8xf32, #tpu.memory_space<vmem>>, %arg2: memref<1x1x1xf32, #tpu.memory_space<vmem>>, %arg3: memref<1x16x1xf32, #tpu.memory_space<vmem>>, %arg4: memref<1x64x512xf32, #tpu.memory_space<vmem>>, %arg5: memref<3x8x16xf32, #tpu.memory_space<vmem>>, %arg6: memref<3x16x32xf32, #tpu.memory_space<vmem>>, %arg7: memref<3x32x32xf32, #tpu.memory_space<vmem>>, %arg8: memref<3x128x128xf32, #tpu.memory_space<vmem>>, %arg9: memref<128x1xf32, #tpu.memory_space<vmem>>, %arg10: memref<3x128x128xf32, #tpu.memory_space<vmem>>, %arg11: memref<128x1xf32, #tpu.memory_space<vmem>>, %arg12: memref<3x4x128xf32, #tpu.memory_space<vmem>>, %arg13: memref<4x1xf32, #tpu.memory_space<vmem>>, %arg14: memref<24x1xf32, #tpu.memory_space<vmem>>, %arg15: memref<32x512xf32, #tpu.memory_space<vmem>>, %arg16: memref<512x512xf32, #tpu.memory_space<vmem>>, %arg17: memref<1x1x512xf32, #tpu.memory_space<vmem>>) attributes {dimension_semantics = [#tpu.dimension_semantics<parallel>], iteration_bounds = array<i64: 2>, scalar_prefetch = 0 : i64, scratch_operands = 0 : i64, tpu.core_type = #tpu.core_type<tc>, window_params = [{transform_indices = @transform_0, window_bounds = array<i64: 1, 128, 8>}, {transform_indices = @transform_1, window_bounds = array<i64: 1, 1, 1>}, {transform_indices = @transform_2, window_bounds = array<i64: 1, 16, 1>}, {transform_indices = @transform_3, window_bounds = array<i64: 1, 64, 512>}, {pipeline_mode = #tpu.pipeline_mode<synchronous>, transform_indices = @transform_4, window_bounds = array<i64: 3, 8, 16>}, {pipeline_mode = #tpu.pipeline_mode<synchronous>, transform_indices = @transform_5, window_bounds = array<i64: 3, 16, 32>}, {pipeline_mode = #tpu.pipeline_mode<synchronous>, transform_indices = @transform_6, window_bounds = array<i64: 3, 32, 32>}, {pipeline_mode = #tpu.pipeline_mode<synchronous>, transform_indices = @transform_7, window_bounds = array<i64: 3, 128, 128>}, {pipeline_mode = #tpu.pipeline_mode<synchronous>, transform_indices = @transform_8, window_bounds = array<i64: 128, 1>}, {pipeline_mode = #tpu.pipeline_mode<synchronous>, transform_indices = @transform_9, window_bounds = array<i64: 3, 128, 128>}, {pipeline_mode = #tpu.pipeline_mode<synchronous>, transform_indices = @transform_10, window_bounds = array<i64: 128, 1>}, {pipeline_mode = #tpu.pipeline_mode<synchronous>, transform_indices = @transform_11, window_bounds = array<i64: 3, 4, 128>}, {pipeline_mode = #tpu.pipeline_mode<synchronous>, transform_indices = @transform_12, window_bounds = array<i64: 4, 1>}, {pipeline_mode = #tpu.pipeline_mode<synchronous>, transform_indices = @transform_13, window_bounds = array<i64: 24, 1>}, {pipeline_mode = #tpu.pipeline_mode<synchronous>, transform_indices = @transform_14, window_bounds = array<i64: 32, 512>}, {pipeline_mode = #tpu.pipeline_mode<synchronous>, transform_indices = @transform_15, window_bounds = array<i64: 512, 512>}, {transform_indices = @transform_16, window_bounds = array<i64: 1, 1, 512>}]} {
    %c0 = arith.constant 0 : index
    %c0_0 = arith.constant 0 : index
    %c0_1 = arith.constant 0 : index
    %0 = vector.load %arg1[%c0, %c0_0, %c0_1] : memref<1x128x8xf32, #tpu.memory_space<vmem>>, vector<1x128x8xf32>
    %1 = vector.shape_cast %0 : vector<1x128x8xf32> to vector<128x8xf32>
    %c0_2 = arith.constant 0 : index
    %c0_3 = arith.constant 0 : index
    %2 = vector.load %arg9[%c0_2, %c0_3] : memref<128x1xf32, #tpu.memory_space<vmem>>, vector<128x1xf32>
    %c0_4 = arith.constant 0 : index
    %c0_5 = arith.constant 0 : index
    %c0_6 = arith.constant 0 : index
    %3 = vector.load %arg5[%c0_4, %c0_5, %c0_6] : memref<3x8x16xf32, #tpu.memory_space<vmem>>, vector<1x8x16xf32>
    %4 = vector.shape_cast %3 : vector<1x8x16xf32> to vector<8x16xf32>
    %cst = arith.constant dense<0.000000e+00> : vector<128x16xf32>
    %5 = tpu.matmul %1, %4, %cst {dimension_numbers = #tpu.dot_dimension_numbers<[1], [0], [0], [1], [0, 0, 1, 1], [], []>} : vector<128x8xf32>, vector<8x16xf32>, vector<128x16xf32> -> vector<128x16xf32>
    %c0_7 = arith.constant 0 : index
    %c0_8 = arith.constant 0 : index
    %c0_9 = arith.constant 0 : index
    %6 = vector.load %arg8[%c0_7, %c0_8, %c0_9] : memref<3x128x128xf32, #tpu.memory_space<vmem>>, vector<1x128x128xf32>
    %7 = vector.shape_cast %6 : vector<1x128x128xf32> to vector<128x128xf32>
    %cst_10 = arith.constant dense<0.000000e+00> : vector<128x16xf32>
    %8 = tpu.matmul %7, %5, %cst_10 {dimension_numbers = #tpu.dot_dimension_numbers<[1], [0], [0], [1], [0, 0, 1, 1], [], []>} : vector<128x128xf32>, vector<128x16xf32>, vector<128x16xf32> -> vector<128x16xf32>
    %9 = vector.broadcast %2 : vector<128x1xf32> to vector<128x16xf32>
    %10 = arith.addf %9, %8 : vector<128x16xf32>
    %c1 = arith.constant 1 : index
    %c0_11 = arith.constant 0 : index
    %c0_12 = arith.constant 0 : index
    %11 = vector.load %arg5[%c1, %c0_11, %c0_12] : memref<3x8x16xf32, #tpu.memory_space<vmem>>, vector<1x8x16xf32>
    %12 = vector.shape_cast %11 : vector<1x8x16xf32> to vector<8x16xf32>
    %cst_13 = arith.constant dense<0.000000e+00> : vector<128x16xf32>
    %13 = tpu.matmul %1, %12, %cst_13 {dimension_numbers = #tpu.dot_dimension_numbers<[1], [0], [0], [1], [0, 0, 1, 1], [], []>} : vector<128x8xf32>, vector<8x16xf32>, vector<128x16xf32> -> vector<128x16xf32>
    %c1_14 = arith.constant 1 : index
    %c0_15 = arith.constant 0 : index
    %c0_16 = arith.constant 0 : index
    %14 = vector.load %arg8[%c1_14, %c0_15, %c0_16] : memref<3x128x128xf32, #tpu.memory_space<vmem>>, vector<1x128x128xf32>
    %15 = vector.shape_cast %14 : vector<1x128x128xf32> to vector<128x128xf32>
    %cst_17 = arith.constant dense<0.000000e+00> : vector<128x16xf32>
    %16 = tpu.matmul %15, %13, %cst_17 {dimension_numbers = #tpu.dot_dimension_numbers<[1], [0], [0], [1], [0, 0, 1, 1], [], []>} : vector<128x128xf32>, vector<128x16xf32>, vector<128x16xf32> -> vector<128x16xf32>
    %17 = arith.addf %10, %16 : vector<128x16xf32>
    %c2 = arith.constant 2 : index
    %c0_18 = arith.constant 0 : index
    %c0_19 = arith.constant 0 : index
    %18 = vector.load %arg5[%c2, %c0_18, %c0_19] : memref<3x8x16xf32, #tpu.memory_space<vmem>>, vector<1x8x16xf32>
    %19 = vector.shape_cast %18 : vector<1x8x16xf32> to vector<8x16xf32>
    %cst_20 = arith.constant dense<0.000000e+00> : vector<128x16xf32>
    %20 = tpu.matmul %1, %19, %cst_20 {dimension_numbers = #tpu.dot_dimension_numbers<[1], [0], [0], [1], [0, 0, 1, 1], [], []>} : vector<128x8xf32>, vector<8x16xf32>, vector<128x16xf32> -> vector<128x16xf32>
    %c2_21 = arith.constant 2 : index
    %c0_22 = arith.constant 0 : index
    %c0_23 = arith.constant 0 : index
    %21 = vector.load %arg8[%c2_21, %c0_22, %c0_23] : memref<3x128x128xf32, #tpu.memory_space<vmem>>, vector<1x128x128xf32>
    %22 = vector.shape_cast %21 : vector<1x128x128xf32> to vector<128x128xf32>
    %cst_24 = arith.constant dense<0.000000e+00> : vector<128x16xf32>
    %23 = tpu.matmul %22, %20, %cst_24 {dimension_numbers = #tpu.dot_dimension_numbers<[1], [0], [0], [1], [0, 0, 1, 1], [], []>} : vector<128x128xf32>, vector<128x16xf32>, vector<128x16xf32> -> vector<128x16xf32>
    %24 = arith.addf %17, %23 : vector<128x16xf32>
    %cst_25 = arith.constant 0.000000e+00 : f32
    %25 = vector.broadcast %cst_25 : f32 to vector<128x16xf32>
    %26 = arith.cmpf oge, %24, %25 : vector<128x16xf32>
    %cst_26 = arith.constant 2.000000e-01 : f32
    %27 = vector.broadcast %cst_26 : f32 to vector<128x16xf32>
    %28 = arith.mulf %27, %24 : vector<128x16xf32>
    %29 = arith.select %26, %24, %28 : vector<128x16xi1>, vector<128x16xf32>
    %c0_27 = arith.constant 0 : index
    %c0_28 = arith.constant 0 : index
    %30 = vector.load %arg11[%c0_27, %c0_28] : memref<128x1xf32, #tpu.memory_space<vmem>>, vector<128x1xf32>
    %c0_29 = arith.constant 0 : index
    %c0_30 = arith.constant 0 : index
    %c0_31 = arith.constant 0 : index
    %31 = vector.load %arg6[%c0_29, %c0_30, %c0_31] : memref<3x16x32xf32, #tpu.memory_space<vmem>>, vector<1x16x32xf32>
    %32 = vector.shape_cast %31 : vector<1x16x32xf32> to vector<16x32xf32>
    %cst_32 = arith.constant dense<0.000000e+00> : vector<128x32xf32>
    %33 = tpu.matmul %29, %32, %cst_32 {dimension_numbers = #tpu.dot_dimension_numbers<[1], [0], [0], [1], [0, 0, 1, 1], [], []>} : vector<128x16xf32>, vector<16x32xf32>, vector<128x32xf32> -> vector<128x32xf32>
    %c0_33 = arith.constant 0 : index
    %c0_34 = arith.constant 0 : index
    %c0_35 = arith.constant 0 : index
    %34 = vector.load %arg10[%c0_33, %c0_34, %c0_35] : memref<3x128x128xf32, #tpu.memory_space<vmem>>, vector<1x128x128xf32>
    %35 = vector.shape_cast %34 : vector<1x128x128xf32> to vector<128x128xf32>
    %cst_36 = arith.constant dense<0.000000e+00> : vector<128x32xf32>
    %36 = tpu.matmul %35, %33, %cst_36 {dimension_numbers = #tpu.dot_dimension_numbers<[1], [0], [0], [1], [0, 0, 1, 1], [], []>} : vector<128x128xf32>, vector<128x32xf32>, vector<128x32xf32> -> vector<128x32xf32>
    %37 = vector.broadcast %30 : vector<128x1xf32> to vector<128x32xf32>
    %38 = arith.addf %37, %36 : vector<128x32xf32>
    %c1_37 = arith.constant 1 : index
    %c0_38 = arith.constant 0 : index
    %c0_39 = arith.constant 0 : index
    %39 = vector.load %arg6[%c1_37, %c0_38, %c0_39] : memref<3x16x32xf32, #tpu.memory_space<vmem>>, vector<1x16x32xf32>
    %40 = vector.shape_cast %39 : vector<1x16x32xf32> to vector<16x32xf32>
    %cst_40 = arith.constant dense<0.000000e+00> : vector<128x32xf32>
    %41 = tpu.matmul %29, %40, %cst_40 {dimension_numbers = #tpu.dot_dimension_numbers<[1], [0], [0], [1], [0, 0, 1, 1], [], []>} : vector<128x16xf32>, vector<16x32xf32>, vector<128x32xf32> -> vector<128x32xf32>
    %c1_41 = arith.constant 1 : index
    %c0_42 = arith.constant 0 : index
    %c0_43 = arith.constant 0 : index
    %42 = vector.load %arg10[%c1_41, %c0_42, %c0_43] : memref<3x128x128xf32, #tpu.memory_space<vmem>>, vector<1x128x128xf32>
    %43 = vector.shape_cast %42 : vector<1x128x128xf32> to vector<128x128xf32>
    %cst_44 = arith.constant dense<0.000000e+00> : vector<128x32xf32>
    %44 = tpu.matmul %43, %41, %cst_44 {dimension_numbers = #tpu.dot_dimension_numbers<[1], [0], [0], [1], [0, 0, 1, 1], [], []>} : vector<128x128xf32>, vector<128x32xf32>, vector<128x32xf32> -> vector<128x32xf32>
    %45 = arith.addf %38, %44 : vector<128x32xf32>
    %c2_45 = arith.constant 2 : index
    %c0_46 = arith.constant 0 : index
    %c0_47 = arith.constant 0 : index
    %46 = vector.load %arg6[%c2_45, %c0_46, %c0_47] : memref<3x16x32xf32, #tpu.memory_space<vmem>>, vector<1x16x32xf32>
    %47 = vector.shape_cast %46 : vector<1x16x32xf32> to vector<16x32xf32>
    %cst_48 = arith.constant dense<0.000000e+00> : vector<128x32xf32>
    %48 = tpu.matmul %29, %47, %cst_48 {dimension_numbers = #tpu.dot_dimension_numbers<[1], [0], [0], [1], [0, 0, 1, 1], [], []>} : vector<128x16xf32>, vector<16x32xf32>, vector<128x32xf32> -> vector<128x32xf32>
    %c2_49 = arith.constant 2 : index
    %c0_50 = arith.constant 0 : index
    %c0_51 = arith.constant 0 : index
    %49 = vector.load %arg10[%c2_49, %c0_50, %c0_51] : memref<3x128x128xf32, #tpu.memory_space<vmem>>, vector<1x128x128xf32>
    %50 = vector.shape_cast %49 : vector<1x128x128xf32> to vector<128x128xf32>
    %cst_52 = arith.constant dense<0.000000e+00> : vector<128x32xf32>
    %51 = tpu.matmul %50, %48, %cst_52 {dimension_numbers = #tpu.dot_dimension_numbers<[1], [0], [0], [1], [0, 0, 1, 1], [], []>} : vector<128x128xf32>, vector<128x32xf32>, vector<128x32xf32> -> vector<128x32xf32>
    %52 = arith.addf %45, %51 : vector<128x32xf32>
    %cst_53 = arith.constant 0.000000e+00 : f32
    %53 = vector.broadcast %cst_53 : f32 to vector<128x32xf32>
    %54 = arith.cmpf oge, %52, %53 : vector<128x32xf32>
    %cst_54 = arith.constant 2.000000e-01 : f32
    %55 = vector.broadcast %cst_54 : f32 to vector<128x32xf32>
    %56 = arith.mulf %55, %52 : vector<128x32xf32>
    %57 = arith.select %54, %52, %56 : vector<128x32xi1>, vector<128x32xf32>
    %c0_55 = arith.constant 0 : index
    %c0_56 = arith.constant 0 : index
    %c0_57 = arith.constant 0 : index
    %58 = vector.load %arg7[%c0_55, %c0_56, %c0_57] : memref<3x32x32xf32, #tpu.memory_space<vmem>>, vector<1x32x32xf32>
    %59 = vector.shape_cast %58 : vector<1x32x32xf32> to vector<32x32xf32>
    %cst_58 = arith.constant dense<0.000000e+00> : vector<128x32xf32>
    %60 = tpu.matmul %57, %59, %cst_58 {dimension_numbers = #tpu.dot_dimension_numbers<[1], [0], [0], [1], [0, 0, 1, 1], [], []>} : vector<128x32xf32>, vector<32x32xf32>, vector<128x32xf32> -> vector<128x32xf32>
    %c2_59 = arith.constant 2 : index
    %c0_60 = arith.constant 0 : index
    %c0_61 = arith.constant 0 : index
    %61 = vector.load %arg7[%c2_59, %c0_60, %c0_61] : memref<3x32x32xf32, #tpu.memory_space<vmem>>, vector<1x32x32xf32>
    %62 = vector.shape_cast %61 : vector<1x32x32xf32> to vector<32x32xf32>
    %cst_62 = arith.constant dense<0.000000e+00> : vector<128x32xf32>
    %63 = tpu.matmul %57, %62, %cst_62 {dimension_numbers = #tpu.dot_dimension_numbers<[1], [0], [0], [1], [0, 0, 1, 1], [], []>} : vector<128x32xf32>, vector<32x32xf32>, vector<128x32xf32> -> vector<128x32xf32>
    %c0_63 = arith.constant 0 : index
    %c0_64 = arith.constant 0 : index
    %c0_65 = arith.constant 0 : index
    %64 = vector.load %arg12[%c0_63, %c0_64, %c0_65] : memref<3x4x128xf32, #tpu.memory_space<vmem>>, vector<1x4x128xf32>
    %65 = vector.shape_cast %64 : vector<1x4x128xf32> to vector<4x128xf32>
    %cst_66 = arith.constant dense<0.000000e+00> : vector<4x32xf32>
    %66 = tpu.matmul %65, %60, %cst_66 {dimension_numbers = #tpu.dot_dimension_numbers<[1], [0], [0], [1], [0, 0, 1, 1], [], []>} : vector<4x128xf32>, vector<128x32xf32>, vector<4x32xf32> -> vector<4x32xf32>
    %c1_67 = arith.constant 1 : index
    %c0_68 = arith.constant 0 : index
    %c0_69 = arith.constant 0 : index
    %67 = vector.load %arg12[%c1_67, %c0_68, %c0_69] : memref<3x4x128xf32, #tpu.memory_space<vmem>>, vector<1x4x128xf32>
    %68 = vector.shape_cast %67 : vector<1x4x128xf32> to vector<4x128xf32>
    %cst_70 = arith.constant dense<0.000000e+00> : vector<4x32xf32>
    %69 = tpu.matmul %68, %57, %cst_70 {dimension_numbers = #tpu.dot_dimension_numbers<[1], [0], [0], [1], [0, 0, 1, 1], [], []>} : vector<4x128xf32>, vector<128x32xf32>, vector<4x32xf32> -> vector<4x32xf32>
    %70 = arith.addf %66, %69 : vector<4x32xf32>
    %c2_71 = arith.constant 2 : index
    %c0_72 = arith.constant 0 : index
    %c0_73 = arith.constant 0 : index
    %71 = vector.load %arg12[%c2_71, %c0_72, %c0_73] : memref<3x4x128xf32, #tpu.memory_space<vmem>>, vector<1x4x128xf32>
    %72 = vector.shape_cast %71 : vector<1x4x128xf32> to vector<4x128xf32>
    %cst_74 = arith.constant dense<0.000000e+00> : vector<4x32xf32>
    %73 = tpu.matmul %72, %63, %cst_74 {dimension_numbers = #tpu.dot_dimension_numbers<[1], [0], [0], [1], [0, 0, 1, 1], [], []>} : vector<4x128xf32>, vector<128x32xf32>, vector<4x32xf32> -> vector<4x32xf32>
    %74 = arith.addf %70, %73 : vector<4x32xf32>
    %c0_75 = arith.constant 0 : index
    %c0_76 = arith.constant 0 : index
    %75 = vector.load %arg13[%c0_75, %c0_76] : memref<4x1xf32, #tpu.memory_space<vmem>>, vector<4x1xf32>
    %76 = vector.broadcast %75 : vector<4x1xf32> to vector<4x32xf32>
    %77 = arith.addf %74, %76 : vector<4x32xf32>
    %78 = vector.extract_strided_slice %77 {offsets = [0, 0], sizes = [1, 32], strides = [1, 1]} : vector<4x32xf32> to vector<1x32xf32>
    %79 = vector.extract_strided_slice %77 {offsets = [1, 0], sizes = [1, 32], strides = [1, 1]} : vector<4x32xf32> to vector<1x32xf32>
    %cst_77 = arith.constant 0.000000e+00 : f32
    %80 = vector.broadcast %cst_77 : f32 to vector<1x32xf32>
    %81 = arith.maximumf %79, %80 : vector<1x32xf32>
    %82 = vector.extract_strided_slice %77 {offsets = [2, 0], sizes = [1, 32], strides = [1, 1]} : vector<4x32xf32> to vector<1x32xf32>
    %cst_78 = arith.constant 0.000000e+00 : f32
    %cst_79 = arith.constant 1.000000e+00 : f32
    %83 = vector.broadcast %cst_78 : f32 to vector<1x32xf32>
    %84 = arith.maximumf %83, %82 : vector<1x32xf32>
    %85 = vector.broadcast %cst_79 : f32 to vector<1x32xf32>
    %86 = arith.minimumf %85, %84 : vector<1x32xf32>
    %cst_80 = arith.constant 2.000000e-01 : f32
    %87 = vector.broadcast %cst_80 : f32 to vector<1x32xf32>
    %88 = arith.mulf %87, %86 : vector<1x32xf32>
    %cst_81 = arith.constant 8.000000e-01 : f32
    %89 = vector.broadcast %cst_81 : f32 to vector<1x32xf32>
    %90 = arith.addf %89, %88 : vector<1x32xf32>
    %91 = vector.extract_strided_slice %77 {offsets = [3, 0], sizes = [1, 32], strides = [1, 1]} : vector<4x32xf32> to vector<1x32xf32>
    %cst_82 = arith.constant 0.000000e+00 : f32
    %cst_83 = arith.constant 1.000000e+00 : f32
    %92 = vector.broadcast %cst_82 : f32 to vector<1x32xf32>
    %93 = arith.maximumf %92, %91 : vector<1x32xf32>
    %94 = vector.broadcast %cst_83 : f32 to vector<1x32xf32>
    %95 = arith.minimumf %94, %93 : vector<1x32xf32>
    %c0_84 = arith.constant 0 : index
    %c0_85 = arith.constant 0 : index
    %c0_86 = arith.constant 0 : index
    %96 = vector.load %arg2[%c0_84, %c0_85, %c0_86] : memref<1x1x1xf32, #tpu.memory_space<vmem>>, vector<1x1x1xf32>
    %97 = vector.shape_cast %96 : vector<1x1x1xf32> to vector<1x1xf32>
    %cst_87 = arith.constant 5.000000e-02 : f32
    %98 = vector.broadcast %cst_87 : f32 to vector<1x1xf32>
    %99 = arith.mulf %97, %98 : vector<1x1xf32>
    %100 = math.tanh %78 : vector<1x32xf32>
    %101 = vector.broadcast %99 : vector<1x1xf32> to vector<1x32xf32>
    %102 = arith.mulf %101, %100 : vector<1x32xf32>
    %103 = vector.broadcast %97 : vector<1x1xf32> to vector<1x32xf32>
    %104 = arith.addf %103, %102 : vector<1x32xf32>
    %c0_88 = arith.constant 0 : index
    %c0_89 = arith.constant 0 : index
    %105 = vector.load %arg14[%c0_88, %c0_89] : memref<24x1xf32, #tpu.memory_space<vmem>>, vector<24x1xf32>
    %106 = vector.broadcast %105 : vector<24x1xf32> to vector<24x32xf32>
    %107 = vector.broadcast %104 : vector<1x32xf32> to vector<24x32xf32>
    %108 = arith.mulf %106, %107 : vector<24x32xf32>
    %cst_90 = arith.constant 1.000000e+00 : f32
    %109 = vector.broadcast %cst_90 : f32 to vector<24x32xf32>
    %110 = arith.cmpf oge, %108, %109 : vector<24x32xf32>
    %cst_91 = arith.constant 0.000000e+00 : f32
    %111 = vector.broadcast %cst_91 : f32 to vector<24x32xf32>
    %112 = arith.select %110, %111, %108 : vector<24x32xi1>, vector<24x32xf32>
    %c0_92 = arith.constant 0 : index
    %c0_93 = arith.constant 0 : index
    %c0_94 = arith.constant 0 : index
    %113 = vector.load %arg3[%c0_92, %c0_93, %c0_94] : memref<1x16x1xf32, #tpu.memory_space<vmem>>, vector<1x16x1xf32>
    %114 = vector.shape_cast %113 : vector<1x16x1xf32> to vector<16x1xf32>
    %cst_95 = arith.constant 0.000000e+00 : f32
    %cst_96 = arith.constant 1.000000e+00 : f32
    %115 = vector.broadcast %cst_95 : f32 to vector<16x1xf32>
    %116 = arith.maximumf %115, %114 : vector<16x1xf32>
    %117 = vector.broadcast %cst_96 : f32 to vector<16x1xf32>
    %118 = arith.minimumf %117, %116 : vector<16x1xf32>
    %119 = vector.broadcast %118 : vector<16x1xf32> to vector<16x32xf32>
    %120 = vector.broadcast %81 : vector<1x32xf32> to vector<16x32xf32>
    %121 = arith.mulf %119, %120 : vector<16x32xf32>
    %cst_97 = arith.constant 0.000000e+00 : f32
    %122 = vector.broadcast %cst_97 : f32 to vector<7x32xf32>
    %123 = tpu.concatenate %81, %121, %122 in 0 : vector<1x32xf32>, vector<16x32xf32>, vector<7x32xf32> -> vector<24x32xf32>
    %c0_98 = arith.constant 0 : index
    %c0_99 = arith.constant 0 : index
    %c0_100 = arith.constant 0 : index
    %124 = vector.load %arg7[%c0_98, %c0_99, %c0_100] : memref<3x32x32xf32, #tpu.memory_space<vmem>>, vector<1x32x32xf32>
    %125 = vector.shape_cast %124 : vector<1x32x32xf32> to vector<32x32xf32>
    %cst_101 = arith.constant dense<0.000000e+00> : vector<24x32xf32>
    %126 = tpu.matmul %123, %125, %cst_101 {dimension_numbers = #tpu.dot_dimension_numbers<[1], [0], [0], [1], [0, 0, 1, 1], [], []>} : vector<24x32xf32>, vector<32x32xf32>, vector<24x32xf32> -> vector<24x32xf32>
    %127 = vector.broadcast %90 : vector<1x32xf32> to vector<24x32xf32>
    %128 = arith.mulf %126, %127 : vector<24x32xf32>
    %129 = arith.addf %123, %128 : vector<24x32xf32>
    %130 = tpu.concatenate %112, %129, %95 in 0 : vector<24x32xf32>, vector<24x32xf32>, vector<1x32xf32> -> vector<49x32xf32>
    %c0_102 = arith.constant 0 : index
    %c0_103 = arith.constant 0 : index
    %131 = vector.load %arg15[%c0_102, %c0_103] : memref<32x512xf32, #tpu.memory_space<vmem>>, vector<32x512xf32>
    %cst_104 = arith.constant dense<0.000000e+00> : vector<49x512xf32>
    %132 = tpu.matmul %130, %131, %cst_104 {dimension_numbers = #tpu.dot_dimension_numbers<[1], [0], [0], [1], [0, 0, 1, 1], [], []>} : vector<49x32xf32>, vector<32x512xf32>, vector<49x512xf32> -> vector<49x512xf32>
    %133 = vector.extract_strided_slice %132 {offsets = [0, 0], sizes = [24, 512], strides = [1, 1]} : vector<49x512xf32> to vector<24x512xf32>
    %134 = vector.extract_strided_slice %132 {offsets = [24, 0], sizes = [24, 512], strides = [1, 1]} : vector<49x512xf32> to vector<24x512xf32>
    %135 = vector.extract_strided_slice %132 {offsets = [48, 0], sizes = [1, 512], strides = [1, 1]} : vector<49x512xf32> to vector<1x512xf32>
    %cst_105 = arith.constant 3.14159274 : f32
    %136 = vector.broadcast %cst_105 : f32 to vector<24x512xf32>
    %137 = arith.mulf %133, %136 : vector<24x512xf32>
    %c0_106 = arith.constant 0 : index
    %c0_107 = arith.constant 0 : index
    %138 = vector.load %arg16[%c0_106, %c0_107] : memref<512x512xf32, #tpu.memory_space<vmem>>, vector<512x512xf32>
    %cst_108 = arith.constant dense<0.000000e+00> : vector<24x512xf32>
    %139 = tpu.matmul %137, %138, %cst_108 {dimension_numbers = #tpu.dot_dimension_numbers<[1], [0], [0], [1], [0, 0, 1, 1], [], []>} : vector<24x512xf32>, vector<512x512xf32>, vector<24x512xf32> -> vector<24x512xf32>
    %140 = math.sin %139 : vector<24x512xf32>
    %141 = vector.extract_strided_slice %140 {offsets = [0, 0], sizes = [24, 64], strides = [1, 1]} : vector<24x512xf32> to vector<24x64xf32>
    %c0_109 = arith.constant 0 : index
    %c0_110 = arith.constant 0 : index
    %c0_111 = arith.constant 0 : index
    %142 = vector.load %arg4[%c0_109, %c0_110, %c0_111] : memref<1x64x512xf32, #tpu.memory_space<vmem>>, vector<1x64x512xf32>
    %143 = vector.shape_cast %142 : vector<1x64x512xf32> to vector<64x512xf32>
    %cst_112 = arith.constant dense<0.000000e+00> : vector<24x512xf32>
    %144 = tpu.matmul %141, %143, %cst_112 {dimension_numbers = #tpu.dot_dimension_numbers<[1], [0], [0], [1], [0, 0, 1, 1], [], []>} : vector<24x64xf32>, vector<64x512xf32>, vector<24x512xf32> -> vector<24x512xf32>
    %145 = arith.mulf %140, %134 : vector<24x512xf32>
    %146 = vector.broadcast %135 : vector<1x512xf32> to vector<24x512xf32>
    %147 = arith.mulf %145, %146 : vector<24x512xf32>
    %148 = arith.mulf %144, %134 : vector<24x512xf32>
    %cst_113 = arith.constant 1.000000e+00 : f32
    %149 = vector.broadcast %cst_113 : f32 to vector<1x512xf32>
    %150 = arith.subf %149, %135 : vector<1x512xf32>
    %151 = vector.broadcast %150 : vector<1x512xf32> to vector<24x512xf32>
    %152 = arith.mulf %148, %151 : vector<24x512xf32>
    %153 = arith.addf %147, %152 : vector<24x512xf32>
    %cst_114 = arith.constant 0.0588235296 : f32
    %154 = vector.broadcast %cst_114 : f32 to vector<1x24xf32>
    %cst_115 = arith.constant dense<0.000000e+00> : vector<1x512xf32>
    %155 = tpu.matmul %154, %153, %cst_115 {dimension_numbers = #tpu.dot_dimension_numbers<[1], [0], [0], [1], [0, 0, 1, 1], [], []>} : vector<1x24xf32>, vector<24x512xf32>, vector<1x512xf32> -> vector<1x512xf32>
    %c0_116 = arith.constant 0 : index
    %c0_117 = arith.constant 0 : index
    %c0_118 = arith.constant 0 : index
    %156 = vector.load %arg17[%c0_116, %c0_117, %c0_118] : memref<1x1x512xf32, #tpu.memory_space<vmem>>, vector<1x1x512xf32>
    %157 = vector.shape_cast %156 : vector<1x1x512xf32> to vector<1x512xf32>
    %158 = vector.shape_cast %155 : vector<1x512xf32> to vector<1x1x512xf32>
    tpu.vector_store %arg17[%c0_116, %c0_117, %c0_118], %158 {strides = array<i32>} : memref<1x1x512xf32, #tpu.memory_space<vmem>>, vector<1x1x512xf32>,
    return
  }
  func.func @transform_0(%arg0: i32) -> (i32, i32, i32) {
    %c0_i32 = arith.constant 0 : i32
    %c0_i32_0 = arith.constant 0 : i32
    %c0_i32_1 = arith.constant 0 : i32
    return %arg0, %c0_i32, %c0_i32_0 : i32, i32, i32
  }
  func.func @transform_1(%arg0: i32) -> (i32, i32, i32) {
    %c0_i32 = arith.constant 0 : i32
    %c0_i32_0 = arith.constant 0 : i32
    %c0_i32_1 = arith.constant 0 : i32
    return %arg0, %c0_i32, %c0_i32_0 : i32, i32, i32
  }
  func.func @transform_2(%arg0: i32) -> (i32, i32, i32) {
    %c0_i32 = arith.constant 0 : i32
    %c0_i32_0 = arith.constant 0 : i32
    %c0_i32_1 = arith.constant 0 : i32
    return %arg0, %c0_i32, %c0_i32_0 : i32, i32, i32
  }
  func.func @transform_3(%arg0: i32) -> (i32, i32, i32) {
    %c0_i32 = arith.constant 0 : i32
    %c0_i32_0 = arith.constant 0 : i32
    %c0_i32_1 = arith.constant 0 : i32
    return %arg0, %c0_i32, %c0_i32_0 : i32, i32, i32
  }
  func.func @transform_4(%arg0: i32) -> (i32, i32, i32) {
    %c0_i32 = arith.constant 0 : i32
    %c0_i32_0 = arith.constant 0 : i32
    %c0_i32_1 = arith.constant 0 : i32
    %c0_i32_2 = arith.constant 0 : i32
    return %c0_i32, %c0_i32_0, %c0_i32_1 : i32, i32, i32
  }
  func.func @transform_5(%arg0: i32) -> (i32, i32, i32) {
    %c0_i32 = arith.constant 0 : i32
    %c0_i32_0 = arith.constant 0 : i32
    %c0_i32_1 = arith.constant 0 : i32
    %c0_i32_2 = arith.constant 0 : i32
    return %c0_i32, %c0_i32_0, %c0_i32_1 : i32, i32, i32
  }
  func.func @transform_6(%arg0: i32) -> (i32, i32, i32) {
    %c0_i32 = arith.constant 0 : i32
    %c0_i32_0 = arith.constant 0 : i32
    %c0_i32_1 = arith.constant 0 : i32
    %c0_i32_2 = arith.constant 0 : i32
    return %c0_i32, %c0_i32_0, %c0_i32_1 : i32, i32, i32
  }
  func.func @transform_7(%arg0: i32) -> (i32, i32, i32) {
    %c0_i32 = arith.constant 0 : i32
    %c0_i32_0 = arith.constant 0 : i32
    %c0_i32_1 = arith.constant 0 : i32
    %c0_i32_2 = arith.constant 0 : i32
    return %c0_i32, %c0_i32_0, %c0_i32_1 : i32, i32, i32
  }
  func.func @transform_8(%arg0: i32) -> (i32, i32) {
    %c0_i32 = arith.constant 0 : i32
    %c0_i32_0 = arith.constant 0 : i32
    %c0_i32_1 = arith.constant 0 : i32
    return %c0_i32, %c0_i32_0 : i32, i32
  }
  func.func @transform_9(%arg0: i32) -> (i32, i32, i32) {
    %c0_i32 = arith.constant 0 : i32
    %c0_i32_0 = arith.constant 0 : i32
    %c0_i32_1 = arith.constant 0 : i32
    %c0_i32_2 = arith.constant 0 : i32
    return %c0_i32, %c0_i32_0, %c0_i32_1 : i32, i32, i32
  }
  func.func @transform_10(%arg0: i32) -> (i32, i32) {
    %c0_i32 = arith.constant 0 : i32
    %c0_i32_0 = arith.constant 0 : i32
    %c0_i32_1 = arith.constant 0 : i32
    return %c0_i32, %c0_i32_0 : i32, i32
  }
  func.func @transform_11(%arg0: i32) -> (i32, i32, i32) {
    %c0_i32 = arith.constant 0 : i32
    %c0_i32_0 = arith.constant 0 : i32
    %c0_i32_1 = arith.constant 0 : i32
    %c0_i32_2 = arith.constant 0 : i32
    return %c0_i32, %c0_i32_0, %c0_i32_1 : i32, i32, i32
  }
  func.func @transform_12(%arg0: i32) -> (i32, i32) {
    %c0_i32 = arith.constant 0 : i32
    %c0_i32_0 = arith.constant 0 : i32
    %c0_i32_1 = arith.constant 0 : i32
    return %c0_i32, %c0_i32_0 : i32, i32
  }
  func.func @transform_13(%arg0: i32) -> (i32, i32) {
    %c0_i32 = arith.constant 0 : i32
    %c0_i32_0 = arith.constant 0 : i32
    %c0_i32_1 = arith.constant 0 : i32
    return %c0_i32, %c0_i32_0 : i32, i32
  }
  func.func @transform_14(%arg0: i32) -> (i32, i32) {
    %c0_i32 = arith.constant 0 : i32
    %c0_i32_0 = arith.constant 0 : i32
    %c0_i32_1 = arith.constant 0 : i32
    return %c0_i32, %c0_i32_0 : i32, i32
  }
  func.func @transform_15(%arg0: i32) -> (i32, i32) {
    %c0_i32 = arith.constant 0 : i32
    %c0_i32_0 = arith.constant 0 : i32
    %c0_i32_1 = arith.constant 0 : i32
    return %c0_i32, %c0_i32_0 : i32, i32
  }
  func.func @transform_16(%arg0: i32) -> (i32, i32, i32) {
    %c0_i32 = arith.constant 0 : i32
    %c0_i32_0 = arith.constant 0 : i32
    %c0_i32_1 = arith.constant 0 : i32
    return %arg0, %c0_i32, %c0_i32_0 : i32, i32, i32
  }
}

</mosaic_0001>

<llo_original>
// kernel: atoms_forward.2
$region0: #{atoms_forward.2}
  #allocation0 [shape = 'u32[]', space=smem, size = 0x4, offset = 0x4, fixed_abs, tag = 'smem constant byte address 0x4 - core index']
  #allocation1 [shape = 'u32[144,128]{1,0:T(1,128)}', space=vmem, size = 0x12000, scoped, tag = 'internal scratch']
  %s0 = inlined_call_operand.vmem [shape: f32[2,32], index: 0, kind: input, shape index: {}]
  %s1 = inlined_call_operand.vmem [shape: f32[2,32,32], index: 1, kind: input, shape index: {}]
  %s2 = inlined_call_operand.vmem [shape: f32[2,1,32], index: 2, kind: input, shape index: {}]
  %s3 = inlined_call_operand.vmem [shape: f32[32,16], index: 3, kind: input, shape index: {}]
  %s4 = inlined_call_operand.vmem [shape: f32[1,16], index: 4, kind: input, shape index: {}]
  %s5 = inlined_call_operand.vmem [shape: f32[2,32,32], index: 5, kind: input, shape index: {}]
  %s6 = inlined_call_operand.vmem [shape: f32[2,1,32], index: 6, kind: input, shape index: {}]
  %s7 = inlined_call_operand.vmem [shape: f32[32,16], index: 7, kind: input, shape index: {}]
  %s8 = inlined_call_operand.vmem [shape: f32[1,16], index: 8, kind: input, shape index: {}]
  %s9 = inlined_call_operand.vmem [shape: f32[32,1024], index: 9, kind: input, shape index: {}]
  %s10 = inlined_call_operand.vmem [shape: f32[1,1024], index: 10, kind: input, shape index: {}]
  %s11 = inlined_call_operand.vmem [shape: f32[1,16], index: 11, kind: input, shape index: {}]
  %s12 = inlined_call_operand.vmem [shape: f32[2,1], index: 12, kind: output, shape index: {0}]
  %s13 = inlined_call_operand.vmem [shape: f32[2,16], index: 13, kind: output, shape index: {1}]
  %s14 = inlined_call_operand.vmem [shape: f32[2,1024], index: 14, kind: output, shape index: {2}]
  %15 = xla_tuple %s12, %s13, %s14
  %s16 = sld [smem:[#allocation0]]
  $region74: #{atoms_forward.2} parent=0
    _
  %s18 = ssub.s32 1, %s16
  %s19 = scalar_select 0, %s18, %s16
  // Predicated region
  $region2: #{atoms_forward.2} parent=0 // pred_check
    _
  $region3: #{atoms_forward.2} parent=0 // pred_check_branch
    %21 = sbr.rel (0) target = $region5
  $region4: #{atoms_forward.2} parent=0 // pred_region
    _
  $region5: #{atoms_forward.2} parent=0 // pred_fallthru
    _
  // Predicated region
  $region6: #{atoms_forward.2} parent=0 // pred_check
    _
  $region7: #{atoms_forward.2} parent=0 // pred_check_branch
    %23 = sbr.rel (0) target = $region9
  $region8: #{atoms_forward.2} parent=0 // pred_region
    _
  $region9: #{atoms_forward.2} parent=0 // pred_fallthru
    _
  // Predicated region
  $region10: #{atoms_forward.2} parent=0 // pred_check
    _
  $region11: #{atoms_forward.2} parent=0 // pred_check_branch
    %25 = sbr.rel (0) target = $region13
  $region12: #{atoms_forward.2} parent=0 // pred_region
    _
  $region13: #{atoms_forward.2} parent=0 // pred_fallthru
    _
  // Predicated region
  $region14: #{atoms_forward.2} parent=0 // pred_check
    _
  $region15: #{atoms_forward.2} parent=0 // pred_check_branch
    %27 = sbr.rel (0) target = $region17
  $region16: #{atoms_forward.2} parent=0 // pred_region
    _
  $region17: #{atoms_forward.2} parent=0 // pred_fallthru
    _
  // Predicated region
  $region18: #{atoms_forward.2} parent=0 // pred_check
    _
  $region19: #{atoms_forward.2} parent=0 // pred_check_branch
    %29 = sbr.rel (0) target = $region21
  $region20: #{atoms_forward.2} parent=0 // pred_region
    _
  $region21: #{atoms_forward.2} parent=0 // pred_fallthru
    _
  // Predicated region
  $region22: #{atoms_forward.2} parent=0 // pred_check
    _
  $region23: #{atoms_forward.2} parent=0 // pred_check_branch
    %31 = sbr.rel (0) target = $region25
  $region24: #{atoms_forward.2} parent=0 // pred_region
    _
  $region25: #{atoms_forward.2} parent=0 // pred_fallthru
    _
  // Predicated region
  $region26: #{atoms_forward.2} parent=0 // pred_check
    _
  $region27: #{atoms_forward.2} parent=0 // pred_check_branch
    %33 = sbr.rel (0) target = $region29
  $region28: #{atoms_forward.2} parent=0 // pred_region
    _
  $region29: #{atoms_forward.2} parent=0 // pred_fallthru
    _
  // Predicated region
  $region30: #{atoms_forward.2} parent=0 // pred_check
    _
  $region31: #{atoms_forward.2} parent=0 // pred_check_branch
    %35 = sbr.rel (0) target = $region33
  $region32: #{atoms_forward.2} parent=0 // pred_region
    _
  $region33: #{atoms_forward.2} parent=0 // pred_fallthru
    _
  // Predicated region
  $region34: #{atoms_forward.2} parent=0 // pred_check
    _
  $region35: #{atoms_forward.2} parent=0 // pred_check_branch
    %37 = sbr.rel (0) target = $region37
  $region36: #{atoms_forward.2} parent=0 // pred_region
    _
  $region37: #{atoms_forward.2} parent=0 // pred_fallthru
    _
  // Predicated region
  $region38: #{atoms_forward.2} parent=0 // pred_check
    _
  $region39: #{atoms_forward.2} parent=0 // pred_check_branch
    %39 = sbr.rel (0) target = $region41
  $region40: #{atoms_forward.2} parent=0 // pred_region
    _
  $region41: #{atoms_forward.2} parent=0 // pred_fallthru
    _
  // Predicated region
  $region42: #{atoms_forward.2} parent=0 // pred_check
    _
  $region43: #{atoms_forward.2} parent=0 // pred_check_branch
    %41 = sbr.rel (0) target = $region45
  $region44: #{atoms_forward.2} parent=0 // pred_region
    _
  $region45: #{atoms_forward.2} parent=0 // pred_fallthru
    _
  // Predicated region
  $region46: #{atoms_forward.2} parent=0 // pred_check
    _
  $region47: #{atoms_forward.2} parent=0 // pred_check_branch
    %43 = sbr.rel (0) target = $region49
  $region48: #{atoms_forward.2} parent=0 // pred_region
    _
  $region49: #{atoms_forward.2} parent=0 // pred_fallthru
    _
  %v44 = vld [vmem:[%s0] sm:$0x3]
  %v45 = vld [vmem:[%s1] sm:$0xff]
  %v46 = vld [vmem:[%s1 + $0x8] sm:$0xff]
  %v47 = vld [vmem:[%s1 + $0x10] sm:$0xff]
  %v48 = vld [vmem:[%s1 + $0x18] sm:$0xff]
  %v49 = vld [vmem:[%s2] sm:$0x1]
  %v51 = vlaneseq
  %v52 = vshrl.u32 %v51, 7
  %v53 = vsub.s32 0, %v52
  %v54 = vrot.slane %v49, %v53
  %vm56 = vcmask 261120
  %v58 = vsel %vm56, %v44, 0
  %60 = vmatprep.subr.mxu0 0.0
  %61 = vmatpush1.msra.mxu0 %v45
  %62 = vmatprep.subr.mxu0 0.0
  %63 = vmatpush1.msra.mxu0 %v46
  %64 = vmatprep.subr.mxu0 0.0
  %65 = vmatpush1.msra.mxu0 %v47
  %66 = vmatprep.subr.mxu0 0.0
  %67 = vmatpush1.msra.mxu0 %v48
  %68 = vmatprep.subr.mxu0 0.0
  %69 = vmatpush1.msra.mxu0 0.0
  %70 = vmatprep.subr.mxu0 0.0
  %71 = vmatpush1.msra.mxu0 0.0
  %72 = vmatprep.subr.mxu0 0.0
  %73 = vmatpush1.msra.mxu0 0.0
  %74 = vmatprep.subr.mxu0 0.0
  %75 = vmatpush1.msra.mxu0 0.0
  %76 = vmatprep.subr.mxu0 0.0
  %77 = vmatpush1.msra.mxu0 0.0
  %78 = vmatprep.subr.mxu0 0.0
  %79 = vmatpush1.msra.mxu0 0.0
  %80 = vmatprep.subr.mxu0 0.0
  %81 = vmatpush1.msra.mxu0 0.0
  %82 = vmatprep.subr.mxu0 0.0
  %83 = vmatpush1.msra.mxu0 0.0
  %84 = vmatprep.subr.mxu0 0.0
  %85 = vmatpush1.msra.mxu0 0.0
  %86 = vmatprep.subr.mxu0 0.0
  %87 = vmatpush1.msra.mxu0 0.0
  %88 = vmatprep.subr.mxu0 0.0
  %89 = vmatpush1.msra.mxu0 0.0
  %90 = vmatprep.subr.mxu0 0.0
  %91 = vmatpush1.msra.mxu0 0.0
  %92 = vmatprep.subr.mxu0 0.0
  %93 = vmatpush1.msra.mxu0 0.0
  %94 = vmatprep.subr.mxu0 0.0
  %95 = vmatpush1.msra.mxu0 0.0
  %96 = vmatprep.subr.mxu0 0.0
  %97 = vmatpush1.msra.mxu0 0.0
  %98 = vmatprep.subr.mxu0 0.0
  %99 = vmatpush1.msra.mxu0 0.0
  %100 = vmatprep.subr.mxu0 0.0
  %101 = vmatpush1.msra.mxu0 0.0
  %102 = vmatprep.subr.mxu0 0.0
  %103 = vmatpush1.msra.mxu0 0.0
  %104 = vmatprep.subr.mxu0 0.0
  %105 = vmatpush1.msra.mxu0 0.0
  %106 = vmatprep.subr.mxu0 0.0
  %107 = vmatpush1.msra.mxu0 0.0
  %108 = vmatprep.subr.mxu0 0.0
  %109 = vmatpush1.msra.mxu0 0.0
  %110 = vmatprep.subr.mxu0 0.0
  %111 = vmatpush1.msra.mxu0 0.0
  %112 = vmatprep.subr.mxu0 0.0
  %113 = vmatpush1.msra.mxu0 0.0
  %114 = vmatprep.subr.mxu0 0.0
  %115 = vmatpush1.msra.mxu0 0.0
  %116 = vmatprep.subr.mxu0 0.0
  %117 = vmatpush1.msra.mxu0 0.0
  %118 = vmatprep.subr.mxu0 0.0
  %119 = vmatpush1.msra.mxu0 0.0
  %120 = vmatprep.subr.mxu0 0.0
  %121 = vmatpush1.msra.mxu0 0.0
  %122 = vmatprep.subr.mxu0 0.0
  %123 = vmatpush1.msra.mxu0 0.0
  %124 = vmatprep.mubr.f32.mxu0 0.0
  %125 = vmatmul.mubr.f32.gmra.mrb[0].mxu0 %v58
  %v126 = vpop.f32.mrb[0].mxu0
  %v127 = vadd.f32 %v54, %v126
  %v128 = vpop.f32.mrb[0].mxu0
  %129 = vdwg.mxu0
  %vm130 = vcmp.ge.f32.partialorder %v127, 0.0
  %v131 = vmul.f32 %v127, 0.2
  %v132 = vsel %vm130, %v127, %v131
  %s133 = scalar_lea.vmem %s1, 32
  %v134 = vld [vmem:[%s133] sm:$0xff]
  %v135 = vld [vmem:[%s133 + $0x8] sm:$0xff]
  %v136 = vld [vmem:[%s133 + $0x10] sm:$0xff]
  %v137 = vld [vmem:[%s133 + $0x18] sm:$0xff]
  %s138 = scalar_lea.vmem %s2, 1
  %v139 = vld [vmem:[%s138] sm:$0x1]
  %v141 = vlaneseq
  %v142 = vshrl.u32 %v141, 7
  %v143 = vsub.s32 0, %v142
  %v144 = vrot.slane %v139, %v143
  %v147 = vsel %vm56, %v132, 0
  %149 = vmatprep.subr.mxu0 0.0
  %150 = vmatpush1.msra.mxu0 %v134
  %151 = vmatprep.subr.mxu0 0.0
  %152 = vmatpush1.msra.mxu0 %v135
  %153 = vmatprep.subr.mxu0 0.0
  %154 = vmatpush1.msra.mxu0 %v136
  %155 = vmatprep.subr.mxu0 0.0
  %156 = vmatpush1.msra.mxu0 %v137
  %157 = vmatprep.subr.mxu0 0.0
  %158 = vmatpush1.msra.mxu0 0.0
  %159 = vmatprep.subr.mxu0 0.0
  %160 = vmatpush1.msra.mxu0 0.0
  %161 = vmatprep.subr.mxu0 0.0
  %162 = vmatpush1.msra.mxu0 0.0
  %163 = vmatprep.subr.mxu0 0.0
  %164 = vmatpush1.msra.mxu0 0.0
  %165 = vmatprep.subr.mxu0 0.0
  %166 = vmatpush1.msra.mxu0 0.0
  %167 = vmatprep.subr.mxu0 0.0
  %168 = vmatpush1.msra.mxu0 0.0
  %169 = vmatprep.subr.mxu0 0.0
  %170 = vmatpush1.msra.mxu0 0.0
  %171 = vmatprep.subr.mxu0 0.0
  %172 = vmatpush1.msra.mxu0 0.0
  %173 = vmatprep.subr.mxu0 0.0
  %174 = vmatpush1.msra.mxu0 0.0
  %175 = vmatprep.subr.mxu0 0.0
  %176 = vmatpush1.msra.mxu0 0.0
  %177 = vmatprep.subr.mxu0 0.0
  %178 = vmatpush1.msra.mxu0 0.0
  %179 = vmatprep.subr.mxu0 0.0
  %180 = vmatpush1.msra.mxu0 0.0
  %181 = vmatprep.subr.mxu0 0.0
  %182 = vmatpush1.msra.mxu0 0.0
  %183 = vmatprep.subr.mxu0 0.0
  %184 = vmatpush1.msra.mxu0 0.0
  %185 = vmatprep.subr.mxu0 0.0
  %186 = vmatpush1.msra.mxu0 0.0
  %187 = vmatprep.subr.mxu0 0.0
  %188 = vmatpush1.msra.mxu0 0.0
  %189 = vmatprep.subr.mxu0 0.0
  %190 = vmatpush1.msra.mxu0 0.0
  %191 = vmatprep.subr.mxu0 0.0
  %192 = vmatpush1.msra.mxu0 0.0
  %193 = vmatprep.subr.mxu0 0.0
  %194 = vmatpush1.msra.mxu0 0.0
  %195 = vmatprep.subr.mxu0 0.0
  %196 = vmatpush1.msra.mxu0 0.0
  %197 = vmatprep.subr.mxu0 0.0
  %198 = vmatpush1.msra.mxu0 0.0
  %199 = vmatprep.subr.mxu0 0.0
  %200 = vmatpush1.msra.mxu0 0.0
  %201 = vmatprep.subr.mxu0 0.0
  %202 = vmatpush1.msra.mxu0 0.0
  %203 = vmatprep.subr.mxu0 0.0
  %204 = vmatpush1.msra.mxu0 0.0
  %205 = vmatprep.subr.mxu0 0.0
  %206 = vmatpush1.msra.mxu0 0.0
  %207 = vmatprep.subr.mxu0 0.0
  %208 = vmatpush1.msra.mxu0 0.0
  %209 = vmatprep.subr.mxu0 0.0
  %210 = vmatpush1.msra.mxu0 0.0
  %211 = vmatprep.subr.mxu0 0.0
  %212 = vmatpush1.msra.mxu0 0.0
  %213 = vmatprep.mubr.f32.mxu0 0.0
  %214 = vmatmul.mubr.f32.gmra.mrb[0].mxu0 %v147
  %v215 = vpop.f32.mrb[0].mxu0
  %v216 = vadd.f32 %v144, %v215
  %v217 = vpop.f32.mrb[0].mxu0
  %218 = vdwg.mxu0
  %vm219 = vcmp.ge.f32.partialorder %v216, 0.0
  %v220 = vmul.f32 %v216, 0.2
  %v221 = vsel %vm219, %v216, %v220
  %v222 = vld [vmem:[%s3] sm:$0xff]
  %v223 = vld [vmem:[%s3 + $0x8] sm:$0xff]
  %v224 = vld [vmem:[%s3 + $0x10] sm:$0xff]
  %v225 = vld [vmem:[%s3 + $0x18] sm:$0xff]
  %v226 = vld [vmem:[%s4] sm:$0x1]
  %v228 = vlaneseq
  %v229 = vshrl.u32 %v228, 7
  %v230 = vsub.s32 0, %v229
  %v231 = vrot.slane %v226, %v230
  %v234 = vsel %vm56, %v221, 0
  %236 = vmatprep.subr.mxu0 0.0
  %237 = vmatpush1.msra.mxu0 %v222
  %238 = vmatprep.subr.mxu0 0.0
  %239 = vmatpush1.msra.mxu0 %v223
  %240 = vmatprep.subr.mxu0 0.0
  %241 = vmatpush1.msra.mxu0 %v224
  %242 = vmatprep.subr.mxu0 0.0
  %243 = vmatpush1.msra.mxu0 %v225
  %244 = vmatprep.subr.mxu0 0.0
  %245 = vmatpush1.msra.mxu0 0.0
  %246 = vmatprep.subr.mxu0 0.0
  %247 = vmatpush1.msra.mxu0 0.0
  %248 = vmatprep.subr.mxu0 0.0
  %249 = vmatpush1.msra.mxu0 0.0
  %250 = vmatprep.subr.mxu0 0.0
  %251 = vmatpush1.msra.mxu0 0.0
  %252 = vmatprep.subr.mxu0 0.0
  %253 = vmatpush1.msra.mxu0 0.0
  %254 = vmatprep.subr.mxu0 0.0
  %255 = vmatpush1.msra.mxu0 0.0
  %256 = vmatprep.subr.mxu0 0.0
  %257 = vmatpush1.msra.mxu0 0.0
  %258 = vmatprep.subr.mxu0 0.0
  %259 = vmatpush1.msra.mxu0 0.0
  %260 = vmatprep.subr.mxu0 0.0
  %261 = vmatpush1.msra.mxu0 0.0
  %262 = vmatprep.subr.mxu0 0.0
  %263 = vmatpush1.msra.mxu0 0.0
  %264 = vmatprep.subr.mxu0 0.0
  %265 = vmatpush1.msra.mxu0 0.0
  %266 = vmatprep.subr.mxu0 0.0
  %267 = vmatpush1.msra.mxu0 0.0
  %268 = vmatprep.subr.mxu0 0.0
  %269 = vmatpush1.msra.mxu0 0.0
  %270 = vmatprep.subr.mxu0 0.0
  %271 = vmatpush1.msra.mxu0 0.0
  %272 = vmatprep.subr.mxu0 0.0
  %273 = vmatpush1.msra.mxu0 0.0
  %274 = vmatprep.subr.mxu0 0.0
  %275 = vmatpush1.msra.mxu0 0.0
  %276 = vmatprep.subr.mxu0 0.0
  %277 = vmatpush1.msra.mxu0 0.0
  %278 = vmatprep.subr.mxu0 0.0
  %279 = vmatpush1.msra.mxu0 0.0
  %280 = vmatprep.subr.mxu0 0.0
  %281 = vmatpush1.msra.mxu0 0.0
  %282 = vmatprep.subr.mxu0 0.0
  %283 = vmatpush1.msra.mxu0 0.0
  %284 = vmatprep.subr.mxu0 0.0
  %285 = vmatpush1.msra.mxu0 0.0
  %286 = vmatprep.subr.mxu0 0.0
  %287 = vmatpush1.msra.mxu0 0.0
  %288 = vmatprep.subr.mxu0 0.0
  %289 = vmatpush1.msra.mxu0 0.0
  %290 = vmatprep.subr.mxu0 0.0
  %291 = vmatpush1.msra.mxu0 0.0
  %292 = vmatprep.subr.mxu0 0.0
  %293 = vmatpush1.msra.mxu0 0.0
  %294 = vmatprep.subr.mxu0 0.0
  %295 = vmatpush1.msra.mxu0 0.0
  %296 = vmatprep.subr.mxu0 0.0
  %297 = vmatpush1.msra.mxu0 0.0
  %298 = vmatprep.subr.mxu0 0.0
  %299 = vmatpush1.msra.mxu0 0.0
  %300 = vmatprep.mubr.f32.mxu0 0.0
  %301 = vmatmul.mubr.f32.gmra.mrb[0].mxu0 %v234
  %v302 = vpop.f32.mrb[0].mxu0
  %v303 = vadd.f32 %v231, %v302
  %v304 = vpop.f32.mrb[0].mxu0
  %305 = vdwg.mxu0
  %v306 = vlaneseq
  %v307 = vand.u32 %v306, 127
  %vm308 = vcmask 123904
  %v309 = vsel %vm308, %v303, -inf
  %310 = vmax.xlane.f32.xlu0 %v309
  %v311 = vpop.xlane.xlu0 %310
  %vm312 = vcmp.ge.f32.partialorder %v303, %v311
  %v313 = vsel %vm312, %v307, 16
  %v314 = vsel %vm308, %v313, 2147483647
  %v315 = vand.u32 %v314, 65535
  %v316 = vshra.s32 %v314, 16
  %v317 = vcvt.s32.f32 %v315
  %v318 = vcvt.s32.f32 %v316
  %319 = vmin.xlane.f32.xlu0 %v318
  %v320 = vpop.xlane.xlu0 %319
  %vm321 = vcmp.eq.f32.partialorder %v318, %v320
  %v322 = vsel %vm321, %v317, inf
  %323 = vmin.xlane.f32.xlu0 %v322
  %v324 = vpop.xlane.xlu0 %323
  %v325 = vcvt.f32.s32 %v324
  %v326 = vcvt.f32.s32 %v320
  %v327 = vshll.u32 %v326, 16
  %v328 = vadd.s32 %v327, %v325
  %vm329 = vcmp.eq.s32.totalorder %v307, %v328
  %v330 = vsel %vm329, 1, 0
  %v331 = vcvt.s32.f32 %v330
  %v332 = vld [vmem:[%s11] sm:$0x1]
  %v334 = vlaneseq
  %v335 = vshrl.u32 %v334, 7
  %v336 = vsub.s32 0, %v335
  %v337 = vrot.slane %v332, %v336
  %v339 = vmul.f32 %v331, %v337
  %v340 = vsel %vm308, %v339, 0.0
  %341 = vadd.xlane.f32.xlu0 %v340
  %v342 = vpop.xlane.xlu0 %341
  %vm343 = vcmask 1024
  %344 = vst.msk [vmem:[%s12] sm:$0x3] %vm343, %v342
  %v345 = vld [vmem:[%s5] sm:$0xff]
  %v346 = vld [vmem:[%s5 + $0x8] sm:$0xff]
  %v347 = vld [vmem:[%s5 + $0x10] sm:$0xff]
  %v348 = vld [vmem:[%s5 + $0x18] sm:$0xff]
  %v349 = vld [vmem:[%s6] sm:$0x1]
  %v351 = vlaneseq
  %v352 = vshrl.u32 %v351, 7
  %v353 = vsub.s32 0, %v352
  %v354 = vrot.slane %v349, %v353
  %356 = vmatprep.subr.mxu0 0.0
  %357 = vmatpush1.msra.mxu0 %v345
  %358 = vmatprep.subr.mxu0 0.0
  %359 = vmatpush1.msra.mxu0 %v346
  %360 = vmatprep.subr.mxu0 0.0
  %361 = vmatpush1.msra.mxu0 %v347
  %362 = vmatprep.subr.mxu0 0.0
  %363 = vmatpush1.msra.mxu0 %v348
  %364 = vmatprep.subr.mxu0 0.0
  %365 = vmatpush1.msra.mxu0 0.0
  %366 = vmatprep.subr.mxu0 0.0
  %367 = vmatpush1.msra.mxu0 0.0
  %368 = vmatprep.subr.mxu0 0.0
  %369 = vmatpush1.msra.mxu0 0.0
  %370 = vmatprep.subr.mxu0 0.0
  %371 = vmatpush1.msra.mxu0 0.0
  %372 = vmatprep.subr.mxu0 0.0
  %373 = vmatpush1.msra.mxu0 0.0
  %374 = vmatprep.subr.mxu0 0.0
  %375 = vmatpush1.msra.mxu0 0.0
  %376 = vmatprep.subr.mxu0 0.0
  %377 = vmatpush1.msra.mxu0 0.0
  %378 = vmatprep.subr.mxu0 0.0
  %379 = vmatpush1.msra.mxu0 0.0
  %380 = vmatprep.subr.mxu0 0.0
  %381 = vmatpush1.msra.mxu0 0.0
  %382 = vmatprep.subr.mxu0 0.0
  %383 = vmatpush1.msra.mxu0 0.0
  %384 = vmatprep.subr.mxu0 0.0
  %385 = vmatpush1.msra.mxu0 0.0
  %386 = vmatprep.subr.mxu0 0.0
  %387 = vmatpush1.msra.mxu0 0.0
  %388 = vmatprep.subr.mxu0 0.0
  %389 = vmatpush1.msra.mxu0 0.0
  %390 = vmatprep.subr.mxu0 0.0
  %391 = vmatpush1.msra.mxu0 0.0
  %392 = vmatprep.subr.mxu0 0.0
  %393 = vmatpush1.msra.mxu0 0.0
  %394 = vmatprep.subr.mxu0 0.0
  %395 = vmatpush1.msra.mxu0 0.0
  %396 = vmatprep.subr.mxu0 0.0
  %397 = vmatpush1.msra.mxu0 0.0
  %398 = vmatprep.subr.mxu0 0.0
  %399 = vmatpush1.msra.mxu0 0.0
  %400 = vmatprep.subr.mxu0 0.0
  %401 = vmatpush1.msra.mxu0 0.0
  %402 = vmatprep.subr.mxu0 0.0
  %403 = vmatpush1.msra.mxu0 0.0
  %404 = vmatprep.subr.mxu0 0.0
  %405 = vmatpush1.msra.mxu0 0.0
  %406 = vmatprep.subr.mxu0 0.0
  %407 = vmatpush1.msra.mxu0 0.0
  %408 = vmatprep.subr.mxu0 0.0
  %409 = vmatpush1.msra.mxu0 0.0
  %410 = vmatprep.subr.mxu0 0.0
  %411 = vmatpush1.msra.mxu0 0.0
  %412 = vmatprep.subr.mxu0 0.0
  %413 = vmatpush1.msra.mxu0 0.0
  %414 = vmatprep.subr.mxu0 0.0
  %415 = vmatpush1.msra.mxu0 0.0
  %416 = vmatprep.subr.mxu0 0.0
  %417 = vmatpush1.msra.mxu0 0.0
  %418 = vmatprep.subr.mxu0 0.0
  %419 = vmatpush1.msra.mxu0 0.0
  %420 = vmatprep.mubr.f32.mxu0 0.0
  %421 = vmatmul.mubr.f32.gmra.mrb[0].mxu0 %v58
  %v422 = vpop.f32.mrb[0].mxu0
  %v423 = vadd.f32 %v354, %v422
  %v424 = vpop.f32.mrb[0].mxu0
  %425 = vdwg.mxu0
  %vm426 = vcmp.ge.f32.partialorder %v423, 0.0
  %v427 = vmul.f32 %v423, 0.2
  %v428 = vsel %vm426, %v423, %v427
  %s429 = scalar_lea.vmem %s5, 32
  %v430 = vld [vmem:[%s429] sm:$0xff]
  %v431 = vld [vmem:[%s429 + $0x8] sm:$0xff]
  %v432 = vld [vmem:[%s429 + $0x10] sm:$0xff]
  %v433 = vld [vmem:[%s429 + $0x18] sm:$0xff]
  %s434 = scalar_lea.vmem %s6, 1
  %v435 = vld [vmem:[%s434] sm:$0x1]
  %v437 = vlaneseq
  %v438 = vshrl.u32 %v437, 7
  %v439 = vsub.s32 0, %v438
  %v440 = vrot.slane %v435, %v439
  %v443 = vsel %vm56, %v428, 0
  %445 = vmatprep.subr.mxu0 0.0
  %446 = vmatpush1.msra.mxu0 %v430
  %447 = vmatprep.subr.mxu0 0.0
  %448 = vmatpush1.msra.mxu0 %v431
  %449 = vmatprep.subr.mxu0 0.0
  %450 = vmatpush1.msra.mxu0 %v432
  %451 = vmatprep.subr.mxu0 0.0
  %452 = vmatpush1.msra.mxu0 %v433
  %453 = vmatprep.subr.mxu0 0.0
  %454 = vmatpush1.msra.mxu0 0.0
  %455 = vmatprep.subr.mxu0 0.0
  %456 = vmatpush1.msra.mxu0 0.0
  %457 = vmatprep.subr.mxu0 0.0
  %458 = vmatpush1.msra.mxu0 0.0
  %459 = vmatprep.subr.mxu0 0.0
  %460 = vmatpush1.msra.mxu0 0.0
  %461 = vmatprep.subr.mxu0 0.0
  %462 = vmatpush1.msra.mxu0 0.0
  %463 = vmatprep.subr.mxu0 0.0
  %464 = vmatpush1.msra.mxu0 0.0
  %465 = vmatprep.subr.mxu0 0.0
  %466 = vmatpush1.msra.mxu0 0.0
  %467 = vmatprep.subr.mxu0 0.0
  %468 = vmatpush1.msra.mxu0 0.0
  %469 = vmatprep.subr.mxu0 0.0
  %470 = vmatpush1.msra.mxu0 0.0
  %471 = vmatprep.subr.mxu0 0.0
  %472 = vmatpush1.msra.mxu0 0.0
  %473 = vmatprep.subr.mxu0 0.0
  %474 = vmatpush1.msra.mxu0 0.0
  %475 = vmatprep.subr.mxu0 0.0
  %476 = vmatpush1.msra.mxu0 0.0
  %477 = vmatprep.subr.mxu0 0.0
  %478 = vmatpush1.msra.mxu0 0.0
  %479 = vmatprep.subr.mxu0 0.0
  %480 = vmatpush1.msra.mxu0 0.0
  %481 = vmatprep.subr.mxu0 0.0
  %482 = vmatpush1.msra.mxu0 0.0
  %483 = vmatprep.subr.mxu0 0.0
  %484 = vmatpush1.msra.mxu0 0.0
  %485 = vmatprep.subr.mxu0 0.0
  %486 = vmatpush1.msra.mxu0 0.0
  %487 = vmatprep.subr.mxu0 0.0
  %488 = vmatpush1.msra.mxu0 0.0
  %489 = vmatprep.subr.mxu0 0.0
  %490 = vmatpush1.msra.mxu0 0.0
  %491 = vmatprep.subr.mxu0 0.0
  %492 = vmatpush1.msra.mxu0 0.0
  %493 = vmatprep.subr.mxu0 0.0
  %494 = vmatpush1.msra.mxu0 0.0
  %495 = vmatprep.subr.mxu0 0.0
  %496 = vmatpush1.msra.mxu0 0.0
  %497 = vmatprep.subr.mxu0 0.0
  %498 = vmatpush1.msra.mxu0 0.0
  %499 = vmatprep.subr.mxu0 0.0
  %500 = vmatpush1.msra.mxu0 0.0
  %501 = vmatprep.subr.mxu0 0.0
  %502 = vmatpush1.msra.mxu0 0.0
  %503 = vmatprep.subr.mxu0 0.0
  %504 = vmatpush1.msra.mxu0 0.0
  %505 = vmatprep.subr.mxu0 0.0
  %506 = vmatpush1.msra.mxu0 0.0
  %507 = vmatprep.subr.mxu0 0.0
  %508 = vmatpush1.msra.mxu0 0.0
  %509 = vmatprep.mubr.f32.mxu0 0.0
  %510 = vmatmul.mubr.f32.gmra.mrb[0].mxu0 %v443
  %v511 = vpop.f32.mrb[0].mxu0
  %v512 = vadd.f32 %v440, %v511
  %v513 = vpop.f32.mrb[0].mxu0
  %514 = vdwg.mxu0
  %vm515 = vcmp.ge.f32.partialorder %v512, 0.0
  %v516 = vmul.f32 %v512, 0.2
  %v517 = vsel %vm515, %v512, %v516
  %v518 = vld [vmem:[%s7] sm:$0xff]
  %v519 = vld [vmem:[%s7 + $0x8] sm:$0xff]
  %v520 = vld [vmem:[%s7 + $0x10] sm:$0xff]
  %v521 = vld [vmem:[%s7 + $0x18] sm:$0xff]
  %v522 = vld [vmem:[%s8] sm:$0x1]
  %v524 = vlaneseq
  %v525 = vshrl.u32 %v524, 7
  %v526 = vsub.s32 0, %v525
  %v527 = vrot.slane %v522, %v526
  %v530 = vsel %vm56, %v517, 0
  %532 = vmatprep.subr.mxu0 0.0
  %533 = vmatpush1.msra.mxu0 %v518
  %534 = vmatprep.subr.mxu0 0.0
  %535 = vmatpush1.msra.mxu0 %v519
  %536 = vmatprep.subr.mxu0 0.0
  %537 = vmatpush1.msra.mxu0 %v520
  %538 = vmatprep.subr.mxu0 0.0
  %539 = vmatpush1.msra.mxu0 %v521
  %540 = vmatprep.subr.mxu0 0.0
  %541 = vmatpush1.msra.mxu0 0.0
  %542 = vmatprep.subr.mxu0 0.0
  %543 = vmatpush1.msra.mxu0 0.0
  %544 = vmatprep.subr.mxu0 0.0
  %545 = vmatpush1.msra.mxu0 0.0
  %546 = vmatprep.subr.mxu0 0.0
  %547 = vmatpush1.msra.mxu0 0.0
  %548 = vmatprep.subr.mxu0 0.0
  %549 = vmatpush1.msra.mxu0 0.0
  %550 = vmatprep.subr.mxu0 0.0
  %551 = vmatpush1.msra.mxu0 0.0
  %552 = vmatprep.subr.mxu0 0.0
  %553 = vmatpush1.msra.mxu0 0.0
  %554 = vmatprep.subr.mxu0 0.0
  %555 = vmatpush1.msra.mxu0 0.0
  %556 = vmatprep.subr.mxu0 0.0
  %557 = vmatpush1.msra.mxu0 0.0
  %558 = vmatprep.subr.mxu0 0.0
  %559 = vmatpush1.msra.mxu0 0.0
  %560 = vmatprep.subr.mxu0 0.0
  %561 = vmatpush1.msra.mxu0 0.0
  %562 = vmatprep.subr.mxu0 0.0
  %563 = vmatpush1.msra.mxu0 0.0
  %564 = vmatprep.subr.mxu0 0.0
  %565 = vmatpush1.msra.mxu0 0.0
  %566 = vmatprep.subr.mxu0 0.0
  %567 = vmatpush1.msra.mxu0 0.0
  %568 = vmatprep.subr.mxu0 0.0
  %569 = vmatpush1.msra.mxu0 0.0
  %570 = vmatprep.subr.mxu0 0.0
  %571 = vmatpush1.msra.mxu0 0.0
  %572 = vmatprep.subr.mxu0 0.0
  %573 = vmatpush1.msra.mxu0 0.0
  %574 = vmatprep.subr.mxu0 0.0
  %575 = vmatpush1.msra.mxu0 0.0
  %576 = vmatprep.subr.mxu0 0.0
  %577 = vmatpush1.msra.mxu0 0.0
  %578 = vmatprep.subr.mxu0 0.0
  %579 = vmatpush1.msra.mxu0 0.0
  %580 = vmatprep.subr.mxu0 0.0
  %581 = vmatpush1.msra.mxu0 0.0
  %582 = vmatprep.subr.mxu0 0.0
  %583 = vmatpush1.msra.mxu0 0.0
  %584 = vmatprep.subr.mxu0 0.0
  %585 = vmatpush1.msra.mxu0 0.0
  %586 = vmatprep.subr.mxu0 0.0
  %587 = vmatpush1.msra.mxu0 0.0
  %588 = vmatprep.subr.mxu0 0.0
  %589 = vmatpush1.msra.mxu0 0.0
  %590 = vmatprep.subr.mxu0 0.0
  %591 = vmatpush1.msra.mxu0 0.0
  %592 = vmatprep.subr.mxu0 0.0
  %593 = vmatpush1.msra.mxu0 0.0
  %594 = vmatprep.subr.mxu0 0.0
  %595 = vmatpush1.msra.mxu0 0.0
  %596 = vmatprep.mubr.f32.mxu0 0.0
  %597 = vmatmul.mubr.f32.gmra.mrb[0].mxu0 %v530
  %v598 = vpop.f32.mrb[0].mxu0
  %v599 = vadd.f32 %v527, %v598
  %v600 = vpop.f32.mrb[0].mxu0
  %601 = vdwg.mxu0
  %602 = vst.msk [vmem:[%s13] sm:$0x3] %vm308, %v599
  %v603 = vld [vmem:[%s9] sm:$0xff]
  %v604 = vld [vmem:[%s9 + $0x8] sm:$0xff]
  %v605 = vld [vmem:[%s9 + $0x10] sm:$0xff]
  %v606 = vld [vmem:[%s9 + $0x18] sm:$0xff]
  %v607 = vld [vmem:[%s9 + $0x20] sm:$0xff]
  %v608 = vld [vmem:[%s9 + $0x28] sm:$0xff]
  %v609 = vld [vmem:[%s9 + $0x30] sm:$0xff]
  %v610 = vld [vmem:[%s9 + $0x38] sm:$0xff]
  %v611 = vld [vmem:[%s9 + $0x40] sm:$0xff]
  %v612 = vld [vmem:[%s9 + $0x48] sm:$0xff]
  %v613 = vld [vmem:[%s9 + $0x50] sm:$0xff]
  %v614 = vld [vmem:[%s9 + $0x58] sm:$0xff]
  %v615 = vld [vmem:[%s9 + $0x60] sm:$0xff]
  %v616 = vld [vmem:[%s9 + $0x68] sm:$0xff]
  %v617 = vld [vmem:[%s9 + $0x70] sm:$0xff]
  %v618 = vld [vmem:[%s9 + $0x78] sm:$0xff]
  %v619 = vld [vmem:[%s9 + $0x80] sm:$0xff]
  %v620 = vld [vmem:[%s9 + $0x88] sm:$0xff]
  %v621 = vld [vmem:[%s9 + $0x90] sm:$0xff]
  %v622 = vld [vmem:[%s9 + $0x98] sm:$0xff]
  %v623 = vld [vmem:[%s9 + $0xa0] sm:$0xff]
  %v624 = vld [vmem:[%s9 + $0xa8] sm:$0xff]
  %v625 = vld [vmem:[%s9 + $0xb0] sm:$0xff]
  %v626 = vld [vmem:[%s9 + $0xb8] sm:$0xff]
  %v627 = vld [vmem:[%s9 + $0xc0] sm:$0xff]
  %v628 = vld [vmem:[%s9 + $0xc8] sm:$0xff]
  %v629 = vld [vmem:[%s9 + $0xd0] sm:$0xff]
  %v630 = vld [vmem:[%s9 + $0xd8] sm:$0xff]
  %v631 = vld [vmem:[%s9 + $0xe0] sm:$0xff]
  %v632 = vld [vmem:[%s9 + $0xe8] sm:$0xff]
  %v633 = vld [vmem:[%s9 + $0xf0] sm:$0xff]
  %v634 = vld [vmem:[%s9 + $0xf8] sm:$0xff]
  %v635 = vld [vmem:[%s10] sm:$0xff]
  %v637 = vlaneseq
  %v638 = vshrl.u32 %v637, 7
  %v639 = vsub.s32 0, %v638
  %v640 = vrot.slane %v635, %v639
  %v641 = vlaneseq
  %v642 = vshrl.u32 %v641, 7
  %v643 = vsub.s32 1, %v642
  %v644 = vrot.slane %v635, %v643
  %v645 = vlaneseq
  %v646 = vshrl.u32 %v645, 7
  %v647 = vsub.s32 2, %v646
  %v648 = vrot.slane %v635, %v647
  %v649 = vlaneseq
  %v650 = vshrl.u32 %v649, 7
  %v651 = vsub.s32 3, %v650
  %v652 = vrot.slane %v635, %v651
  %v653 = vlaneseq
  %v654 = vshrl.u32 %v653, 7
  %v655 = vsub.s32 4, %v654
  %v656 = vrot.slane %v635, %v655
  %v657 = vlaneseq
  %v658 = vshrl.u32 %v657, 7
  %v659 = vsub.s32 5, %v658
  %v660 = vrot.slane %v635, %v659
  %v661 = vlaneseq
  %v662 = vshrl.u32 %v661, 7
  %v663 = vsub.s32 6, %v662
  %v664 = vrot.slane %v635, %v663
  %v665 = vlaneseq
  %v666 = vshrl.u32 %v665, 7
  %v667 = vsub.s32 7, %v666
  %v668 = vrot.slane %v635, %v667
  %677 = vmatprep.subr.mxu0 %v604
  %678 = vmatpush1.msra.mxu0 %v603
  %679 = vmatprep.subr.mxu0 %v612
  %680 = vmatpush1.msra.mxu0 %v611
  %681 = vmatprep.subr.mxu0 %v620
  %682 = vmatpush1.msra.mxu0 %v619
  %683 = vmatprep.subr.mxu0 %v628
  %684 = vmatpush1.msra.mxu0 %v627
  %685 = vmatprep.subr.mxu0 0.0
  %686 = vmatpush1.msra.mxu0 0.0
  %687 = vmatprep.subr.mxu0 0.0
  %688 = vmatpush1.msra.mxu0 0.0
  %689 = vmatprep.subr.mxu0 0.0
  %690 = vmatpush1.msra.mxu0 0.0
  %691 = vmatprep.subr.mxu0 0.0
  %692 = vmatpush1.msra.mxu0 0.0
  %693 = vmatprep.subr.mxu0 0.0
  %694 = vmatpush1.msra.mxu0 0.0
  %695 = vmatprep.subr.mxu0 0.0
  %696 = vmatpush1.msra.mxu0 0.0
  %697 = vmatprep.subr.mxu0 0.0
  %698 = vmatpush1.msra.mxu0 0.0
  %699 = vmatprep.subr.mxu0 0.0
  %700 = vmatpush1.msra.mxu0 0.0
  %701 = vmatprep.subr.mxu0 0.0
  %702 = vmatpush1.msra.mxu0 0.0
  %703 = vmatprep.subr.mxu0 0.0
  %704 = vmatpush1.msra.mxu0 0.0
  %705 = vmatprep.subr.mxu0 0.0
  %706 = vmatpush1.msra.mxu0 0.0
  %707 = vmatprep.subr.mxu0 0.0
  %708 = vmatpush1.msra.mxu0 0.0
  %709 = vmatprep.subr.mxu0 0.0
  %710 = vmatpush1.msra.mxu0 0.0
  %711 = vmatprep.subr.mxu0 0.0
  %712 = vmatpush1.msra.mxu0 0.0
  %713 = vmatprep.subr.mxu0 0.0
  %714 = vmatpush1.msra.mxu0 0.0
  %715 = vmatprep.subr.mxu0 0.0
  %716 = vmatpush1.msra.mxu0 0.0
  %717 = vmatprep.subr.mxu0 0.0
  %718 = vmatpush1.msra.mxu0 0.0
  %719 = vmatprep.subr.mxu0 0.0
  %720 = vmatpush1.msra.mxu0 0.0
  %721 = vmatprep.subr.mxu0 0.0
  %722 = vmatpush1.msra.mxu0 0.0
  %723 = vmatprep.subr.mxu0 0.0
  %724 = vmatpush1.msra.mxu0 0.0
  %725 = vmatprep.subr.mxu0 0.0
  %726 = vmatpush1.msra.mxu0 0.0
  %727 = vmatprep.subr.mxu0 0.0
  %728 = vmatpush1.msra.mxu0 0.0
  %729 = vmatprep.subr.mxu0 0.0
  %730 = vmatpush1.msra.mxu0 0.0
  %731 = vmatprep.subr.mxu0 0.0
  %732 = vmatpush1.msra.mxu0 0.0
  %733 = vmatprep.subr.mxu0 0.0
  %734 = vmatpush1.msra.mxu0 0.0
  %735 = vmatprep.subr.mxu0 0.0
  %736 = vmatpush1.msra.mxu0 0.0
  %737 = vmatprep.subr.mxu0 0.0
  %738 = vmatpush1.msra.mxu0 0.0
  %739 = vmatprep.subr.mxu0 0.0
  %740 = vmatpush1.msra.mxu0 0.0
  %741 = vmatprep.mubr.f32.mxu0 0.0
  %742 = vmatmul.mubr.f32.gmra.mrb[0].mxu0 %v58
  %v743 = vpop.f32.mrb[0].mxu0
  %v744 = vadd.f32 %v640, %v743
  %v745 = vpop.f32.mrb[0].mxu0
  %v746 = vadd.f32 %v644, %v745
  %747 = vdwg.mxu0
  %748 = vmatprep.subr.mxu0 %v606
  %749 = vmatpush1.msra.mxu0 %v605
  %750 = vmatprep.subr.mxu0 %v614
  %751 = vmatpush1.msra.mxu0 %v613
  %752 = vmatprep.subr.mxu0 %v622
  %753 = vmatpush1.msra.mxu0 %v621
  %754 = vmatprep.subr.mxu0 %v630
  %755 = vmatpush1.msra.mxu0 %v629
  %756 = vmatprep.subr.mxu0 0.0
  %757 = vmatpush1.msra.mxu0 0.0
  %758 = vmatprep.subr.mxu0 0.0
  %759 = vmatpush1.msra.mxu0 0.0
  %760 = vmatprep.subr.mxu0 0.0
  %761 = vmatpush1.msra.mxu0 0.0
  %762 = vmatprep.subr.mxu0 0.0
  %763 = vmatpush1.msra.mxu0 0.0
  %764 = vmatprep.subr.mxu0 0.0
  %765 = vmatpush1.msra.mxu0 0.0
  %766 = vmatprep.subr.mxu0 0.0
  %767 = vmatpush1.msra.mxu0 0.0
  %768 = vmatprep.subr.mxu0 0.0
  %769 = vmatpush1.msra.mxu0 0.0
  %770 = vmatprep.subr.mxu0 0.0
  %771 = vmatpush1.msra.mxu0 0.0
  %772 = vmatprep.subr.mxu0 0.0
  %773 = vmatpush1.msra.mxu0 0.0
  %774 = vmatprep.subr.mxu0 0.0
  %775 = vmatpush1.msra.mxu0 0.0
  %776 = vmatprep.subr.mxu0 0.0
  %777 = vmatpush1.msra.mxu0 0.0
  %778 = vmatprep.subr.mxu0 0.0
  %779 = vmatpush1.msra.mxu0 0.0
  %780 = vmatprep.subr.mxu0 0.0
  %781 = vmatpush1.msra.mxu0 0.0
  %782 = vmatprep.subr.mxu0 0.0
  %783 = vmatpush1.msra.mxu0 0.0
  %784 = vmatprep.subr.mxu0 0.0
  %785 = vmatpush1.msra.mxu0 0.0
  %786 = vmatprep.subr.mxu0 0.0
  %787 = vmatpush1.msra.mxu0 0.0
  %788 = vmatprep.subr.mxu0 0.0
  %789 = vmatpush1.msra.mxu0 0.0
  %790 = vmatprep.subr.mxu0 0.0
  %791 = vmatpush1.msra.mxu0 0.0
  %792 = vmatprep.subr.mxu0 0.0
  %793 = vmatpush1.msra.mxu0 0.0
  %794 = vmatprep.subr.mxu0 0.0
  %795 = vmatpush1.msra.mxu0 0.0
  %796 = vmatprep.subr.mxu0 0.0
  %797 = vmatpush1.msra.mxu0 0.0
  %798 = vmatprep.subr.mxu0 0.0
  %799 = vmatpush1.msra.mxu0 0.0
  %800 = vmatprep.subr.mxu0 0.0
  %801 = vmatpush1.msra.mxu0 0.0
  %802 = vmatprep.subr.mxu0 0.0
  %803 = vmatpush1.msra.mxu0 0.0
  %804 = vmatprep.subr.mxu0 0.0
  %805 = vmatpush1.msra.mxu0 0.0
  %806 = vmatprep.subr.mxu0 0.0
  %807 = vmatpush1.msra.mxu0 0.0
  %808 = vmatprep.subr.mxu0 0.0
  %809 = vmatpush1.msra.mxu0 0.0
  %810 = vmatprep.subr.mxu0 0.0
  %811 = vmatpush1.msra.mxu0 0.0
  %812 = vmatprep.mubr.f32.mxu0 0.0
  %813 = vmatmul.mubr.f32.gmra.mrb[0].mxu0 %v58
  %v814 = vpop.f32.mrb[0].mxu0
  %v815 = vadd.f32 %v648, %v814
  %v816 = vpop.f32.mrb[0].mxu0
  %v817 = vadd.f32 %v652, %v816
  %818 = vdwg.mxu0
  %819 = vmatprep.subr.mxu0 %v608
  %820 = vmatpush1.msra.mxu0 %v607
  %821 = vmatprep.subr.mxu0 %v616
  %822 = vmatpush1.msra.mxu0 %v615
  %823 = vmatprep.subr.mxu0 %v624
  %824 = vmatpush1.msra.mxu0 %v623
  %825 = vmatprep.subr.mxu0 %v632
  %826 = vmatpush1.msra.mxu0 %v631
  %827 = vmatprep.subr.mxu0 0.0
  %828 = vmatpush1.msra.mxu0 0.0
  %829 = vmatprep.subr.mxu0 0.0
  %830 = vmatpush1.msra.mxu0 0.0
  %831 = vmatprep.subr.mxu0 0.0
  %832 = vmatpush1.msra.mxu0 0.0
  %833 = vmatprep.subr.mxu0 0.0
  %834 = vmatpush1.msra.mxu0 0.0
  %835 = vmatprep.subr.mxu0 0.0
  %836 = vmatpush1.msra.mxu0 0.0
  %837 = vmatprep.subr.mxu0 0.0
  %838 = vmatpush1.msra.mxu0 0.0
  %839 = vmatprep.subr.mxu0 0.0
  %840 = vmatpush1.msra.mxu0 0.0
  %841 = vmatprep.subr.mxu0 0.0
  %842 = vmatpush1.msra.mxu0 0.0
  %843 = vmatprep.subr.mxu0 0.0
  %844 = vmatpush1.msra.mxu0 0.0
  %845 = vmatprep.subr.mxu0 0.0
  %846 = vmatpush1.msra.mxu0 0.0
  %847 = vmatprep.subr.mxu0 0.0
  %848 = vmatpush1.msra.mxu0 0.0
  %849 = vmatprep.subr.mxu0 0.0
  %850 = vmatpush1.msra.mxu0 0.0
  %851 = vmatprep.subr.mxu0 0.0
  %852 = vmatpush1.msra.mxu0 0.0
  %853 = vmatprep.subr.mxu0 0.0
  %854 = vmatpush1.msra.mxu0 0.0
  %855 = vmatprep.subr.mxu0 0.0
  %856 = vmatpush1.msra.mxu0 0.0
  %857 = vmatprep.subr.mxu0 0.0
  %858 = vmatpush1.msra.mxu0 0.0
  %859 = vmatprep.subr.mxu0 0.0
  %860 = vmatpush1.msra.mxu0 0.0
  %861 = vmatprep.subr.mxu0 0.0
  %862 = vmatpush1.msra.mxu0 0.0
  %863 = vmatprep.subr.mxu0 0.0
  %864 = vmatpush1.msra.mxu0 0.0
  %865 = vmatprep.subr.mxu0 0.0
  %866 = vmatpush1.msra.mxu0 0.0
  %867 = vmatprep.subr.mxu0 0.0
  %868 = vmatpush1.msra.mxu0 0.0
  %869 = vmatprep.subr.mxu0 0.0
  %870 = vmatpush1.msra.mxu0 0.0
  %871 = vmatprep.subr.mxu0 0.0
  %872 = vmatpush1.msra.mxu0 0.0
  %873 = vmatprep.subr.mxu0 0.0
  %874 = vmatpush1.msra.mxu0 0.0
  %875 = vmatprep.subr.mxu0 0.0
  %876 = vmatpush1.msra.mxu0 0.0
  %877 = vmatprep.subr.mxu0 0.0
  %878 = vmatpush1.msra.mxu0 0.0
  %879 = vmatprep.subr.mxu0 0.0
  %880 = vmatpush1.msra.mxu0 0.0
  %881 = vmatprep.subr.mxu0 0.0
  %882 = vmatpush1.msra.mxu0 0.0
  %883 = vmatprep.mubr.f32.mxu0 0.0
  %884 = vmatmul.mubr.f32.gmra.mrb[0].mxu0 %v58
  %v885 = vpop.f32.mrb[0].mxu0
  %v886 = vadd.f32 %v656, %v885
  %v887 = vpop.f32.mrb[0].mxu0
  %v888 = vadd.f32 %v660, %v887
  %889 = vdwg.mxu0
  %890 = vmatprep.subr.mxu0 %v610
  %891 = vmatpush1.msra.mxu0 %v609
  %892 = vmatprep.subr.mxu0 %v618
  %893 = vmatpush1.msra.mxu0 %v617
  %894 = vmatprep.subr.mxu0 %v626
  %895 = vmatpush1.msra.mxu0 %v625
  %896 = vmatprep.subr.mxu0 %v634
  %897 = vmatpush1.msra.mxu0 %v633
  %898 = vmatprep.subr.mxu0 0.0
  %899 = vmatpush1.msra.mxu0 0.0
  %900 = vmatprep.subr.mxu0 0.0
  %901 = vmatpush1.msra.mxu0 0.0
  %902 = vmatprep.subr.mxu0 0.0
  %903 = vmatpush1.msra.mxu0 0.0
  %904 = vmatprep.subr.mxu0 0.0
  %905 = vmatpush1.msra.mxu0 0.0
  %906 = vmatprep.subr.mxu0 0.0
  %907 = vmatpush1.msra.mxu0 0.0
  %908 = vmatprep.subr.mxu0 0.0
  %909 = vmatpush1.msra.mxu0 0.0
  %910 = vmatprep.subr.mxu0 0.0
  %911 = vmatpush1.msra.mxu0 0.0
  %912 = vmatprep.subr.mxu0 0.0
  %913 = vmatpush1.msra.mxu0 0.0
  %914 = vmatprep.subr.mxu0 0.0
  %915 = vmatpush1.msra.mxu0 0.0
  %916 = vmatprep.subr.mxu0 0.0
  %917 = vmatpush1.msra.mxu0 0.0
  %918 = vmatprep.subr.mxu0 0.0
  %919 = vmatpush1.msra.mxu0 0.0
  %920 = vmatprep.subr.mxu0 0.0
  %921 = vmatpush1.msra.mxu0 0.0
  %922 = vmatprep.subr.mxu0 0.0
  %923 = vmatpush1.msra.mxu0 0.0
  %924 = vmatprep.subr.mxu0 0.0
  %925 = vmatpush1.msra.mxu0 0.0
  %926 = vmatprep.subr.mxu0 0.0
  %927 = vmatpush1.msra.mxu0 0.0
  %928 = vmatprep.subr.mxu0 0.0
  %929 = vmatpush1.msra.mxu0 0.0
  %930 = vmatprep.subr.mxu0 0.0
  %931 = vmatpush1.msra.mxu0 0.0
  %932 = vmatprep.subr.mxu0 0.0
  %933 = vmatpush1.msra.mxu0 0.0
  %934 = vmatprep.subr.mxu0 0.0
  %935 = vmatpush1.msra.mxu0 0.0
  %936 = vmatprep.subr.mxu0 0.0
  %937 = vmatpush1.msra.mxu0 0.0
  %938 = vmatprep.subr.mxu0 0.0
  %939 = vmatpush1.msra.mxu0 0.0
  %940 = vmatprep.subr.mxu0 0.0
  %941 = vmatpush1.msra.mxu0 0.0
  %942 = vmatprep.subr.mxu0 0.0
  %943 = vmatpush1.msra.mxu0 0.0
  %944 = vmatprep.subr.mxu0 0.0
  %945 = vmatpush1.msra.mxu0 0.0
  %946 = vmatprep.subr.mxu0 0.0
  %947 = vmatpush1.msra.mxu0 0.0
  %948 = vmatprep.subr.mxu0 0.0
  %949 = vmatpush1.msra.mxu0 0.0
  %950 = vmatprep.subr.mxu0 0.0
  %951 = vmatpush1.msra.mxu0 0.0
  %952 = vmatprep.subr.mxu0 0.0
  %953 = vmatpush1.msra.mxu0 0.0
  %954 = vmatprep.mubr.f32.mxu0 0.0
  %955 = vmatmul.mubr.f32.gmra.mrb[0].mxu0 %v58
  %v956 = vpop.f32.mrb[0].mxu0
  %v957 = vadd.f32 %v664, %v956
  %v958 = vpop.f32.mrb[0].mxu0
  %v959 = vadd.f32 %v668, %v958
  %960 = vdwg.mxu0
  %v969 = vcombine.low %v744, %v746
  %v970 = vcombine.low %v815, %v817
  %v972 = vunpack.c.l.s4 1983009808
  %v973 = vunpack.c.0.s8 %v972
  %v974 = vlaneseq
  %v975 = vshrl.u32 %v974, 7
  %v976 = vsub.s32 %v973, %v975
  %v977 = vrot.slane %v969, %v976
  %v979 = vunpack.c.l.s4 1983009808
  %v980 = vunpack.c.0.s8 %v979
  %v981 = vlaneseq
  %v982 = vshrl.u32 %v981, 7
  %v983 = vsub.s32 %v980, %v982
  %v984 = vrot.slane %v970, %v983
  %v985 = vcombine.low %v977, %v984
  %v986 = vcombine.low %v886, %v888
  %v987 = vcombine.low %v957, %v959
  %v989 = vunpack.c.l.s4 1983009808
  %v990 = vunpack.c.0.s8 %v989
  %v991 = vlaneseq
  %v992 = vshrl.u32 %v991, 7
  %v993 = vsub.s32 %v990, %v992
  %v994 = vrot.slane %v986, %v993
  %v996 = vunpack.c.l.s4 1983009808
  %v997 = vunpack.c.0.s8 %v996
  %v998 = vlaneseq
  %v999 = vshrl.u32 %v998, 7
  %v1000 = vsub.s32 %v997, %v999
  %v1001 = vrot.slane %v987, %v1000
  %v1002 = vcombine.low %v994, %v1001
  %1005 = vst [vmem:[%s14] sm:$0xff] %v985
  %1006 = vst [vmem:[%s14 + $0x8] sm:$0xff] %v1002
  // Predicated region
  $region50: #{atoms_forward.2} parent=0 // pred_check
    _
  $region51: #{atoms_forward.2} parent=0 // pred_check_branch
    %1008 = sbr.rel (0) target = $region53
  $region52: #{atoms_forward.2} parent=0 // pred_region
    _
  $region53: #{atoms_forward.2} parent=0 // pred_fallthru
    _
  // Predicated region
  $region54: #{atoms_forward.2} parent=0 // pred_check
    _
  $region55: #{atoms_forward.2} parent=0 // pred_check_branch
    %1010 = sbr.rel (0) target = $region57
  $region56: #{atoms_forward.2} parent=0 // pred_region
    _
  $region57: #{atoms_forward.2} parent=0 // pred_fallthru
    _
  // Predicated region
  $region58: #{atoms_forward.2} parent=0 // pred_check
    _
  $region59: #{atoms_forward.2} parent=0 // pred_check_branch
    %1012 = sbr.rel (0) target = $region61
  $region60: #{atoms_forward.2} parent=0 // pred_region
    _
  $region61: #{atoms_forward.2} parent=0 // pred_fallthru
    _
  // Predicated region
  $region62: #{atoms_forward.2} parent=0 // pred_check
    _
  $region63: #{atoms_forward.2} parent=0 // pred_check_branch
    %1014 = sbr.rel (0) target = $region65
  $region64: #{atoms_forward.2} parent=0 // pred_region
    _
  $region65: #{atoms_forward.2} parent=0 // pred_fallthru
    _
  // Predicated region
  $region66: #{atoms_forward.2} parent=0 // pred_check
    _
  $region67: #{atoms_forward.2} parent=0 // pred_check_branch
    %1016 = sbr.rel (0) target = $region69
  $region68: #{atoms_forward.2} parent=0 // pred_region
    _
  $region69: #{atoms_forward.2} parent=0 // pred_fallthru
    _
  // Predicated region
  $region70: #{atoms_forward.2} parent=0 // pred_check
    _
  $region71: #{atoms_forward.2} parent=0 // pred_check_branch
    %1018 = sbr.rel (0) target = $region73
  $region72: #{atoms_forward.2} parent=0 // pred_region
    _
  $region73: #{atoms_forward.2} parent=0 // pred_fallthru
    _

// kernel: atoms_forward.3
$region0: #{atoms_forward.3}
  #allocation0 [shape = 'u32[]', space=smem, size = 0x4, offset = 0x4, fixed_abs, tag = 'smem constant byte address 0x4 - core index']
  #allocation1 [shape = 'u32[144,128]{1,0:T(1,128)}', space=vmem, size = 0x12000, scoped, tag = 'internal scratch']
  %s0 = inlined_call_operand.vmem [shape: f32[2,128,8], index: 0, kind: input, shape index: {}]
  %s1 = inlined_call_operand.vmem [shape: f32[2,1,1], index: 1, kind: input, shape index: {}]
  %s2 = inlined_call_operand.vmem [shape: f32[2,16,1], index: 2, kind: input, shape index: {}]
  %s3 = inlined_call_operand.vmem [shape: f32[2,64,512], index: 3, kind: input, shape index: {}]
  %s4 = inlined_call_operand.vmem [shape: f32[3,8,16], index: 4, kind: input, shape index: {}]
  %s5 = inlined_call_operand.vmem [shape: f32[3,16,32], index: 5, kind: input, shape index: {}]
  %s6 = inlined_call_operand.vmem [shape: f32[3,32,32], index: 6, kind: input, shape index: {}]
  %s7 = inlined_call_operand.vmem [shape: f32[3,128,128], index: 7, kind: input, shape index: {}]
  %s8 = inlined_call_operand.vmem [shape: f32[128,1], index: 8, kind: input, shape index: {}]
  %s9 = inlined_call_operand.vmem [shape: f32[3,128,128], index: 9, kind: input, shape index: {}]
  %s10 = inlined_call_operand.vmem [shape: f32[128,1], index: 10, kind: input, shape index: {}]
  %s11 = inlined_call_operand.vmem [shape: f32[3,4,128], index: 11, kind: input, shape index: {}]
  %s12 = inlined_call_operand.vmem [shape: f32[4,1], index: 12, kind: input, shape index: {}]
  %s13 = inlined_call_operand.vmem [shape: f32[24,1], index: 13, kind: input, shape index: {}]
  %s14 = inlined_call_operand.vmem [shape: f32[32,512], index: 14, kind: input, shape index: {}]
  %s15 = inlined_call_operand.vmem [shape: f32[512,512], index: 15, kind: input, shape index: {}]
  %s16 = inlined_call_operand.hbm [shape: f32[2,1,512], index: 16, kind: output, shape index: {}]
  %s17 = sld [smem:[#allocation0]]
  $region97: #{atoms_forward.3} parent=0
    _
  %s19 = ssub.s32 1, %s17
  %s20 = scalar_select 0, %s19, %s17
  $region1: #{atoms_forward.3} parent=0
    #allocation2 [shape = 'u8[4096]{0}', space=vmem, size = 0x1000, scoped, tag = 'output window, operand 0']
    #allocation3 [shape = 's32[2]{0}', space=sflag, size = 0x8, scoped, tag = 'scoped memory for atoms_forward.3']
    %21 = vsyncpa [#allocation3], 0
    %s22 = scalar_lea.sflag [#allocation3], 1
    %23 = vsyncpa %s22, 0
    loop: start=0, step=1, limit=4
    $region2: #{atoms_forward.3} parent=1 // loop_pre_header
      _
    $region3: #{atoms_forward.3} parent=1 // loop_header
      %s25 = sphi 0, %s29
      %p26 = scmp.ge.s32.totalorder %s25, 4
      %s35 = sphi 0, %s37
      %s38 = sphi 0, %s35
      %s39 = sphi 0, %s38
      %s55 = sphi 0, %s39
      %s61 = sphi 0, %s63
      %s64 = sphi 0, %s61
      %s65 = sphi 0, %s64
      %s81 = sphi 0, %s65
      %s87 = sphi 0, %s89
      %s90 = sphi 0, %s87
      %s91 = sphi 0, %s90
      %s107 = sphi 0, %s91
      %s113 = sphi 0, %s115
      %s116 = sphi 0, %s113
      %s117 = sphi 0, %s116
      %s133 = sphi 0, %s117
      %s137 = sphi 0, %s137
      %s139 = sphi 0, %s137
      %s140 = sphi 0, %s139
      %s154 = sphi 0, %s140
      %s158 = sphi 0, %s158
      %s160 = sphi 0, %s158
      %s161 = sphi 0, %s160
      %s175 = sphi 0, %s161
      %s179 = sphi 0, %s179
      %s181 = sphi 0, %s179
      %s182 = sphi 0, %s181
      %s196 = sphi 0, %s182
      %s200 = sphi 0, %s200
      %s202 = sphi 0, %s200
      %s203 = sphi 0, %s202
      %s217 = sphi 0, %s203
      %s221 = sphi 0, %s221
      %s223 = sphi 0, %s221
      %s224 = sphi 0, %s223
      %s238 = sphi 0, %s224
      %s242 = sphi 0, %s242
      %s244 = sphi 0, %s242
      %s245 = sphi 0, %s244
      %s259 = sphi 0, %s245
      %s263 = sphi 0, %s263
      %s265 = sphi 0, %s263
      %s266 = sphi 0, %s265
      %s280 = sphi 0, %s266
      %s284 = sphi 0, %s284
      %s286 = sphi 0, %s284
      %s287 = sphi 0, %s286
      %s301 = sphi 0, %s287
      %s305 = sphi 0, %s305
      %s307 = sphi 0, %s305
      %s308 = sphi 0, %s307
      %s322 = sphi 0, %s308
      %s326 = sphi 0, %s326
      %s328 = sphi 0, %s326
      %s329 = sphi 0, %s328
      %s343 = sphi 0, %s329
      %s347 = sphi 0, %s347
      %s349 = sphi 0, %s347
      %s350 = sphi 0, %s349
      %s364 = sphi 0, %s350
      %s368 = sphi 0, %s368
      %s370 = sphi 0, %s368
      %s371 = sphi 0, %s370
      %s385 = sphi 0, %s371
      %s391 = sphi 0, %s393
      %s394 = sphi 0, %s391
      %s395 = sphi 0, %s394
      %s411 = sphi 0, %s395
    $region4: #{atoms_forward.3} parent=1 // loop_header_branch
      %28 = sbr.rel (%p26) target = $region8
    $region5: #{atoms_forward.3} parent=1 // loop_body
      %s30 = ssub.s32 %s25, 1
      %s31 = ssub.s32 %s25, 2
      %s32 = sadd.s32 %s25, 1
      %s33 = ssub.s32 %s25, %s32
      %p34 = scmp.eq.s32.totalorder %s33, 0
      %s36 = sadd.s32 %s35, 1
      %s37 = scalar_select %p34, %s35, %s36
      %p40 = pneg %p34
      %p41 = scmp.eq.s32.totalorder %s25, 1
      %p42 = por %p40, %p41
      %p43 = scmp.ne.s32.totalorder %s35, %s38
      %p44 = scmp.eq.s32.totalorder %s25, 0
      %p45 = por %p43, %p44
      %p46 = scmp.ne.s32.totalorder %s35, %s38
      %p47 = scmp.eq.s32.totalorder %s30, 1
      %p48 = por %p46, %p47
      %p49 = scmp.ne.s32.totalorder %s38, %s39
      %p50 = scmp.eq.s32.totalorder %s30, 0
      %p51 = por %p49, %p50
      %p52 = scmp.ne.s32.totalorder %s38, %s39
      %p53 = scmp.eq.s32.totalorder %s31, 1
      %p54 = por %p52, %p53
      %p56 = scmp.ne.s32.totalorder %s39, %s55
      %p57 = scmp.eq.s32.totalorder %s31, 0
      %p58 = por %p56, %p57
      %s59 = ssub.s32 %s25, %s32
      %p60 = scmp.eq.s32.totalorder %s59, 0
      %s62 = sadd.s32 %s61, 1
      %s63 = scalar_select %p60, %s61, %s62
      %p66 = pneg %p60
      %p67 = scmp.eq.s32.totalorder %s25, 1
      %p68 = por %p66, %p67
      %p69 = scmp.ne.s32.totalorder %s61, %s64
      %p70 = scmp.eq.s32.totalorder %s25, 0
      %p71 = por %p69, %p70
      %p72 = scmp.ne.s32.totalorder %s61, %s64
      %p73 = scmp.eq.s32.totalorder %s30, 1
      %p74 = por %p72, %p73
      %p75 = scmp.ne.s32.totalorder %s64, %s65
      %p76 = scmp.eq.s32.totalorder %s30, 0
      %p77 = por %p75, %p76
      %p78 = scmp.ne.s32.totalorder %s64, %s65
      %p79 = scmp.eq.s32.totalorder %s31, 1
      %p80 = por %p78, %p79
      %p82 = scmp.ne.s32.totalorder %s65, %s81
      %p83 = scmp.eq.s32.totalorder %s31, 0
      %p84 = por %p82, %p83
      %s85 = ssub.s32 %s25, %s32
      %p86 = scmp.eq.s32.totalorder %s85, 0
      %s88 = sadd.s32 %s87, 1
      %s89 = scalar_select %p86, %s87, %s88
      %p92 = pneg %p86
      %p93 = scmp.eq.s32.totalorder %s25, 1
      %p94 = por %p92, %p93
      %p95 = scmp.ne.s32.totalorder %s87, %s90
      %p96 = scmp.eq.s32.totalorder %s25, 0
      %p97 = por %p95, %p96
      %p98 = scmp.ne.s32.totalorder %s87, %s90
      %p99 = scmp.eq.s32.totalorder %s30, 1
      %p100 = por %p98, %p99
      %p101 = scmp.ne.s32.totalorder %s90, %s91
      %p102 = scmp.eq.s32.totalorder %s30, 0
      %p103 = por %p101, %p102
      %p104 = scmp.ne.s32.totalorder %s90, %s91
      %p105 = scmp.eq.s32.totalorder %s31, 1
      %p106 = por %p104, %p105
      %p108 = scmp.ne.s32.totalorder %s91, %s107
      %p109 = scmp.eq.s32.totalorder %s31, 0
      %p110 = por %p108, %p109
      %s111 = ssub.s32 %s25, %s32
      %p112 = scmp.eq.s32.totalorder %s111, 0
      %s114 = sadd.s32 %s113, 1
      %s115 = scalar_select %p112, %s113, %s114
      %p118 = pneg %p112
      %p119 = scmp.eq.s32.totalorder %s25, 1
      %p120 = por %p118, %p119
      %p121 = scmp.ne.s32.totalorder %s113, %s116
      %p122 = scmp.eq.s32.totalorder %s25, 0
      %p123 = por %p121, %p122
      %p124 = scmp.ne.s32.totalorder %s113, %s116
      %p125 = scmp.eq.s32.totalorder %s30, 1
      %p126 = por %p124, %p125
      %p127 = scmp.ne.s32.totalorder %s116, %s117
      %p128 = scmp.eq.s32.totalorder %s30, 0
      %p129 = por %p127, %p128
      %p130 = scmp.ne.s32.totalorder %s116, %s117
      %p131 = scmp.eq.s32.totalorder %s31, 1
      %p132 = por %p130, %p131
      %p134 = scmp.ne.s32.totalorder %s117, %s133
      %p135 = scmp.eq.s32.totalorder %s31, 0
      %p136 = por %p134, %p135
      %s138 = sadd.s32 %s137, 1
      %p141 = scmp.eq.s32.totalorder %s25, 1
      %p142 = scmp.ne.s32.totalorder %s137, %s139
      %p143 = scmp.eq.s32.totalorder %s25, 0
      %p144 = por %p142, %p143
      %p145 = scmp.ne.s32.totalorder %s137, %s139
      %p146 = scmp.eq.s32.totalorder %s30, 1
      %p147 = por %p145, %p146
      %p148 = scmp.ne.s32.totalorder %s139, %s140
      %p149 = scmp.eq.s32.totalorder %s30, 0
      %p150 = por %p148, %p149
      %p151 = scmp.ne.s32.totalorder %s139, %s140
      %p152 = scmp.eq.s32.totalorder %s31, 1
      %p153 = por %p151, %p152
      %p155 = scmp.ne.s32.totalorder %s140, %s154
      %p156 = scmp.eq.s32.totalorder %s31, 0
      %p157 = por %p155, %p156
      %s159 = sadd.s32 %s158, 1
      %p162 = scmp.eq.s32.totalorder %s25, 1
      %p163 = scmp.ne.s32.totalorder %s158, %s160
      %p164 = scmp.eq.s32.totalorder %s25, 0
      %p165 = por %p163, %p164
      %p166 = scmp.ne.s32.totalorder %s158, %s160
      %p167 = scmp.eq.s32.totalorder %s30, 1
      %p168 = por %p166, %p167
      %p169 = scmp.ne.s32.totalorder %s160, %s161
      %p170 = scmp.eq.s32.totalorder %s30, 0
      %p171 = por %p169, %p170
      %p172 = scmp.ne.s32.totalorder %s160, %s161
      %p173 = scmp.eq.s32.totalorder %s31, 1
      %p174 = por %p172, %p173
      %p176 = scmp.ne.s32.totalorder %s161, %s175
      %p177 = scmp.eq.s32.totalorder %s31, 0
      %p178 = por %p176, %p177
      %s180 = sadd.s32 %s179, 1
      %p183 = scmp.eq.s32.totalorder %s25, 1
      %p184 = scmp.ne.s32.totalorder %s179, %s181
      %p185 = scmp.eq.s32.totalorder %s25, 0
      %p186 = por %p184, %p185
      %p187 = scmp.ne.s32.totalorder %s179, %s181
      %p188 = scmp.eq.s32.totalorder %s30, 1
      %p189 = por %p187, %p188
      %p190 = scmp.ne.s32.totalorder %s181, %s182
      %p191 = scmp.eq.s32.totalorder %s30, 0
      %p192 = por %p190, %p191
      %p193 = scmp.ne.s32.totalorder %s181, %s182
      %p194 = scmp.eq.s32.totalorder %s31, 1
      %p195 = por %p193, %p194
      %p197 = scmp.ne.s32.totalorder %s182, %s196
      %p198 = scmp.eq.s32.totalorder %s31, 0
      %p199 = por %p197, %p198
      %s201 = sadd.s32 %s200, 1
      %p204 = scmp.eq.s32.totalorder %s25, 1
      %p205 = scmp.ne.s32.totalorder %s200, %s202
      %p206 = scmp.eq.s32.totalorder %s25, 0
      %p207 = por %p205, %p206
      %p208 = scmp.ne.s32.totalorder %s200, %s202
      %p209 = scmp.eq.s32.totalorder %s30, 1
      %p210 = por %p208, %p209
      %p211 = scmp.ne.s32.totalorder %s202, %s203
      %p212 = scmp.eq.s32.totalorder %s30, 0
      %p213 = por %p211, %p212
      %p214 = scmp.ne.s32.totalorder %s202, %s203
      %p215 = scmp.eq.s32.totalorder %s31, 1
      %p216 = por %p214, %p215
      %p218 = scmp.ne.s32.totalorder %s203, %s217
      %p219 = scmp.eq.s32.totalorder %s31, 0
      %p220 = por %p218, %p219
      %s222 = sadd.s32 %s221, 1
      %p225 = scmp.eq.s32.totalorder %s25, 1
      %p226 = scmp.ne.s32.totalorder %s221, %s223
      %p227 = scmp.eq.s32.totalorder %s25, 0
      %p228 = por %p226, %p227
      %p229 = scmp.ne.s32.totalorder %s221, %s223
      %p230 = scmp.eq.s32.totalorder %s30, 1
      %p231 = por %p229, %p230
      %p232 = scmp.ne.s32.totalorder %s223, %s224
      %p233 = scmp.eq.s32.totalorder %s30, 0
      %p234 = por %p232, %p233
      %p235 = scmp.ne.s32.totalorder %s223, %s224
      %p236 = scmp.eq.s32.totalorder %s31, 1
      %p237 = por %p235, %p236
      %p239 = scmp.ne.s32.totalorder %s224, %s238
      %p240 = scmp.eq.s32.totalorder %s31, 0
      %p241 = por %p239, %p240
      %s243 = sadd.s32 %s242, 1
      %p246 = scmp.eq.s32.totalorder %s25, 1
      %p247 = scmp.ne.s32.totalorder %s242, %s244
      %p248 = scmp.eq.s32.totalorder %s25, 0
      %p249 = por %p247, %p248
      %p250 = scmp.ne.s32.totalorder %s242, %s244
      %p251 = scmp.eq.s32.totalorder %s30, 1
      %p252 = por %p250, %p251
      %p253 = scmp.ne.s32.totalorder %s244, %s245
      %p254 = scmp.eq.s32.totalorder %s30, 0
      %p255 = por %p253, %p254
      %p256 = scmp.ne.s32.totalorder %s244, %s245
      %p257 = scmp.eq.s32.totalorder %s31, 1
      %p258 = por %p256, %p257
      %p260 = scmp.ne.s32.totalorder %s245, %s259
      %p261 = scmp.eq.s32.totalorder %s31, 0
      %p262 = por %p260, %p261
      %s264 = sadd.s32 %s263, 1
      %p267 = scmp.eq.s32.totalorder %s25, 1
      %p268 = scmp.ne.s32.totalorder %s263, %s265
      %p269 = scmp.eq.s32.totalorder %s25, 0
      %p270 = por %p268, %p269
      %p271 = scmp.ne.s32.totalorder %s263, %s265
      %p272 = scmp.eq.s32.totalorder %s30, 1
      %p273 = por %p271, %p272
      %p274 = scmp.ne.s32.totalorder %s265, %s266
      %p275 = scmp.eq.s32.totalorder %s30, 0
      %p276 = por %p274, %p275
      %p277 = scmp.ne.s32.totalorder %s265, %s266
      %p278 = scmp.eq.s32.totalorder %s31, 1
      %p279 = por %p277, %p278
      %p281 = scmp.ne.s32.totalorder %s266, %s280
      %p282 = scmp.eq.s32.totalorder %s31, 0
      %p283 = por %p281, %p282
      %s285 = sadd.s32 %s284, 1
      %p288 = scmp.eq.s32.totalorder %s25, 1
      %p289 = scmp.ne.s32.totalorder %s284, %s286
      %p290 = scmp.eq.s32.totalorder %s25, 0
      %p291 = por %p289, %p290
      %p292 = scmp.ne.s32.totalorder %s284, %s286
      %p293 = scmp.eq.s32.totalorder %s30, 1
      %p294 = por %p292, %p293
      %p295 = scmp.ne.s32.totalorder %s286, %s287
      %p296 = scmp.eq.s32.totalorder %s30, 0
      %p297 = por %p295, %p296
      %p298 = scmp.ne.s32.totalorder %s286, %s287
      %p299 = scmp.eq.s32.totalorder %s31, 1
      %p300 = por %p298, %p299
      %p302 = scmp.ne.s32.totalorder %s287, %s301
      %p303 = scmp.eq.s32.totalorder %s31, 0
      %p304 = por %p302, %p303
      %s306 = sadd.s32 %s305, 1
      %p309 = scmp.eq.s32.totalorder %s25, 1
      %p310 = scmp.ne.s32.totalorder %s305, %s307
      %p311 = scmp.eq.s32.totalorder %s25, 0
      %p312 = por %p310, %p311
      %p313 = scmp.ne.s32.totalorder %s305, %s307
      %p314 = scmp.eq.s32.totalorder %s30, 1
      %p315 = por %p313, %p314
      %p316 = scmp.ne.s32.totalorder %s307, %s308
      %p317 = scmp.eq.s32.totalorder %s30, 0
      %p318 = por %p316, %p317
      %p319 = scmp.ne.s32.totalorder %s307, %s308
      %p320 = scmp.eq.s32.totalorder %s31, 1
      %p321 = por %p319, %p320
      %p323 = scmp.ne.s32.totalorder %s308, %s322
      %p324 = scmp.eq.s32.totalorder %s31, 0
      %p325 = por %p323, %p324
      %s327 = sadd.s32 %s326, 1
      %p330 = scmp.eq.s32.totalorder %s25, 1
      %p331 = scmp.ne.s32.totalorder %s326, %s328
      %p332 = scmp.eq.s32.totalorder %s25, 0
      %p333 = por %p331, %p332
      %p334 = scmp.ne.s32.totalorder %s326, %s328
      %p335 = scmp.eq.s32.totalorder %s30, 1
      %p336 = por %p334, %p335
      %p337 = scmp.ne.s32.totalorder %s328, %s329
      %p338 = scmp.eq.s32.totalorder %s30, 0
      %p339 = por %p337, %p338
      %p340 = scmp.ne.s32.totalorder %s328, %s329
      %p341 = scmp.eq.s32.totalorder %s31, 1
      %p342 = por %p340, %p341
      %p344 = scmp.ne.s32.totalorder %s329, %s343
      %p345 = scmp.eq.s32.totalorder %s31, 0
      %p346 = por %p344, %p345
      %s348 = sadd.s32 %s347, 1
      %p351 = scmp.eq.s32.totalorder %s25, 1
      %p352 = scmp.ne.s32.totalorder %s347, %s349
      %p353 = scmp.eq.s32.totalorder %s25, 0
      %p354 = por %p352, %p353
      %p355 = scmp.ne.s32.totalorder %s347, %s349
      %p356 = scmp.eq.s32.totalorder %s30, 1
      %p357 = por %p355, %p356
      %p358 = scmp.ne.s32.totalorder %s349, %s350
      %p359 = scmp.eq.s32.totalorder %s30, 0
      %p360 = por %p358, %p359
      %p361 = scmp.ne.s32.totalorder %s349, %s350
      %p362 = scmp.eq.s32.totalorder %s31, 1
      %p363 = por %p361, %p362
      %p365 = scmp.ne.s32.totalorder %s350, %s364
      %p366 = scmp.eq.s32.totalorder %s31, 0
      %p367 = por %p365, %p366
      %s369 = sadd.s32 %s368, 1
      %p372 = scmp.eq.s32.totalorder %s25, 1
      %p373 = scmp.ne.s32.totalorder %s368, %s370
      %p374 = scmp.eq.s32.totalorder %s25, 0
      %p375 = por %p373, %p374
      %p376 = scmp.ne.s32.totalorder %s368, %s370
      %p377 = scmp.eq.s32.totalorder %s30, 1
      %p378 = por %p376, %p377
      %p379 = scmp.ne.s32.totalorder %s370, %s371
      %p380 = scmp.eq.s32.totalorder %s30, 0
      %p381 = por %p379, %p380
      %p382 = scmp.ne.s32.totalorder %s370, %s371
      %p383 = scmp.eq.s32.totalorder %s31, 1
      %p384 = por %p382, %p383
      %p386 = scmp.ne.s32.totalorder %s371, %s385
      %p387 = scmp.eq.s32.totalorder %s31, 0
      %p388 = por %p386, %p387
      %s389 = ssub.s32 %s25, %s32
      %p390 = scmp.eq.s32.totalorder %s389, 0
      %s392 = sadd.s32 %s391, 1
      %s393 = scalar_select %p390, %s391, %s392
      %p396 = pneg %p390
      %p397 = scmp.eq.s32.totalorder %s25, 1
      %p398 = por %p396, %p397
      %p399 = scmp.ne.s32.totalorder %s391, %s394
      %p400 = scmp.eq.s32.totalorder %s25, 0
      %p401 = por %p399, %p400
      %p402 = scmp.ne.s32.totalorder %s391, %s394
      %p403 = scmp.eq.s32.totalorder %s30, 1
      %p404 = por %p402, %p403
      %p405 = scmp.ne.s32.totalorder %s394, %s395
      %p406 = scmp.eq.s32.totalorder %s30, 0
      %p407 = por %p405, %p406
      %p408 = scmp.ne.s32.totalorder %s394, %s395
      %p409 = scmp.eq.s32.totalorder %s31, 1
      %p410 = por %p408, %p409
      %p412 = scmp.ne.s32.totalorder %s395, %s411
      %p413 = scmp.eq.s32.totalorder %s31, 0
      %p414 = por %p412, %p413
      %p415 = scmp.le.s32.totalorder 1, %s25
      %p416 = scmp.lt.s32.totalorder %s25, 3
      %p417 = pnand %p415, %p416
      %p418 = pneg %p417
      // Predicated region
      $region9: #{atoms_forward.3} parent=5 // pred_check
        _
      $region10: #{atoms_forward.3} parent=5 // pred_check_branch
        %420 = sbr.rel (%p417) target = $region12
      $region11: #{atoms_forward.3} parent=5 // pred_region
        %s421 = ssub.s32 %s25, 1
        // Predicated region
        $region13: #{atoms_forward.3} parent=11 // pred_check
          %p422 = pneg %p150
        $region14: #{atoms_forward.3} parent=11 // pred_check_branch
          %424 = sbr.rel (%p422) target = $region16
        $region15: #{atoms_forward.3} parent=11 // pred_region
          _
        $region16: #{atoms_forward.3} parent=11 // pred_fallthru
          _
        // Predicated region
        $region17: #{atoms_forward.3} parent=11 // pred_check
          %p425 = pneg %p171
        $region18: #{atoms_forward.3} parent=11 // pred_check_branch
          %427 = sbr.rel (%p425) target = $region20
        $region19: #{atoms_forward.3} parent=11 // pred_region
          _
        $region20: #{atoms_forward.3} parent=11 // pred_fallthru
          _
        // Predicated region
        $region21: #{atoms_forward.3} parent=11 // pred_check
          %p428 = pneg %p192
        $region22: #{atoms_forward.3} parent=11 // pred_check_branch
          %430 = sbr.rel (%p428) target = $region24
        $region23: #{atoms_forward.3} parent=11 // pred_region
          _
        $region24: #{atoms_forward.3} parent=11 // pred_fallthru
          _
        // Predicated region
        $region25: #{atoms_forward.3} parent=11 // pred_check
          %p431 = pneg %p213
        $region26: #{atoms_forward.3} parent=11 // pred_check_branch
          %433 = sbr.rel (%p431) target = $region28
        $region27: #{atoms_forward.3} parent=11 // pred_region
          _
        $region28: #{atoms_forward.3} parent=11 // pred_fallthru
          _
        // Predicated region
        $region29: #{atoms_forward.3} parent=11 // pred_check
          %p434 = pneg %p234
        $region30: #{atoms_forward.3} parent=11 // pred_check_branch
          %436 = sbr.rel (%p434) target = $region32
        $region31: #{atoms_forward.3} parent=11 // pred_region
          _
        $region32: #{atoms_forward.3} parent=11 // pred_fallthru
          _
        // Predicated region
        $region33: #{atoms_forward.3} parent=11 // pred_check
          %p437 = pneg %p255
        $region34: #{atoms_forward.3} parent=11 // pred_check_branch
          %439 = sbr.rel (%p437) target = $region36
        $region35: #{atoms_forward.3} parent=11 // pred_region
          _
        $region36: #{atoms_forward.3} parent=11 // pred_fallthru
          _
        // Predicated region
        $region37: #{atoms_forward.3} parent=11 // pred_check
          %p440 = pneg %p276
        $region38: #{atoms_forward.3} parent=11 // pred_check_branch
          %442 = sbr.rel (%p440) target = $region40
        $region39: #{atoms_forward.3} parent=11 // pred_region
          _
        $region40: #{atoms_forward.3} parent=11 // pred_fallthru
          _
        // Predicated region
        $region41: #{atoms_forward.3} parent=11 // pred_check
          %p443 = pneg %p297
        $region42: #{atoms_forward.3} parent=11 // pred_check_branch
          %445 = sbr.rel (%p443) target = $region44
        $region43: #{atoms_forward.3} parent=11 // pred_region
          _
        $region44: #{atoms_forward.3} parent=11 // pred_fallthru
          _
        // Predicated region
        $region45: #{atoms_forward.3} parent=11 // pred_check
          %p446 = pneg %p318
        $region46: #{atoms_forward.3} parent=11 // pred_check_branch
          %448 = sbr.rel (%p446) target = $region48
        $region47: #{atoms_forward.3} parent=11 // pred_region
          _
        $region48: #{atoms_forward.3} parent=11 // pred_fallthru
          _
        // Predicated region
        $region49: #{atoms_forward.3} parent=11 // pred_check
          %p449 = pneg %p339
        $region50: #{atoms_forward.3} parent=11 // pred_check_branch
          %451 = sbr.rel (%p449) target = $region52
        $region51: #{atoms_forward.3} parent=11 // pred_region
          _
        $region52: #{atoms_forward.3} parent=11 // pred_fallthru
          _
        // Predicated region
        $region53: #{atoms_forward.3} parent=11 // pred_check
          %p452 = pneg %p360
        $region54: #{atoms_forward.3} parent=11 // pred_check_branch
          %454 = sbr.rel (%p452) target = $region56
        $region55: #{atoms_forward.3} parent=11 // pred_region
          _
        $region56: #{atoms_forward.3} parent=11 // pred_fallthru
          _
        // Predicated region
        $region57: #{atoms_forward.3} parent=11 // pred_check
          %p455 = pneg %p381
        $region58: #{atoms_forward.3} parent=11 // pred_check_branch
          %457 = sbr.rel (%p455) target = $region60
        $region59: #{atoms_forward.3} parent=11 // pred_region
          _
        $region60: #{atoms_forward.3} parent=11 // pred_fallthru
          _
      $region12: #{atoms_forward.3} parent=5 // pred_fallthru
        _
      %p458 = scmp.lt.s32.totalorder %s25, 2
      // Predicated region
      $region61: #{atoms_forward.3} parent=5 // pred_check
        %p459 = pneg %p458
      $region62: #{atoms_forward.3} parent=5 // pred_check_branch
        %461 = sbr.rel (%p459) target = $region64
      $region63: #{atoms_forward.3} parent=5 // pred_region
        // Predicated region
        $region65: #{atoms_forward.3} parent=63 // pred_check
          %p462 = pneg %p45
        $region66: #{atoms_forward.3} parent=63 // pred_check_branch
          %464 = sbr.rel (%p462) target = $region68
        $region67: #{atoms_forward.3} parent=63 // pred_region
          %p465 = scmp.lt.s32.totalorder %s25, 1
          %s466 = scalar_select %p465, %s25, 1
          %s467 = smul.addr %s466, 16
          %s468 = smul.addr %s467, 8
          %s469 = scalar_lea.vmem %s0, %s468
        $region68: #{atoms_forward.3} parent=63 // pred_fallthru
          _
        // Predicated region
        $region69: #{atoms_forward.3} parent=63 // pred_check
          %p470 = pneg %p71
        $region70: #{atoms_forward.3} parent=63 // pred_check_branch
          %472 = sbr.rel (%p470) target = $region72
        $region71: #{atoms_forward.3} parent=63 // pred_region
          %p473 = scmp.lt.s32.totalorder %s25, 1
          %s474 = scalar_select %p473, %s25, 1
          %s475 = scalar_lea.vmem %s1, %s474
        $region72: #{atoms_forward.3} parent=63 // pred_fallthru
          _
        // Predicated region
        $region73: #{atoms_forward.3} parent=63 // pred_check
          %p476 = pneg %p97
        $region74: #{atoms_forward.3} parent=63 // pred_check_branch
          %478 = sbr.rel (%p476) target = $region76
        $region75: #{atoms_forward.3} parent=63 // pred_region
          %p479 = scmp.lt.s32.totalorder %s25, 1
          %s480 = scalar_select %p479, %s25, 1
          %s481 = smul.addr %s480, 2
          %s482 = smul.addr %s481, 8
          %s483 = scalar_lea.vmem %s2, %s482
        $region76: #{atoms_forward.3} parent=63 // pred_fallthru
          _
        // Predicated region
        $region77: #{atoms_forward.3} parent=63 // pred_check
          %p484 = pneg %p123
        $region78: #{atoms_forward.3} parent=63 // pred_check_branch
          %486 = sbr.rel (%p484) target = $region80
        $region79: #{atoms_forward.3} parent=63 // pred_region
          %p487 = scmp.lt.s32.totalorder %s25, 1
          %s488 = scalar_select %p487, %s25, 1
          %s489 = smul.addr %s488, 32
          %s490 = smul.addr %s489, 8
          %s491 = scalar_lea.vmem %s3, %s490
        $region80: #{atoms_forward.3} parent=63 // pred_fallthru
          _
      $region64: #{atoms_forward.3} parent=5 // pred_fallthru
        _
      %p492 = scmp.le.s32.totalorder 1, %s25
      %p493 = scmp.lt.s32.totalorder %s25, 3
      %p494 = pnand %p492, %p493
      %p495 = pneg %p494
      // Predicated region
      $region81: #{atoms_forward.3} parent=5 // pred_check
        _
      $region82: #{atoms_forward.3} parent=5 // pred_check_branch
        %497 = sbr.rel (%p494) target = $region84
      $region83: #{atoms_forward.3} parent=5 // pred_region
        %s498 = ssub.s32 %s25, 1
        %p499 = scmp.lt.s32.totalorder %s30, 1
        %s500 = scalar_select %p499, %s30, 1
        %s501 = smul.addr %s500, 16
        %s502 = smul.addr %s501, 8
        %s503 = scalar_lea.vmem %s0, %s502
        %p504 = pneg %p51
        %p505 = pneg %p48
        %p506 = scmp.lt.s32.totalorder %s30, 1
        %s507 = scalar_select %p506, %s30, 1
        %s508 = scalar_lea.vmem %s1, %s507
        %p509 = pneg %p77
        %p510 = pneg %p74
        %p511 = scmp.lt.s32.totalorder %s30, 1
        %s512 = scalar_select %p511, %s30, 1
        %s513 = smul.addr %s512, 2
        %s514 = smul.addr %s513, 8
        %s515 = scalar_lea.vmem %s2, %s514
        %p516 = pneg %p103
        %p517 = pneg %p100
        %p518 = scmp.lt.s32.totalorder %s30, 1
        %s519 = scalar_select %p518, %s30, 1
        %s520 = smul.addr %s519, 32
        %s521 = smul.addr %s520, 8
        %s522 = scalar_lea.vmem %s3, %s521
        %p523 = pneg %p129
        %p524 = pneg %p126
        %p525 = pneg %p150
        %p526 = pneg %p147
        %p527 = pneg %p171
        %p528 = pneg %p168
        %p529 = pneg %p192
        %p530 = pneg %p189
        %p531 = pneg %p213
        %p532 = pneg %p210
        %p533 = pneg %p234
        %p534 = pneg %p231
        %p535 = pneg %p255
        %p536 = pneg %p252
        %p537 = pneg %p276
        %p538 = pneg %p273
        %p539 = pneg %p297
        %p540 = pneg %p294
        %p541 = pneg %p318
        %p542 = pneg %p315
        %p543 = pneg %p339
        %p544 = pneg %p336
        %p545 = pneg %p360
        %p546 = pneg %p357
        %p547 = pneg %p381
        %p548 = pneg %p378
        %p549 = pneg %p407
        %p550 = pneg %p404
        %s551 = sand.u32 %s394, 1
        %s552 = scalar_lea.sflag [#allocation3], %s551
        %s553 = sand.u32 %s394, 1
        %s554 = smul.addr %s553, 4
        %s555 = scalar_lea.vmem [#allocation2], %s554
        %p556 = scmp.lt.s32.totalorder %s30, 1
        %s557 = scalar_select %p556, %s30, 1
        %s558 = smul.addr %s557, 16
        %s559 = smul.addr %s558, 8
        %s560 = scalar_lea.vmem %s0, %s559
        %p561 = scmp.lt.s32.totalorder %s30, 1
        %s562 = scalar_select %p561, %s30, 1
        %s563 = scalar_lea.vmem %s1, %s562
        %p564 = scmp.lt.s32.totalorder %s30, 1
        %s565 = scalar_select %p564, %s30, 1
        %s566 = smul.addr %s565, 2
        %s567 = smul.addr %s566, 8
        %s568 = scalar_lea.vmem %s2, %s567
        %p569 = scmp.lt.s32.totalorder %s30, 1
        %s570 = scalar_select %p569, %s30, 1
        %s571 = smul.addr %s570, 32
        %s572 = smul.addr %s571, 8
        %s573 = scalar_lea.vmem %s3, %s572
        %v574 = vld [vmem:[%s560] sm:$0xff]
        %v575 = vld [vmem:[%s560 + $0x8] sm:$0xff]
        %v576 = vld [vmem:[%s560 + $0x10] sm:$0xff]
        %v577 = vld [vmem:[%s560 + $0x18] sm:$0xff]
        %v578 = vld [vmem:[%s560 + $0x20] sm:$0xff]
        %v579 = vld [vmem:[%s560 + $0x28] sm:$0xff]
        %v580 = vld [vmem:[%s560 + $0x30] sm:$0xff]
        %v581 = vld [vmem:[%s560 + $0x38] sm:$0xff]
        %v582 = vld [vmem:[%s560 + $0x40] sm:$0xff]
        %v583 = vld [vmem:[%s560 + $0x48] sm:$0xff]
        %v584 = vld [vmem:[%s560 + $0x50] sm:$0xff]
        %v585 = vld [vmem:[%s560 + $0x58] sm:$0xff]
        %v586 = vld [vmem:[%s560 + $0x60] sm:$0xff]
        %v587 = vld [vmem:[%s560 + $0x68] sm:$0xff]
        %v588 = vld [vmem:[%s560 + $0x70] sm:$0xff]
        %v589 = vld [vmem:[%s560 + $0x78] sm:$0xff]
        %v590 = vld [vmem:[%s8] sm:$0xff]
        %v591 = vld [vmem:[%s8 + $0x8] sm:$0xff]
        %v592 = vld [vmem:[%s8 + $0x10] sm:$0xff]
        %v593 = vld [vmem:[%s8 + $0x18] sm:$0xff]
        %v594 = vld [vmem:[%s8 + $0x20] sm:$0xff]
        %v595 = vld [vmem:[%s8 + $0x28] sm:$0xff]
        %v596 = vld [vmem:[%s8 + $0x30] sm:$0xff]
        %v597 = vld [vmem:[%s8 + $0x38] sm:$0xff]
        %v598 = vld [vmem:[%s8 + $0x40] sm:$0xff]
        %v599 = vld [vmem:[%s8 + $0x48] sm:$0xff]
        %v600 = vld [vmem:[%s8 + $0x50] sm:$0xff]
        %v601 = vld [vmem:[%s8 + $0x58] sm:$0xff]
        %v602 = vld [vmem:[%s8 + $0x60] sm:$0xff]
        %v603 = vld [vmem:[%s8 + $0x68] sm:$0xff]
        %v604 = vld [vmem:[%s8 + $0x70] sm:$0xff]
        %v605 = vld [vmem:[%s8 + $0x78] sm:$0xff]
        %v606 = vld [vmem:[%s4] sm:$0xff]
        %vm607 = vcmask 64512
        %v609 = vsel %vm607, %v574, 0
        %v612 = vsel %vm607, %v575, 0
        %v615 = vsel %vm607, %v576, 0
        %v618 = vsel %vm607, %v577, 0
        %v621 = vsel %vm607, %v578, 0
        %v624 = vsel %vm607, %v579, 0
        %v627 = vsel %vm607, %v580, 0
        %v630 = vsel %vm607, %v581, 0
        %v633 = vsel %vm607, %v582, 0
        %v636 = vsel %vm607, %v583, 0
        %v639 = vsel %vm607, %v584, 0
        %v642 = vsel %vm607, %v585, 0
        %v645 = vsel %vm607, %v586, 0
        %v648 = vsel %vm607, %v587, 0
        %v651 = vsel %vm607, %v588, 0
        %v654 = vsel %vm607, %v589, 0
        %656 = vmatprep.subr.mxu0 0.0
        %657 = vmatpush1.msra.mxu0 %v606
        %658 = vmatprep.subr.mxu0 0.0
        %659 = vmatpush1.msra.mxu0 0.0
        %660 = vmatprep.subr.mxu0 0.0
        %661 = vmatpush1.msra.mxu0 0.0
        %662 = vmatprep.subr.mxu0 0.0
        %663 = vmatpush1.msra.mxu0 0.0
        %664 = vmatprep.subr.mxu0 0.0
        %665 = vmatpush1.msra.mxu0 0.0
        %666 = vmatprep.subr.mxu0 0.0
        %667 = vmatpush1.msra.mxu0 0.0
        %668 = vmatprep.subr.mxu0 0.0
        %669 = vmatpush1.msra.mxu0 0.0
        %670 = vmatprep.subr.mxu0 0.0
        %671 = vmatpush1.msra.mxu0 0.0
        %672 = vmatprep.subr.mxu0 0.0
        %673 = vmatpush1.msra.mxu0 0.0
        %674 = vmatprep.subr.mxu0 0.0
        %675 = vmatpush1.msra.mxu0 0.0
        %676 = vmatprep.subr.mxu0 0.0
        %677 = vmatpush1.msra.mxu0 0.0
        %678 = vmatprep.subr.mxu0 0.0
        %679 = vmatpush1.msra.mxu0 0.0
        %680 = vmatprep.subr.mxu0 0.0
        %681 = vmatpush1.msra.mxu0 0.0
        %682 = vmatprep.subr.mxu0 0.0
        %683 = vmatpush1.msra.mxu0 0.0
        %684 = vmatprep.subr.mxu0 0.0
        %685 = vmatpush1.msra.mxu0 0.0
        %686 = vmatprep.subr.mxu0 0.0
        %687 = vmatpush1.msra.mxu0 0.0
        %688 = vmatprep.subr.mxu0 0.0
        %689 = vmatpush1.msra.mxu0 0.0
        %690 = vmatprep.subr.mxu0 0.0
        %691 = vmatpush1.msra.mxu0 0.0
        %692 = vmatprep.subr.mxu0 0.0
        %693 = vmatpush1.msra.mxu0 0.0
        %694 = vmatprep.subr.mxu0 0.0
        %695 = vmatpush1.msra.mxu0 0.0
        %696 = vmatprep.subr.mxu0 0.0
        %697 = vmatpush1.msra.mxu0 0.0
        %698 = vmatprep.subr.mxu0 0.0
        %699 = vmatpush1.msra.mxu0 0.0
        %700 = vmatprep.subr.mxu0 0.0
        %701 = vmatpush1.msra.mxu0 0.0
        %702 = vmatprep.subr.mxu0 0.0
        %703 = vmatpush1.msra.mxu0 0.0
        %704 = vmatprep.subr.mxu0 0.0
        %705 = vmatpush1.msra.mxu0 0.0
        %706 = vmatprep.subr.mxu0 0.0
        %707 = vmatpush1.msra.mxu0 0.0
        %708 = vmatprep.subr.mxu0 0.0
        %709 = vmatpush1.msra.mxu0 0.0
        %710 = vmatprep.subr.mxu0 0.0
        %711 = vmatpush1.msra.mxu0 0.0
        %712 = vmatprep.subr.mxu0 0.0
        %713 = vmatpush1.msra.mxu0 0.0
        %714 = vmatprep.subr.mxu0 0.0
        %715 = vmatpush1.msra.mxu0 0.0
        %716 = vmatprep.subr.mxu0 0.0
        %717 = vmatpush1.msra.mxu0 0.0
        %718 = vmatprep.subr.mxu0 0.0
        %719 = vmatpush1.msra.mxu0 0.0
        %720 = vmatprep.mubr.f32.mxu0 0.0
        %721 = vmatmul.mubr.f32.gmra.mrb[0].mxu0 %v609
        %v722 = vpop.f32.mrb[0].mxu0
        %v723 = vadd.f32 0.0, %v722
        %v724 = vpop.f32.mrb[0].mxu0
        %725 = vmatprep.mubr.f32.mxu0 0.0
        %726 = vmatmul.mubr.f32.gmra.mrb[0].mxu0 %v612
        %v727 = vpop.f32.mrb[0].mxu0
        %v728 = vadd.f32 0.0, %v727
        %v729 = vpop.f32.mrb[0].mxu0
        %730 = vmatprep.mubr.f32.mxu0 0.0
        %731 = vmatmul.mubr.f32.gmra.mrb[0].mxu0 %v615
        %v732 = vpop.f32.mrb[0].mxu0
        %v733 = vadd.f32 0.0, %v732
        %v734 = vpop.f32.mrb[0].mxu0
        %735 = vmatprep.mubr.f32.mxu0 0.0
        %736 = vmatmul.mubr.f32.gmra.mrb[0].mxu0 %v618
        %v737 = vpop.f32.mrb[0].mxu0
        %v738 = vadd.f32 0.0, %v737
        %v739 = vpop.f32.mrb[0].mxu0
        %740 = vmatprep.mubr.f32.mxu0 0.0
        %741 = vmatmul.mubr.f32.gmra.mrb[0].mxu0 %v621
        %v742 = vpop.f32.mrb[0].mxu0
        %v743 = vadd.f32 0.0, %v742
        %v744 = vpop.f32.mrb[0].mxu0
        %745 = vmatprep.mubr.f32.mxu0 0.0
        %746 = vmatmul.mubr.f32.gmra.mrb[0].mxu0 %v624
        %v747 = vpop.f32.mrb[0].mxu0
        %v748 = vadd.f32 0.0, %v747
        %v749 = vpop.f32.mrb[0].mxu0
        %750 = vmatprep.mubr.f32.mxu0 0.0
        %751 = vmatmul.mubr.f32.gmra.mrb[0].mxu0 %v627
        %v752 = vpop.f32.mrb[0].mxu0
        %v753 = vadd.f32 0.0, %v752
        %v754 = vpop.f32.mrb[0].mxu0
        %755 = vmatprep.mubr.f32.mxu0 0.0
        %756 = vmatmul.mubr.f32.gmra.mrb[0].mxu0 %v630
        %v757 = vpop.f32.mrb[0].mxu0
        %v758 = vadd.f32 0.0, %v757
        %v759 = vpop.f32.mrb[0].mxu0
        %760 = vmatprep.mubr.f32.mxu0 0.0
        %761 = vmatmul.mubr.f32.gmra.mrb[0].mxu0 %v633
        %v762 = vpop.f32.mrb[0].mxu0
        %v763 = vadd.f32 0.0, %v762
        %v764 = vpop.f32.mrb[0].mxu0
        %765 = vmatprep.mubr.f32.mxu0 0.0
        %766 = vmatmul.mubr.f32.gmra.mrb[0].mxu0 %v636
        %v767 = vpop.f32.mrb[0].mxu0
        %v768 = vadd.f32 0.0, %v767
        %v769 = vpop.f32.mrb[0].mxu0
        %770 = vmatprep.mubr.f32.mxu0 0.0
        %771 = vmatmul.mubr.f32.gmra.mrb[0].mxu0 %v639
        %v772 = vpop.f32.mrb[0].mxu0
        %v773 = vadd.f32 0.0, %v772
        %v774 = vpop.f32.mrb[0].mxu0
        %775 = vmatprep.mubr.f32.mxu0 0.0
        %776 = vmatmul.mubr.f32.gmra.mrb[0].mxu0 %v642
        %v777 = vpop.f32.mrb[0].mxu0
        %v778 = vadd.f32 0.0, %v777
        %v779 = vpop.f32.mrb[0].mxu0
        %780 = vmatprep.mubr.f32.mxu0 0.0
        %781 = vmatmul.mubr.f32.gmra.mrb[0].mxu0 %v645
        %v782 = vpop.f32.mrb[0].mxu0
        %v783 = vadd.f32 0.0, %v782
        %v784 = vpop.f32.mrb[0].mxu0
        %785 = vmatprep.mubr.f32.mxu0 0.0
        %786 = vmatmul.mubr.f32.gmra.mrb[0].mxu0 %v648
        %v787 = vpop.f32.mrb[0].mxu0
        %v788 = vadd.f32 0.0, %v787
        %v789 = vpop.f32.mrb[0].mxu0
        %790 = vmatprep.mubr.f32.mxu0 0.0
        %791 = vmatmul.mubr.f32.gmra.mrb[0].mxu0 %v651
        %v792 = vpop.f32.mrb[0].mxu0
        %v793 = vadd.f32 0.0, %v792
        %v794 = vpop.f32.mrb[0].mxu0
        %795 = vmatprep.mubr.f32.mxu0 0.0
        %796 = vmatmul.mubr.f32.gmra.mrb[0].mxu0 %v654
        %v797 = vpop.f32.mrb[0].mxu0
        %v798 = vadd.f32 0.0, %v797
        %v799 = vpop.f32.mrb[0].mxu0
        %800 = vdwg.mxu0
        %v801 = vld [vmem:[%s7] sm:$0xff]
        %v802 = vld [vmem:[%s7 + $0x8] sm:$0xff]
        %v803 = vld [vmem:[%s7 + $0x10] sm:$0xff]
        %v804 = vld [vmem:[%s7 + $0x18] sm:$0xff]
        %v805 = vld [vmem:[%s7 + $0x20] sm:$0xff]
        %v806 = vld [vmem:[%s7 + $0x28] sm:$0xff]
        %v807 = vld [vmem:[%s7 + $0x30] sm:$0xff]
        %v808 = vld [vmem:[%s7 + $0x38] sm:$0xff]
        %v809 = vld [vmem:[%s7 + $0x40] sm:$0xff]
        %v810 = vld [vmem:[%s7 + $0x48] sm:$0xff]
        %v811 = vld [vmem:[%s7 + $0x50] sm:$0xff]
        %v812 = vld [vmem:[%s7 + $0x58] sm:$0xff]
        %v813 = vld [vmem:[%s7 + $0x60] sm:$0xff]
        %v814 = vld [vmem:[%s7 + $0x68] sm:$0xff]
        %v815 = vld [vmem:[%s7 + $0x70] sm:$0xff]
        %v816 = vld [vmem:[%s7 + $0x78] sm:$0xff]
        %817 = vmatprep.subr.mxu0 0.0
        %818 = vmatpush1.msra.mxu0 %v723
        %819 = vmatprep.subr.mxu0 0.0
        %820 = vmatpush1.msra.mxu0 %v728
        %821 = vmatprep.subr.mxu0 0.0
        %822 = vmatpush1.msra.mxu0 %v733
        %823 = vmatprep.subr.mxu0 0.0
        %824 = vmatpush1.msra.mxu0 %v738
        %825 = vmatprep.subr.mxu0 0.0
        %826 = vmatpush1.msra.mxu0 %v743
        %827 = vmatprep.subr.mxu0 0.0
        %828 = vmatpush1.msra.mxu0 %v748
        %829 = vmatprep.subr.mxu0 0.0
        %830 = vmatpush1.msra.mxu0 %v753
        %831 = vmatprep.subr.mxu0 0.0
        %832 = vmatpush1.msra.mxu0 %v758
        %833 = vmatprep.subr.mxu0 0.0
        %834 = vmatpush1.msra.mxu0 %v763
        %835 = vmatprep.subr.mxu0 0.0
        %836 = vmatpush1.msra.mxu0 %v768
        %837 = vmatprep.subr.mxu0 0.0
        %838 = vmatpush1.msra.mxu0 %v773
        %839 = vmatprep.subr.mxu0 0.0
        %840 = vmatpush1.msra.mxu0 %v778
        %841 = vmatprep.subr.mxu0 0.0
        %842 = vmatpush1.msra.mxu0 %v783
        %843 = vmatprep.subr.mxu0 0.0
        %844 = vmatpush1.msra.mxu0 %v788
        %845 = vmatprep.subr.mxu0 0.0
        %846 = vmatpush1.msra.mxu0 %v793
        %847 = vmatprep.subr.mxu0 0.0
        %848 = vmatpush1.msra.mxu0 %v798
        %849 = vmatprep.subr.mxu0 0.0
        %850 = vmatpush1.msra.mxu0 0.0
        %851 = vmatprep.subr.mxu0 0.0
        %852 = vmatpush1.msra.mxu0 0.0
        %853 = vmatprep.subr.mxu0 0.0
        %854 = vmatpush1.msra.mxu0 0.0
        %855 = vmatprep.subr.mxu0 0.0
        %856 = vmatpush1.msra.mxu0 0.0
        %857 = vmatprep.subr.mxu0 0.0
        %858 = vmatpush1.msra.mxu0 0.0
        %859 = vmatprep.subr.mxu0 0.0
        %860 = vmatpush1.msra.mxu0 0.0
        %861 = vmatprep.subr.mxu0 0.0
        %862 = vmatpush1.msra.mxu0 0.0
        %863 = vmatprep.subr.mxu0 0.0
        %864 = vmatpush1.msra.mxu0 0.0
        %865 = vmatprep.subr.mxu0 0.0
        %866 = vmatpush1.msra.mxu0 0.0
        %867 = vmatprep.subr.mxu0 0.0
        %868 = vmatpush1.msra.mxu0 0.0
        %869 = vmatprep.subr.mxu0 0.0
        %870 = vmatpush1.msra.mxu0 0.0
        %871 = vmatprep.subr.mxu0 0.0
        %872 = vmatpush1.msra.mxu0 0.0
        %873 = vmatprep.subr.mxu0 0.0
        %874 = vmatpush1.msra.mxu0 0.0
        %875 = vmatprep.subr.mxu0 0.0
        %876 = vmatpush1.msra.mxu0 0.0
        %877 = vmatprep.subr.mxu0 0.0
        %878 = vmatpush1.msra.mxu0 0.0
        %879 = vmatprep.subr.mxu0 0.0
        %880 = vmatpush1.msra.mxu0 0.0
        %881 = vmatprep.mubr.f32.mxu0 0.0
        %882 = vmatmul.mubr.f32.gmra.mrb[0].mxu0 %v801
        %v883 = vpop.f32.mrb[0].mxu0
        %v884 = vadd.f32 0.0, %v883
        %v885 = vpop.f32.mrb[0].mxu0
        %886 = vmatprep.mubr.f32.mxu0 0.0
        %887 = vmatmul.mubr.f32.gmra.mrb[0].mxu0 %v802
        %v888 = vpop.f32.mrb[0].mxu0
        %v889 = vadd.f32 0.0, %v888
        %v890 = vpop.f32.mrb[0].mxu0
        %891 = vmatprep.mubr.f32.mxu0 0.0
        %892 = vmatmul.mubr.f32.gmra.mrb[0].mxu0 %v803
        %v893 = vpop.f32.mrb[0].mxu0
        %v894 = vadd.f32 0.0, %v893
        %v895 = vpop.f32.mrb[0].mxu0
        %896 = vmatprep.mubr.f32.mxu0 0.0
        %897 = vmatmul.mubr.f32.gmra.mrb[0].mxu0 %v804
        %v898 = vpop.f32.mrb[0].mxu0
        %v899 = vadd.f32 0.0, %v898
        %v900 = vpop.f32.mrb[0].mxu0
        %901 = vmatprep.mubr.f32.mxu0 0.0
        %902 = vmatmul.mubr.f32.gmra.mrb[0].mxu0 %v805
        %v903 = vpop.f32.mrb[0].mxu0
        %v904 = vadd.f32 0.0, %v903
        %v905 = vpop.f32.mrb[0].mxu0
        %906 = vmatprep.mubr.f32.mxu0 0.0
        %907 = vmatmul.mubr.f32.gmra.mrb[0].mxu0 %v806
        %v908 = vpop.f32.mrb[0].mxu0
        %v909 = vadd.f32 0.0, %v908
        %v910 = vpop.f32.mrb[0].mxu0
        %911 = vmatprep.mubr.f32.mxu0 0.0
        %912 = vmatmul.mubr.f32.gmra.mrb[0].mxu0 %v807
        %v913 = vpop.f32.mrb[0].mxu0
        %v914 = vadd.f32 0.0, %v913
        %v915 = vpop.f32.mrb[0].mxu0
        %916 = vmatprep.mubr.f32.mxu0 0.0
        %917 = vmatmul.mubr.f32.gmra.mrb[0].mxu0 %v808
        %v918 = vpop.f32.mrb[0].mxu0
        %v919 = vadd.f32 0.0, %v918
        %v920 = vpop.f32.mrb[0].mxu0
        %921 = vmatprep.mubr.f32.mxu0 0.0
        %922 = vmatmul.mubr.f32.gmra.mrb[0].mxu0 %v809
        %v923 = vpop.f32.mrb[0].mxu0
        %v924 = vadd.f32 0.0, %v923
        %v925 = vpop.f32.mrb[0].mxu0
        %926 = vmatprep.mubr.f32.mxu0 0.0
        %927 = vmatmul.mubr.f32.gmra.mrb[0].mxu0 %v810
        %v928 = vpop.f32.mrb[0].mxu0
        %v929 = vadd.f32 0.0, %v928
        %v930 = vpop.f32.mrb[0].mxu0
        %931 = vmatprep.mubr.f32.mxu0 0.0
        %932 = vmatmul.mubr.f32.gmra.mrb[0].mxu0 %v811
        %v933 = vpop.f32.mrb[0].mxu0
        %v934 = vadd.f32 0.0, %v933
        %v935 = vpop.f32.mrb[0].mxu0
        %936 = vmatprep.mubr.f32.mxu0 0.0
        %937 = vmatmul.mubr.f32.gmra.mrb[0].mxu0 %v812
        %v938 = vpop.f32.mrb[0].mxu0
        %v939 = vadd.f32 0.0, %v938
        %v940 = vpop.f32.mrb[0].mxu0
        %941 = vmatprep.mubr.f32.mxu0 0.0
        %942 = vmatmul.mubr.f32.gmra.mrb[0].mxu0 %v813
        %v943 = vpop.f32.mrb[0].mxu0
        %v944 = vadd.f32 0.0, %v943
        %v945 = vpop.f32.mrb[0].mxu0
        %946 = vmatprep.mubr.f32.mxu0 0.0
        %947 = vmatmul.mubr.f32.gmra.mrb[0].mxu0 %v814
        %v948 = vpop.f32.mrb[0].mxu0
        %v949 = vadd.f32 0.0, %v948
        %v950 = vpop.f32.mrb[0].mxu0
        %951 = vmatprep.mubr.f32.mxu0 0.0
        %952 = vmatmul.mubr.f32.gmra.mrb[0].mxu0 %v815
        %v953 = vpop.f32.mrb[0].mxu0
        %v954 = vadd.f32 0.0, %v953
        %v955 = vpop.f32.mrb[0].mxu0
        %956 = vmatprep.mubr.f32.mxu0 0.0
        %957 = vmatmul.mubr.f32.gmra.mrb[0].mxu0 %v816
        %v958 = vpop.f32.mrb[0].mxu0
        %v959 = vadd.f32 0.0, %v958
        %v960 = vpop.f32.mrb[0].mxu0
        %961 = vdwg.mxu0
        %963 = vset.pattern.permute.xlu0 0
        %964 = vperm.xlu0 %963, %v590
        %v965 = vpop.permute.xlu0 %964
        %968 = vset.pattern.permute.xlu0 0
        %969 = vperm.xlu0 %968, %v591
        %v970 = vpop.permute.xlu0 %969
        %973 = vset.pattern.permute.xlu0 0
        %974 = vperm.xlu0 %973, %v592
        %v975 = vpop.permute.xlu0 %974
        %978 = vset.pattern.permute.xlu0 0
        %979 = vperm.xlu0 %978, %v593
        %v980 = vpop.permute.xlu0 %979
        %983 = vset.pattern.permute.xlu0 0
        %984 = vperm.xlu0 %983, %v594
        %v985 = vpop.permute.xlu0 %984
        %988 = vset.pattern.permute.xlu0 0
        %989 = vperm.xlu0 %988, %v595
        %v990 = vpop.permute.xlu0 %989
        %993 = vset.pattern.permute.xlu0 0
        %994 = vperm.xlu0 %993, %v596
        %v995 = vpop.permute.xlu0 %994
        %998 = vset.pattern.permute.xlu0 0
        %999 = vperm.xlu0 %998, %v597
        %v1000 = vpop.permute.xlu0 %999
        %1003 = vset.pattern.permute.xlu0 0
        %1004 = vperm.xlu0 %1003, %v598
        %v1005 = vpop.permute.xlu0 %1004
        %1008 = vset.pattern.permute.xlu0 0
        %1009 = vperm.xlu0 %1008, %v599
        %v1010 = vpop.permute.xlu0 %1009
        %1013 = vset.pattern.permute.xlu0 0
        %1014 = vperm.xlu0 %1013, %v600
        %v1015 = vpop.permute.xlu0 %1014
        %1018 = vset.pattern.permute.xlu0 0
        %1019 = vperm.xlu0 %1018, %v601
        %v1020 = vpop.permute.xlu0 %1019
        %1023 = vset.pattern.permute.xlu0 0
        %1024 = vperm.xlu0 %1023, %v602
        %v1025 = vpop.permute.xlu0 %1024
        %1028 = vset.pattern.permute.xlu0 0
        %1029 = vperm.xlu0 %1028, %v603
        %v1030 = vpop.permute.xlu0 %1029
        %1033 = vset.pattern.permute.xlu0 0
        %1034 = vperm.xlu0 %1033, %v604
        %v1035 = vpop.permute.xlu0 %1034
        %1038 = vset.pattern.permute.xlu0 0
        %1039 = vperm.xlu0 %1038, %v605
        %v1040 = vpop.permute.xlu0 %1039
        %v1042 = vadd.f32 %v965, %v884
        %v1043 = vadd.f32 %v970, %v889
        %v1044 = vadd.f32 %v975, %v894
        %v1045 = vadd.f32 %v980, %v899
        %v1046 = vadd.f32 %v985, %v904
        %v1047 = vadd.f32 %v990, %v909
        %v1048 = vadd.f32 %v995, %v914
        %v1049 = vadd.f32 %v1000, %v919
        %v1050 = vadd.f32 %v1005, %v924
        %v1051 = vadd.f32 %v1010, %v929
        %v1052 = vadd.f32 %v1015, %v934
        %v1053 = vadd.f32 %v1020, %v939
        %v1054 = vadd.f32 %v1025, %v944
        %v1055 = vadd.f32 %v1030, %v949
        %v1056 = vadd.f32 %v1035, %v954
        %v1057 = vadd.f32 %v1040, %v959
        %s1058 = scalar_lea.vmem %s4, 8
        %v1059 = vld [vmem:[%s1058] sm:$0xff]
        %1060 = vmatprep.subr.mxu0 0.0
        %1061 = vmatpush1.msra.mxu0 %v1059
        %1062 = vmatprep.subr.mxu0 0.0
        %1063 = vmatpush1.msra.mxu0 0.0
        %1064 = vmatprep.subr.mxu0 0.0
        %1065 = vmatpush1.msra.mxu0 0.0
        %1066 = vmatprep.subr.mxu0 0.0
        %1067 = vmatpush1.msra.mxu0 0.0
        %1068 = vmatprep.subr.mxu0 0.0
        %1069 = vmatpush1.msra.mxu0 0.0
        %1070 = vmatprep.subr.mxu0 0.0
        %1071 = vmatpush1.msra.mxu0 0.0
        %1072 = vmatprep.subr.mxu0 0.0
        %1073 = vmatpush1.msra.mxu0 0.0
        %1074 = vmatprep.subr.mxu0 0.0
        %1075 = vmatpush1.msra.mxu0 0.0
        %1076 = vmatprep.subr.mxu0 0.0
        %1077 = vmatpush1.msra.mxu0 0.0
        %1078 = vmatprep.subr.mxu0 0.0
        %1079 = vmatpush1.msra.mxu0 0.0
        %1080 = vmatprep.subr.mxu0 0.0
        %1081 = vmatpush1.msra.mxu0 0.0
        %1082 = vmatprep.subr.mxu0 0.0
        %1083 = vmatpush1.msra.mxu0 0.0
        %1084 = vmatprep.subr.mxu0 0.0
        %1085 = vmatpush1.msra.mxu0 0.0
        %1086 = vmatprep.subr.mxu0 0.0
        %1087 = vmatpush1.msra.mxu0 0.0
        %1088 = vmatprep.subr.mxu0 0.0
        %1089 = vmatpush1.msra.mxu0 0.0
        %1090 = vmatprep.subr.mxu0 0.0
        %1091 = vmatpush1.msra.mxu0 0.0
        %1092 = vmatprep.subr.mxu0 0.0
        %1093 = vmatpush1.msra.mxu0 0.0
        %1094 = vmatprep.subr.mxu0 0.0
        %1095 = vmatpush1.msra.mxu0 0.0
        %1096 = vmatprep.subr.mxu0 0.0
        %1097 = vmatpush1.msra.mxu0 0.0
        %1098 = vmatprep.subr.mxu0 0.0
        %1099 = vmatpush1.msra.mxu0 0.0
        %1100 = vmatprep.subr.mxu0 0.0
        %1101 = vmatpush1.msra.mxu0 0.0
        %1102 = vmatprep.subr.mxu0 0.0
        %1103 = vmatpush1.msra.mxu0 0.0
        %1104 = vmatprep.subr.mxu0 0.0
        %1105 = vmatpush1.msra.mxu0 0.0
        %1106 = vmatprep.subr.mxu0 0.0
        %1107 = vmatpush1.msra.mxu0 0.0
        %1108 = vmatprep.subr.mxu0 0.0
        %1109 = vmatpush1.msra.mxu0 0.0
        %1110 = vmatprep.subr.mxu0 0.0
        %1111 = vmatpush1.msra.mxu0 0.0
        %1112 = vmatprep.subr.mxu0 0.0
        %1113 = vmatpush1.msra.mxu0 0.0
        %1114 = vmatprep.subr.mxu0 0.0
        %1115 = vmatpush1.msra.mxu0 0.0
        %1116 = vmatprep.subr.mxu0 0.0
        %1117 = vmatpush1.msra.mxu0 0.0
        %1118 = vmatprep.subr.mxu0 0.0
        %1119 = vmatpush1.msra.mxu0 0.0
        %1120 = vmatprep.subr.mxu0 0.0
        %1121 = vmatpush1.msra.mxu0 0.0
        %1122 = vmatprep.subr.mxu0 0.0
        %1123 = vmatpush1.msra.mxu0 0.0
        %1124 = vmatprep.mubr.f32.mxu0 0.0
        %1125 = vmatmul.mubr.f32.gmra.mrb[0].mxu0 %v609
        %v1126 = vpop.f32.mrb[0].mxu0
        %v1127 = vadd.f32 0.0, %v1126
        %v1128 = vpop.f32.mrb[0].mxu0
        %1129 = vmatprep.mubr.f32.mxu0 0.0
        %1130 = vmatmul.mubr.f32.gmra.mrb[0].mxu0 %v612
        %v1131 = vpop.f32.mrb[0].mxu0
        %v1132 = vadd.f32 0.0, %v1131
        %v1133 = vpop.f32.mrb[0].mxu0
        %1134 = vmatprep.mubr.f32.mxu0 0.0
        %1135 = vmatmul.mubr.f32.gmra.mrb[0].mxu0 %v615
        %v1136 = vpop.f32.mrb[0].mxu0
        %v1137 = vadd.f32 0.0, %v1136
        %v1138 = vpop.f32.mrb[0].mxu0
        %1139 = vmatprep.mubr.f32.mxu0 0.0
        %1140 = vmatmul.mubr.f32.gmra.mrb[0].mxu0 %v618
        %v1141 = vpop.f32.mrb[0].mxu0
        %v1142 = vadd.f32 0.0, %v1141
        %v1143 = vpop.f32.mrb[0].mxu0
        %1144 = vmatprep.mubr.f32.mxu0 0.0
        %1145 = vmatmul.mubr.f32.gmra.mrb[0].mxu0 %v621
        %v1146 = vpop.f32.mrb[0].mxu0
        %v1147 = vadd.f32 0.0, %v1146
        %v1148 = vpop.f32.mrb[0].mxu0
        %1149 = vmatprep.mubr.f32.mxu0 0.0
        %1150 = vmatmul.mubr.f32.gmra.mrb[0].mxu0 %v624
        %v1151 = vpop.f32.mrb[0].mxu0
        %v1152 = vadd.f32 0.0, %v1151
        %v1153 = vpop.f32.mrb[0].mxu0
        %1154 = vmatprep.mubr.f32.mxu0 0.0
        %1155 = vmatmul.mubr.f32.gmra.mrb[0].mxu0 %v627
        %v1156 = vpop.f32.mrb[0].mxu0
        %v1157 = vadd.f32 0.0, %v1156
        %v1158 = vpop.f32.mrb[0].mxu0
        %1159 = vmatprep.mubr.f32.mxu0 0.0
        %1160 = vmatmul.mubr.f32.gmra.mrb[0].mxu0 %v630
        %v1161 = vpop.f32.mrb[0].mxu0
        %v1162 = vadd.f32 0.0, %v1161
        %v1163 = vpop.f32.mrb[0].mxu0
        %1164 = vmatprep.mubr.f32.mxu0 0.0
        %1165 = vmatmul.mubr.f32.gmra.mrb[0].mxu0 %v633
        %v1166 = vpop.f32.mrb[0].mxu0
        %v1167 = vadd.f32 0.0, %v1166
        %v1168 = vpop.f32.mrb[0].mxu0
        %1169 = vmatprep.mubr.f32.mxu0 0.0
        %1170 = vmatmul.mubr.f32.gmra.mrb[0].mxu0 %v636
        %v1171 = vpop.f32.mrb[0].mxu0
        %v1172 = vadd.f32 0.0, %v1171
        %v1173 = vpop.f32.mrb[0].mxu0
        %1174 = vmatprep.mubr.f32.mxu0 0.0
        %1175 = vmatmul.mubr.f32.gmra.mrb[0].mxu0 %v639
        %v1176 = vpop.f32.mrb[0].mxu0
        %v1177 = vadd.f32 0.0, %v1176
        %v1178 = vpop.f32.mrb[0].mxu0
        %1179 = vmatprep.mubr.f32.mxu0 0.0
        %1180 = vmatmul.mubr.f32.gmra.mrb[0].mxu0 %v642
        %v1181 = vpop.f32.mrb[0].mxu0
        %v1182 = vadd.f32 0.0, %v1181
        %v1183 = vpop.f32.mrb[0].mxu0
        %1184 = vmatprep.mubr.f32.mxu0 0.0
        %1185 = vmatmul.mubr.f32.gmra.mrb[0].mxu0 %v645
        %v1186 = vpop.f32.mrb[0].mxu0
        %v1187 = vadd.f32 0.0, %v1186
        %v1188 = vpop.f32.mrb[0].mxu0
        %1189 = vmatprep.mubr.f32.mxu0 0.0
        %1190 = vmatmul.mubr.f32.gmra.mrb[0].mxu0 %v648
        %v1191 = vpop.f32.mrb[0].mxu0
        %v1192 = vadd.f32 0.0, %v1191
        %v1193 = vpop.f32.mrb[0].mxu0
        %1194 = vmatprep.mubr.f32.mxu0 0.0
        %1195 = vmatmul.mubr.f32.gmra.mrb[0].mxu0 %v651
        %v1196 = vpop.f32.mrb[0].mxu0
        %v1197 = vadd.f32 0.0, %v1196
        %v1198 = vpop.f32.mrb[0].mxu0
        %1199 = vmatprep.mubr.f32.mxu0 0.0
        %1200 = vmatmul.mubr.f32.gmra.mrb[0].mxu0 %v654
        %v1201 = vpop.f32.mrb[0].mxu0
        %v1202 = vadd.f32 0.0, %v1201
        %v1203 = vpop.f32.mrb[0].mxu0
        %1204 = vdwg.mxu0
        %s1205 = scalar_lea.vmem %s7, 128
        %v1206 = vld [vmem:[%s1205] sm:$0xff]
        %v1207 = vld [vmem:[%s1205 + $0x8] sm:$0xff]
        %v1208 = vld [vmem:[%s1205 + $0x10] sm:$0xff]
        %v1209 = vld [vmem:[%s1205 + $0x18] sm:$0xff]
        %v1210 = vld [vmem:[%s1205 + $0x20] sm:$0xff]
        %v1211 = vld [vmem:[%s1205 + $0x28] sm:$0xff]
        %v1212 = vld [vmem:[%s1205 + $0x30] sm:$0xff]
        %v1213 = vld [vmem:[%s1205 + $0x38] sm:$0xff]
        %v1214 = vld [vmem:[%s1205 + $0x40] sm:$0xff]
        %v1215 = vld [vmem:[%s1205 + $0x48] sm:$0xff]
        %v1216 = vld [vmem:[%s1205 + $0x50] sm:$0xff]
        %v1217 = vld [vmem:[%s1205 + $0x58] sm:$0xff]
        %v1218 = vld [vmem:[%s1205 + $0x60] sm:$0xff]
        %v1219 = vld [vmem:[%s1205 + $0x68] sm:$0xff]
        %v1220 = vld [vmem:[%s1205 + $0x70] sm:$0xff]
        %v1221 = vld [vmem:[%s1205 + $0x78] sm:$0xff]
        %1222 = vmatprep.subr.mxu0 0.0
        %1223 = vmatpush1.msra.mxu0 %v1127
        %1224 = vmatprep.subr.mxu0 0.0
        %1225 = vmatpush1.msra.mxu0 %v1132
        %1226 = vmatprep.subr.mxu0 0.0
        %1227 = vmatpush1.msra.mxu0 %v1137
        %1228 = vmatprep.subr.mxu0 0.0
        %1229 = vmatpush1.msra.mxu0 %v1142
        %1230 = vmatprep.subr.mxu0 0.0
        %1231 = vmatpush1.msra.mxu0 %v1147
        %1232 = vmatprep.subr.mxu0 0.0
        %1233 = vmatpush1.msra.mxu0 %v1152
        %1234 = vmatprep.subr.mxu0 0.0
        %1235 = vmatpush1.msra.mxu0 %v1157
        %1236 = vmatprep.subr.mxu0 0.0
        %1237 = vmatpush1.msra.mxu0 %v1162
        %1238 = vmatprep.subr.mxu0 0.0
        %1239 = vmatpush1.msra.mxu0 %v1167
        %1240 = vmatprep.subr.mxu0 0.0
        %1241 = vmatpush1.msra.mxu0 %v1172
        %1242 = vmatprep.subr.mxu0 0.0
        %1243 = vmatpush1.msra.mxu0 %v1177
        %1244 = vmatprep.subr.mxu0 0.0
        %1245 = vmatpush1.msra.mxu0 %v1182
        %1246 = vmatprep.subr.mxu0 0.0
        %1247 = vmatpush1.msra.mxu0 %v1187
        %1248 = vmatprep.subr.mxu0 0.0
        %1249 = vmatpush1.msra.mxu0 %v1192
        %1250 = vmatprep.subr.mxu0 0.0
        %1251 = vmatpush1.msra.mxu0 %v1197
        %1252 = vmatprep.subr.mxu0 0.0
        %1253 = vmatpush1.msra.mxu0 %v1202
        %1254 = vmatprep.subr.mxu0 0.0
        %1255 = vmatpush1.msra.mxu0 0.0
        %1256 = vmatprep.subr.mxu0 0.0
        %1257 = vmatpush1.msra.mxu0 0.0
        %1258 = vmatprep.subr.mxu0 0.0
        %1259 = vmatpush1.msra.mxu0 0.0
        %1260 = vmatprep.subr.mxu0 0.0
        %1261 = vmatpush1.msra.mxu0 0.0
        %1262 = vmatprep.subr.mxu0 0.0
        %1263 = vmatpush1.msra.mxu0 0.0
        %1264 = vmatprep.subr.mxu0 0.0
        %1265 = vmatpush1.msra.mxu0 0.0
        %1266 = vmatprep.subr.mxu0 0.0
        %1267 = vmatpush1.msra.mxu0 0.0
        %1268 = vmatprep.subr.mxu0 0.0
        %1269 = vmatpush1.msra.mxu0 0.0
        %1270 = vmatprep.subr.mxu0 0.0
        %1271 = vmatpush1.msra.mxu0 0.0
        %1272 = vmatprep.subr.mxu0 0.0
        %1273 = vmatpush1.msra.mxu0 0.0
        %1274 = vmatprep.subr.mxu0 0.0
        %1275 = vmatpush1.msra.mxu0 0.0
        %1276 = vmatprep.subr.mxu0 0.0
        %1277 = vmatpush1.msra.mxu0 0.0
        %1278 = vmatprep.subr.mxu0 0.0
        %1279 = vmatpush1.msra.mxu0 0.0
        %1280 = vmatprep.subr.mxu0 0.0
        %1281 = vmatpush1.msra.mxu0 0.0
        %1282 = vmatprep.subr.mxu0 0.0
        %1283 = vmatpush1.msra.mxu0 0.0
        %1284 = vmatprep.subr.mxu0 0.0
        %1285 = vmatpush1.msra.mxu0 0.0
        %1286 = vmatprep.mubr.f32.mxu0 0.0
        %1287 = vmatmul.mubr.f32.gmra.mrb[0].mxu0 %v1206
        %v1288 = vpop.f32.mrb[0].mxu0
        %v1289 = vadd.f32 0.0, %v1288
        %v1290 = vpop.f32.mrb[0].mxu0
        %1291 = vmatprep.mubr.f32.mxu0 0.0
        %1292 = vmatmul.mubr.f32.gmra.mrb[0].mxu0 %v1207
        %v1293 = vpop.f32.mrb[0].mxu0
        %v1294 = vadd.f32 0.0, %v1293
        %v1295 = vpop.f32.mrb[0].mxu0
        %1296 = vmatprep.mubr.f32.mxu0 0.0
        %1297 = vmatmul.mubr.f32.gmra.mrb[0].mxu0 %v1208
        %v1298 = vpop.f32.mrb[0].mxu0
        %v1299 = vadd.f32 0.0, %v1298
        %v1300 = vpop.f32.mrb[0].mxu0
        %1301 = vmatprep.mubr.f32.mxu0 0.0
        %1302 = vmatmul.mubr.f32.gmra.mrb[0].mxu0 %v1209
        %v1303 = vpop.f32.mrb[0].mxu0
        %v1304 = vadd.f32 0.0, %v1303
        %v1305 = vpop.f32.mrb[0].mxu0
        %1306 = vmatprep.mubr.f32.mxu0 0.0
        %1307 = vmatmul.mubr.f32.gmra.mrb[0].mxu0 %v1210
        %v1308 = vpop.f32.mrb[0].mxu0
        %v1309 = vadd.f32 0.0, %v1308
        %v1310 = vpop.f32.mrb[0].mxu0
        %1311 = vmatprep.mubr.f32.mxu0 0.0
        %1312 = vmatmul.mubr.f32.gmra.mrb[0].mxu0 %v1211
        %v1313 = vpop.f32.mrb[0].mxu0
        %v1314 = vadd.f32 0.0, %v1313
        %v1315 = vpop.f32.mrb[0].mxu0
        %1316 = vmatprep.mubr.f32.mxu0 0.0
        %1317 = vmatmul.mubr.f32.gmra.mrb[0].mxu0 %v1212
        %v1318 = vpop.f32.mrb[0].mxu0
        %v1319 = vadd.f32 0.0, %v1318
        %v1320 = vpop.f32.mrb[0].mxu0
        %1321 = vmatprep.mubr.f32.mxu0 0.0
        %1322 = vmatmul.mubr.f32.gmra.mrb[0].mxu0 %v1213
        %v1323 = vpop.f32.mrb[0].mxu0
        %v1324 = vadd.f32 0.0, %v1323
        %v1325 = vpop.f32.mrb[0].mxu0
        %1326 = vmatprep.mubr.f32.mxu0 0.0
        %1327 = vmatmul.mubr.f32.gmra.mrb[0].mxu0 %v1214
        %v1328 = vpop.f32.mrb[0].mxu0
        %v1329 = vadd.f32 0.0, %v1328
        %v1330 = vpop.f32.mrb[0].mxu0
        %1331 = vmatprep.mubr.f32.mxu0 0.0
        %1332 = vmatmul.mubr.f32.gmra.mrb[0].mxu0 %v1215
        %v1333 = vpop.f32.mrb[0].mxu0
        %v1334 = vadd.f32 0.0, %v1333
        %v1335 = vpop.f32.mrb[0].mxu0
        %1336 = vmatprep.mubr.f32.mxu0 0.0
        %1337 = vmatmul.mubr.f32.gmra.mrb[0].mxu0 %v1216
        %v1338 = vpop.f32.mrb[0].mxu0
        %v1339 = vadd.f32 0.0, %v1338
        %v1340 = vpop.f32.mrb[0].mxu0
        %1341 = vmatprep.mubr.f32.mxu0 0.0
        %1342 = vmatmul.mubr.f32.gmra.mrb[0].mxu0 %v1217
        %v1343 = vpop.f32.mrb[0].mxu0
        %v1344 = vadd.f32 0.0, %v1343
        %v1345 = vpop.f32.mrb[0].mxu0
        %1346 = vmatprep.mubr.f32.mxu0 0.0
        %1347 = vmatmul.mubr.f32.gmra.mrb[0].mxu0 %v1218
        %v1348 = vpop.f32.mrb[0].mxu0
        %v1349 = vadd.f32 0.0, %v1348
        %v1350 = vpop.f32.mrb[0].mxu0
        %1351 = vmatprep.mubr.f32.mxu0 0.0
        %1352 = vmatmul.mubr.f32.gmra.mrb[0].mxu0 %v1219
        %v1353 = vpop.f32.mrb[0].mxu0
        %v1354 = vadd.f32 0.0, %v1353
        %v1355 = vpop.f32.mrb[0].mxu0
        %1356 = vmatprep.mubr.f32.mxu0 0.0
        %1357 = vmatmul.mubr.f32.gmra.mrb[0].mxu0 %v1220
        %v1358 = vpop.f32.mrb[0].mxu0
        %v1359 = vadd.f32 0.0, %v1358
        %v1360 = vpop.f32.mrb[0].mxu0
        %1361 = vmatprep.mubr.f32.mxu0 0.0
        %1362 = vmatmul.mubr.f32.gmra.mrb[0].mxu0 %v1221
        %v1363 = vpop.f32.mrb[0].mxu0
        %v1364 = vadd.f32 0.0, %v1363
        %v1365 = vpop.f32.mrb[0].mxu0
        %1366 = vdwg.mxu0
        %v1367 = vadd.f32 %v1042, %v1289
        %v1368 = vadd.f32 %v1043, %v1294
        %v1369 = vadd.f32 %v1044, %v1299
        %v1370 = vadd.f32 %v1045, %v1304
        %v1371 = vadd.f32 %v1046, %v1309
        %v1372 = vadd.f32 %v1047, %v1314
        %v1373 = vadd.f32 %v1048, %v1319
        %v1374 = vadd.f32 %v1049, %v1324
        %v1375 = vadd.f32 %v1050, %v1329
        %v1376 = vadd.f32 %v1051, %v1334
        %v1377 = vadd.f32 %v1052, %v1339
        %v1378 = vadd.f32 %v1053, %v1344
        %v1379 = vadd.f32 %v1054, %v1349
        %v1380 = vadd.f32 %v1055, %v1354
        %v1381 = vadd.f32 %v1056, %v1359
        %v1382 = vadd.f32 %v1057, %v1364
        %s1383 = scalar_lea.vmem %s4, 16
        %v1384 = vld [vmem:[%s1383] sm:$0xff]
        %1385 = vmatprep.subr.mxu0 0.0
        %1386 = vmatpush1.msra.mxu0 %v1384
        %1387 = vmatprep.subr.mxu0 0.0
        %1388 = vmatpush1.msra.mxu0 0.0
        %1389 = vmatprep.subr.mxu0 0.0
        %1390 = vmatpush1.msra.mxu0 0.0
        %1391 = vmatprep.subr.mxu0 0.0
        %1392 = vmatpush1.msra.mxu0 0.0
        %1393 = vmatprep.subr.mxu0 0.0
        %1394 = vmatpush1.msra.mxu0 0.0
        %1395 = vmatprep.subr.mxu0 0.0
        %1396 = vmatpush1.msra.mxu0 0.0
        %1397 = vmatprep.subr.mxu0 0.0
        %1398 = vmatpush1.msra.mxu0 0.0
        %1399 = vmatprep.subr.mxu0 0.0
        %1400 = vmatpush1.msra.mxu0 0.0
        %1401 = vmatprep.subr.mxu0 0.0
        %1402 = vmatpush1.msra.mxu0 0.0
        %1403 = vmatprep.subr.mxu0 0.0
        %1404 = vmatpush1.msra.mxu0 0.0
        %1405 = vmatprep.subr.mxu0 0.0
        %1406 = vmatpush1.msra.mxu0 0.0
        %1407 = vmatprep.subr.mxu0 0.0
        %1408 = vmatpush1.msra.mxu0 0.0
        %1409 = vmatprep.subr.mxu0 0.0
        %1410 = vmatpush1.msra.mxu0 0.0
        %1411 = vmatprep.subr.mxu0 0.0
        %1412 = vmatpush1.msra.mxu0 0.0
        %1413 = vmatprep.subr.mxu0 0.0
        %1414 = vmatpush1.msra.mxu0 0.0
        %1415 = vmatprep.subr.mxu0 0.0
        %1416 = vmatpush1.msra.mxu0 0.0
        %1417 = vmatprep.subr.mxu0 0.0
        %1418 = vmatpush1.msra.mxu0 0.0
        %1419 = vmatprep.subr.mxu0 0.0
        %1420 = vmatpush1.msra.mxu0 0.0
        %1421 = vmatprep.subr.mxu0 0.0
        %1422 = vmatpush1.msra.mxu0 0.0
        %1423 = vmatprep.subr.mxu0 0.0
        %1424 = vmatpush1.msra.mxu0 0.0
        %1425 = vmatprep.subr.mxu0 0.0
        %1426 = vmatpush1.msra.mxu0 0.0
        %1427 = vmatprep.subr.mxu0 0.0
        %1428 = vmatpush1.msra.mxu0 0.0
        %1429 = vmatprep.subr.mxu0 0.0
        %1430 = vmatpush1.msra.mxu0 0.0
        %1431 = vmatprep.subr.mxu0 0.0
        %1432 = vmatpush1.msra.mxu0 0.0
        %1433 = vmatprep.subr.mxu0 0.0
        %1434 = vmatpush1.msra.mxu0 0.0
        %1435 = vmatprep.subr.mxu0 0.0
        %1436 = vmatpush1.msra.mxu0 0.0
        %1437 = vmatprep.subr.mxu0 0.0
        %1438 = vmatpush1.msra.mxu0 0.0
        %1439 = vmatprep.subr.mxu0 0.0
        %1440 = vmatpush1.msra.mxu0 0.0
        %1441 = vmatprep.subr.mxu0 0.0
        %1442 = vmatpush1.msra.mxu0 0.0
        %1443 = vmatprep.subr.mxu0 0.0
        %1444 = vmatpush1.msra.mxu0 0.0
        %1445 = vmatprep.subr.mxu0 0.0
        %1446 = vmatpush1.msra.mxu0 0.0
        %1447 = vmatprep.subr.mxu0 0.0
        %1448 = vmatpush1.msra.mxu0 0.0
        %1449 = vmatprep.mubr.f32.mxu0 0.0
        %1450 = vmatmul.mubr.f32.gmra.mrb[0].mxu0 %v609
        %v1451 = vpop.f32.mrb[0].mxu0
        %v1452 = vadd.f32 0.0, %v1451
        %v1453 = vpop.f32.mrb[0].mxu0
        %1454 = vmatprep.mubr.f32.mxu0 0.0
        %1455 = vmatmul.mubr.f32.gmra.mrb[0].mxu0 %v612
        %v1456 = vpop.f32.mrb[0].mxu0
        %v1457 = vadd.f32 0.0, %v1456
        %v1458 = vpop.f32.mrb[0].mxu0
        %1459 = vmatprep.mubr.f32.mxu0 0.0
        %1460 = vmatmul.mubr.f32.gmra.mrb[0].mxu0 %v615
        %v1461 = vpop.f32.mrb[0].mxu0
        %v1462 = vadd.f32 0.0, %v1461
        %v1463 = vpop.f32.mrb[0].mxu0
        %1464 = vmatprep.mubr.f32.mxu0 0.0
        %1465 = vmatmul.mubr.f32.gmra.mrb[0].mxu0 %v618
        %v1466 = vpop.f32.mrb[0].mxu0
        %v1467 = vadd.f32 0.0, %v1466
        %v1468 = vpop.f32.mrb[0].mxu0
        %1469 = vmatprep.mubr.f32.mxu0 0.0
        %1470 = vmatmul.mubr.f32.gmra.mrb[0].mxu0 %v621
        %v1471 = vpop.f32.mrb[0].mxu0
        %v1472 = vadd.f32 0.0, %v1471
        %v1473 = vpop.f32.mrb[0].mxu0
        %1474 = vmatprep.mubr.f32.mxu0 0.0
        %1475 = vmatmul.mubr.f32.gmra.mrb[0].mxu0 %v624
        %v1476 = vpop.f32.mrb[0].mxu0
        %v1477 = vadd.f32 0.0, %v1476
        %v1478 = vpop.f32.mrb[0].mxu0
        %1479 = vmatprep.mubr.f32.mxu0 0.0
        %1480 = vmatmul.mubr.f32.gmra.mrb[0].mxu0 %v627
        %v1481 = vpop.f32.mrb[0].mxu0
        %v1482 = vadd.f32 0.0, %v1481
        %v1483 = vpop.f32.mrb[0].mxu0
        %1484 = vmatprep.mubr.f32.mxu0 0.0
        %1485 = vmatmul.mubr.f32.gmra.mrb[0].mxu0 %v630
        %v1486 = vpop.f32.mrb[0].mxu0
        %v1487 = vadd.f32 0.0, %v1486
        %v1488 = vpop.f32.mrb[0].mxu0
        %1489 = vmatprep.mubr.f32.mxu0 0.0
        %1490 = vmatmul.mubr.f32.gmra.mrb[0].mxu0 %v633
        %v1491 = vpop.f32.mrb[0].mxu0
        %v1492 = vadd.f32 0.0, %v1491
        %v1493 = vpop.f32.mrb[0].mxu0
        %1494 = vmatprep.mubr.f32.mxu0 0.0
        %1495 = vmatmul.mubr.f32.gmra.mrb[0].mxu0 %v636
        %v1496 = vpop.f32.mrb[0].mxu0
        %v1497 = vadd.f32 0.0, %v1496
        %v1498 = vpop.f32.mrb[0].mxu0
        %1499 = vmatprep.mubr.f32.mxu0 0.0
        %1500 = vmatmul.mubr.f32.gmra.mrb[0].mxu0 %v639
        %v1501 = vpop.f32.mrb[0].mxu0
        %v1502 = vadd.f32 0.0, %v1501
        %v1503 = vpop.f32.mrb[0].mxu0
        %1504 = vmatprep.mubr.f32.mxu0 0.0
        %1505 = vmatmul.mubr.f32.gmra.mrb[0].mxu0 %v642
        %v1506 = vpop.f32.mrb[0].mxu0
        %v1507 = vadd.f32 0.0, %v1506
        %v1508 = vpop.f32.mrb[0].mxu0
        %1509 = vmatprep.mubr.f32.mxu0 0.0
        %1510 = vmatmul.mubr.f32.gmra.mrb[0].mxu0 %v645
        %v1511 = vpop.f32.mrb[0].mxu0
        %v1512 = vadd.f32 0.0, %v1511
        %v1513 = vpop.f32.mrb[0].mxu0
        %1514 = vmatprep.mubr.f32.mxu0 0.0
        %1515 = vmatmul.mubr.f32.gmra.mrb[0].mxu0 %v648
        %v1516 = vpop.f32.mrb[0].mxu0
        %v1517 = vadd.f32 0.0, %v1516
        %v1518 = vpop.f32.mrb[0].mxu0
        %1519 = vmatprep.mubr.f32.mxu0 0.0
        %1520 = vmatmul.mubr.f32.gmra.mrb[0].mxu0 %v651
        %v1521 = vpop.f32.mrb[0].mxu0
        %v1522 = vadd.f32 0.0, %v1521
        %v1523 = vpop.f32.mrb[0].mxu0
        %1524 = vmatprep.mubr.f32.mxu0 0.0
        %1525 = vmatmul.mubr.f32.gmra.mrb[0].mxu0 %v654
        %v1526 = vpop.f32.mrb[0].mxu0
        %v1527 = vadd.f32 0.0, %v1526
        %v1528 = vpop.f32.mrb[0].mxu0
        %1529 = vdwg.mxu0
        %s1530 = scalar_lea.vmem %s7, 256
        %v1531 = vld [vmem:[%s1530] sm:$0xff]
        %v1532 = vld [vmem:[%s1530 + $0x8] sm:$0xff]
        %v1533 = vld [vmem:[%s1530 + $0x10] sm:$0xff]
        %v1534 = vld [vmem:[%s1530 + $0x18] sm:$0xff]
        %v1535 = vld [vmem:[%s1530 + $0x20] sm:$0xff]
        %v1536 = vld [vmem:[%s1530 + $0x28] sm:$0xff]
        %v1537 = vld [vmem:[%s1530 + $0x30] sm:$0xff]
        %v1538 = vld [vmem:[%s1530 + $0x38] sm:$0xff]
        %v1539 = vld [vmem:[%s1530 + $0x40] sm:$0xff]
        %v1540 = vld [vmem:[%s1530 + $0x48] sm:$0xff]
        %v1541 = vld [vmem:[%s1530 + $0x50] sm:$0xff]
        %v1542 = vld [vmem:[%s1530 + $0x58] sm:$0xff]
        %v1543 = vld [vmem:[%s1530 + $0x60] sm:$0xff]
        %v1544 = vld [vmem:[%s1530 + $0x68] sm:$0xff]
        %v1545 = vld [vmem:[%s1530 + $0x70] sm:$0xff]
        %v1546 = vld [vmem:[%s1530 + $0x78] sm:$0xff]
        %1547 = vmatprep.subr.mxu0 0.0
        %1548 = vmatpush1.msra.mxu0 %v1452
        %1549 = vmatprep.subr.mxu0 0.0
        %1550 = vmatpush1.msra.mxu0 %v1457
        %1551 = vmatprep.subr.mxu0 0.0
        %1552 = vmatpush1.msra.mxu0 %v1462
        %1553 = vmatprep.subr.mxu0 0.0
        %1554 = vmatpush1.msra.mxu0 %v1467
        %1555 = vmatprep.subr.mxu0 0.0
        %1556 = vmatpush1.msra.mxu0 %v1472
        %1557 = vmatprep.subr.mxu0 0.0
        %1558 = vmatpush1.msra.mxu0 %v1477
        %1559 = vmatprep.subr.mxu0 0.0
        %1560 = vmatpush1.msra.mxu0 %v1482
        %1561 = vmatprep.subr.mxu0 0.0
        %1562 = vmatpush1.msra.mxu0 %v1487
        %1563 = vmatprep.subr.mxu0 0.0
        %1564 = vmatpush1.msra.mxu0 %v1492
        %1565 = vmatprep.subr.mxu0 0.0
        %1566 = vmatpush1.msra.mxu0 %v1497
        %1567 = vmatprep.subr.mxu0 0.0
        %1568 = vmatpush1.msra.mxu0 %v1502
        %1569 = vmatprep.subr.mxu0 0.0
        %1570 = vmatpush1.msra.mxu0 %v1507
        %1571 = vmatprep.subr.mxu0 0.0
        %1572 = vmatpush1.msra.mxu0 %v1512
        %1573 = vmatprep.subr.mxu0 0.0
        %1574 = vmatpush1.msra.mxu0 %v1517
        %1575 = vmatprep.subr.mxu0 0.0
        %1576 = vmatpush1.msra.mxu0 %v1522
        %1577 = vmatprep.subr.mxu0 0.0
        %1578 = vmatpush1.msra.mxu0 %v1527
        %1579 = vmatprep.subr.mxu0 0.0
        %1580 = vmatpush1.msra.mxu0 0.0
        %1581 = vmatprep.subr.mxu0 0.0
        %1582 = vmatpush1.msra.mxu0 0.0
        %1583 = vmatprep.subr.mxu0 0.0
        %1584 = vmatpush1.msra.mxu0 0.0
        %1585 = vmatprep.subr.mxu0 0.0
        %1586 = vmatpush1.msra.mxu0 0.0
        %1587 = vmatprep.subr.mxu0 0.0
        %1588 = vmatpush1.msra.mxu0 0.0
        %1589 = vmatprep.subr.mxu0 0.0
        %1590 = vmatpush1.msra.mxu0 0.0
        %1591 = vmatprep.subr.mxu0 0.0
        %1592 = vmatpush1.msra.mxu0 0.0
        %1593 = vmatprep.subr.mxu0 0.0
        %1594 = vmatpush1.msra.mxu0 0.0
        %1595 = vmatprep.subr.mxu0 0.0
        %1596 = vmatpush1.msra.mxu0 0.0
        %1597 = vmatprep.subr.mxu0 0.0
        %1598 = vmatpush1.msra.mxu0 0.0
        %1599 = vmatprep.subr.mxu0 0.0
        %1600 = vmatpush1.msra.mxu0 0.0
        %1601 = vmatprep.subr.mxu0 0.0
        %1602 = vmatpush1.msra.mxu0 0.0
        %1603 = vmatprep.subr.mxu0 0.0
        %1604 = vmatpush1.msra.mxu0 0.0
        %1605 = vmatprep.subr.mxu0 0.0
        %1606 = vmatpush1.msra.mxu0 0.0
        %1607 = vmatprep.subr.mxu0 0.0
        %1608 = vmatpush1.msra.mxu0 0.0
        %1609 = vmatprep.subr.mxu0 0.0
        %1610 = vmatpush1.msra.mxu0 0.0
        %1611 = vmatprep.mubr.f32.mxu0 0.0
        %1612 = vmatmul.mubr.f32.gmra.mrb[0].mxu0 %v1531
        %v1613 = vpop.f32.mrb[0].mxu0
        %v1614 = vadd.f32 0.0, %v1613
        %v1615 = vpop.f32.mrb[0].mxu0
        %1616 = vmatprep.mubr.f32.mxu0 0.0
        %1617 = vmatmul.mubr.f32.gmra.mrb[0].mxu0 %v1532
        %v1618 = vpop.f32.mrb[0].mxu0
        %v1619 = vadd.f32 0.0, %v1618
        %v1620 = vpop.f32.mrb[0].mxu0
        %1621 = vmatprep.mubr.f32.mxu0 0.0
        %1622 = vmatmul.mubr.f32.gmra.mrb[0].mxu0 %v1533
        %v1623 = vpop.f32.mrb[0].mxu0
        %v1624 = vadd.f32 0.0, %v1623
        %v1625 = vpop.f32.mrb[0].mxu0
        %1626 = vmatprep.mubr.f32.mxu0 0.0
        %1627 = vmatmul.mubr.f32.gmra.mrb[0].mxu0 %v1534
        %v1628 = vpop.f32.mrb[0].mxu0
        %v1629 = vadd.f32 0.0, %v1628
        %v1630 = vpop.f32.mrb[0].mxu0
        %1631 = vmatprep.mubr.f32.mxu0 0.0
        %1632 = vmatmul.mubr.f32.gmra.mrb[0].mxu0 %v1535
        %v1633 = vpop.f32.mrb[0].mxu0
        %v1634 = vadd.f32 0.0, %v1633
        %v1635 = vpop.f32.mrb[0].mxu0
        %1636 = vmatprep.mubr.f32.mxu0 0.0
        %1637 = vmatmul.mubr.f32.gmra.mrb[0].mxu0 %v1536
        %v1638 = vpop.f32.mrb[0].mxu0
        %v1639 = vadd.f32 0.0, %v1638
        %v1640 = vpop.f32.mrb[0].mxu0
        %1641 = vmatprep.mubr.f32.mxu0 0.0
        %1642 = vmatmul.mubr.f32.gmra.mrb[0].mxu0 %v1537
        %v1643 = vpop.f32.mrb[0].mxu0
        %v1644 = vadd.f32 0.0, %v1643
        %v1645 = vpop.f32.mrb[0].mxu0
        %1646 = vmatprep.mubr.f32.mxu0 0.0
        %1647 = vmatmul.mubr.f32.gmra.mrb[0].mxu0 %v1538
        %v1648 = vpop.f32.mrb[0].mxu0
        %v1649 = vadd.f32 0.0, %v1648
        %v1650 = vpop.f32.mrb[0].mxu0
        %1651 = vmatprep.mubr.f32.mxu0 0.0
        %1652 = vmatmul.mubr.f32.gmra.mrb[0].mxu0 %v1539
        %v1653 = vpop.f32.mrb[0].mxu0
        %v1654 = vadd.f32 0.0, %v1653
        %v1655 = vpop.f32.mrb[0].mxu0
        %1656 = vmatprep.mubr.f32.mxu0 0.0
        %1657 = vmatmul.mubr.f32.gmra.mrb[0].mxu0 %v1540
        %v1658 = vpop.f32.mrb[0].mxu0
        %v1659 = vadd.f32 0.0, %v1658
        %v1660 = vpop.f32.mrb[0].mxu0
        %1661 = vmatprep.mubr.f32.mxu0 0.0
        %1662 = vmatmul.mubr.f32.gmra.mrb[0].mxu0 %v1541
        %v1663 = vpop.f32.mrb[0].mxu0
        %v1664 = vadd.f32 0.0, %v1663
        %v1665 = vpop.f32.mrb[0].mxu0
        %1666 = vmatprep.mubr.f32.mxu0 0.0
        %1667 = vmatmul.mubr.f32.gmra.mrb[0].mxu0 %v1542
        %v1668 = vpop.f32.mrb[0].mxu0
        %v1669 = vadd.f32 0.0, %v1668
        %v1670 = vpop.f32.mrb[0].mxu0
        %1671 = vmatprep.mubr.f32.mxu0 0.0
        %1672 = vmatmul.mubr.f32.gmra.mrb[0].mxu0 %v1543
        %v1673 = vpop.f32.mrb[0].mxu0
        %v1674 = vadd.f32 0.0, %v1673
        %v1675 = vpop.f32.mrb[0].mxu0
        %1676 = vmatprep.mubr.f32.mxu0 0.0
        %1677 = vmatmul.mubr.f32.gmra.mrb[0].mxu0 %v1544
        %v1678 = vpop.f32.mrb[0].mxu0
        %v1679 = vadd.f32 0.0, %v1678
        %v1680 = vpop.f32.mrb[0].mxu0
        %1681 = vmatprep.mubr.f32.mxu0 0.0
        %1682 = vmatmul.mubr.f32.gmra.mrb[0].mxu0 %v1545
        %v1683 = vpop.f32.mrb[0].mxu0
        %v1684 = vadd.f32 0.0, %v1683
        %v1685 = vpop.f32.mrb[0].mxu0
        %1686 = vmatprep.mubr.f32.mxu0 0.0
        %1687 = vmatmul.mubr.f32.gmra.mrb[0].mxu0 %v1546
        %v1688 = vpop.f32.mrb[0].mxu0
        %v1689 = vadd.f32 0.0, %v1688
        %v1690 = vpop.f32.mrb[0].mxu0
        %1691 = vdwg.mxu0
        %v1692 = vadd.f32 %v1367, %v1614
        %v1693 = vadd.f32 %v1368, %v1619
        %v1694 = vadd.f32 %v1369, %v1624
        %v1695 = vadd.f32 %v1370, %v1629
        %v1696 = vadd.f32 %v1371, %v1634
        %v1697 = vadd.f32 %v1372, %v1639
        %v1698 = vadd.f32 %v1373, %v1644
        %v1699 = vadd.f32 %v1374, %v1649
        %v1700 = vadd.f32 %v1375, %v1654
        %v1701 = vadd.f32 %v1376, %v1659
        %v1702 = vadd.f32 %v1377, %v1664
        %v1703 = vadd.f32 %v1378, %v1669
        %v1704 = vadd.f32 %v1379, %v1674
        %v1705 = vadd.f32 %v1380, %v1679
        %v1706 = vadd.f32 %v1381, %v1684
        %v1707 = vadd.f32 %v1382, %v1689
        %vm1708 = vcmp.ge.f32.partialorder %v1692, 0.0
        %vm1709 = vcmp.ge.f32.partialorder %v1693, 0.0
        %vm1710 = vcmp.ge.f32.partialorder %v1694, 0.0
        %vm1711 = vcmp.ge.f32.partialorder %v1695, 0.0
        %vm1712 = vcmp.ge.f32.partialorder %v1696, 0.0
        %vm1713 = vcmp.ge.f32.partialorder %v1697, 0.0
        %vm1714 = vcmp.ge.f32.partialorder %v1698, 0.0
        %vm1715 = vcmp.ge.f32.partialorder %v1699, 0.0
        %vm1716 = vcmp.ge.f32.partialorder %v1700, 0.0
        %vm1717 = vcmp.ge.f32.partialorder %v1701, 0.0
        %vm1718 = vcmp.ge.f32.partialorder %v1702, 0.0
        %vm1719 = vcmp.ge.f32.partialorder %v1703, 0.0
        %vm1720 = vcmp.ge.f32.partialorder %v1704, 0.0
        %vm1721 = vcmp.ge.f32.partialorder %v1705, 0.0
        %vm1722 = vcmp.ge.f32.partialorder %v1706, 0.0
        %vm1723 = vcmp.ge.f32.partialorder %v1707, 0.0
        %v1724 = vmul.f32 %v1692, 0.2
        %v1725 = vmul.f32 %v1693, 0.2
        %v1726 = vmul.f32 %v1694, 0.2
        %v1727 = vmul.f32 %v1695, 0.2
        %v1728 = vmul.f32 %v1696, 0.2
        %v1729 = vmul.f32 %v1697, 0.2
        %v1730 = vmul.f32 %v1698, 0.2
        %v1731 = vmul.f32 %v1699, 0.2
        %v1732 = vmul.f32 %v1700, 0.2
        %v1733 = vmul.f32 %v1701, 0.2
        %v1734 = vmul.f32 %v1702, 0.2
        %v1735 = vmul.f32 %v1703, 0.2
        %v1736 = vmul.f32 %v1704, 0.2
        %v1737 = vmul.f32 %v1705, 0.2
        %v1738 = vmul.f32 %v1706, 0.2
        %v1739 = vmul.f32 %v1707, 0.2
        %v1740 = vsel %vm1708, %v1692, %v1724
        %v1741 = vsel %vm1709, %v1693, %v1725
        %v1742 = vsel %vm1710, %v1694, %v1726
        %v1743 = vsel %vm1711, %v1695, %v1727
        %v1744 = vsel %vm1712, %v1696, %v1728
        %v1745 = vsel %vm1713, %v1697, %v1729
        %v1746 = vsel %vm1714, %v1698, %v1730
        %v1747 = vsel %vm1715, %v1699, %v1731
        %v1748 = vsel %vm1716, %v1700, %v1732
        %v1749 = vsel %vm1717, %v1701, %v1733
        %v1750 = vsel %vm1718, %v1702, %v1734
        %v1751 = vsel %vm1719, %v1703, %v1735
        %v1752 = vsel %vm1720, %v1704, %v1736
        %v1753 = vsel %vm1721, %v1705, %v1737
        %v1754 = vsel %vm1722, %v1706, %v1738
        %v1755 = vsel %vm1723, %v1707, %v1739
        %v1756 = vld [vmem:[%s10] sm:$0xff]
        %v1757 = vld [vmem:[%s10 + $0x8] sm:$0xff]
        %v1758 = vld [vmem:[%s10 + $0x10] sm:$0xff]
        %v1759 = vld [vmem:[%s10 + $0x18] sm:$0xff]
        %v1760 = vld [vmem:[%s10 + $0x20] sm:$0xff]
        %v1761 = vld [vmem:[%s10 + $0x28] sm:$0xff]
        %v1762 = vld [vmem:[%s10 + $0x30] sm:$0xff]
        %v1763 = vld [vmem:[%s10 + $0x38] sm:$0xff]
        %v1764 = vld [vmem:[%s10 + $0x40] sm:$0xff]
        %v1765 = vld [vmem:[%s10 + $0x48] sm:$0xff]
        %v1766 = vld [vmem:[%s10 + $0x50] sm:$0xff]
        %v1767 = vld [vmem:[%s10 + $0x58] sm:$0xff]
        %v1768 = vld [vmem:[%s10 + $0x60] sm:$0xff]
        %v1769 = vld [vmem:[%s10 + $0x68] sm:$0xff]
        %v1770 = vld [vmem:[%s10 + $0x70] sm:$0xff]
        %v1771 = vld [vmem:[%s10 + $0x78] sm:$0xff]
        %v1772 = vld [vmem:[%s5] sm:$0xff]
        %v1773 = vld [vmem:[%s5 + $0x8] sm:$0xff]
        %vm1774 = vcmask 130048
        %v1776 = vsel %vm1774, %v1740, 0
        %v1779 = vsel %vm1774, %v1741, 0
        %v1782 = vsel %vm1774, %v1742, 0
        %v1785 = vsel %vm1774, %v1743, 0
        %v1788 = vsel %vm1774, %v1744, 0
        %v1791 = vsel %vm1774, %v1745, 0
        %v1794 = vsel %vm1774, %v1746, 0
        %v1797 = vsel %vm1774, %v1747, 0
        %v1800 = vsel %vm1774, %v1748, 0
        %v1803 = vsel %vm1774, %v1749, 0
        %v1806 = vsel %vm1774, %v1750, 0
        %v1809 = vsel %vm1774, %v1751, 0
        %v1812 = vsel %vm1774, %v1752, 0
        %v1815 = vsel %vm1774, %v1753, 0
        %v1818 = vsel %vm1774, %v1754, 0
        %v1821 = vsel %vm1774, %v1755, 0
        %1823 = vmatprep.subr.mxu0 0.0
        %1824 = vmatpush1.msra.mxu0 %v1772
        %1825 = vmatprep.subr.mxu0 0.0
        %1826 = vmatpush1.msra.mxu0 %v1773
        %1827 = vmatprep.subr.mxu0 0.0
        %1828 = vmatpush1.msra.mxu0 0.0
        %1829 = vmatprep.subr.mxu0 0.0
        %1830 = vmatpush1.msra.mxu0 0.0
        %1831 = vmatprep.subr.mxu0 0.0
        %1832 = vmatpush1.msra.mxu0 0.0
        %1833 = vmatprep.subr.mxu0 0.0
        %1834 = vmatpush1.msra.mxu0 0.0
        %1835 = vmatprep.subr.mxu0 0.0
        %1836 = vmatpush1.msra.mxu0 0.0
        %1837 = vmatprep.subr.mxu0 0.0
        %1838 = vmatpush1.msra.mxu0 0.0
        %1839 = vmatprep.subr.mxu0 0.0
        %1840 = vmatpush1.msra.mxu0 0.0
        %1841 = vmatprep.subr.mxu0 0.0
        %1842 = vmatpush1.msra.mxu0 0.0
        %1843 = vmatprep.subr.mxu0 0.0
        %1844 = vmatpush1.msra.mxu0 0.0
        %1845 = vmatprep.subr.mxu0 0.0
        %1846 = vmatpush1.msra.mxu0 0.0
        %1847 = vmatprep.subr.mxu0 0.0
        %1848 = vmatpush1.msra.mxu0 0.0
        %1849 = vmatprep.subr.mxu0 0.0
        %1850 = vmatpush1.msra.mxu0 0.0
        %1851 = vmatprep.subr.mxu0 0.0
        %1852 = vmatpush1.msra.mxu0 0.0
        %1853 = vmatprep.subr.mxu0 0.0
        %1854 = vmatpush1.msra.mxu0 0.0
        %1855 = vmatprep.subr.mxu0 0.0
        %1856 = vmatpush1.msra.mxu0 0.0
        %1857 = vmatprep.subr.mxu0 0.0
        %1858 = vmatpush1.msra.mxu0 0.0
        %1859 = vmatprep.subr.mxu0 0.0
        %1860 = vmatpush1.msra.mxu0 0.0
        %1861 = vmatprep.subr.mxu0 0.0
        %1862 = vmatpush1.msra.mxu0 0.0
        %1863 = vmatprep.subr.mxu0 0.0
        %1864 = vmatpush1.msra.mxu0 0.0
        %1865 = vmatprep.subr.mxu0 0.0
        %1866 = vmatpush1.msra.mxu0 0.0
        %1867 = vmatprep.subr.mxu0 0.0
        %1868 = vmatpush1.msra.mxu0 0.0
        %1869 = vmatprep.subr.mxu0 0.0
        %1870 = vmatpush1.msra.mxu0 0.0
        %1871 = vmatprep.subr.mxu0 0.0
        %1872 = vmatpush1.msra.mxu0 0.0
        %1873 = vmatprep.subr.mxu0 0.0
        %1874 = vmatpush1.msra.mxu0 0.0
        %1875 = vmatprep.subr.mxu0 0.0
        %1876 = vmatpush1.msra.mxu0 0.0
        %1877 = vmatprep.subr.mxu0 0.0
        %1878 = vmatpush1.msra.mxu0 0.0
        %1879 = vmatprep.subr.mxu0 0.0
        %1880 = vmatpush1.msra.mxu0 0.0
        %1881 = vmatprep.subr.mxu0 0.0
        %1882 = vmatpush1.msra.mxu0 0.0
        %1883 = vmatprep.subr.mxu0 0.0
        %1884 = vmatpush1.msra.mxu0 0.0
        %1885 = vmatprep.subr.mxu0 0.0
        %1886 = vmatpush1.msra.mxu0 0.0
        %1887 = vmatprep.mubr.f32.mxu0 0.0
        %1888 = vmatmul.mubr.f32.gmra.mrb[0].mxu0 %v1776
        %v1889 = vpop.f32.mrb[0].mxu0
        %v1890 = vadd.f32 0.0, %v1889
        %v1891 = vpop.f32.mrb[0].mxu0
        %1892 = vmatprep.mubr.f32.mxu0 0.0
        %1893 = vmatmul.mubr.f32.gmra.mrb[0].mxu0 %v1779
        %v1894 = vpop.f32.mrb[0].mxu0
        %v1895 = vadd.f32 0.0, %v1894
        %v1896 = vpop.f32.mrb[0].mxu0
        %1897 = vmatprep.mubr.f32.mxu0 0.0
        %1898 = vmatmul.mubr.f32.gmra.mrb[0].mxu0 %v1782
        %v1899 = vpop.f32.mrb[0].mxu0
        %v1900 = vadd.f32 0.0, %v1899
        %v1901 = vpop.f32.mrb[0].mxu0
        %1902 = vmatprep.mubr.f32.mxu0 0.0
        %1903 = vmatmul.mubr.f32.gmra.mrb[0].mxu0 %v1785
        %v1904 = vpop.f32.mrb[0].mxu0
        %v1905 = vadd.f32 0.0, %v1904
        %v1906 = vpop.f32.mrb[0].mxu0
        %1907 = vmatprep.mubr.f32.mxu0 0.0
        %1908 = vmatmul.mubr.f32.gmra.mrb[0].mxu0 %v1788
        %v1909 = vpop.f32.mrb[0].mxu0
        %v1910 = vadd.f32 0.0, %v1909
        %v1911 = vpop.f32.mrb[0].mxu0
        %1912 = vmatprep.mubr.f32.mxu0 0.0
        %1913 = vmatmul.mubr.f32.gmra.mrb[0].mxu0 %v1791
        %v1914 = vpop.f32.mrb[0].mxu0
        %v1915 = vadd.f32 0.0, %v1914
        %v1916 = vpop.f32.mrb[0].mxu0
        %1917 = vmatprep.mubr.f32.mxu0 0.0
        %1918 = vmatmul.mubr.f32.gmra.mrb[0].mxu0 %v1794
        %v1919 = vpop.f32.mrb[0].mxu0
        %v1920 = vadd.f32 0.0, %v1919
        %v1921 = vpop.f32.mrb[0].mxu0
        %1922 = vmatprep.mubr.f32.mxu0 0.0
        %1923 = vmatmul.mubr.f32.gmra.mrb[0].mxu0 %v1797
        %v1924 = vpop.f32.mrb[0].mxu0
        %v1925 = vadd.f32 0.0, %v1924
        %v1926 = vpop.f32.mrb[0].mxu0
        %1927 = vmatprep.mubr.f32.mxu0 0.0
        %1928 = vmatmul.mubr.f32.gmra.mrb[0].mxu0 %v1800
        %v1929 = vpop.f32.mrb[0].mxu0
        %v1930 = vadd.f32 0.0, %v1929
        %v1931 = vpop.f32.mrb[0].mxu0
        %1932 = vmatprep.mubr.f32.mxu0 0.0
        %1933 = vmatmul.mubr.f32.gmra.mrb[0].mxu0 %v1803
        %v1934 = vpop.f32.mrb[0].mxu0
        %v1935 = vadd.f32 0.0, %v1934
        %v1936 = vpop.f32.mrb[0].mxu0
        %1937 = vmatprep.mubr.f32.mxu0 0.0
        %1938 = vmatmul.mubr.f32.gmra.mrb[0].mxu0 %v1806
        %v1939 = vpop.f32.mrb[0].mxu0
        %v1940 = vadd.f32 0.0, %v1939
        %v1941 = vpop.f32.mrb[0].mxu0
        %1942 = vmatprep.mubr.f32.mxu0 0.0
        %1943 = vmatmul.mubr.f32.gmra.mrb[0].mxu0 %v1809
        %v1944 = vpop.f32.mrb[0].mxu0
        %v1945 = vadd.f32 0.0, %v1944
        %v1946 = vpop.f32.mrb[0].mxu0
        %1947 = vmatprep.mubr.f32.mxu0 0.0
        %1948 = vmatmul.mubr.f32.gmra.mrb[0].mxu0 %v1812
        %v1949 = vpop.f32.mrb[0].mxu0
        %v1950 = vadd.f32 0.0, %v1949
        %v1951 = vpop.f32.mrb[0].mxu0
        %1952 = vmatprep.mubr.f32.mxu0 0.0
        %1953 = vmatmul.mubr.f32.gmra.mrb[0].mxu0 %v1815
        %v1954 = vpop.f32.mrb[0].mxu0
        %v1955 = vadd.f32 0.0, %v1954
        %v1956 = vpop.f32.mrb[0].mxu0
        %1957 = vmatprep.mubr.f32.mxu0 0.0
        %1958 = vmatmul.mubr.f32.gmra.mrb[0].mxu0 %v1818
        %v1959 = vpop.f32.mrb[0].mxu0
        %v1960 = vadd.f32 0.0, %v1959
        %v1961 = vpop.f32.mrb[0].mxu0
        %1962 = vmatprep.mubr.f32.mxu0 0.0
        %1963 = vmatmul.mubr.f32.gmra.mrb[0].mxu0 %v1821
        %v1964 = vpop.f32.mrb[0].mxu0
        %v1965 = vadd.f32 0.0, %v1964
        %v1966 = vpop.f32.mrb[0].mxu0
        %1967 = vdwg.mxu0
        %v1968 = vld [vmem:[%s9] sm:$0xff]
        %v1969 = vld [vmem:[%s9 + $0x8] sm:$0xff]
        %v1970 = vld [vmem:[%s9 + $0x10] sm:$0xff]
        %v1971 = vld [vmem:[%s9 + $0x18] sm:$0xff]
        %v1972 = vld [vmem:[%s9 + $0x20] sm:$0xff]
        %v1973 = vld [vmem:[%s9 + $0x28] sm:$0xff]
        %v1974 = vld [vmem:[%s9 + $0x30] sm:$0xff]
        %v1975 = vld [vmem:[%s9 + $0x38] sm:$0xff]
        %v1976 = vld [vmem:[%s9 + $0x40] sm:$0xff]
        %v1977 = vld [vmem:[%s9 + $0x48] sm:$0xff]
        %v1978 = vld [vmem:[%s9 + $0x50] sm:$0xff]
        %v1979 = vld [vmem:[%s9 + $0x58] sm:$0xff]
        %v1980 = vld [vmem:[%s9 + $0x60] sm:$0xff]
        %v1981 = vld [vmem:[%s9 + $0x68] sm:$0xff]
        %v1982 = vld [vmem:[%s9 + $0x70] sm:$0xff]
        %v1983 = vld [vmem:[%s9 + $0x78] sm:$0xff]
        %1984 = vmatprep.subr.mxu0 0.0
        %1985 = vmatpush1.msra.mxu0 %v1890
        %1986 = vmatprep.subr.mxu0 0.0
        %1987 = vmatpush1.msra.mxu0 %v1895
        %1988 = vmatprep.subr.mxu0 0.0
        %1989 = vmatpush1.msra.mxu0 %v1900
        %1990 = vmatprep.subr.mxu0 0.0
        %1991 = vmatpush1.msra.mxu0 %v1905
        %1992 = vmatprep.subr.mxu0 0.0
        %1993 = vmatpush1.msra.mxu0 %v1910
        %1994 = vmatprep.subr.mxu0 0.0
        %1995 = vmatpush1.msra.mxu0 %v1915
        %1996 = vmatprep.subr.mxu0 0.0
        %1997 = vmatpush1.msra.mxu0 %v1920
        %1998 = vmatprep.subr.mxu0 0.0
        %1999 = vmatpush1.msra.mxu0 %v1925
        %2000 = vmatprep.subr.mxu0 0.0
        %2001 = vmatpush1.msra.mxu0 %v1930
        %2002 = vmatprep.subr.mxu0 0.0
        %2003 = vmatpush1.msra.mxu0 %v1935
        %2004 = vmatprep.subr.mxu0 0.0
        %2005 = vmatpush1.msra.mxu0 %v1940
        %2006 = vmatprep.subr.mxu0 0.0
        %2007 = vmatpush1.msra.mxu0 %v1945
        %2008 = vmatprep.subr.mxu0 0.0
        %2009 = vmatpush1.msra.mxu0 %v1950
        %2010 = vmatprep.subr.mxu0 0.0
        %2011 = vmatpush1.msra.mxu0 %v1955
        %2012 = vmatprep.subr.mxu0 0.0
        %2013 = vmatpush1.msra.mxu0 %v1960
        %2014 = vmatprep.subr.mxu0 0.0
        %2015 = vmatpush1.msra.mxu0 %v1965
        %2016 = vmatprep.subr.mxu0 0.0
        %2017 = vmatpush1.msra.mxu0 0.0
        %2018 = vmatprep.subr.mxu0 0.0
        %2019 = vmatpush1.msra.mxu0 0.0
        %2020 = vmatprep.subr.mxu0 0.0
        %2021 = vmatpush1.msra.mxu0 0.0
        %2022 = vmatprep.subr.mxu0 0.0
        %2023 = vmatpush1.msra.mxu0 0.0
        %2024 = vmatprep.subr.mxu0 0.0
        %2025 = vmatpush1.msra.mxu0 0.0
        %2026 = vmatprep.subr.mxu0 0.0
        %2027 = vmatpush1.msra.mxu0 0.0
        %2028 = vmatprep.subr.mxu0 0.0
        %2029 = vmatpush1.msra.mxu0 0.0
        %2030 = vmatprep.subr.mxu0 0.0
        %2031 = vmatpush1.msra.mxu0 0.0
        %2032 = vmatprep.subr.mxu0 0.0
        %2033 = vmatpush1.msra.mxu0 0.0
        %2034 = vmatprep.subr.mxu0 0.0
        %2035 = vmatpush1.msra.mxu0 0.0
        %2036 = vmatprep.subr.mxu0 0.0
        %2037 = vmatpush1.msra.mxu0 0.0
        %2038 = vmatprep.subr.mxu0 0.0
        %2039 = vmatpush1.msra.mxu0 0.0
        %2040 = vmatprep.subr.mxu0 0.0
        %2041 = vmatpush1.msra.mxu0 0.0
        %2042 = vmatprep.subr.mxu0 0.0
        %2043 = vmatpush1.msra.mxu0 0.0
        %2044 = vmatprep.subr.mxu0 0.0
        %2045 = vmatpush1.msra.mxu0 0.0
        %2046 = vmatprep.subr.mxu0 0.0
        %2047 = vmatpush1.msra.mxu0 0.0
        %2048 = vmatprep.mubr.f32.mxu0 0.0
        %2049 = vmatmul.mubr.f32.gmra.mrb[0].mxu0 %v1968
        %v2050 = vpop.f32.mrb[0].mxu0
        %v2051 = vadd.f32 0.0, %v2050
        %v2052 = vpop.f32.mrb[0].mxu0
        %2053 = vmatprep.mubr.f32.mxu0 0.0
        %2054 = vmatmul.mubr.f32.gmra.mrb[0].mxu0 %v1969
        %v2055 = vpop.f32.mrb[0].mxu0
        %v2056 = vadd.f32 0.0, %v2055
        %v2057 = vpop.f32.mrb[0].mxu0
        %2058 = vmatprep.mubr.f32.mxu0 0.0
        %2059 = vmatmul.mubr.f32.gmra.mrb[0].mxu0 %v1970
        %v2060 = vpop.f32.mrb[0].mxu0
        %v2061 = vadd.f32 0.0, %v2060
        %v2062 = vpop.f32.mrb[0].mxu0
        %2063 = vmatprep.mubr.f32.mxu0 0.0
        %2064 = vmatmul.mubr.f32.gmra.mrb[0].mxu0 %v1971
        %v2065 = vpop.f32.mrb[0].mxu0
        %v2066 = vadd.f32 0.0, %v2065
        %v2067 = vpop.f32.mrb[0].mxu0
        %2068 = vmatprep.mubr.f32.mxu0 0.0
        %2069 = vmatmul.mubr.f32.gmra.mrb[0].mxu0 %v1972
        %v2070 = vpop.f32.mrb[0].mxu0
        %v2071 = vadd.f32 0.0, %v2070
        %v2072 = vpop.f32.mrb[0].mxu0
        %2073 = vmatprep.mubr.f32.mxu0 0.0
        %2074 = vmatmul.mubr.f32.gmra.mrb[0].mxu0 %v1973
        %v2075 = vpop.f32.mrb[0].mxu0
        %v2076 = vadd.f32 0.0, %v2075
        %v2077 = vpop.f32.mrb[0].mxu0
        %2078 = vmatprep.mubr.f32.mxu0 0.0
        %2079 = vmatmul.mubr.f32.gmra.mrb[0].mxu0 %v1974
        %v2080 = vpop.f32.mrb[0].mxu0
        %v2081 = vadd.f32 0.0, %v2080
        %v2082 = vpop.f32.mrb[0].mxu0
        %2083 = vmatprep.mubr.f32.mxu0 0.0
        %2084 = vmatmul.mubr.f32.gmra.mrb[0].mxu0 %v1975
        %v2085 = vpop.f32.mrb[0].mxu0
        %v2086 = vadd.f32 0.0, %v2085
        %v2087 = vpop.f32.mrb[0].mxu0
        %2088 = vmatprep.mubr.f32.mxu0 0.0
        %2089 = vmatmul.mubr.f32.gmra.mrb[0].mxu0 %v1976
        %v2090 = vpop.f32.mrb[0].mxu0
        %v2091 = vadd.f32 0.0, %v2090
        %v2092 = vpop.f32.mrb[0].mxu0
        %2093 = vmatprep.mubr.f32.mxu0 0.0
        %2094 = vmatmul.mubr.f32.gmra.mrb[0].mxu0 %v1977
        %v2095 = vpop.f32.mrb[0].mxu0
        %v2096 = vadd.f32 0.0, %v2095
        %v2097 = vpop.f32.mrb[0].mxu0
        %2098 = vmatprep.mubr.f32.mxu0 0.0
        %2099 = vmatmul.mubr.f32.gmra.mrb[0].mxu0 %v1978
        %v2100 = vpop.f32.mrb[0].mxu0
        %v2101 = vadd.f32 0.0, %v2100
        %v2102 = vpop.f32.mrb[0].mxu0
        %2103 = vmatprep.mubr.f32.mxu0 0.0
        %2104 = vmatmul.mubr.f32.gmra.mrb[0].mxu0 %v1979
        %v2105 = vpop.f32.mrb[0].mxu0
        %v2106 = vadd.f32 0.0, %v2105
        %v2107 = vpop.f32.mrb[0].mxu0
        %2108 = vmatprep.mubr.f32.mxu0 0.0
        %2109 = vmatmul.mubr.f32.gmra.mrb[0].mxu0 %v1980
        %v2110 = vpop.f32.mrb[0].mxu0
        %v2111 = vadd.f32 0.0, %v2110
        %v2112 = vpop.f32.mrb[0].mxu0
        %2113 = vmatprep.mubr.f32.mxu0 0.0
        %2114 = vmatmul.mubr.f32.gmra.mrb[0].mxu0 %v1981
        %v2115 = vpop.f32.mrb[0].mxu0
        %v2116 = vadd.f32 0.0, %v2115
        %v2117 = vpop.f32.mrb[0].mxu0
        %2118 = vmatprep.mubr.f32.mxu0 0.0
        %2119 = vmatmul.mubr.f32.gmra.mrb[0].mxu0 %v1982
        %v2120 = vpop.f32.mrb[0].mxu0
        %v2121 = vadd.f32 0.0, %v2120
        %v2122 = vpop.f32.mrb[0].mxu0
        %2123 = vmatprep.mubr.f32.mxu0 0.0
        %2124 = vmatmul.mubr.f32.gmra.mrb[0].mxu0 %v1983
        %v2125 = vpop.f32.mrb[0].mxu0
        %v2126 = vadd.f32 0.0, %v2125
        %v2127 = vpop.f32.mrb[0].mxu0
        %2128 = vdwg.mxu0
        %2130 = vset.pattern.permute.xlu0 0
        %2131 = vperm.xlu0 %2130, %v1756
        %v2132 = vpop.permute.xlu0 %2131
        %2135 = vset.pattern.permute.xlu0 0
        %2136 = vperm.xlu0 %2135, %v1757
        %v2137 = vpop.permute.xlu0 %2136
        %2140 = vset.pattern.permute.xlu0 0
        %2141 = vperm.xlu0 %2140, %v1758
        %v2142 = vpop.permute.xlu0 %2141
        %2145 = vset.pattern.permute.xlu0 0
        %2146 = vperm.xlu0 %2145, %v1759
        %v2147 = vpop.permute.xlu0 %2146
        %2150 = vset.pattern.permute.xlu0 0
        %2151 = vperm.xlu0 %2150, %v1760
        %v2152 = vpop.permute.xlu0 %2151
        %2155 = vset.pattern.permute.xlu0 0
        %2156 = vperm.xlu0 %2155, %v1761
        %v2157 = vpop.permute.xlu0 %2156
        %2160 = vset.pattern.permute.xlu0 0
        %2161 = vperm.xlu0 %2160, %v1762
        %v2162 = vpop.permute.xlu0 %2161
        %2165 = vset.pattern.permute.xlu0 0
        %2166 = vperm.xlu0 %2165, %v1763
        %v2167 = vpop.permute.xlu0 %2166
        %2170 = vset.pattern.permute.xlu0 0
        %2171 = vperm.xlu0 %2170, %v1764
        %v2172 = vpop.permute.xlu0 %2171
        %2175 = vset.pattern.permute.xlu0 0
        %2176 = vperm.xlu0 %2175, %v1765
        %v2177 = vpop.permute.xlu0 %2176
        %2180 = vset.pattern.permute.xlu0 0
        %2181 = vperm.xlu0 %2180, %v1766
        %v2182 = vpop.permute.xlu0 %2181
        %2185 = vset.pattern.permute.xlu0 0
        %2186 = vperm.xlu0 %2185, %v1767
        %v2187 = vpop.permute.xlu0 %2186
        %2190 = vset.pattern.permute.xlu0 0
        %2191 = vperm.xlu0 %2190, %v1768
        %v2192 = vpop.permute.xlu0 %2191
        %2195 = vset.pattern.permute.xlu0 0
        %2196 = vperm.xlu0 %2195, %v1769
        %v2197 = vpop.permute.xlu0 %2196
        %2200 = vset.pattern.permute.xlu0 0
        %2201 = vperm.xlu0 %2200, %v1770
        %v2202 = vpop.permute.xlu0 %2201
        %2205 = vset.pattern.permute.xlu0 0
        %2206 = vperm.xlu0 %2205, %v1771
        %v2207 = vpop.permute.xlu0 %2206
        %v2209 = vadd.f32 %v2132, %v2051
        %v2210 = vadd.f32 %v2137, %v2056
        %v2211 = vadd.f32 %v2142, %v2061
        %v2212 = vadd.f32 %v2147, %v2066
        %v2213 = vadd.f32 %v2152, %v2071
        %v2214 = vadd.f32 %v2157, %v2076
        %v2215 = vadd.f32 %v2162, %v2081
        %v2216 = vadd.f32 %v2167, %v2086
        %v2217 = vadd.f32 %v2172, %v2091
        %v2218 = vadd.f32 %v2177, %v2096
        %v2219 = vadd.f32 %v2182, %v2101
        %v2220 = vadd.f32 %v2187, %v2106
        %v2221 = vadd.f32 %v2192, %v2111
        %v2222 = vadd.f32 %v2197, %v2116
        %v2223 = vadd.f32 %v2202, %v2121
        %v2224 = vadd.f32 %v2207, %v2126
        %s2225 = scalar_lea.vmem %s5, 16
        %v2226 = vld [vmem:[%s2225] sm:$0xff]
        %v2227 = vld [vmem:[%s2225 + $0x8] sm:$0xff]
        %2228 = vmatprep.subr.mxu0 0.0
        %2229 = vmatpush1.msra.mxu0 %v2226
        %2230 = vmatprep.subr.mxu0 0.0
        %2231 = vmatpush1.msra.mxu0 %v2227
        %2232 = vmatprep.subr.mxu0 0.0
        %2233 = vmatpush1.msra.mxu0 0.0
        %2234 = vmatprep.subr.mxu0 0.0
        %2235 = vmatpush1.msra.mxu0 0.0
        %2236 = vmatprep.subr.mxu0 0.0
        %2237 = vmatpush1.msra.mxu0 0.0
        %2238 = vmatprep.subr.mxu0 0.0
        %2239 = vmatpush1.msra.mxu0 0.0
        %2240 = vmatprep.subr.mxu0 0.0
        %2241 = vmatpush1.msra.mxu0 0.0
        %2242 = vmatprep.subr.mxu0 0.0
        %2243 = vmatpush1.msra.mxu0 0.0
        %2244 = vmatprep.subr.mxu0 0.0
        %2245 = vmatpush1.msra.mxu0 0.0
        %2246 = vmatprep.subr.mxu0 0.0
        %2247 = vmatpush1.msra.mxu0 0.0
        %2248 = vmatprep.subr.mxu0 0.0
        %2249 = vmatpush1.msra.mxu0 0.0
        %2250 = vmatprep.subr.mxu0 0.0
        %2251 = vmatpush1.msra.mxu0 0.0
        %2252 = vmatprep.subr.mxu0 0.0
        %2253 = vmatpush1.msra.mxu0 0.0
        %2254 = vmatprep.subr.mxu0 0.0
        %2255 = vmatpush1.msra.mxu0 0.0
        %2256 = vmatprep.subr.mxu0 0.0
        %2257 = vmatpush1.msra.mxu0 0.0
        %2258 = vmatprep.subr.mxu0 0.0
        %2259 = vmatpush1.msra.mxu0 0.0
        %2260 = vmatprep.subr.mxu0 0.0
        %2261 = vmatpush1.msra.mxu0 0.0
        %2262 = vmatprep.subr.mxu0 0.0
        %2263 = vmatpush1.msra.mxu0 0.0
        %2264 = vmatprep.subr.mxu0 0.0
        %2265 = vmatpush1.msra.mxu0 0.0
        %2266 = vmatprep.subr.mxu0 0.0
        %2267 = vmatpush1.msra.mxu0 0.0
        %2268 = vmatprep.subr.mxu0 0.0
        %2269 = vmatpush1.msra.mxu0 0.0
        %2270 = vmatprep.subr.mxu0 0.0
        %2271 = vmatpush1.msra.mxu0 0.0
        %2272 = vmatprep.subr.mxu0 0.0
        %2273 = vmatpush1.msra.mxu0 0.0
        %2274 = vmatprep.subr.mxu0 0.0
        %2275 = vmatpush1.msra.mxu0 0.0
        %2276 = vmatprep.subr.mxu0 0.0
        %2277 = vmatpush1.msra.mxu0 0.0
        %2278 = vmatprep.subr.mxu0 0.0
        %2279 = vmatpush1.msra.mxu0 0.0
        %2280 = vmatprep.subr.mxu0 0.0
        %2281 = vmatpush1.msra.mxu0 0.0
        %2282 = vmatprep.subr.mxu0 0.0
        %2283 = vmatpush1.msra.mxu0 0.0
        %2284 = vmatprep.subr.mxu0 0.0
        %2285 = vmatpush1.msra.mxu0 0.0
        %2286 = vmatprep.subr.mxu0 0.0
        %2287 = vmatpush1.msra.mxu0 0.0
        %2288 = vmatprep.subr.mxu0 0.0
        %2289 = vmatpush1.msra.mxu0 0.0
        %2290 = vmatprep.subr.mxu0 0.0
        %2291 = vmatpush1.msra.mxu0 0.0
        %2292 = vmatprep.mubr.f32.mxu0 0.0
        %2293 = vmatmul.mubr.f32.gmra.mrb[0].mxu0 %v1776
        %v2294 = vpop.f32.mrb[0].mxu0
        %v2295 = vadd.f32 0.0, %v2294
        %v2296 = vpop.f32.mrb[0].mxu0
        %2297 = vmatprep.mubr.f32.mxu0 0.0
        %2298 = vmatmul.mubr.f32.gmra.mrb[0].mxu0 %v1779
        %v2299 = vpop.f32.mrb[0].mxu0
        %v2300 = vadd.f32 0.0, %v2299
        %v2301 = vpop.f32.mrb[0].mxu0
        %2302 = vmatprep.mubr.f32.mxu0 0.0
        %2303 = vmatmul.mubr.f32.gmra.mrb[0].mxu0 %v1782
        %v2304 = vpop.f32.mrb[0].mxu0
        %v2305 = vadd.f32 0.0, %v2304
        %v2306 = vpop.f32.mrb[0].mxu0
        %2307 = vmatprep.mubr.f32.mxu0 0.0
        %2308 = vmatmul.mubr.f32.gmra.mrb[0].mxu0 %v1785
        %v2309 = vpop.f32.mrb[0].mxu0
        %v2310 = vadd.f32 0.0, %v2309
        %v2311 = vpop.f32.mrb[0].mxu0
        %2312 = vmatprep.mubr.f32.mxu0 0.0
        %2313 = vmatmul.mubr.f32.gmra.mrb[0].mxu0 %v1788
        %v2314 = vpop.f32.mrb[0].mxu0
        %v2315 = vadd.f32 0.0, %v2314
        %v2316 = vpop.f32.mrb[0].mxu0
        %2317 = vmatprep.mubr.f32.mxu0 0.0
        %2318 = vmatmul.mubr.f32.gmra.mrb[0].mxu0 %v1791
        %v2319 = vpop.f32.mrb[0].mxu0
        %v2320 = vadd.f32 0.0, %v2319
        %v2321 = vpop.f32.mrb[0].mxu0
        %2322 = vmatprep.mubr.f32.mxu0 0.0
        %2323 = vmatmul.mubr.f32.gmra.mrb[0].mxu0 %v1794
        %v2324 = vpop.f32.mrb[0].mxu0
        %v2325 = vadd.f32 0.0, %v2324
        %v2326 = vpop.f32.mrb[0].mxu0
        %2327 = vmatprep.mubr.f32.mxu0 0.0
        %2328 = vmatmul.mubr.f32.gmra.mrb[0].mxu0 %v1797
        %v2329 = vpop.f32.mrb[0].mxu0
        %v2330 = vadd.f32 0.0, %v2329
        %v2331 = vpop.f32.mrb[0].mxu0
        %2332 = vmatprep.mubr.f32.mxu0 0.0
        %2333 = vmatmul.mubr.f32.gmra.mrb[0].mxu0 %v1800
        %v2334 = vpop.f32.mrb[0].mxu0
        %v2335 = vadd.f32 0.0, %v2334
        %v2336 = vpop.f32.mrb[0].mxu0
        %2337 = vmatprep.mubr.f32.mxu0 0.0
        %2338 = vmatmul.mubr.f32.gmra.mrb[0].mxu0 %v1803
        %v2339 = vpop.f32.mrb[0].mxu0
        %v2340 = vadd.f32 0.0, %v2339
        %v2341 = vpop.f32.mrb[0].mxu0
        %2342 = vmatprep.mubr.f32.mxu0 0.0
        %2343 = vmatmul.mubr.f32.gmra.mrb[0].mxu0 %v1806
        %v2344 = vpop.f32.mrb[0].mxu0
        %v2345 = vadd.f32 0.0, %v2344
        %v2346 = vpop.f32.mrb[0].mxu0
        %2347 = vmatprep.mubr.f32.mxu0 0.0
        %2348 = vmatmul.mubr.f32.gmra.mrb[0].mxu0 %v1809
        %v2349 = vpop.f32.mrb[0].mxu0
        %v2350 = vadd.f32 0.0, %v2349
        %v2351 = vpop.f32.mrb[0].mxu0
        %2352 = vmatprep.mubr.f32.mxu0 0.0
        %2353 = vmatmul.mubr.f32.gmra.mrb[0].mxu0 %v1812
        %v2354 = vpop.f32.mrb[0].mxu0
        %v2355 = vadd.f32 0.0, %v2354
        %v2356 = vpop.f32.mrb[0].mxu0
        %2357 = vmatprep.mubr.f32.mxu0 0.0
        %2358 = vmatmul.mubr.f32.gmra.mrb[0].mxu0 %v1815
        %v2359 = vpop.f32.mrb[0].mxu0
        %v2360 = vadd.f32 0.0, %v2359
        %v2361 = vpop.f32.mrb[0].mxu0
        %2362 = vmatprep.mubr.f32.mxu0 0.0
        %2363 = vmatmul.mubr.f32.gmra.mrb[0].mxu0 %v1818
        %v2364 = vpop.f32.mrb[0].mxu0
        %v2365 = vadd.f32 0.0, %v2364
        %v2366 = vpop.f32.mrb[0].mxu0
        %2367 = vmatprep.mubr.f32.mxu0 0.0
        %2368 = vmatmul.mubr.f32.gmra.mrb[0].mxu0 %v1821
        %v2369 = vpop.f32.mrb[0].mxu0
        %v2370 = vadd.f32 0.0, %v2369
        %v2371 = vpop.f32.mrb[0].mxu0
        %2372 = vdwg.mxu0
        %s2373 = scalar_lea.vmem %s9, 128
        %v2374 = vld [vmem:[%s2373] sm:$0xff]
        %v2375 = vld [vmem:[%s2373 + $0x8] sm:$0xff]
        %v2376 = vld [vmem:[%s2373 + $0x10] sm:$0xff]
        %v2377 = vld [vmem:[%s2373 + $0x18] sm:$0xff]
        %v2378 = vld [vmem:[%s2373 + $0x20] sm:$0xff]
        %v2379 = vld [vmem:[%s2373 + $0x28] sm:$0xff]
        %v2380 = vld [vmem:[%s2373 + $0x30] sm:$0xff]
        %v2381 = vld [vmem:[%s2373 + $0x38] sm:$0xff]
        %v2382 = vld [vmem:[%s2373 + $0x40] sm:$0xff]
        %v2383 = vld [vmem:[%s2373 + $0x48] sm:$0xff]
        %v2384 = vld [vmem:[%s2373 + $0x50] sm:$0xff]
        %v2385 = vld [vmem:[%s2373 + $0x58] sm:$0xff]
        %v2386 = vld [vmem:[%s2373 + $0x60] sm:$0xff]
        %v2387 = vld [vmem:[%s2373 + $0x68] sm:$0xff]
        %v2388 = vld [vmem:[%s2373 + $0x70] sm:$0xff]
        %v2389 = vld [vmem:[%s2373 + $0x78] sm:$0xff]
        %2390 = vmatprep.subr.mxu0 0.0
        %2391 = vmatpush1.msra.mxu0 %v2295
        %2392 = vmatprep.subr.mxu0 0.0
        %2393 = vmatpush1.msra.mxu0 %v2300
        %2394 = vmatprep.subr.mxu0 0.0
        %2395 = vmatpush1.msra.mxu0 %v2305
        %2396 = vmatprep.subr.mxu0 0.0
        %2397 = vmatpush1.msra.mxu0 %v2310
        %2398 = vmatprep.subr.mxu0 0.0
        %2399 = vmatpush1.msra.mxu0 %v2315
        %2400 = vmatprep.subr.mxu0 0.0
        %2401 = vmatpush1.msra.mxu0 %v2320
        %2402 = vmatprep.subr.mxu0 0.0
        %2403 = vmatpush1.msra.mxu0 %v2325
        %2404 = vmatprep.subr.mxu0 0.0
        %2405 = vmatpush1.msra.mxu0 %v2330
        %2406 = vmatprep.subr.mxu0 0.0
        %2407 = vmatpush1.msra.mxu0 %v2335
        %2408 = vmatprep.subr.mxu0 0.0
        %2409 = vmatpush1.msra.mxu0 %v2340
        %2410 = vmatprep.subr.mxu0 0.0
        %2411 = vmatpush1.msra.mxu0 %v2345
        %2412 = vmatprep.subr.mxu0 0.0
        %2413 = vmatpush1.msra.mxu0 %v2350
        %2414 = vmatprep.subr.mxu0 0.0
        %2415 = vmatpush1.msra.mxu0 %v2355
        %2416 = vmatprep.subr.mxu0 0.0
        %2417 = vmatpush1.msra.mxu0 %v2360
        %2418 = vmatprep.subr.mxu0 0.0
        %2419 = vmatpush1.msra.mxu0 %v2365
        %2420 = vmatprep.subr.mxu0 0.0
        %2421 = vmatpush1.msra.mxu0 %v2370
        %2422 = vmatprep.subr.mxu0 0.0
        %2423 = vmatpush1.msra.mxu0 0.0
        %2424 = vmatprep.subr.mxu0 0.0
        %2425 = vmatpush1.msra.mxu0 0.0
        %2426 = vmatprep.subr.mxu0 0.0
        %2427 = vmatpush1.msra.mxu0 0.0
        %2428 = vmatprep.subr.mxu0 0.0
        %2429 = vmatpush1.msra.mxu0 0.0
        %2430 = vmatprep.subr.mxu0 0.0
        %2431 = vmatpush1.msra.mxu0 0.0
        %2432 = vmatprep.subr.mxu0 0.0
        %2433 = vmatpush1.msra.mxu0 0.0
        %2434 = vmatprep.subr.mxu0 0.0
        %2435 = vmatpush1.msra.mxu0 0.0
        %2436 = vmatprep.subr.mxu0 0.0
        %2437 = vmatpush1.msra.mxu0 0.0
        %2438 = vmatprep.subr.mxu0 0.0
        %2439 = vmatpush1.msra.mxu0 0.0
        %2440 = vmatprep.subr.mxu0 0.0
        %2441 = vmatpush1.msra.mxu0 0.0
        %2442 = vmatprep.subr.mxu0 0.0
        %2443 = vmatpush1.msra.mxu0 0.0
        %2444 = vmatprep.subr.mxu0 0.0
        %2445 = vmatpush1.msra.mxu0 0.0
        %2446 = vmatprep.subr.mxu0 0.0
        %2447 = vmatpush1.msra.mxu0 0.0
        %2448 = vmatprep.subr.mxu0 0.0
        %2449 = vmatpush1.msra.mxu0 0.0
        %2450 = vmatprep.subr.mxu0 0.0
        %2451 = vmatpush1.msra.mxu0 0.0
        %2452 = vmatprep.subr.mxu0 0.0
        %2453 = vmatpush1.msra.mxu0 0.0
        %2454 = vmatprep.mubr.f32.mxu0 0.0
        %2455 = vmatmul.mubr.f32.gmra.mrb[0].mxu0 %v2374
        %v2456 = vpop.f32.mrb[0].mxu0
        %v2457 = vadd.f32 0.0, %v2456
        %v2458 = vpop.f32.mrb[0].mxu0
        %2459 = vmatprep.mubr.f32.mxu0 0.0
        %2460 = vmatmul.mubr.f32.gmra.mrb[0].mxu0 %v2375
        %v2461 = vpop.f32.mrb[0].mxu0
        %v2462 = vadd.f32 0.0, %v2461
        %v2463 = vpop.f32.mrb[0].mxu0
        %2464 = vmatprep.mubr.f32.mxu0 0.0
        %2465 = vmatmul.mubr.f32.gmra.mrb[0].mxu0 %v2376
        %v2466 = vpop.f32.mrb[0].mxu0
        %v2467 = vadd.f32 0.0, %v2466
        %v2468 = vpop.f32.mrb[0].mxu0
        %2469 = vmatprep.mubr.f32.mxu0 0.0
        %2470 = vmatmul.mubr.f32.gmra.mrb[0].mxu0 %v2377
        %v2471 = vpop.f32.mrb[0].mxu0
        %v2472 = vadd.f32 0.0, %v2471
        %v2473 = vpop.f32.mrb[0].mxu0
        %2474 = vmatprep.mubr.f32.mxu0 0.0
        %2475 = vmatmul.mubr.f32.gmra.mrb[0].mxu0 %v2378
        %v2476 = vpop.f32.mrb[0].mxu0
        %v2477 = vadd.f32 0.0, %v2476
        %v2478 = vpop.f32.mrb[0].mxu0
        %2479 = vmatprep.mubr.f32.mxu0 0.0
        %2480 = vmatmul.mubr.f32.gmra.mrb[0].mxu0 %v2379
        %v2481 = vpop.f32.mrb[0].mxu0
        %v2482 = vadd.f32 0.0, %v2481
        %v2483 = vpop.f32.mrb[0].mxu0
        %2484 = vmatprep.mubr.f32.mxu0 0.0
        %2485 = vmatmul.mubr.f32.gmra.mrb[0].mxu0 %v2380
        %v2486 = vpop.f32.mrb[0].mxu0
        %v2487 = vadd.f32 0.0, %v2486
        %v2488 = vpop.f32.mrb[0].mxu0
        %2489 = vmatprep.mubr.f32.mxu0 0.0
        %2490 = vmatmul.mubr.f32.gmra.mrb[0].mxu0 %v2381
        %v2491 = vpop.f32.mrb[0].mxu0
        %v2492 = vadd.f32 0.0, %v2491
        %v2493 = vpop.f32.mrb[0].mxu0
        %2494 = vmatprep.mubr.f32.mxu0 0.0
        %2495 = vmatmul.mubr.f32.gmra.mrb[0].mxu0 %v2382
        %v2496 = vpop.f32.mrb[0].mxu0
        %v2497 = vadd.f32 0.0, %v2496
        %v2498 = vpop.f32.mrb[0].mxu0
        %2499 = vmatprep.mubr.f32.mxu0 0.0
        %2500 = vmatmul.mubr.f32.gmra.mrb[0].mxu0 %v2383
        %v2501 = vpop.f32.mrb[0].mxu0
        %v2502 = vadd.f32 0.0, %v2501
        %v2503 = vpop.f32.mrb[0].mxu0
        %2504 = vmatprep.mubr.f32.mxu0 0.0
        %2505 = vmatmul.mubr.f32.gmra.mrb[0].mxu0 %v2384
        %v2506 = vpop.f32.mrb[0].mxu0
        %v2507 = vadd.f32 0.0, %v2506
        %v2508 = vpop.f32.mrb[0].mxu0
        %2509 = vmatprep.mubr.f32.mxu0 0.0
        %2510 = vmatmul.mubr.f32.gmra.mrb[0].mxu0 %v2385
        %v2511 = vpop.f32.mrb[0].mxu0
        %v2512 = vadd.f32 0.0, %v2511
        %v2513 = vpop.f32.mrb[0].mxu0
        %2514 = vmatprep.mubr.f32.mxu0 0.0
        %2515 = vmatmul.mubr.f32.gmra.mrb[0].mxu0 %v2386
        %v2516 = vpop.f32.mrb[0].mxu0
        %v2517 = vadd.f32 0.0, %v2516
        %v2518 = vpop.f32.mrb[0].mxu0
        %2519 = vmatprep.mubr.f32.mxu0 0.0
        %2520 = vmatmul.mubr.f32.gmra.mrb[0].mxu0 %v2387
        %v2521 = vpop.f32.mrb[0].mxu0
        %v2522 = vadd.f32 0.0, %v2521
        %v2523 = vpop.f32.mrb[0].mxu0
        %2524 = vmatprep.mubr.f32.mxu0 0.0
        %2525 = vmatmul.mubr.f32.gmra.mrb[0].mxu0 %v2388
        %v2526 = vpop.f32.mrb[0].mxu0
        %v2527 = vadd.f32 0.0, %v2526
        %v2528 = vpop.f32.mrb[0].mxu0
        %2529 = vmatprep.mubr.f32.mxu0 0.0
        %2530 = vmatmul.mubr.f32.gmra.mrb[0].mxu0 %v2389
        %v2531 = vpop.f32.mrb[0].mxu0
        %v2532 = vadd.f32 0.0, %v2531
        %v2533 = vpop.f32.mrb[0].mxu0
        %2534 = vdwg.mxu0
        %v2535 = vadd.f32 %v2209, %v2457
        %v2536 = vadd.f32 %v2210, %v2462
        %v2537 = vadd.f32 %v2211, %v2467
        %v2538 = vadd.f32 %v2212, %v2472
        %v2539 = vadd.f32 %v2213, %v2477
        %v2540 = vadd.f32 %v2214, %v2482
        %v2541 = vadd.f32 %v2215, %v2487
        %v2542 = vadd.f32 %v2216, %v2492
        %v2543 = vadd.f32 %v2217, %v2497
        %v2544 = vadd.f32 %v2218, %v2502
        %v2545 = vadd.f32 %v2219, %v2507
        %v2546 = vadd.f32 %v2220, %v2512
        %v2547 = vadd.f32 %v2221, %v2517
        %v2548 = vadd.f32 %v2222, %v2522
        %v2549 = vadd.f32 %v2223, %v2527
        %v2550 = vadd.f32 %v2224, %v2532
        %s2551 = scalar_lea.vmem %s5, 32
        %v2552 = vld [vmem:[%s2551] sm:$0xff]
        %v2553 = vld [vmem:[%s2551 + $0x8] sm:$0xff]
        %2554 = vmatprep.subr.mxu0 0.0
        %2555 = vmatpush1.msra.mxu0 %v2552
        %2556 = vmatprep.subr.mxu0 0.0
        %2557 = vmatpush1.msra.mxu0 %v2553
        %2558 = vmatprep.subr.mxu0 0.0
        %2559 = vmatpush1.msra.mxu0 0.0
        %2560 = vmatprep.subr.mxu0 0.0
        %2561 = vmatpush1.msra.mxu0 0.0
        %2562 = vmatprep.subr.mxu0 0.0
        %2563 = vmatpush1.msra.mxu0 0.0
        %2564 = vmatprep.subr.mxu0 0.0
        %2565 = vmatpush1.msra.mxu0 0.0
        %2566 = vmatprep.subr.mxu0 0.0
        %2567 = vmatpush1.msra.mxu0 0.0
        %2568 = vmatprep.subr.mxu0 0.0
        %2569 = vmatpush1.msra.mxu0 0.0
        %2570 = vmatprep.subr.mxu0 0.0
        %2571 = vmatpush1.msra.mxu0 0.0
        %2572 = vmatprep.subr.mxu0 0.0
        %2573 = vmatpush1.msra.mxu0 0.0
        %2574 = vmatprep.subr.mxu0 0.0
        %2575 = vmatpush1.msra.mxu0 0.0
        %2576 = vmatprep.subr.mxu0 0.0
        %2577 = vmatpush1.msra.mxu0 0.0
        %2578 = vmatprep.subr.mxu0 0.0
        %2579 = vmatpush1.msra.mxu0 0.0
        %2580 = vmatprep.subr.mxu0 0.0
        %2581 = vmatpush1.msra.mxu0 0.0
        %2582 = vmatprep.subr.mxu0 0.0
        %2583 = vmatpush1.msra.mxu0 0.0
        %2584 = vmatprep.subr.mxu0 0.0
        %2585 = vmatpush1.msra.mxu0 0.0
        %2586 = vmatprep.subr.mxu0 0.0
        %2587 = vmatpush1.msra.mxu0 0.0
        %2588 = vmatprep.subr.mxu0 0.0
        %2589 = vmatpush1.msra.mxu0 0.0
        %2590 = vmatprep.subr.mxu0 0.0
        %2591 = vmatpush1.msra.mxu0 0.0
        %2592 = vmatprep.subr.mxu0 0.0
        %2593 = vmatpush1.msra.mxu0 0.0
        %2594 = vmatprep.subr.mxu0 0.0
        %2595 = vmatpush1.msra.mxu0 0.0
        %2596 = vmatprep.subr.mxu0 0.0
        %2597 = vmatpush1.msra.mxu0 0.0
        %2598 = vmatprep.subr.mxu0 0.0
        %2599 = vmatpush1.msra.mxu0 0.0
        %2600 = vmatprep.subr.mxu0 0.0
        %2601 = vmatpush1.msra.mxu0 0.0
        %2602 = vmatprep.subr.mxu0 0.0
        %2603 = vmatpush1.msra.mxu0 0.0
        %2604 = vmatprep.subr.mxu0 0.0
        %2605 = vmatpush1.msra.mxu0 0.0
        %2606 = vmatprep.subr.mxu0 0.0
        %2607 = vmatpush1.msra.mxu0 0.0
        %2608 = vmatprep.subr.mxu0 0.0
        %2609 = vmatpush1.msra.mxu0 0.0
        %2610 = vmatprep.subr.mxu0 0.0
        %2611 = vmatpush1.msra.mxu0 0.0
        %2612 = vmatprep.subr.mxu0 0.0
        %2613 = vmatpush1.msra.mxu0 0.0
        %2614 = vmatprep.subr.mxu0 0.0
        %2615 = vmatpush1.msra.mxu0 0.0
        %2616 = vmatprep.subr.mxu0 0.0
        %2617 = vmatpush1.msra.mxu0 0.0
        %2618 = vmatprep.mubr.f32.mxu0 0.0
        %2619 = vmatmul.mubr.f32.gmra.mrb[0].mxu0 %v1776
        %v2620 = vpop.f32.mrb[0].mxu0
        %v2621 = vadd.f32 0.0, %v2620
        %v2622 = vpop.f32.mrb[0].mxu0
        %2623 = vmatprep.mubr.f32.mxu0 0.0
        %2624 = vmatmul.mubr.f32.gmra.mrb[0].mxu0 %v1779
        %v2625 = vpop.f32.mrb[0].mxu0
        %v2626 = vadd.f32 0.0, %v2625
        %v2627 = vpop.f32.mrb[0].mxu0
        %2628 = vmatprep.mubr.f32.mxu0 0.0
        %2629 = vmatmul.mubr.f32.gmra.mrb[0].mxu0 %v1782
        %v2630 = vpop.f32.mrb[0].mxu0
        %v2631 = vadd.f32 0.0, %v2630
        %v2632 = vpop.f32.mrb[0].mxu0
        %2633 = vmatprep.mubr.f32.mxu0 0.0
        %2634 = vmatmul.mubr.f32.gmra.mrb[0].mxu0 %v1785
        %v2635 = vpop.f32.mrb[0].mxu0
        %v2636 = vadd.f32 0.0, %v2635
        %v2637 = vpop.f32.mrb[0].mxu0
        %2638 = vmatprep.mubr.f32.mxu0 0.0
        %2639 = vmatmul.mubr.f32.gmra.mrb[0].mxu0 %v1788
        %v2640 = vpop.f32.mrb[0].mxu0
        %v2641 = vadd.f32 0.0, %v2640
        %v2642 = vpop.f32.mrb[0].mxu0
        %2643 = vmatprep.mubr.f32.mxu0 0.0
        %2644 = vmatmul.mubr.f32.gmra.mrb[0].mxu0 %v1791
        %v2645 = vpop.f32.mrb[0].mxu0
        %v2646 = vadd.f32 0.0, %v2645
        %v2647 = vpop.f32.mrb[0].mxu0
        %2648 = vmatprep.mubr.f32.mxu0 0.0
        %2649 = vmatmul.mubr.f32.gmra.mrb[0].mxu0 %v1794
        %v2650 = vpop.f32.mrb[0].mxu0
        %v2651 = vadd.f32 0.0, %v2650
        %v2652 = vpop.f32.mrb[0].mxu0
        %2653 = vmatprep.mubr.f32.mxu0 0.0
        %2654 = vmatmul.mubr.f32.gmra.mrb[0].mxu0 %v1797
        %v2655 = vpop.f32.mrb[0].mxu0
        %v2656 = vadd.f32 0.0, %v2655
        %v2657 = vpop.f32.mrb[0].mxu0
        %2658 = vmatprep.mubr.f32.mxu0 0.0
        %2659 = vmatmul.mubr.f32.gmra.mrb[0].mxu0 %v1800
        %v2660 = vpop.f32.mrb[0].mxu0
        %v2661 = vadd.f32 0.0, %v2660
        %v2662 = vpop.f32.mrb[0].mxu0
        %2663 = vmatprep.mubr.f32.mxu0 0.0
        %2664 = vmatmul.mubr.f32.gmra.mrb[0].mxu0 %v1803
        %v2665 = vpop.f32.mrb[0].mxu0
        %v2666 = vadd.f32 0.0, %v2665
        %v2667 = vpop.f32.mrb[0].mxu0
        %2668 = vmatprep.mubr.f32.mxu0 0.0
        %2669 = vmatmul.mubr.f32.gmra.mrb[0].mxu0 %v1806
        %v2670 = vpop.f32.mrb[0].mxu0
        %v2671 = vadd.f32 0.0, %v2670
        %v2672 = vpop.f32.mrb[0].mxu0
        %2673 = vmatprep.mubr.f32.mxu0 0.0
        %2674 = vmatmul.mubr.f32.gmra.mrb[0].mxu0 %v1809
        %v2675 = vpop.f32.mrb[0].mxu0
        %v2676 = vadd.f32 0.0, %v2675
        %v2677 = vpop.f32.mrb[0].mxu0
        %2678 = vmatprep.mubr.f32.mxu0 0.0
        %2679 = vmatmul.mubr.f32.gmra.mrb[0].mxu0 %v1812
        %v2680 = vpop.f32.mrb[0].mxu0
        %v2681 = vadd.f32 0.0, %v2680
        %v2682 = vpop.f32.mrb[0].mxu0
        %2683 = vmatprep.mubr.f32.mxu0 0.0
        %2684 = vmatmul.mubr.f32.gmra.mrb[0].mxu0 %v1815
        %v2685 = vpop.f32.mrb[0].mxu0
        %v2686 = vadd.f32 0.0, %v2685
        %v2687 = vpop.f32.mrb[0].mxu0
        %2688 = vmatprep.mubr.f32.mxu0 0.0
        %2689 = vmatmul.mubr.f32.gmra.mrb[0].mxu0 %v1818
        %v2690 = vpop.f32.mrb[0].mxu0
        %v2691 = vadd.f32 0.0, %v2690
        %v2692 = vpop.f32.mrb[0].mxu0
        %2693 = vmatprep.mubr.f32.mxu0 0.0
        %2694 = vmatmul.mubr.f32.gmra.mrb[0].mxu0 %v1821
        %v2695 = vpop.f32.mrb[0].mxu0
        %v2696 = vadd.f32 0.0, %v2695
        %v2697 = vpop.f32.mrb[0].mxu0
        %2698 = vdwg.mxu0
        %s2699 = scalar_lea.vmem %s9, 256
        %v2700 = vld [vmem:[%s2699] sm:$0xff]
        %v2701 = vld [vmem:[%s2699 + $0x8] sm:$0xff]
        %v2702 = vld [vmem:[%s2699 + $0x10] sm:$0xff]
        %v2703 = vld [vmem:[%s2699 + $0x18] sm:$0xff]
        %v2704 = vld [vmem:[%s2699 + $0x20] sm:$0xff]
        %v2705 = vld [vmem:[%s2699 + $0x28] sm:$0xff]
        %v2706 = vld [vmem:[%s2699 + $0x30] sm:$0xff]
        %v2707 = vld [vmem:[%s2699 + $0x38] sm:$0xff]
        %v2708 = vld [vmem:[%s2699 + $0x40] sm:$0xff]
        %v2709 = vld [vmem:[%s2699 + $0x48] sm:$0xff]
        %v2710 = vld [vmem:[%s2699 + $0x50] sm:$0xff]
        %v2711 = vld [vmem:[%s2699 + $0x58] sm:$0xff]
        %v2712 = vld [vmem:[%s2699 + $0x60] sm:$0xff]
        %v2713 = vld [vmem:[%s2699 + $0x68] sm:$0xff]
        %v2714 = vld [vmem:[%s2699 + $0x70] sm:$0xff]
        %v2715 = vld [vmem:[%s2699 + $0x78] sm:$0xff]
        %2716 = vmatprep.subr.mxu0 0.0
        %2717 = vmatpush1.msra.mxu0 %v2621
        %2718 = vmatprep.subr.mxu0 0.0
        %2719 = vmatpush1.msra.mxu0 %v2626
        %2720 = vmatprep.subr.mxu0 0.0
        %2721 = vmatpush1.msra.mxu0 %v2631
        %2722 = vmatprep.subr.mxu0 0.0
        %2723 = vmatpush1.msra.mxu0 %v2636
        %2724 = vmatprep.subr.mxu0 0.0
        %2725 = vmatpush1.msra.mxu0 %v2641
        %2726 = vmatprep.subr.mxu0 0.0
        %2727 = vmatpush1.msra.mxu0 %v2646
        %2728 = vmatprep.subr.mxu0 0.0
        %2729 = vmatpush1.msra.mxu0 %v2651
        %2730 = vmatprep.subr.mxu0 0.0
        %2731 = vmatpush1.msra.mxu0 %v2656
        %2732 = vmatprep.subr.mxu0 0.0
        %2733 = vmatpush1.msra.mxu0 %v2661
        %2734 = vmatprep.subr.mxu0 0.0
        %2735 = vmatpush1.msra.mxu0 %v2666
        %2736 = vmatprep.subr.mxu0 0.0
        %2737 = vmatpush1.msra.mxu0 %v2671
        %2738 = vmatprep.subr.mxu0 0.0
        %2739 = vmatpush1.msra.mxu0 %v2676
        %2740 = vmatprep.subr.mxu0 0.0
        %2741 = vmatpush1.msra.mxu0 %v2681
        %2742 = vmatprep.subr.mxu0 0.0
        %2743 = vmatpush1.msra.mxu0 %v2686
        %2744 = vmatprep.subr.mxu0 0.0
        %2745 = vmatpush1.msra.mxu0 %v2691
        %2746 = vmatprep.subr.mxu0 0.0
        %2747 = vmatpush1.msra.mxu0 %v2696
        %2748 = vmatprep.subr.mxu0 0.0
        %2749 = vmatpush1.msra.mxu0 0.0
        %2750 = vmatprep.subr.mxu0 0.0
        %2751 = vmatpush1.msra.mxu0 0.0
        %2752 = vmatprep.subr.mxu0 0.0
        %2753 = vmatpush1.msra.mxu0 0.0
        %2754 = vmatprep.subr.mxu0 0.0
        %2755 = vmatpush1.msra.mxu0 0.0
        %2756 = vmatprep.subr.mxu0 0.0
        %2757 = vmatpush1.msra.mxu0 0.0
        %2758 = vmatprep.subr.mxu0 0.0
        %2759 = vmatpush1.msra.mxu0 0.0
        %2760 = vmatprep.subr.mxu0 0.0
        %2761 = vmatpush1.msra.mxu0 0.0
        %2762 = vmatprep.subr.mxu0 0.0
        %2763 = vmatpush1.msra.mxu0 0.0
        %2764 = vmatprep.subr.mxu0 0.0
        %2765 = vmatpush1.msra.mxu0 0.0
        %2766 = vmatprep.subr.mxu0 0.0
        %2767 = vmatpush1.msra.mxu0 0.0
        %2768 = vmatprep.subr.mxu0 0.0
        %2769 = vmatpush1.msra.mxu0 0.0
        %2770 = vmatprep.subr.mxu0 0.0
        %2771 = vmatpush1.msra.mxu0 0.0
        %2772 = vmatprep.subr.mxu0 0.0
        %2773 = vmatpush1.msra.mxu0 0.0
        %2774 = vmatprep.subr.mxu0 0.0
        %2775 = vmatpush1.msra.mxu0 0.0
        %2776 = vmatprep.subr.mxu0 0.0
        %2777 = vmatpush1.msra.mxu0 0.0
        %2778 = vmatprep.subr.mxu0 0.0
        %2779 = vmatpush1.msra.mxu0 0.0
        %2780 = vmatprep.mubr.f32.mxu0 0.0
        %2781 = vmatmul.mubr.f32.gmra.mrb[0].mxu0 %v2700
        %v2782 = vpop.f32.mrb[0].mxu0
        %v2783 = vadd.f32 0.0, %v2782
        %v2784 = vpop.f32.mrb[0].mxu0
        %2785 = vmatprep.mubr.f32.mxu0 0.0
        %2786 = vmatmul.mubr.f32.gmra.mrb[0].mxu0 %v2701
        %v2787 = vpop.f32.mrb[0].mxu0
        %v2788 = vadd.f32 0.0, %v2787
        %v2789 = vpop.f32.mrb[0].mxu0
        %2790 = vmatprep.mubr.f32.mxu0 0.0
        %2791 = vmatmul.mubr.f32.gmra.mrb[0].mxu0 %v2702
        %v2792 = vpop.f32.mrb[0].mxu0
        %v2793 = vadd.f32 0.0, %v2792
        %v2794 = vpop.f32.mrb[0].mxu0
        %2795 = vmatprep.mubr.f32.mxu0 0.0
        %2796 = vmatmul.mubr.f32.gmra.mrb[0].mxu0 %v2703
        %v2797 = vpop.f32.mrb[0].mxu0
        %v2798 = vadd.f32 0.0, %v2797
        %v2799 = vpop.f32.mrb[0].mxu0
        %2800 = vmatprep.mubr.f32.mxu0 0.0
        %2801 = vmatmul.mubr.f32.gmra.mrb[0].mxu0 %v2704
        %v2802 = vpop.f32.mrb[0].mxu0
        %v2803 = vadd.f32 0.0, %v2802
        %v2804 = vpop.f32.mrb[0].mxu0
        %2805 = vmatprep.mubr.f32.mxu0 0.0
        %2806 = vmatmul.mubr.f32.gmra.mrb[0].mxu0 %v2705
        %v2807 = vpop.f32.mrb[0].mxu0
        %v2808 = vadd.f32 0.0, %v2807
        %v2809 = vpop.f32.mrb[0].mxu0
        %2810 = vmatprep.mubr.f32.mxu0 0.0
        %2811 = vmatmul.mubr.f32.gmra.mrb[0].mxu0 %v2706
        %v2812 = vpop.f32.mrb[0].mxu0
        %v2813 = vadd.f32 0.0, %v2812
        %v2814 = vpop.f32.mrb[0].mxu0
        %2815 = vmatprep.mubr.f32.mxu0 0.0
        %2816 = vmatmul.mubr.f32.gmra.mrb[0].mxu0 %v2707
        %v2817 = vpop.f32.mrb[0].mxu0
        %v2818 = vadd.f32 0.0, %v2817
        %v2819 = vpop.f32.mrb[0].mxu0
        %2820 = vmatprep.mubr.f32.mxu0 0.0
        %2821 = vmatmul.mubr.f32.gmra.mrb[0].mxu0 %v2708
        %v2822 = vpop.f32.mrb[0].mxu0
        %v2823 = vadd.f32 0.0, %v2822
        %v2824 = vpop.f32.mrb[0].mxu0
        %2825 = vmatprep.mubr.f32.mxu0 0.0
        %2826 = vmatmul.mubr.f32.gmra.mrb[0].mxu0 %v2709
        %v2827 = vpop.f32.mrb[0].mxu0
        %v2828 = vadd.f32 0.0, %v2827
        %v2829 = vpop.f32.mrb[0].mxu0
        %2830 = vmatprep.mubr.f32.mxu0 0.0
        %2831 = vmatmul.mubr.f32.gmra.mrb[0].mxu0 %v2710
        %v2832 = vpop.f32.mrb[0].mxu0
        %v2833 = vadd.f32 0.0, %v2832
        %v2834 = vpop.f32.mrb[0].mxu0
        %2835 = vmatprep.mubr.f32.mxu0 0.0
        %2836 = vmatmul.mubr.f32.gmra.mrb[0].mxu0 %v2711
        %v2837 = vpop.f32.mrb[0].mxu0
        %v2838 = vadd.f32 0.0, %v2837
        %v2839 = vpop.f32.mrb[0].mxu0
        %2840 = vmatprep.mubr.f32.mxu0 0.0
        %2841 = vmatmul.mubr.f32.gmra.mrb[0].mxu0 %v2712
        %v2842 = vpop.f32.mrb[0].mxu0
        %v2843 = vadd.f32 0.0, %v2842
        %v2844 = vpop.f32.mrb[0].mxu0
        %2845 = vmatprep.mubr.f32.mxu0 0.0
        %2846 = vmatmul.mubr.f32.gmra.mrb[0].mxu0 %v2713
        %v2847 = vpop.f32.mrb[0].mxu0
        %v2848 = vadd.f32 0.0, %v2847
        %v2849 = vpop.f32.mrb[0].mxu0
        %2850 = vmatprep.mubr.f32.mxu0 0.0
        %2851 = vmatmul.mubr.f32.gmra.mrb[0].mxu0 %v2714
        %v2852 = vpop.f32.mrb[0].mxu0
        %v2853 = vadd.f32 0.0, %v2852
        %v2854 = vpop.f32.mrb[0].mxu0
        %2855 = vmatprep.mubr.f32.mxu0 0.0
        %2856 = vmatmul.mubr.f32.gmra.mrb[0].mxu0 %v2715
        %v2857 = vpop.f32.mrb[0].mxu0
        %v2858 = vadd.f32 0.0, %v2857
        %v2859 = vpop.f32.mrb[0].mxu0
        %2860 = vdwg.mxu0
        %v2861 = vadd.f32 %v2535, %v2783
        %v2862 = vadd.f32 %v2536, %v2788
        %v2863 = vadd.f32 %v2537, %v2793
        %v2864 = vadd.f32 %v2538, %v2798
        %v2865 = vadd.f32 %v2539, %v2803
        %v2866 = vadd.f32 %v2540, %v2808
        %v2867 = vadd.f32 %v2541, %v2813
        %v2868 = vadd.f32 %v2542, %v2818
        %v2869 = vadd.f32 %v2543, %v2823
        %v2870 = vadd.f32 %v2544, %v2828
        %v2871 = vadd.f32 %v2545, %v2833
        %v2872 = vadd.f32 %v2546, %v2838
        %v2873 = vadd.f32 %v2547, %v2843
        %v2874 = vadd.f32 %v2548, %v2848
        %v2875 = vadd.f32 %v2549, %v2853
        %v2876 = vadd.f32 %v2550, %v2858
        %vm2877 = vcmp.ge.f32.partialorder %v2861, 0.0
        %vm2878 = vcmp.ge.f32.partialorder %v2862, 0.0
        %vm2879 = vcmp.ge.f32.partialorder %v2863, 0.0
        %vm2880 = vcmp.ge.f32.partialorder %v2864, 0.0
        %vm2881 = vcmp.ge.f32.partialorder %v2865, 0.0
        %vm2882 = vcmp.ge.f32.partialorder %v2866, 0.0
        %vm2883 = vcmp.ge.f32.partialorder %v2867, 0.0
        %vm2884 = vcmp.ge.f32.partialorder %v2868, 0.0
        %vm2885 = vcmp.ge.f32.partialorder %v2869, 0.0
        %vm2886 = vcmp.ge.f32.partialorder %v2870, 0.0
        %vm2887 = vcmp.ge.f32.partialorder %v2871, 0.0
        %vm2888 = vcmp.ge.f32.partialorder %v2872, 0.0
        %vm2889 = vcmp.ge.f32.partialorder %v2873, 0.0
        %vm2890 = vcmp.ge.f32.partialorder %v2874, 0.0
        %vm2891 = vcmp.ge.f32.partialorder %v2875, 0.0
        %vm2892 = vcmp.ge.f32.partialorder %v2876, 0.0
        %v2893 = vmul.f32 %v2861, 0.2
        %v2894 = vmul.f32 %v2862, 0.2
        %v2895 = vmul.f32 %v2863, 0.2
        %v2896 = vmul.f32 %v2864, 0.2
        %v2897 = vmul.f32 %v2865, 0.2
        %v2898 = vmul.f32 %v2866, 0.2
        %v2899 = vmul.f32 %v2867, 0.2
        %v2900 = vmul.f32 %v2868, 0.2
        %v2901 = vmul.f32 %v2869, 0.2
        %v2902 = vmul.f32 %v2870, 0.2
        %v2903 = vmul.f32 %v2871, 0.2
        %v2904 = vmul.f32 %v2872, 0.2
        %v2905 = vmul.f32 %v2873, 0.2
        %v2906 = vmul.f32 %v2874, 0.2
        %v2907 = vmul.f32 %v2875, 0.2
        %v2908 = vmul.f32 %v2876, 0.2
        %v2909 = vsel %vm2877, %v2861, %v2893
        %v2910 = vsel %vm2878, %v2862, %v2894
        %v2911 = vsel %vm2879, %v2863, %v2895
        %v2912 = vsel %vm2880, %v2864, %v2896
        %v2913 = vsel %vm2881, %v2865, %v2897
        %v2914 = vsel %vm2882, %v2866, %v2898
        %v2915 = vsel %vm2883, %v2867, %v2899
        %v2916 = vsel %vm2884, %v2868, %v2900
        %v2917 = vsel %vm2885, %v2869, %v2901
        %v2918 = vsel %vm2886, %v2870, %v2902
        %v2919 = vsel %vm2887, %v2871, %v2903
        %v2920 = vsel %vm2888, %v2872, %v2904
        %v2921 = vsel %vm2889, %v2873, %v2905
        %v2922 = vsel %vm2890, %v2874, %v2906
        %v2923 = vsel %vm2891, %v2875, %v2907
        %v2924 = vsel %vm2892, %v2876, %v2908
        %v2925 = vld [vmem:[%s6] sm:$0xff]
        %v2926 = vld [vmem:[%s6 + $0x8] sm:$0xff]
        %v2927 = vld [vmem:[%s6 + $0x10] sm:$0xff]
        %v2928 = vld [vmem:[%s6 + $0x18] sm:$0xff]
        %vm2929 = vcmask 261120
        %v2931 = vsel %vm2929, %v2909, 0
        %v2934 = vsel %vm2929, %v2910, 0
        %v2937 = vsel %vm2929, %v2911, 0
        %v2940 = vsel %vm2929, %v2912, 0
        %v2943 = vsel %vm2929, %v2913, 0
        %v2946 = vsel %vm2929, %v2914, 0
        %v2949 = vsel %vm2929, %v2915, 0
        %v2952 = vsel %vm2929, %v2916, 0
        %v2955 = vsel %vm2929, %v2917, 0
        %v2958 = vsel %vm2929, %v2918, 0
        %v2961 = vsel %vm2929, %v2919, 0
        %v2964 = vsel %vm2929, %v2920, 0
        %v2967 = vsel %vm2929, %v2921, 0
        %v2970 = vsel %vm2929, %v2922, 0
        %v2973 = vsel %vm2929, %v2923, 0
        %v2976 = vsel %vm2929, %v2924, 0
        %2978 = vmatprep.subr.mxu0 0.0
        %2979 = vmatpush1.msra.mxu0 %v2925
        %2980 = vmatprep.subr.mxu0 0.0
        %2981 = vmatpush1.msra.mxu0 %v2926
        %2982 = vmatprep.subr.mxu0 0.0
        %2983 = vmatpush1.msra.mxu0 %v2927
        %2984 = vmatprep.subr.mxu0 0.0
        %2985 = vmatpush1.msra.mxu0 %v2928
        %2986 = vmatprep.subr.mxu0 0.0
        %2987 = vmatpush1.msra.mxu0 0.0
        %2988 = vmatprep.subr.mxu0 0.0
        %2989 = vmatpush1.msra.mxu0 0.0
        %2990 = vmatprep.subr.mxu0 0.0
        %2991 = vmatpush1.msra.mxu0 0.0
        %2992 = vmatprep.subr.mxu0 0.0
        %2993 = vmatpush1.msra.mxu0 0.0
        %2994 = vmatprep.subr.mxu0 0.0
        %2995 = vmatpush1.msra.mxu0 0.0
        %2996 = vmatprep.subr.mxu0 0.0
        %2997 = vmatpush1.msra.mxu0 0.0
        %2998 = vmatprep.subr.mxu0 0.0
        %2999 = vmatpush1.msra.mxu0 0.0
        %3000 = vmatprep.subr.mxu0 0.0
        %3001 = vmatpush1.msra.mxu0 0.0
        %3002 = vmatprep.subr.mxu0 0.0
        %3003 = vmatpush1.msra.mxu0 0.0
        %3004 = vmatprep.subr.mxu0 0.0
        %3005 = vmatpush1.msra.mxu0 0.0
        %3006 = vmatprep.subr.mxu0 0.0
        %3007 = vmatpush1.msra.mxu0 0.0
        %3008 = vmatprep.subr.mxu0 0.0
        %3009 = vmatpush1.msra.mxu0 0.0
        %3010 = vmatprep.subr.mxu0 0.0
        %3011 = vmatpush1.msra.mxu0 0.0
        %3012 = vmatprep.subr.mxu0 0.0
        %3013 = vmatpush1.msra.mxu0 0.0
        %3014 = vmatprep.subr.mxu0 0.0
        %3015 = vmatpush1.msra.mxu0 0.0
        %3016 = vmatprep.subr.mxu0 0.0
        %3017 = vmatpush1.msra.mxu0 0.0
        %3018 = vmatprep.subr.mxu0 0.0
        %3019 = vmatpush1.msra.mxu0 0.0
        %3020 = vmatprep.subr.mxu0 0.0
        %3021 = vmatpush1.msra.mxu0 0.0
        %3022 = vmatprep.subr.mxu0 0.0
        %3023 = vmatpush1.msra.mxu0 0.0
        %3024 = vmatprep.subr.mxu0 0.0
        %3025 = vmatpush1.msra.mxu0 0.0
        %3026 = vmatprep.subr.mxu0 0.0
        %3027 = vmatpush1.msra.mxu0 0.0
        %3028 = vmatprep.subr.mxu0 0.0
        %3029 = vmatpush1.msra.mxu0 0.0
        %3030 = vmatprep.subr.mxu0 0.0
        %3031 = vmatpush1.msra.mxu0 0.0
        %3032 = vmatprep.subr.mxu0 0.0
        %3033 = vmatpush1.msra.mxu0 0.0
        %3034 = vmatprep.subr.mxu0 0.0
        %3035 = vmatpush1.msra.mxu0 0.0
        %3036 = vmatprep.subr.mxu0 0.0
        %3037 = vmatpush1.msra.mxu0 0.0
        %3038 = vmatprep.subr.mxu0 0.0
        %3039 = vmatpush1.msra.mxu0 0.0
        %3040 = vmatprep.subr.mxu0 0.0
        %3041 = vmatpush1.msra.mxu0 0.0
        %3042 = vmatprep.mubr.f32.mxu0 0.0
        %3043 = vmatmul.mubr.f32.gmra.mrb[0].mxu0 %v2931
        %v3044 = vpop.f32.mrb[0].mxu0
        %v3045 = vadd.f32 0.0, %v3044
        %v3046 = vpop.f32.mrb[0].mxu0
        %3047 = vmatprep.mubr.f32.mxu0 0.0
        %3048 = vmatmul.mubr.f32.gmra.mrb[0].mxu0 %v2934
        %v3049 = vpop.f32.mrb[0].mxu0
        %v3050 = vadd.f32 0.0, %v3049
        %v3051 = vpop.f32.mrb[0].mxu0
        %3052 = vmatprep.mubr.f32.mxu0 0.0
        %3053 = vmatmul.mubr.f32.gmra.mrb[0].mxu0 %v2937
        %v3054 = vpop.f32.mrb[0].mxu0
        %v3055 = vadd.f32 0.0, %v3054
        %v3056 = vpop.f32.mrb[0].mxu0
        %3057 = vmatprep.mubr.f32.mxu0 0.0
        %3058 = vmatmul.mubr.f32.gmra.mrb[0].mxu0 %v2940
        %v3059 = vpop.f32.mrb[0].mxu0
        %v3060 = vadd.f32 0.0, %v3059
        %v3061 = vpop.f32.mrb[0].mxu0
        %3062 = vmatprep.mubr.f32.mxu0 0.0
        %3063 = vmatmul.mubr.f32.gmra.mrb[0].mxu0 %v2943
        %v3064 = vpop.f32.mrb[0].mxu0
        %v3065 = vadd.f32 0.0, %v3064
        %v3066 = vpop.f32.mrb[0].mxu0
        %3067 = vmatprep.mubr.f32.mxu0 0.0
        %3068 = vmatmul.mubr.f32.gmra.mrb[0].mxu0 %v2946
        %v3069 = vpop.f32.mrb[0].mxu0
        %v3070 = vadd.f32 0.0, %v3069
        %v3071 = vpop.f32.mrb[0].mxu0
        %3072 = vmatprep.mubr.f32.mxu0 0.0
        %3073 = vmatmul.mubr.f32.gmra.mrb[0].mxu0 %v2949
        %v3074 = vpop.f32.mrb[0].mxu0
        %v3075 = vadd.f32 0.0, %v3074
        %v3076 = vpop.f32.mrb[0].mxu0
        %3077 = vmatprep.mubr.f32.mxu0 0.0
        %3078 = vmatmul.mubr.f32.gmra.mrb[0].mxu0 %v2952
        %v3079 = vpop.f32.mrb[0].mxu0
        %v3080 = vadd.f32 0.0, %v3079
        %v3081 = vpop.f32.mrb[0].mxu0
        %3082 = vmatprep.mubr.f32.mxu0 0.0
        %3083 = vmatmul.mubr.f32.gmra.mrb[0].mxu0 %v2955
        %v3084 = vpop.f32.mrb[0].mxu0
        %v3085 = vadd.f32 0.0, %v3084
        %v3086 = vpop.f32.mrb[0].mxu0
        %3087 = vmatprep.mubr.f32.mxu0 0.0
        %3088 = vmatmul.mubr.f32.gmra.mrb[0].mxu0 %v2958
        %v3089 = vpop.f32.mrb[0].mxu0
        %v3090 = vadd.f32 0.0, %v3089
        %v3091 = vpop.f32.mrb[0].mxu0
        %3092 = vmatprep.mubr.f32.mxu0 0.0
        %3093 = vmatmul.mubr.f32.gmra.mrb[0].mxu0 %v2961
        %v3094 = vpop.f32.mrb[0].mxu0
        %v3095 = vadd.f32 0.0, %v3094
        %v3096 = vpop.f32.mrb[0].mxu0
        %3097 = vmatprep.mubr.f32.mxu0 0.0
        %3098 = vmatmul.mubr.f32.gmra.mrb[0].mxu0 %v2964
        %v3099 = vpop.f32.mrb[0].mxu0
        %v3100 = vadd.f32 0.0, %v3099
        %v3101 = vpop.f32.mrb[0].mxu0
        %3102 = vmatprep.mubr.f32.mxu0 0.0
        %3103 = vmatmul.mubr.f32.gmra.mrb[0].mxu0 %v2967
        %v3104 = vpop.f32.mrb[0].mxu0
        %v3105 = vadd.f32 0.0, %v3104
        %v3106 = vpop.f32.mrb[0].mxu0
        %3107 = vmatprep.mubr.f32.mxu0 0.0
        %3108 = vmatmul.mubr.f32.gmra.mrb[0].mxu0 %v2970
        %v3109 = vpop.f32.mrb[0].mxu0
        %v3110 = vadd.f32 0.0, %v3109
        %v3111 = vpop.f32.mrb[0].mxu0
        %3112 = vmatprep.mubr.f32.mxu0 0.0
        %3113 = vmatmul.mubr.f32.gmra.mrb[0].mxu0 %v2973
        %v3114 = vpop.f32.mrb[0].mxu0
        %v3115 = vadd.f32 0.0, %v3114
        %v3116 = vpop.f32.mrb[0].mxu0
        %3117 = vmatprep.mubr.f32.mxu0 0.0
        %3118 = vmatmul.mubr.f32.gmra.mrb[0].mxu0 %v2976
        %v3119 = vpop.f32.mrb[0].mxu0
        %v3120 = vadd.f32 0.0, %v3119
        %v3121 = vpop.f32.mrb[0].mxu0
        %3122 = vdwg.mxu0
        %s3123 = scalar_lea.vmem %s6, 64
        %v3124 = vld [vmem:[%s3123] sm:$0xff]
        %v3125 = vld [vmem:[%s3123 + $0x8] sm:$0xff]
        %v3126 = vld [vmem:[%s3123 + $0x10] sm:$0xff]
        %v3127 = vld [vmem:[%s3123 + $0x18] sm:$0xff]
        %3128 = vmatprep.subr.mxu0 0.0
        %3129 = vmatpush1.msra.mxu0 %v3124
        %3130 = vmatprep.subr.mxu0 0.0
        %3131 = vmatpush1.msra.mxu0 %v3125
        %3132 = vmatprep.subr.mxu0 0.0
        %3133 = vmatpush1.msra.mxu0 %v3126
        %3134 = vmatprep.subr.mxu0 0.0
        %3135 = vmatpush1.msra.mxu0 %v3127
        %3136 = vmatprep.subr.mxu0 0.0
        %3137 = vmatpush1.msra.mxu0 0.0
        %3138 = vmatprep.subr.mxu0 0.0
        %3139 = vmatpush1.msra.mxu0 0.0
        %3140 = vmatprep.subr.mxu0 0.0
        %3141 = vmatpush1.msra.mxu0 0.0
        %3142 = vmatprep.subr.mxu0 0.0
        %3143 = vmatpush1.msra.mxu0 0.0
        %3144 = vmatprep.subr.mxu0 0.0
        %3145 = vmatpush1.msra.mxu0 0.0
        %3146 = vmatprep.subr.mxu0 0.0
        %3147 = vmatpush1.msra.mxu0 0.0
        %3148 = vmatprep.subr.mxu0 0.0
        %3149 = vmatpush1.msra.mxu0 0.0
        %3150 = vmatprep.subr.mxu0 0.0
        %3151 = vmatpush1.msra.mxu0 0.0
        %3152 = vmatprep.subr.mxu0 0.0
        %3153 = vmatpush1.msra.mxu0 0.0
        %3154 = vmatprep.subr.mxu0 0.0
        %3155 = vmatpush1.msra.mxu0 0.0
        %3156 = vmatprep.subr.mxu0 0.0
        %3157 = vmatpush1.msra.mxu0 0.0
        %3158 = vmatprep.subr.mxu0 0.0
        %3159 = vmatpush1.msra.mxu0 0.0
        %3160 = vmatprep.subr.mxu0 0.0
        %3161 = vmatpush1.msra.mxu0 0.0
        %3162 = vmatprep.subr.mxu0 0.0
        %3163 = vmatpush1.msra.mxu0 0.0
        %3164 = vmatprep.subr.mxu0 0.0
        %3165 = vmatpush1.msra.mxu0 0.0
        %3166 = vmatprep.subr.mxu0 0.0
        %3167 = vmatpush1.msra.mxu0 0.0
        %3168 = vmatprep.subr.mxu0 0.0
        %3169 = vmatpush1.msra.mxu0 0.0
        %3170 = vmatprep.subr.mxu0 0.0
        %3171 = vmatpush1.msra.mxu0 0.0
        %3172 = vmatprep.subr.mxu0 0.0
        %3173 = vmatpush1.msra.mxu0 0.0
        %3174 = vmatprep.subr.mxu0 0.0
        %3175 = vmatpush1.msra.mxu0 0.0
        %3176 = vmatprep.subr.mxu0 0.0
        %3177 = vmatpush1.msra.mxu0 0.0
        %3178 = vmatprep.subr.mxu0 0.0
        %3179 = vmatpush1.msra.mxu0 0.0
        %3180 = vmatprep.subr.mxu0 0.0
        %3181 = vmatpush1.msra.mxu0 0.0
        %3182 = vmatprep.subr.mxu0 0.0
        %3183 = vmatpush1.msra.mxu0 0.0
        %3184 = vmatprep.subr.mxu0 0.0
        %3185 = vmatpush1.msra.mxu0 0.0
        %3186 = vmatprep.subr.mxu0 0.0
        %3187 = vmatpush1.msra.mxu0 0.0
        %3188 = vmatprep.subr.mxu0 0.0
        %3189 = vmatpush1.msra.mxu0 0.0
        %3190 = vmatprep.subr.mxu0 0.0
        %3191 = vmatpush1.msra.mxu0 0.0
        %3192 = vmatprep.mubr.f32.mxu0 0.0
        %3193 = vmatmul.mubr.f32.gmra.mrb[0].mxu0 %v2931
        %v3194 = vpop.f32.mrb[0].mxu0
        %v3195 = vadd.f32 0.0, %v3194
        %v3196 = vpop.f32.mrb[0].mxu0
        %3197 = vmatprep.mubr.f32.mxu0 0.0
        %3198 = vmatmul.mubr.f32.gmra.mrb[0].mxu0 %v2934
        %v3199 = vpop.f32.mrb[0].mxu0
        %v3200 = vadd.f32 0.0, %v3199
        %v3201 = vpop.f32.mrb[0].mxu0
        %3202 = vmatprep.mubr.f32.mxu0 0.0
        %3203 = vmatmul.mubr.f32.gmra.mrb[0].mxu0 %v2937
        %v3204 = vpop.f32.mrb[0].mxu0
        %v3205 = vadd.f32 0.0, %v3204
        %v3206 = vpop.f32.mrb[0].mxu0
        %3207 = vmatprep.mubr.f32.mxu0 0.0
        %3208 = vmatmul.mubr.f32.gmra.mrb[0].mxu0 %v2940
        %v3209 = vpop.f32.mrb[0].mxu0
        %v3210 = vadd.f32 0.0, %v3209
        %v3211 = vpop.f32.mrb[0].mxu0
        %3212 = vmatprep.mubr.f32.mxu0 0.0
        %3213 = vmatmul.mubr.f32.gmra.mrb[0].mxu0 %v2943
        %v3214 = vpop.f32.mrb[0].mxu0
        %v3215 = vadd.f32 0.0, %v3214
        %v3216 = vpop.f32.mrb[0].mxu0
        %3217 = vmatprep.mubr.f32.mxu0 0.0
        %3218 = vmatmul.mubr.f32.gmra.mrb[0].mxu0 %v2946
        %v3219 = vpop.f32.mrb[0].mxu0
        %v3220 = vadd.f32 0.0, %v3219
        %v3221 = vpop.f32.mrb[0].mxu0
        %3222 = vmatprep.mubr.f32.mxu0 0.0
        %3223 = vmatmul.mubr.f32.gmra.mrb[0].mxu0 %v2949
        %v3224 = vpop.f32.mrb[0].mxu0
        %v3225 = vadd.f32 0.0, %v3224
        %v3226 = vpop.f32.mrb[0].mxu0
        %3227 = vmatprep.mubr.f32.mxu0 0.0
        %3228 = vmatmul.mubr.f32.gmra.mrb[0].mxu0 %v2952
        %v3229 = vpop.f32.mrb[0].mxu0
        %v3230 = vadd.f32 0.0, %v3229
        %v3231 = vpop.f32.mrb[0].mxu0
        %3232 = vmatprep.mubr.f32.mxu0 0.0
        %3233 = vmatmul.mubr.f32.gmra.mrb[0].mxu0 %v2955
        %v3234 = vpop.f32.mrb[0].mxu0
        %v3235 = vadd.f32 0.0, %v3234
        %v3236 = vpop.f32.mrb[0].mxu0
        %3237 = vmatprep.mubr.f32.mxu0 0.0
        %3238 = vmatmul.mubr.f32.gmra.mrb[0].mxu0 %v2958
        %v3239 = vpop.f32.mrb[0].mxu0
        %v3240 = vadd.f32 0.0, %v3239
        %v3241 = vpop.f32.mrb[0].mxu0
        %3242 = vmatprep.mubr.f32.mxu0 0.0
        %3243 = vmatmul.mubr.f32.gmra.mrb[0].mxu0 %v2961
        %v3244 = vpop.f32.mrb[0].mxu0
        %v3245 = vadd.f32 0.0, %v3244
        %v3246 = vpop.f32.mrb[0].mxu0
        %3247 = vmatprep.mubr.f32.mxu0 0.0
        %3248 = vmatmul.mubr.f32.gmra.mrb[0].mxu0 %v2964
        %v3249 = vpop.f32.mrb[0].mxu0
        %v3250 = vadd.f32 0.0, %v3249
        %v3251 = vpop.f32.mrb[0].mxu0
        %3252 = vmatprep.mubr.f32.mxu0 0.0
        %3253 = vmatmul.mubr.f32.gmra.mrb[0].mxu0 %v2967
        %v3254 = vpop.f32.mrb[0].mxu0
        %v3255 = vadd.f32 0.0, %v3254
        %v3256 = vpop.f32.mrb[0].mxu0
        %3257 = vmatprep.mubr.f32.mxu0 0.0
        %3258 = vmatmul.mubr.f32.gmra.mrb[0].mxu0 %v2970
        %v3259 = vpop.f32.mrb[0].mxu0
        %v3260 = vadd.f32 0.0, %v3259
        %v3261 = vpop.f32.mrb[0].mxu0
        %3262 = vmatprep.mubr.f32.mxu0 0.0
        %3263 = vmatmul.mubr.f32.gmra.mrb[0].mxu0 %v2973
        %v3264 = vpop.f32.mrb[0].mxu0
        %v3265 = vadd.f32 0.0, %v3264
        %v3266 = vpop.f32.mrb[0].mxu0
        %3267 = vmatprep.mubr.f32.mxu0 0.0
        %3268 = vmatmul.mubr.f32.gmra.mrb[0].mxu0 %v2976
        %v3269 = vpop.f32.mrb[0].mxu0
        %v3270 = vadd.f32 0.0, %v3269
        %v3271 = vpop.f32.mrb[0].mxu0
        %3272 = vdwg.mxu0
        %v3273 = vld [vmem:[%s11] sm:$0xf]
        %s3274 = scalar_lea.vmem %s11, 4
        %v3275 = vld [vmem:[%s3274] sm:$0xf]
        %3276 = vmatprep.subr.mxu0 0.0
        %3277 = vmatpush1.msra.mxu0 %v2909
        %3278 = vmatprep.subr.mxu0 0.0
        %3279 = vmatpush1.msra.mxu0 %v2910
        %3280 = vmatprep.subr.mxu0 0.0
        %3281 = vmatpush1.msra.mxu0 %v2911
        %3282 = vmatprep.subr.mxu0 0.0
        %3283 = vmatpush1.msra.mxu0 %v2912
        %3284 = vmatprep.subr.mxu0 0.0
        %3285 = vmatpush1.msra.mxu0 %v2913
        %3286 = vmatprep.subr.mxu0 0.0
        %3287 = vmatpush1.msra.mxu0 %v2914
        %3288 = vmatprep.subr.mxu0 0.0
        %3289 = vmatpush1.msra.mxu0 %v2915
        %3290 = vmatprep.subr.mxu0 0.0
        %3291 = vmatpush1.msra.mxu0 %v2916
        %3292 = vmatprep.subr.mxu0 0.0
        %3293 = vmatpush1.msra.mxu0 %v2917
        %3294 = vmatprep.subr.mxu0 0.0
        %3295 = vmatpush1.msra.mxu0 %v2918
        %3296 = vmatprep.subr.mxu0 0.0
        %3297 = vmatpush1.msra.mxu0 %v2919
        %3298 = vmatprep.subr.mxu0 0.0
        %3299 = vmatpush1.msra.mxu0 %v2920
        %3300 = vmatprep.subr.mxu0 0.0
        %3301 = vmatpush1.msra.mxu0 %v2921
        %3302 = vmatprep.subr.mxu0 0.0
        %3303 = vmatpush1.msra.mxu0 %v2922
        %3304 = vmatprep.subr.mxu0 0.0
        %3305 = vmatpush1.msra.mxu0 %v2923
        %3306 = vmatprep.subr.mxu0 0.0
        %3307 = vmatpush1.msra.mxu0 %v2924
        %3308 = vmatprep.subr.mxu0 0.0
        %3309 = vmatpush1.msra.mxu0 0.0
        %3310 = vmatprep.subr.mxu0 0.0
        %3311 = vmatpush1.msra.mxu0 0.0
        %3312 = vmatprep.subr.mxu0 0.0
        %3313 = vmatpush1.msra.mxu0 0.0
        %3314 = vmatprep.subr.mxu0 0.0
        %3315 = vmatpush1.msra.mxu0 0.0
        %3316 = vmatprep.subr.mxu0 0.0
        %3317 = vmatpush1.msra.mxu0 0.0
        %3318 = vmatprep.subr.mxu0 0.0
        %3319 = vmatpush1.msra.mxu0 0.0
        %3320 = vmatprep.subr.mxu0 0.0
        %3321 = vmatpush1.msra.mxu0 0.0
        %3322 = vmatprep.subr.mxu0 0.0
        %3323 = vmatpush1.msra.mxu0 0.0
        %3324 = vmatprep.subr.mxu0 0.0
        %3325 = vmatpush1.msra.mxu0 0.0
        %3326 = vmatprep.subr.mxu0 0.0
        %3327 = vmatpush1.msra.mxu0 0.0
        %3328 = vmatprep.subr.mxu0 0.0
        %3329 = vmatpush1.msra.mxu0 0.0
        %3330 = vmatprep.subr.mxu0 0.0
        %3331 = vmatpush1.msra.mxu0 0.0
        %3332 = vmatprep.subr.mxu0 0.0
        %3333 = vmatpush1.msra.mxu0 0.0
        %3334 = vmatprep.subr.mxu0 0.0
        %3335 = vmatpush1.msra.mxu0 0.0
        %3336 = vmatprep.subr.mxu0 0.0
        %3337 = vmatpush1.msra.mxu0 0.0
        %3338 = vmatprep.subr.mxu0 0.0
        %3339 = vmatpush1.msra.mxu0 0.0
        %3340 = vmatprep.mubr.f32.mxu0 0.0
        %3341 = vmatmul.mubr.f32.gmra.mrb[0].mxu0 %v3275
        %v3342 = vpop.f32.mrb[0].mxu0
        %v3343 = vadd.f32 0.0, %v3342
        %v3344 = vpop.f32.mrb[0].mxu0
        %3345 = vdwg.mxu0
        %3346 = vmatprep.subr.mxu0 0.0
        %3347 = vmatpush1.msra.mxu0 %v3045
        %3348 = vmatprep.subr.mxu0 0.0
        %3349 = vmatpush1.msra.mxu0 %v3050
        %3350 = vmatprep.subr.mxu0 0.0
        %3351 = vmatpush1.msra.mxu0 %v3055
        %3352 = vmatprep.subr.mxu0 0.0
        %3353 = vmatpush1.msra.mxu0 %v3060
        %3354 = vmatprep.subr.mxu0 0.0
        %3355 = vmatpush1.msra.mxu0 %v3065
        %3356 = vmatprep.subr.mxu0 0.0
        %3357 = vmatpush1.msra.mxu0 %v3070
        %3358 = vmatprep.subr.mxu0 0.0
        %3359 = vmatpush1.msra.mxu0 %v3075
        %3360 = vmatprep.subr.mxu0 0.0
        %3361 = vmatpush1.msra.mxu0 %v3080
        %3362 = vmatprep.subr.mxu0 0.0
        %3363 = vmatpush1.msra.mxu0 %v3085
        %3364 = vmatprep.subr.mxu0 0.0
        %3365 = vmatpush1.msra.mxu0 %v3090
        %3366 = vmatprep.subr.mxu0 0.0
        %3367 = vmatpush1.msra.mxu0 %v3095
        %3368 = vmatprep.subr.mxu0 0.0
        %3369 = vmatpush1.msra.mxu0 %v3100
        %3370 = vmatprep.subr.mxu0 0.0
        %3371 = vmatpush1.msra.mxu0 %v3105
        %3372 = vmatprep.subr.mxu0 0.0
        %3373 = vmatpush1.msra.mxu0 %v3110
        %3374 = vmatprep.subr.mxu0 0.0
        %3375 = vmatpush1.msra.mxu0 %v3115
        %3376 = vmatprep.subr.mxu0 0.0
        %3377 = vmatpush1.msra.mxu0 %v3120
        %3378 = vmatprep.subr.mxu0 0.0
        %3379 = vmatpush1.msra.mxu0 0.0
        %3380 = vmatprep.subr.mxu0 0.0
        %3381 = vmatpush1.msra.mxu0 0.0
        %3382 = vmatprep.subr.mxu0 0.0
        %3383 = vmatpush1.msra.mxu0 0.0
        %3384 = vmatprep.subr.mxu0 0.0
        %3385 = vmatpush1.msra.mxu0 0.0
        %3386 = vmatprep.subr.mxu0 0.0
        %3387 = vmatpush1.msra.mxu0 0.0
        %3388 = vmatprep.subr.mxu0 0.0
        %3389 = vmatpush1.msra.mxu0 0.0
        %3390 = vmatprep.subr.mxu0 0.0
        %3391 = vmatpush1.msra.mxu0 0.0
        %3392 = vmatprep.subr.mxu0 0.0
        %3393 = vmatpush1.msra.mxu0 0.0
        %3394 = vmatprep.subr.mxu0 0.0
        %3395 = vmatpush1.msra.mxu0 0.0
        %3396 = vmatprep.subr.mxu0 0.0
        %3397 = vmatpush1.msra.mxu0 0.0
        %3398 = vmatprep.subr.mxu0 0.0
        %3399 = vmatpush1.msra.mxu0 0.0
        %3400 = vmatprep.subr.mxu0 0.0
        %3401 = vmatpush1.msra.mxu0 0.0
        %3402 = vmatprep.subr.mxu0 0.0
        %3403 = vmatpush1.msra.mxu0 0.0
        %3404 = vmatprep.subr.mxu0 0.0
        %3405 = vmatpush1.msra.mxu0 0.0
        %3406 = vmatprep.subr.mxu0 0.0
        %3407 = vmatpush1.msra.mxu0 0.0
        %3408 = vmatprep.subr.mxu0 0.0
        %3409 = vmatpush1.msra.mxu0 0.0
        %3410 = vmatprep.mubr.f32.mxu0 0.0
        %3411 = vmatmul.mubr.f32.gmra.mrb[0].mxu0 %v3273
        %v3412 = vpop.f32.mrb[0].mxu0
        %v3413 = vadd.f32 %v3343, %v3412
        %v3414 = vpop.f32.mrb[0].mxu0
        %3415 = vdwg.mxu0
        %s3416 = scalar_lea.vmem %s11, 8
        %v3417 = vld [vmem:[%s3416] sm:$0xf]
        %3418 = vmatprep.subr.mxu0 0.0
        %3419 = vmatpush1.msra.mxu0 %v3195
        %3420 = vmatprep.subr.mxu0 0.0
        %3421 = vmatpush1.msra.mxu0 %v3200
        %3422 = vmatprep.subr.mxu0 0.0
        %3423 = vmatpush1.msra.mxu0 %v3205
        %3424 = vmatprep.subr.mxu0 0.0
        %3425 = vmatpush1.msra.mxu0 %v3210
        %3426 = vmatprep.subr.mxu0 0.0
        %3427 = vmatpush1.msra.mxu0 %v3215
        %3428 = vmatprep.subr.mxu0 0.0
        %3429 = vmatpush1.msra.mxu0 %v3220
        %3430 = vmatprep.subr.mxu0 0.0
        %3431 = vmatpush1.msra.mxu0 %v3225
        %3432 = vmatprep.subr.mxu0 0.0
        %3433 = vmatpush1.msra.mxu0 %v3230
        %3434 = vmatprep.subr.mxu0 0.0
        %3435 = vmatpush1.msra.mxu0 %v3235
        %3436 = vmatprep.subr.mxu0 0.0
        %3437 = vmatpush1.msra.mxu0 %v3240
        %3438 = vmatprep.subr.mxu0 0.0
        %3439 = vmatpush1.msra.mxu0 %v3245
        %3440 = vmatprep.subr.mxu0 0.0
        %3441 = vmatpush1.msra.mxu0 %v3250
        %3442 = vmatprep.subr.mxu0 0.0
        %3443 = vmatpush1.msra.mxu0 %v3255
        %3444 = vmatprep.subr.mxu0 0.0
        %3445 = vmatpush1.msra.mxu0 %v3260
        %3446 = vmatprep.subr.mxu0 0.0
        %3447 = vmatpush1.msra.mxu0 %v3265
        %3448 = vmatprep.subr.mxu0 0.0
        %3449 = vmatpush1.msra.mxu0 %v3270
        %3450 = vmatprep.subr.mxu0 0.0
        %3451 = vmatpush1.msra.mxu0 0.0
        %3452 = vmatprep.subr.mxu0 0.0
        %3453 = vmatpush1.msra.mxu0 0.0
        %3454 = vmatprep.subr.mxu0 0.0
        %3455 = vmatpush1.msra.mxu0 0.0
        %3456 = vmatprep.subr.mxu0 0.0
        %3457 = vmatpush1.msra.mxu0 0.0
        %3458 = vmatprep.subr.mxu0 0.0
        %3459 = vmatpush1.msra.mxu0 0.0
        %3460 = vmatprep.subr.mxu0 0.0
        %3461 = vmatpush1.msra.mxu0 0.0
        %3462 = vmatprep.subr.mxu0 0.0
        %3463 = vmatpush1.msra.mxu0 0.0
        %3464 = vmatprep.subr.mxu0 0.0
        %3465 = vmatpush1.msra.mxu0 0.0
        %3466 = vmatprep.subr.mxu0 0.0
        %3467 = vmatpush1.msra.mxu0 0.0
        %3468 = vmatprep.subr.mxu0 0.0
        %3469 = vmatpush1.msra.mxu0 0.0
        %3470 = vmatprep.subr.mxu0 0.0
        %3471 = vmatpush1.msra.mxu0 0.0
        %3472 = vmatprep.subr.mxu0 0.0
        %3473 = vmatpush1.msra.mxu0 0.0
        %3474 = vmatprep.subr.mxu0 0.0
        %3475 = vmatpush1.msra.mxu0 0.0
        %3476 = vmatprep.subr.mxu0 0.0
        %3477 = vmatpush1.msra.mxu0 0.0
        %3478 = vmatprep.subr.mxu0 0.0
        %3479 = vmatpush1.msra.mxu0 0.0
        %3480 = vmatprep.subr.mxu0 0.0
        %3481 = vmatpush1.msra.mxu0 0.0
        %3482 = vmatprep.mubr.f32.mxu0 0.0
        %3483 = vmatmul.mubr.f32.gmra.mrb[0].mxu0 %v3417
        %v3484 = vpop.f32.mrb[0].mxu0
        %v3485 = vadd.f32 0.0, %v3484
        %v3486 = vpop.f32.mrb[0].mxu0
        %3487 = vdwg.mxu0
        %v3488 = vadd.f32 %v3413, %v3485
        %v3489 = vld [vmem:[%s12] sm:$0xf]
        %3491 = vset.pattern.permute.xlu0 0
        %3492 = vperm.xlu0 %3491, %v3489
        %v3493 = vpop.permute.xlu0 %3492
        %v3495 = vadd.f32 %v3488, %v3493
        %v3496 = vmax.f32 %v3495, 0.0
        %v3497 = vmin.f32 %v3496, 1.0
        %v3498 = vmul.f32 %v3497, 0.2
        %v3499 = vadd.f32 %v3498, 0.8
        %v3500 = vld [vmem:[%s563] sm:$0x1]
        %v3501 = vmul.f32 %v3500, 0.05
        %v3502 = vtanh.pop %v3495
        %3504 = vset.pattern.permute.xlu0 0
        %3505 = vperm.xlu0 %3504, %v3501
        %v3506 = vpop.permute.xlu0 %3505
        %v3508 = vlaneseq
        %v3509 = vshrl.u32 %v3508, 7
        %v3510 = vsub.s32 0, %v3509
        %v3511 = vrot.slane %v3506, %v3510
        %v3512 = vmul.f32 %v3511, %v3502
        %3514 = vset.pattern.permute.xlu0 0
        %3515 = vperm.xlu0 %3514, %v3500
        %v3516 = vpop.permute.xlu0 %3515
        %v3518 = vlaneseq
        %v3519 = vshrl.u32 %v3518, 7
        %v3520 = vsub.s32 0, %v3519
        %v3521 = vrot.slane %v3516, %v3520
        %v3522 = vadd.f32 %v3521, %v3512
        %v3523 = vld [vmem:[%s13] sm:$0xff]
        %v3524 = vld [vmem:[%s13 + $0x8] sm:$0xff]
        %v3525 = vld [vmem:[%s13 + $0x10] sm:$0xff]
        %3527 = vset.pattern.permute.xlu0 0
        %3528 = vperm.xlu0 %3527, %v3523
        %v3529 = vpop.permute.xlu0 %3528
        %3532 = vset.pattern.permute.xlu0 0
        %3533 = vperm.xlu0 %3532, %v3524
        %v3534 = vpop.permute.xlu0 %3533
        %3537 = vset.pattern.permute.xlu0 0
        %3538 = vperm.xlu0 %3537, %v3525
        %v3539 = vpop.permute.xlu0 %3538
        %v3541 = vlaneseq
        %v3542 = vshrl.u32 %v3541, 7
        %v3543 = vsub.s32 0, %v3542
        %v3544 = vrot.slane %v3522, %v3543
        %v3545 = vmul.f32 %v3529, %v3544
        %v3546 = vmul.f32 %v3534, %v3544
        %v3547 = vmul.f32 %v3539, %v3544
        %vm3548 = vcmp.ge.f32.partialorder %v3545, 1.0
        %vm3549 = vcmp.ge.f32.partialorder %v3546, 1.0
        %vm3550 = vcmp.ge.f32.partialorder %v3547, 1.0
        %v3551 = vsel %vm3548, 0.0, %v3545
        %v3552 = vsel %vm3549, 0.0, %v3546
        %v3553 = vsel %vm3550, 0.0, %v3547
        %v3554 = vld [vmem:[%s568] sm:$0xff]
        %v3555 = vld [vmem:[%s568 + $0x8] sm:$0xff]
        %v3556 = vmax.f32 %v3554, 0.0
        %v3557 = vmax.f32 %v3555, 0.0
        %v3558 = vmin.f32 %v3556, 1.0
        %v3559 = vmin.f32 %v3557, 1.0
        %3561 = vset.pattern.permute.xlu0 0
        %3562 = vperm.xlu0 %3561, %v3558
        %v3563 = vpop.permute.xlu0 %3562
        %3566 = vset.pattern.permute.xlu0 0
        %3567 = vperm.xlu0 %3566, %v3559
        %v3568 = vpop.permute.xlu0 %3567
        %v3570 = vlaneseq
        %v3571 = vshrl.u32 %v3570, 7
        %v3572 = vsub.s32 1, %v3571
        %v3573 = vrot.slane %v3496, %v3572
        %v3574 = vmul.f32 %v3563, %v3573
        %v3575 = vmul.f32 %v3568, %v3573
        %v3577 = vrot.slane %v3496, 1
        %vm3581 = vcmask 1040384
        %v3582 = vrot.slane %v3574, 7
        %v3583 = vrot.slane %v3575, 7
        %v3584 = vsel %vm3581, %v3582, %v3583
        %v3588 = vsel %vm3581, %v3577, %v3582
        %v3589 = vsel %vm3581, %v3583, 0.0
        %v3591 = vsel %vm2929, %v3588, 0
        %v3593 = vsel %vm2929, %v3584, 0
        %v3596 = vsel %vm2929, %v3589, 0
        %3598 = vmatprep.subr.mxu0 0.0
        %3599 = vmatpush1.msra.mxu0 %v2925
        %3600 = vmatprep.subr.mxu0 0.0
        %3601 = vmatpush1.msra.mxu0 %v2926
        %3602 = vmatprep.subr.mxu0 0.0
        %3603 = vmatpush1.msra.mxu0 %v2927
        %3604 = vmatprep.subr.mxu0 0.0
        %3605 = vmatpush1.msra.mxu0 %v2928
        %3606 = vmatprep.subr.mxu0 0.0
        %3607 = vmatpush1.msra.mxu0 0.0
        %3608 = vmatprep.subr.mxu0 0.0
        %3609 = vmatpush1.msra.mxu0 0.0
        %3610 = vmatprep.subr.mxu0 0.0
        %3611 = vmatpush1.msra.mxu0 0.0
        %3612 = vmatprep.subr.mxu0 0.0
        %3613 = vmatpush1.msra.mxu0 0.0
        %3614 = vmatprep.subr.mxu0 0.0
        %3615 = vmatpush1.msra.mxu0 0.0
        %3616 = vmatprep.subr.mxu0 0.0
        %3617 = vmatpush1.msra.mxu0 0.0
        %3618 = vmatprep.subr.mxu0 0.0
        %3619 = vmatpush1.msra.mxu0 0.0
        %3620 = vmatprep.subr.mxu0 0.0
        %3621 = vmatpush1.msra.mxu0 0.0
        %3622 = vmatprep.subr.mxu0 0.0
        %3623 = vmatpush1.msra.mxu0 0.0
        %3624 = vmatprep.subr.mxu0 0.0
        %3625 = vmatpush1.msra.mxu0 0.0
        %3626 = vmatprep.subr.mxu0 0.0
        %3627 = vmatpush1.msra.mxu0 0.0
        %3628 = vmatprep.subr.mxu0 0.0
        %3629 = vmatpush1.msra.mxu0 0.0
        %3630 = vmatprep.subr.mxu0 0.0
        %3631 = vmatpush1.msra.mxu0 0.0
        %3632 = vmatprep.subr.mxu0 0.0
        %3633 = vmatpush1.msra.mxu0 0.0
        %3634 = vmatprep.subr.mxu0 0.0
        %3635 = vmatpush1.msra.mxu0 0.0
        %3636 = vmatprep.subr.mxu0 0.0
        %3637 = vmatpush1.msra.mxu0 0.0
        %3638 = vmatprep.subr.mxu0 0.0
        %3639 = vmatpush1.msra.mxu0 0.0
        %3640 = vmatprep.subr.mxu0 0.0
        %3641 = vmatpush1.msra.mxu0 0.0
        %3642 = vmatprep.subr.mxu0 0.0
        %3643 = vmatpush1.msra.mxu0 0.0
        %3644 = vmatprep.subr.mxu0 0.0
        %3645 = vmatpush1.msra.mxu0 0.0
        %3646 = vmatprep.subr.mxu0 0.0
        %3647 = vmatpush1.msra.mxu0 0.0
        %3648 = vmatprep.subr.mxu0 0.0
        %3649 = vmatpush1.msra.mxu0 0.0
        %3650 = vmatprep.subr.mxu0 0.0
        %3651 = vmatpush1.msra.mxu0 0.0
        %3652 = vmatprep.subr.mxu0 0.0
        %3653 = vmatpush1.msra.mxu0 0.0
        %3654 = vmatprep.subr.mxu0 0.0
        %3655 = vmatpush1.msra.mxu0 0.0
        %3656 = vmatprep.subr.mxu0 0.0
        %3657 = vmatpush1.msra.mxu0 0.0
        %3658 = vmatprep.subr.mxu0 0.0
        %3659 = vmatpush1.msra.mxu0 0.0
        %3660 = vmatprep.subr.mxu0 0.0
        %3661 = vmatpush1.msra.mxu0 0.0
        %3662 = vmatprep.mubr.f32.mxu0 0.0
        %3663 = vmatmul.mubr.f32.gmra.mrb[0].mxu0 %v3591
        %v3664 = vpop.f32.mrb[0].mxu0
        %v3665 = vadd.f32 0.0, %v3664
        %v3666 = vpop.f32.mrb[0].mxu0
        %3667 = vmatprep.mubr.f32.mxu0 0.0
        %3668 = vmatmul.mubr.f32.gmra.mrb[0].mxu0 %v3593
        %v3669 = vpop.f32.mrb[0].mxu0
        %v3670 = vadd.f32 0.0, %v3669
        %v3671 = vpop.f32.mrb[0].mxu0
        %3672 = vmatprep.mubr.f32.mxu0 0.0
        %3673 = vmatmul.mubr.f32.gmra.mrb[0].mxu0 %v3596
        %v3674 = vpop.f32.mrb[0].mxu0
        %v3675 = vadd.f32 0.0, %v3674
        %v3676 = vpop.f32.mrb[0].mxu0
        %3677 = vdwg.mxu0
        %v3678 = vlaneseq
        %v3679 = vshrl.u32 %v3678, 7
        %v3680 = vsub.s32 2, %v3679
        %v3681 = vrot.slane %v3499, %v3680
        %v3682 = vmul.f32 %v3665, %v3681
        %v3683 = vmul.f32 %v3670, %v3681
        %v3684 = vmul.f32 %v3675, %v3681
        %v3685 = vadd.f32 %v3588, %v3682
        %v3686 = vadd.f32 %v3584, %v3683
        %v3687 = vadd.f32 %v3589, %v3684
        %v3689 = vrot.slane %v3497, 3
        %v3690 = vld [vmem:[%s14] sm:$0xff]
        %v3691 = vld [vmem:[%s14 + $0x8] sm:$0xff]
        %v3692 = vld [vmem:[%s14 + $0x10] sm:$0xff]
        %v3693 = vld [vmem:[%s14 + $0x18] sm:$0xff]
        %v3694 = vld [vmem:[%s14 + $0x20] sm:$0xff]
        %v3695 = vld [vmem:[%s14 + $0x28] sm:$0xff]
        %v3696 = vld [vmem:[%s14 + $0x30] sm:$0xff]
        %v3697 = vld [vmem:[%s14 + $0x38] sm:$0xff]
        %v3698 = vld [vmem:[%s14 + $0x40] sm:$0xff]
        %v3699 = vld [vmem:[%s14 + $0x48] sm:$0xff]
        %v3700 = vld [vmem:[%s14 + $0x50] sm:$0xff]
        %v3701 = vld [vmem:[%s14 + $0x58] sm:$0xff]
        %v3702 = vld [vmem:[%s14 + $0x60] sm:$0xff]
        %v3703 = vld [vmem:[%s14 + $0x68] sm:$0xff]
        %v3704 = vld [vmem:[%s14 + $0x70] sm:$0xff]
        %v3705 = vld [vmem:[%s14 + $0x78] sm:$0xff]
        %v3707 = vsel %vm2929, %v3551, 0
        %v3710 = vsel %vm2929, %v3552, 0
        %v3713 = vsel %vm2929, %v3553, 0
        %v3716 = vsel %vm2929, %v3685, 0
        %v3719 = vsel %vm2929, %v3686, 0
        %v3722 = vsel %vm2929, %v3687, 0
        %v3724 = vsel %vm2929, %v3689, 0
        %3726 = vmatprep.subr.mxu0 %v3691
        %3727 = vmatpush1.msra.mxu0 %v3690
        %3728 = vmatprep.subr.mxu0 %v3695
        %3729 = vmatpush1.msra.mxu0 %v3694
        %3730 = vmatprep.subr.mxu0 %v3699
        %3731 = vmatpush1.msra.mxu0 %v3698
        %3732 = vmatprep.subr.mxu0 %v3703
        %3733 = vmatpush1.msra.mxu0 %v3702
        %3734 = vmatprep.subr.mxu0 0.0
        %3735 = vmatpush1.msra.mxu0 0.0
        %3736 = vmatprep.subr.mxu0 0.0
        %3737 = vmatpush1.msra.mxu0 0.0
        %3738 = vmatprep.subr.mxu0 0.0
        %3739 = vmatpush1.msra.mxu0 0.0
        %3740 = vmatprep.subr.mxu0 0.0
        %3741 = vmatpush1.msra.mxu0 0.0
        %3742 = vmatprep.subr.mxu0 0.0
        %3743 = vmatpush1.msra.mxu0 0.0
        %3744 = vmatprep.subr.mxu0 0.0
        %3745 = vmatpush1.msra.mxu0 0.0
        %3746 = vmatprep.subr.mxu0 0.0
        %3747 = vmatpush1.msra.mxu0 0.0
        %3748 = vmatprep.subr.mxu0 0.0
        %3749 = vmatpush1.msra.mxu0 0.0
        %3750 = vmatprep.subr.mxu0 0.0
        %3751 = vmatpush1.msra.mxu0 0.0
        %3752 = vmatprep.subr.mxu0 0.0
        %3753 = vmatpush1.msra.mxu0 0.0
        %3754 = vmatprep.subr.mxu0 0.0
        %3755 = vmatpush1.msra.mxu0 0.0
        %3756 = vmatprep.subr.mxu0 0.0
        %3757 = vmatpush1.msra.mxu0 0.0
        %3758 = vmatprep.subr.mxu0 0.0
        %3759 = vmatpush1.msra.mxu0 0.0
        %3760 = vmatprep.subr.mxu0 0.0
        %3761 = vmatpush1.msra.mxu0 0.0
        %3762 = vmatprep.subr.mxu0 0.0
        %3763 = vmatpush1.msra.mxu0 0.0
        %3764 = vmatprep.subr.mxu0 0.0
        %3765 = vmatpush1.msra.mxu0 0.0
        %3766 = vmatprep.subr.mxu0 0.0
        %3767 = vmatpush1.msra.mxu0 0.0
        %3768 = vmatprep.subr.mxu0 0.0
        %3769 = vmatpush1.msra.mxu0 0.0
        %3770 = vmatprep.subr.mxu0 0.0
        %3771 = vmatpush1.msra.mxu0 0.0
        %3772 = vmatprep.subr.mxu0 0.0
        %3773 = vmatpush1.msra.mxu0 0.0
        %3774 = vmatprep.subr.mxu0 0.0
        %3775 = vmatpush1.msra.mxu0 0.0
        %3776 = vmatprep.subr.mxu0 0.0
        %3777 = vmatpush1.msra.mxu0 0.0
        %3778 = vmatprep.subr.mxu0 0.0
        %3779 = vmatpush1.msra.mxu0 0.0
        %3780 = vmatprep.subr.mxu0 0.0
        %3781 = vmatpush1.msra.mxu0 0.0
        %3782 = vmatprep.subr.mxu0 0.0
        %3783 = vmatpush1.msra.mxu0 0.0
        %3784 = vmatprep.subr.mxu0 0.0
        %3785 = vmatpush1.msra.mxu0 0.0
        %3786 = vmatprep.subr.mxu0 0.0
        %3787 = vmatpush1.msra.mxu0 0.0
        %3788 = vmatprep.subr.mxu0 0.0
        %3789 = vmatpush1.msra.mxu0 0.0
        %3790 = vmatprep.mubr.f32.mxu0 0.0
        %3791 = vmatmul.mubr.f32.gmra.mrb[0].mxu0 %v3707
        %v3792 = vpop.f32.mrb[0].mxu0
        %v3793 = vadd.f32 0.0, %v3792
        %v3794 = vpop.f32.mrb[0].mxu0
        %v3795 = vadd.f32 0.0, %v3794
        %3796 = vmatprep.mubr.f32.mxu0 0.0
        %3797 = vmatmul.mubr.f32.gmra.mrb[0].mxu0 %v3710
        %v3798 = vpop.f32.mrb[0].mxu0
        %v3799 = vadd.f32 0.0, %v3798
        %v3800 = vpop.f32.mrb[0].mxu0
        %v3801 = vadd.f32 0.0, %v3800
        %3802 = vmatprep.mubr.f32.mxu0 0.0
        %3803 = vmatmul.mubr.f32.gmra.mrb[0].mxu0 %v3713
        %v3804 = vpop.f32.mrb[0].mxu0
        %v3805 = vadd.f32 0.0, %v3804
        %v3806 = vpop.f32.mrb[0].mxu0
        %v3807 = vadd.f32 0.0, %v3806
        %3808 = vmatprep.mubr.f32.mxu0 0.0
        %3809 = vmatmul.mubr.f32.gmra.mrb[0].mxu0 %v3716
        %v3810 = vpop.f32.mrb[0].mxu0
        %v3811 = vadd.f32 0.0, %v3810
        %v3812 = vpop.f32.mrb[0].mxu0
        %v3813 = vadd.f32 0.0, %v3812
        %3814 = vmatprep.mubr.f32.mxu0 0.0
        %3815 = vmatmul.mubr.f32.gmra.mrb[0].mxu0 %v3719
        %v3816 = vpop.f32.mrb[0].mxu0
        %v3817 = vadd.f32 0.0, %v3816
        %v3818 = vpop.f32.mrb[0].mxu0
        %v3819 = vadd.f32 0.0, %v3818
        %3820 = vmatprep.mubr.f32.mxu0 0.0
        %3821 = vmatmul.mubr.f32.gmra.mrb[0].mxu0 %v3722
        %v3822 = vpop.f32.mrb[0].mxu0
        %v3823 = vadd.f32 0.0, %v3822
        %v3824 = vpop.f32.mrb[0].mxu0
        %v3825 = vadd.f32 0.0, %v3824
        %3826 = vmatprep.mubr.f32.mxu0 0.0
        %3827 = vmatmul.mubr.f32.gmra.mrb[0].mxu0 %v3724
        %v3828 = vpop.f32.mrb[0].mxu0
        %v3829 = vadd.f32 0.0, %v3828
        %v3830 = vpop.f32.mrb[0].mxu0
        %v3831 = vadd.f32 0.0, %v3830
        %3832 = vdwg.mxu0
        %3833 = vmatprep.subr.mxu0 %v3693
        %3834 = vmatpush1.msra.mxu0 %v3692
        %3835 = vmatprep.subr.mxu0 %v3697
        %3836 = vmatpush1.msra.mxu0 %v3696
        %3837 = vmatprep.subr.mxu0 %v3701
        %3838 = vmatpush1.msra.mxu0 %v3700
        %3839 = vmatprep.subr.mxu0 %v3705
        %3840 = vmatpush1.msra.mxu0 %v3704
        %3841 = vmatprep.subr.mxu0 0.0
        %3842 = vmatpush1.msra.mxu0 0.0
        %3843 = vmatprep.subr.mxu0 0.0
        %3844 = vmatpush1.msra.mxu0 0.0
        %3845 = vmatprep.subr.mxu0 0.0
        %3846 = vmatpush1.msra.mxu0 0.0
        %3847 = vmatprep.subr.mxu0 0.0
        %3848 = vmatpush1.msra.mxu0 0.0
        %3849 = vmatprep.subr.mxu0 0.0
        %3850 = vmatpush1.msra.mxu0 0.0
        %3851 = vmatprep.subr.mxu0 0.0
        %3852 = vmatpush1.msra.mxu0 0.0
        %3853 = vmatprep.subr.mxu0 0.0
        %3854 = vmatpush1.msra.mxu0 0.0
        %3855 = vmatprep.subr.mxu0 0.0
        %3856 = vmatpush1.msra.mxu0 0.0
        %3857 = vmatprep.subr.mxu0 0.0
        %3858 = vmatpush1.msra.mxu0 0.0
        %3859 = vmatprep.subr.mxu0 0.0
        %3860 = vmatpush1.msra.mxu0 0.0
        %3861 = vmatprep.subr.mxu0 0.0
        %3862 = vmatpush1.msra.mxu0 0.0
        %3863 = vmatprep.subr.mxu0 0.0
        %3864 = vmatpush1.msra.mxu0 0.0
        %3865 = vmatprep.subr.mxu0 0.0
        %3866 = vmatpush1.msra.mxu0 0.0
        %3867 = vmatprep.subr.mxu0 0.0
        %3868 = vmatpush1.msra.mxu0 0.0
        %3869 = vmatprep.subr.mxu0 0.0
        %3870 = vmatpush1.msra.mxu0 0.0
        %3871 = vmatprep.subr.mxu0 0.0
        %3872 = vmatpush1.msra.mxu0 0.0
        %3873 = vmatprep.subr.mxu0 0.0
        %3874 = vmatpush1.msra.mxu0 0.0
        %3875 = vmatprep.subr.mxu0 0.0
        %3876 = vmatpush1.msra.mxu0 0.0
        %3877 = vmatprep.subr.mxu0 0.0
        %3878 = vmatpush1.msra.mxu0 0.0
        %3879 = vmatprep.subr.mxu0 0.0
        %3880 = vmatpush1.msra.mxu0 0.0
        %3881 = vmatprep.subr.mxu0 0.0
        %3882 = vmatpush1.msra.mxu0 0.0
        %3883 = vmatprep.subr.mxu0 0.0
        %3884 = vmatpush1.msra.mxu0 0.0
        %3885 = vmatprep.subr.mxu0 0.0
        %3886 = vmatpush1.msra.mxu0 0.0
        %3887 = vmatprep.subr.mxu0 0.0
        %3888 = vmatpush1.msra.mxu0 0.0
        %3889 = vmatprep.subr.mxu0 0.0
        %3890 = vmatpush1.msra.mxu0 0.0
        %3891 = vmatprep.subr.mxu0 0.0
        %3892 = vmatpush1.msra.mxu0 0.0
        %3893 = vmatprep.subr.mxu0 0.0
        %3894 = vmatpush1.msra.mxu0 0.0
        %3895 = vmatprep.subr.mxu0 0.0
        %3896 = vmatpush1.msra.mxu0 0.0
        %3897 = vmatprep.mubr.f32.mxu0 0.0
        %3898 = vmatmul.mubr.f32.gmra.mrb[0].mxu0 %v3707
        %v3899 = vpop.f32.mrb[0].mxu0
        %v3900 = vadd.f32 0.0, %v3899
        %v3901 = vpop.f32.mrb[0].mxu0
        %v3902 = vadd.f32 0.0, %v3901
        %3903 = vmatprep.mubr.f32.mxu0 0.0
        %3904 = vmatmul.mubr.f32.gmra.mrb[0].mxu0 %v3710
        %v3905 = vpop.f32.mrb[0].mxu0
        %v3906 = vadd.f32 0.0, %v3905
        %v3907 = vpop.f32.mrb[0].mxu0
        %v3908 = vadd.f32 0.0, %v3907
        %3909 = vmatprep.mubr.f32.mxu0 0.0
        %3910 = vmatmul.mubr.f32.gmra.mrb[0].mxu0 %v3713
        %v3911 = vpop.f32.mrb[0].mxu0
        %v3912 = vadd.f32 0.0, %v3911
        %v3913 = vpop.f32.mrb[0].mxu0
        %v3914 = vadd.f32 0.0, %v3913
        %3915 = vmatprep.mubr.f32.mxu0 0.0
        %3916 = vmatmul.mubr.f32.gmra.mrb[0].mxu0 %v3716
        %v3917 = vpop.f32.mrb[0].mxu0
        %v3918 = vadd.f32 0.0, %v3917
        %v3919 = vpop.f32.mrb[0].mxu0
        %v3920 = vadd.f32 0.0, %v3919
        %3921 = vmatprep.mubr.f32.mxu0 0.0
        %3922 = vmatmul.mubr.f32.gmra.mrb[0].mxu0 %v3719
        %v3923 = vpop.f32.mrb[0].mxu0
        %v3924 = vadd.f32 0.0, %v3923
        %v3925 = vpop.f32.mrb[0].mxu0
        %v3926 = vadd.f32 0.0, %v3925
        %3927 = vmatprep.mubr.f32.mxu0 0.0
        %3928 = vmatmul.mubr.f32.gmra.mrb[0].mxu0 %v3722
        %v3929 = vpop.f32.mrb[0].mxu0
        %v3930 = vadd.f32 0.0, %v3929
        %v3931 = vpop.f32.mrb[0].mxu0
        %v3932 = vadd.f32 0.0, %v3931
        %3933 = vmatprep.mubr.f32.mxu0 0.0
        %3934 = vmatmul.mubr.f32.gmra.mrb[0].mxu0 %v3724
        %v3935 = vpop.f32.mrb[0].mxu0
        %v3936 = vadd.f32 0.0, %v3935
        %v3937 = vpop.f32.mrb[0].mxu0
        %v3938 = vadd.f32 0.0, %v3937
        %3939 = vdwg.mxu0
        %v3940 = vmul.f32 %v3793, 3.1415927
        %v3941 = vmul.f32 %v3795, 3.1415927
        %v3942 = vmul.f32 %v3900, 3.1415927
        %v3943 = vmul.f32 %v3902, 3.1415927
        %v3944 = vmul.f32 %v3799, 3.1415927
        %v3945 = vmul.f32 %v3801, 3.1415927
        %v3946 = vmul.f32 %v3906, 3.1415927
        %v3947 = vmul.f32 %v3908, 3.1415927
        %v3948 = vmul.f32 %v3805, 3.1415927
        %v3949 = vmul.f32 %v3807, 3.1415927
        %v3950 = vmul.f32 %v3912, 3.1415927
        %v3951 = vmul.f32 %v3914, 3.1415927
        %v3952 = vld [vmem:[%s15] sm:$0xff]
        %v3953 = vld [vmem:[%s15 + $0x8] sm:$0xff]
        %v3954 = vld [vmem:[%s15 + $0x10] sm:$0xff]
        %v3955 = vld [vmem:[%s15 + $0x18] sm:$0xff]
        %v3956 = vld [vmem:[%s15 + $0x20] sm:$0xff]
        %v3957 = vld [vmem:[%s15 + $0x28] sm:$0xff]
        %v3958 = vld [vmem:[%s15 + $0x30] sm:$0xff]
        %v3959 = vld [vmem:[%s15 + $0x38] sm:$0xff]
        %v3960 = vld [vmem:[%s15 + $0x40] sm:$0xff]
        %v3961 = vld [vmem:[%s15 + $0x48] sm:$0xff]
        %v3962 = vld [vmem:[%s15 + $0x50] sm:$0xff]
        %v3963 = vld [vmem:[%s15 + $0x58] sm:$0xff]
        %v3964 = vld [vmem:[%s15 + $0x60] sm:$0xff]
        %v3965 = vld [vmem:[%s15 + $0x68] sm:$0xff]
        %v3966 = vld [vmem:[%s15 + $0x70] sm:$0xff]
        %v3967 = vld [vmem:[%s15 + $0x78] sm:$0xff]
        %v3968 = vld [vmem:[%s15 + $0x80] sm:$0xff]
        %v3969 = vld [vmem:[%s15 + $0x88] sm:$0xff]
        %v3970 = vld [vmem:[%s15 + $0x90] sm:$0xff]
        %v3971 = vld [vmem:[%s15 + $0x98] sm:$0xff]
        %v3972 = vld [vmem:[%s15 + $0xa0] sm:$0xff]
        %v3973 = vld [vmem:[%s15 + $0xa8] sm:$0xff]
        %v3974 = vld [vmem:[%s15 + $0xb0] sm:$0xff]
        %v3975 = vld [vmem:[%s15 + $0xb8] sm:$0xff]
        %v3976 = vld [vmem:[%s15 + $0xc0] sm:$0xff]
        %v3977 = vld [vmem:[%s15 + $0xc8] sm:$0xff]
        %v3978 = vld [vmem:[%s15 + $0xd0] sm:$0xff]
        %v3979 = vld [vmem:[%s15 + $0xd8] sm:$0xff]
        %v3980 = vld [vmem:[%s15 + $0xe0] sm:$0xff]
        %v3981 = vld [vmem:[%s15 + $0xe8] sm:$0xff]
        %v3982 = vld [vmem:[%s15 + $0xf0] sm:$0xff]
        %v3983 = vld [vmem:[%s15 + $0xf8] sm:$0xff]
        %v3984 = vld [vmem:[%s15 + $0x100] sm:$0xff]
        %v3985 = vld [vmem:[%s15 + $0x108] sm:$0xff]
        %v3986 = vld [vmem:[%s15 + $0x110] sm:$0xff]
        %v3987 = vld [vmem:[%s15 + $0x118] sm:$0xff]
        %v3988 = vld [vmem:[%s15 + $0x120] sm:$0xff]
        %v3989 = vld [vmem:[%s15 + $0x128] sm:$0xff]
        %v3990 = vld [vmem:[%s15 + $0x130] sm:$0xff]
        %v3991 = vld [vmem:[%s15 + $0x138] sm:$0xff]
        %v3992 = vld [vmem:[%s15 + $0x140] sm:$0xff]
        %v3993 = vld [vmem:[%s15 + $0x148] sm:$0xff]
        %v3994 = vld [vmem:[%s15 + $0x150] sm:$0xff]
        %v3995 = vld [vmem:[%s15 + $0x158] sm:$0xff]
        %v3996 = vld [vmem:[%s15 + $0x160] sm:$0xff]
        %v3997 = vld [vmem:[%s15 + $0x168] sm:$0xff]
        %v3998 = vld [vmem:[%s15 + $0x170] sm:$0xff]
        %v3999 = vld [vmem:[%s15 + $0x178] sm:$0xff]
        %v4000 = vld [vmem:[%s15 + $0x180] sm:$0xff]
        %v4001 = vld [vmem:[%s15 + $0x188] sm:$0xff]
        %v4002 = vld [vmem:[%s15 + $0x190] sm:$0xff]
        %v4003 = vld [vmem:[%s15 + $0x198] sm:$0xff]
        %v4004 = vld [vmem:[%s15 + $0x1a0] sm:$0xff]
        %v4005 = vld [vmem:[%s15 + $0x1a8] sm:$0xff]
        %v4006 = vld [vmem:[%s15 + $0x1b0] sm:$0xff]
        %v4007 = vld [vmem:[%s15 + $0x1b8] sm:$0xff]
        %v4008 = vld [vmem:[%s15 + $0x1c0] sm:$0xff]
        %v4009 = vld [vmem:[%s15 + $0x1c8] sm:$0xff]
        %v4010 = vld [vmem:[%s15 + $0x1d0] sm:$0xff]
        %v4011 = vld [vmem:[%s15 + $0x1d8] sm:$0xff]
        %v4012 = vld [vmem:[%s15 + $0x1e0] sm:$0xff]
        %v4013 = vld [vmem:[%s15 + $0x1e8] sm:$0xff]
        %v4014 = vld [vmem:[%s15 + $0x1f0] sm:$0xff]
        %v4015 = vld [vmem:[%s15 + $0x1f8] sm:$0xff]
        %v4016 = vld [vmem:[%s15 + $0x200] sm:$0xff]
        %v4017 = vld [vmem:[%s15 + $0x208] sm:$0xff]
        %v4018 = vld [vmem:[%s15 + $0x210] sm:$0xff]
        %v4019 = vld [vmem:[%s15 + $0x218] sm:$0xff]
        %v4020 = vld [vmem:[%s15 + $0x220] sm:$0xff]
        %v4021 = vld [vmem:[%s15 + $0x228] sm:$0xff]
        %v4022 = vld [vmem:[%s15 + $0x230] sm:$0xff]
        %v4023 = vld [vmem:[%s15 + $0x238] sm:$0xff]
        %v4024 = vld [vmem:[%s15 + $0x240] sm:$0xff]
        %v4025 = vld [vmem:[%s15 + $0x248] sm:$0xff]
        %v4026 = vld [vmem:[%s15 + $0x250] sm:$0xff]
        %v4027 = vld [vmem:[%s15 + $0x258] sm:$0xff]
        %v4028 = vld [vmem:[%s15 + $0x260] sm:$0xff]
        %v4029 = vld [vmem:[%s15 + $0x268] sm:$0xff]
        %v4030 = vld [vmem:[%s15 + $0x270] sm:$0xff]
        %v4031 = vld [vmem:[%s15 + $0x278] sm:$0xff]
        %v4032 = vld [vmem:[%s15 + $0x280] sm:$0xff]
        %v4033 = vld [vmem:[%s15 + $0x288] sm:$0xff]
        %v4034 = vld [vmem:[%s15 + $0x290] sm:$0xff]
        %v4035 = vld [vmem:[%s15 + $0x298] sm:$0xff]
        %v4036 = vld [vmem:[%s15 + $0x2a0] sm:$0xff]
        %v4037 = vld [vmem:[%s15 + $0x2a8] sm:$0xff]
        %v4038 = vld [vmem:[%s15 + $0x2b0] sm:$0xff]
        %v4039 = vld [vmem:[%s15 + $0x2b8] sm:$0xff]
        %v4040 = vld [vmem:[%s15 + $0x2c0] sm:$0xff]
        %v4041 = vld [vmem:[%s15 + $0x2c8] sm:$0xff]
        %v4042 = vld [vmem:[%s15 + $0x2d0] sm:$0xff]
        %v4043 = vld [vmem:[%s15 + $0x2d8] sm:$0xff]
        %v4044 = vld [vmem:[%s15 + $0x2e0] sm:$0xff]
        %v4045 = vld [vmem:[%s15 + $0x2e8] sm:$0xff]
        %v4046 = vld [vmem:[%s15 + $0x2f0] sm:$0xff]
        %v4047 = vld [vmem:[%s15 + $0x2f8] sm:$0xff]
        %v4048 = vld [vmem:[%s15 + $0x300] sm:$0xff]
        %v4049 = vld [vmem:[%s15 + $0x308] sm:$0xff]
        %v4050 = vld [vmem:[%s15 + $0x310] sm:$0xff]
        %v4051 = vld [vmem:[%s15 + $0x318] sm:$0xff]
        %v4052 = vld [vmem:[%s15 + $0x320] sm:$0xff]
        %v4053 = vld [vmem:[%s15 + $0x328] sm:$0xff]
        %v4054 = vld [vmem:[%s15 + $0x330] sm:$0xff]
        %v4055 = vld [vmem:[%s15 + $0x338] sm:$0xff]
        %v4056 = vld [vmem:[%s15 + $0x340] sm:$0xff]
        %v4057 = vld [vmem:[%s15 + $0x348] sm:$0xff]
        %v4058 = vld [vmem:[%s15 + $0x350] sm:$0xff]
        %v4059 = vld [vmem:[%s15 + $0x358] sm:$0xff]
        %v4060 = vld [vmem:[%s15 + $0x360] sm:$0xff]
        %v4061 = vld [vmem:[%s15 + $0x368] sm:$0xff]
        %v4062 = vld [vmem:[%s15 + $0x370] sm:$0xff]
        %v4063 = vld [vmem:[%s15 + $0x378] sm:$0xff]
        %v4064 = vld [vmem:[%s15 + $0x380] sm:$0xff]
        %v4065 = vld [vmem:[%s15 + $0x388] sm:$0xff]
        %v4066 = vld [vmem:[%s15 + $0x390] sm:$0xff]
        %v4067 = vld [vmem:[%s15 + $0x398] sm:$0xff]
        %v4068 = vld [vmem:[%s15 + $0x3a0] sm:$0xff]
        %v4069 = vld [vmem:[%s15 + $0x3a8] sm:$0xff]
        %v4070 = vld [vmem:[%s15 + $0x3b0] sm:$0xff]
        %v4071 = vld [vmem:[%s15 + $0x3b8] sm:$0xff]
        %v4072 = vld [vmem:[%s15 + $0x3c0] sm:$0xff]
        %v4073 = vld [vmem:[%s15 + $0x3c8] sm:$0xff]
        %v4074 = vld [vmem:[%s15 + $0x3d0] sm:$0xff]
        %v4075 = vld [vmem:[%s15 + $0x3d8] sm:$0xff]
        %v4076 = vld [vmem:[%s15 + $0x3e0] sm:$0xff]
        %v4077 = vld [vmem:[%s15 + $0x3e8] sm:$0xff]
        %v4078 = vld [vmem:[%s15 + $0x3f0] sm:$0xff]
        %v4079 = vld [vmem:[%s15 + $0x3f8] sm:$0xff]
        %v4080 = vld [vmem:[%s15 + $0x400] sm:$0xff]
        %v4081 = vld [vmem:[%s15 + $0x408] sm:$0xff]
        %v4082 = vld [vmem:[%s15 + $0x410] sm:$0xff]
        %v4083 = vld [vmem:[%s15 + $0x418] sm:$0xff]
        %v4084 = vld [vmem:[%s15 + $0x420] sm:$0xff]
        %v4085 = vld [vmem:[%s15 + $0x428] sm:$0xff]
        %v4086 = vld [vmem:[%s15 + $0x430] sm:$0xff]
        %v4087 = vld [vmem:[%s15 + $0x438] sm:$0xff]
        %v4088 = vld [vmem:[%s15 + $0x440] sm:$0xff]
        %v4089 = vld [vmem:[%s15 + $0x448] sm:$0xff]
        %v4090 = vld [vmem:[%s15 + $0x450] sm:$0xff]
        %v4091 = vld [vmem:[%s15 + $0x458] sm:$0xff]
        %v4092 = vld [vmem:[%s15 + $0x460] sm:$0xff]
        %v4093 = vld [vmem:[%s15 + $0x468] sm:$0xff]
        %v4094 = vld [vmem:[%s15 + $0x470] sm:$0xff]
        %v4095 = vld [vmem:[%s15 + $0x478] sm:$0xff]
        %v4096 = vld [vmem:[%s15 + $0x480] sm:$0xff]
        %v4097 = vld [vmem:[%s15 + $0x488] sm:$0xff]
        %v4098 = vld [vmem:[%s15 + $0x490] sm:$0xff]
        %v4099 = vld [vmem:[%s15 + $0x498] sm:$0xff]
        %v4100 = vld [vmem:[%s15 + $0x4a0] sm:$0xff]
        %v4101 = vld [vmem:[%s15 + $0x4a8] sm:$0xff]
        %v4102 = vld [vmem:[%s15 + $0x4b0] sm:$0xff]
        %v4103 = vld [vmem:[%s15 + $0x4b8] sm:$0xff]
        %v4104 = vld [vmem:[%s15 + $0x4c0] sm:$0xff]
        %v4105 = vld [vmem:[%s15 + $0x4c8] sm:$0xff]
        %v4106 = vld [vmem:[%s15 + $0x4d0] sm:$0xff]
        %v4107 = vld [vmem:[%s15 + $0x4d8] sm:$0xff]
        %v4108 = vld [vmem:[%s15 + $0x4e0] sm:$0xff]
        %v4109 = vld [vmem:[%s15 + $0x4e8] sm:$0xff]
        %v4110 = vld [vmem:[%s15 + $0x4f0] sm:$0xff]
        %v4111 = vld [vmem:[%s15 + $0x4f8] sm:$0xff]
        %v4112 = vld [vmem:[%s15 + $0x500] sm:$0xff]
        %v4113 = vld [vmem:[%s15 + $0x508] sm:$0xff]
        %v4114 = vld [vmem:[%s15 + $0x510] sm:$0xff]
        %v4115 = vld [vmem:[%s15 + $0x518] sm:$0xff]
        %v4116 = vld [vmem:[%s15 + $0x520] sm:$0xff]
        %v4117 = vld [vmem:[%s15 + $0x528] sm:$0xff]
        %v4118 = vld [vmem:[%s15 + $0x530] sm:$0xff]
        %v4119 = vld [vmem:[%s15 + $0x538] sm:$0xff]
        %v4120 = vld [vmem:[%s15 + $0x540] sm:$0xff]
        %v4121 = vld [vmem:[%s15 + $0x548] sm:$0xff]
        %v4122 = vld [vmem:[%s15 + $0x550] sm:$0xff]
        %v4123 = vld [vmem:[%s15 + $0x558] sm:$0xff]
        %v4124 = vld [vmem:[%s15 + $0x560] sm:$0xff]
        %v4125 = vld [vmem:[%s15 + $0x568] sm:$0xff]
        %v4126 = vld [vmem:[%s15 + $0x570] sm:$0xff]
        %v4127 = vld [vmem:[%s15 + $0x578] sm:$0xff]
        %v4128 = vld [vmem:[%s15 + $0x580] sm:$0xff]
        %v4129 = vld [vmem:[%s15 + $0x588] sm:$0xff]
        %v4130 = vld [vmem:[%s15 + $0x590] sm:$0xff]
        %v4131 = vld [vmem:[%s15 + $0x598] sm:$0xff]
        %v4132 = vld [vmem:[%s15 + $0x5a0] sm:$0xff]
        %v4133 = vld [vmem:[%s15 + $0x5a8] sm:$0xff]
        %v4134 = vld [vmem:[%s15 + $0x5b0] sm:$0xff]
        %v4135 = vld [vmem:[%s15 + $0x5b8] sm:$0xff]
        %v4136 = vld [vmem:[%s15 + $0x5c0] sm:$0xff]
        %v4137 = vld [vmem:[%s15 + $0x5c8] sm:$0xff]
        %v4138 = vld [vmem:[%s15 + $0x5d0] sm:$0xff]
        %v4139 = vld [vmem:[%s15 + $0x5d8] sm:$0xff]
        %v4140 = vld [vmem:[%s15 + $0x5e0] sm:$0xff]
        %v4141 = vld [vmem:[%s15 + $0x5e8] sm:$0xff]
        %v4142 = vld [vmem:[%s15 + $0x5f0] sm:$0xff]
        %v4143 = vld [vmem:[%s15 + $0x5f8] sm:$0xff]
        %v4144 = vld [vmem:[%s15 + $0x600] sm:$0xff]
        %v4145 = vld [vmem:[%s15 + $0x608] sm:$0xff]
        %v4146 = vld [vmem:[%s15 + $0x610] sm:$0xff]
        %v4147 = vld [vmem:[%s15 + $0x618] sm:$0xff]
        %v4148 = vld [vmem:[%s15 + $0x620] sm:$0xff]
        %v4149 = vld [vmem:[%s15 + $0x628] sm:$0xff]
        %v4150 = vld [vmem:[%s15 + $0x630] sm:$0xff]
        %v4151 = vld [vmem:[%s15 + $0x638] sm:$0xff]
        %v4152 = vld [vmem:[%s15 + $0x640] sm:$0xff]
        %v4153 = vld [vmem:[%s15 + $0x648] sm:$0xff]
        %v4154 = vld [vmem:[%s15 + $0x650] sm:$0xff]
        %v4155 = vld [vmem:[%s15 + $0x658] sm:$0xff]
        %v4156 = vld [vmem:[%s15 + $0x660] sm:$0xff]
        %v4157 = vld [vmem:[%s15 + $0x668] sm:$0xff]
        %v4158 = vld [vmem:[%s15 + $0x670] sm:$0xff]
        %v4159 = vld [vmem:[%s15 + $0x678] sm:$0xff]
        %v4160 = vld [vmem:[%s15 + $0x680] sm:$0xff]
        %v4161 = vld [vmem:[%s15 + $0x688] sm:$0xff]
        %v4162 = vld [vmem:[%s15 + $0x690] sm:$0xff]
        %v4163 = vld [vmem:[%s15 + $0x698] sm:$0xff]
        %v4164 = vld [vmem:[%s15 + $0x6a0] sm:$0xff]
        %v4165 = vld [vmem:[%s15 + $0x6a8] sm:$0xff]
        %v4166 = vld [vmem:[%s15 + $0x6b0] sm:$0xff]
        %v4167 = vld [vmem:[%s15 + $0x6b8] sm:$0xff]
        %v4168 = vld [vmem:[%s15 + $0x6c0] sm:$0xff]
        %v4169 = vld [vmem:[%s15 + $0x6c8] sm:$0xff]
        %v4170 = vld [vmem:[%s15 + $0x6d0] sm:$0xff]
        %v4171 = vld [vmem:[%s15 + $0x6d8] sm:$0xff]
        %v4172 = vld [vmem:[%s15 + $0x6e0] sm:$0xff]
        %v4173 = vld [vmem:[%s15 + $0x6e8] sm:$0xff]
        %v4174 = vld [vmem:[%s15 + $0x6f0] sm:$0xff]
        %v4175 = vld [vmem:[%s15 + $0x6f8] sm:$0xff]
        %v4176 = vld [vmem:[%s15 + $0x700] sm:$0xff]
        %v4177 = vld [vmem:[%s15 + $0x708] sm:$0xff]
        %v4178 = vld [vmem:[%s15 + $0x710] sm:$0xff]
        %v4179 = vld [vmem:[%s15 + $0x718] sm:$0xff]
        %v4180 = vld [vmem:[%s15 + $0x720] sm:$0xff]
        %v4181 = vld [vmem:[%s15 + $0x728] sm:$0xff]
        %v4182 = vld [vmem:[%s15 + $0x730] sm:$0xff]
        %v4183 = vld [vmem:[%s15 + $0x738] sm:$0xff]
        %v4184 = vld [vmem:[%s15 + $0x740] sm:$0xff]
        %v4185 = vld [vmem:[%s15 + $0x748] sm:$0xff]
        %v4186 = vld [vmem:[%s15 + $0x750] sm:$0xff]
        %v4187 = vld [vmem:[%s15 + $0x758] sm:$0xff]
        %v4188 = vld [vmem:[%s15 + $0x760] sm:$0xff]
        %v4189 = vld [vmem:[%s15 + $0x768] sm:$0xff]
        %v4190 = vld [vmem:[%s15 + $0x770] sm:$0xff]
        %v4191 = vld [vmem:[%s15 + $0x778] sm:$0xff]
        %v4192 = vld [vmem:[%s15 + $0x780] sm:$0xff]
        %v4193 = vld [vmem:[%s15 + $0x788] sm:$0xff]
        %v4194 = vld [vmem:[%s15 + $0x790] sm:$0xff]
        %v4195 = vld [vmem:[%s15 + $0x798] sm:$0xff]
        %v4196 = vld [vmem:[%s15 + $0x7a0] sm:$0xff]
        %v4197 = vld [vmem:[%s15 + $0x7a8] sm:$0xff]
        %v4198 = vld [vmem:[%s15 + $0x7b0] sm:$0xff]
        %v4199 = vld [vmem:[%s15 + $0x7b8] sm:$0xff]
        %v4200 = vld [vmem:[%s15 + $0x7c0] sm:$0xff]
        %v4201 = vld [vmem:[%s15 + $0x7c8] sm:$0xff]
        %v4202 = vld [vmem:[%s15 + $0x7d0] sm:$0xff]
        %v4203 = vld [vmem:[%s15 + $0x7d8] sm:$0xff]
        %v4204 = vld [vmem:[%s15 + $0x7e0] sm:$0xff]
        %v4205 = vld [vmem:[%s15 + $0x7e8] sm:$0xff]
        %v4206 = vld [vmem:[%s15 + $0x7f0] sm:$0xff]
        %v4207 = vld [vmem:[%s15 + $0x7f8] sm:$0xff]
        %4208 = vmatprep.subr.mxu0 %v3953
        %4209 = vmatpush1.msra.mxu0 %v3952
        %4210 = vmatprep.subr.mxu0 %v3957
        %4211 = vmatpush1.msra.mxu0 %v3956
        %4212 = vmatprep.subr.mxu0 %v3961
        %4213 = vmatpush1.msra.mxu0 %v3960
        %4214 = vmatprep.subr.mxu0 %v3965
        %4215 = vmatpush1.msra.mxu0 %v3964
        %4216 = vmatprep.subr.mxu0 %v3969
        %4217 = vmatpush1.msra.mxu0 %v3968
        %4218 = vmatprep.subr.mxu0 %v3973
        %4219 = vmatpush1.msra.mxu0 %v3972
        %4220 = vmatprep.subr.mxu0 %v3977
        %4221 = vmatpush1.msra.mxu0 %v3976
        %4222 = vmatprep.subr.mxu0 %v3981
        %4223 = vmatpush1.msra.mxu0 %v3980
        %4224 = vmatprep.subr.mxu0 %v3985
        %4225 = vmatpush1.msra.mxu0 %v3984
        %4226 = vmatprep.subr.mxu0 %v3989
        %4227 = vmatpush1.msra.mxu0 %v3988
        %4228 = vmatprep.subr.mxu0 %v3993
        %4229 = vmatpush1.msra.mxu0 %v3992
        %4230 = vmatprep.subr.mxu0 %v3997
        %4231 = vmatpush1.msra.mxu0 %v3996
        %4232 = vmatprep.subr.mxu0 %v4001
        %4233 = vmatpush1.msra.mxu0 %v4000
        %4234 = vmatprep.subr.mxu0 %v4005
        %4235 = vmatpush1.msra.mxu0 %v4004
        %4236 = vmatprep.subr.mxu0 %v4009
        %4237 = vmatpush1.msra.mxu0 %v4008
        %4238 = vmatprep.subr.mxu0 %v4013
        %4239 = vmatpush1.msra.mxu0 %v4012
        %4240 = vmatprep.subr.mxu0 %v4017
        %4241 = vmatpush1.msra.mxu0 %v4016
        %4242 = vmatprep.subr.mxu0 %v4021
        %4243 = vmatpush1.msra.mxu0 %v4020
        %4244 = vmatprep.subr.mxu0 %v4025
        %4245 = vmatpush1.msra.mxu0 %v4024
        %4246 = vmatprep.subr.mxu0 %v4029
        %4247 = vmatpush1.msra.mxu0 %v4028
        %4248 = vmatprep.subr.mxu0 %v4033
        %4249 = vmatpush1.msra.mxu0 %v4032
        %4250 = vmatprep.subr.mxu0 %v4037
        %4251 = vmatpush1.msra.mxu0 %v4036
        %4252 = vmatprep.subr.mxu0 %v4041
        %4253 = vmatpush1.msra.mxu0 %v4040
        %4254 = vmatprep.subr.mxu0 %v4045
        %4255 = vmatpush1.msra.mxu0 %v4044
        %4256 = vmatprep.subr.mxu0 %v4049
        %4257 = vmatpush1.msra.mxu0 %v4048
        %4258 = vmatprep.subr.mxu0 %v4053
        %4259 = vmatpush1.msra.mxu0 %v4052
        %4260 = vmatprep.subr.mxu0 %v4057
        %4261 = vmatpush1.msra.mxu0 %v4056
        %4262 = vmatprep.subr.mxu0 %v4061
        %4263 = vmatpush1.msra.mxu0 %v4060
        %4264 = vmatprep.subr.mxu0 %v4065
        %4265 = vmatpush1.msra.mxu0 %v4064
        %4266 = vmatprep.subr.mxu0 %v4069
        %4267 = vmatpush1.msra.mxu0 %v4068
        %4268 = vmatprep.subr.mxu0 %v4073
        %4269 = vmatpush1.msra.mxu0 %v4072
        %4270 = vmatprep.subr.mxu0 %v4077
        %4271 = vmatpush1.msra.mxu0 %v4076
        %4272 = vmatprep.mubr.f32.mxu0 %v3941
        %4273 = vmatmul.mubr.f32.gmra.mrb[0].mxu0 %v3940
        %v4274 = vpop.f32.mrb[0].mxu0
        %v4275 = vadd.f32 0.0, %v4274
        %v4276 = vpop.f32.mrb[0].mxu0
        %v4277 = vadd.f32 0.0, %v4276
        %4278 = vmatprep.mubr.f32.mxu0 %v3945
        %4279 = vmatmul.mubr.f32.gmra.mrb[0].mxu0 %v3944
        %v4280 = vpop.f32.mrb[0].mxu0
        %v4281 = vadd.f32 0.0, %v4280
        %v4282 = vpop.f32.mrb[0].mxu0
        %v4283 = vadd.f32 0.0, %v4282
        %4284 = vmatprep.mubr.f32.mxu0 %v3949
        %4285 = vmatmul.mubr.f32.gmra.mrb[0].mxu0 %v3948
        %v4286 = vpop.f32.mrb[0].mxu0
        %v4287 = vadd.f32 0.0, %v4286
        %v4288 = vpop.f32.mrb[0].mxu0
        %v4289 = vadd.f32 0.0, %v4288
        %4290 = vdwg.mxu0
        %4291 = vmatprep.subr.mxu0 %v4081
        %4292 = vmatpush1.msra.mxu0 %v4080
        %4293 = vmatprep.subr.mxu0 %v4085
        %4294 = vmatpush1.msra.mxu0 %v4084
        %4295 = vmatprep.subr.mxu0 %v4089
        %4296 = vmatpush1.msra.mxu0 %v4088
        %4297 = vmatprep.subr.mxu0 %v4093
        %4298 = vmatpush1.msra.mxu0 %v4092
        %4299 = vmatprep.subr.mxu0 %v4097
        %4300 = vmatpush1.msra.mxu0 %v4096
        %4301 = vmatprep.subr.mxu0 %v4101
        %4302 = vmatpush1.msra.mxu0 %v4100
        %4303 = vmatprep.subr.mxu0 %v4105
        %4304 = vmatpush1.msra.mxu0 %v4104
        %4305 = vmatprep.subr.mxu0 %v4109
        %4306 = vmatpush1.msra.mxu0 %v4108
        %4307 = vmatprep.subr.mxu0 %v4113
        %4308 = vmatpush1.msra.mxu0 %v4112
        %4309 = vmatprep.subr.mxu0 %v4117
        %4310 = vmatpush1.msra.mxu0 %v4116
        %4311 = vmatprep.subr.mxu0 %v4121
        %4312 = vmatpush1.msra.mxu0 %v4120
        %4313 = vmatprep.subr.mxu0 %v4125
        %4314 = vmatpush1.msra.mxu0 %v4124
        %4315 = vmatprep.subr.mxu0 %v4129
        %4316 = vmatpush1.msra.mxu0 %v4128
        %4317 = vmatprep.subr.mxu0 %v4133
        %4318 = vmatpush1.msra.mxu0 %v4132
        %4319 = vmatprep.subr.mxu0 %v4137
        %4320 = vmatpush1.msra.mxu0 %v4136
        %4321 = vmatprep.subr.mxu0 %v4141
        %4322 = vmatpush1.msra.mxu0 %v4140
        %4323 = vmatprep.subr.mxu0 %v4145
        %4324 = vmatpush1.msra.mxu0 %v4144
        %4325 = vmatprep.subr.mxu0 %v4149
        %4326 = vmatpush1.msra.mxu0 %v4148
        %4327 = vmatprep.subr.mxu0 %v4153
        %4328 = vmatpush1.msra.mxu0 %v4152
        %4329 = vmatprep.subr.mxu0 %v4157
        %4330 = vmatpush1.msra.mxu0 %v4156
        %4331 = vmatprep.subr.mxu0 %v4161
        %4332 = vmatpush1.msra.mxu0 %v4160
        %4333 = vmatprep.subr.mxu0 %v4165
        %4334 = vmatpush1.msra.mxu0 %v4164
        %4335 = vmatprep.subr.mxu0 %v4169
        %4336 = vmatpush1.msra.mxu0 %v4168
        %4337 = vmatprep.subr.mxu0 %v4173
        %4338 = vmatpush1.msra.mxu0 %v4172
        %4339 = vmatprep.subr.mxu0 %v4177
        %4340 = vmatpush1.msra.mxu0 %v4176
        %4341 = vmatprep.subr.mxu0 %v4181
        %4342 = vmatpush1.msra.mxu0 %v4180
        %4343 = vmatprep.subr.mxu0 %v4185
        %4344 = vmatpush1.msra.mxu0 %v4184
        %4345 = vmatprep.subr.mxu0 %v4189
        %4346 = vmatpush1.msra.mxu0 %v4188
        %4347 = vmatprep.subr.mxu0 %v4193
        %4348 = vmatpush1.msra.mxu0 %v4192
        %4349 = vmatprep.subr.mxu0 %v4197
        %4350 = vmatpush1.msra.mxu0 %v4196
        %4351 = vmatprep.subr.mxu0 %v4201
        %4352 = vmatpush1.msra.mxu0 %v4200
        %4353 = vmatprep.subr.mxu0 %v4205
        %4354 = vmatpush1.msra.mxu0 %v4204
        %4355 = vmatprep.mubr.f32.mxu0 %v3943
        %4356 = vmatmul.mubr.f32.gmra.mrb[0].mxu0 %v3942
        %v4357 = vpop.f32.mrb[0].mxu0
        %v4358 = vadd.f32 %v4275, %v4357
        %v4359 = vpop.f32.mrb[0].mxu0
        %v4360 = vadd.f32 %v4277, %v4359
        %4361 = vmatprep.mubr.f32.mxu0 %v3947
        %4362 = vmatmul.mubr.f32.gmra.mrb[0].mxu0 %v3946
        %v4363 = vpop.f32.mrb[0].mxu0
        %v4364 = vadd.f32 %v4281, %v4363
        %v4365 = vpop.f32.mrb[0].mxu0
        %v4366 = vadd.f32 %v4283, %v4365
        %4367 = vmatprep.mubr.f32.mxu0 %v3951
        %4368 = vmatmul.mubr.f32.gmra.mrb[0].mxu0 %v3950
        %v4369 = vpop.f32.mrb[0].mxu0
        %v4370 = vadd.f32 %v4287, %v4369
        %v4371 = vpop.f32.mrb[0].mxu0
        %v4372 = vadd.f32 %v4289, %v4371
        %4373 = vdwg.mxu0
        %4374 = vmatprep.subr.mxu0 %v3955
        %4375 = vmatpush1.msra.mxu0 %v3954
        %4376 = vmatprep.subr.mxu0 %v3959
        %4377 = vmatpush1.msra.mxu0 %v3958
        %4378 = vmatprep.subr.mxu0 %v3963
        %4379 = vmatpush1.msra.mxu0 %v3962
        %4380 = vmatprep.subr.mxu0 %v3967
        %4381 = vmatpush1.msra.mxu0 %v3966
        %4382 = vmatprep.subr.mxu0 %v3971
        %4383 = vmatpush1.msra.mxu0 %v3970
        %4384 = vmatprep.subr.mxu0 %v3975
        %4385 = vmatpush1.msra.mxu0 %v3974
        %4386 = vmatprep.subr.mxu0 %v3979
        %4387 = vmatpush1.msra.mxu0 %v3978
        %4388 = vmatprep.subr.mxu0 %v3983
        %4389 = vmatpush1.msra.mxu0 %v3982
        %4390 = vmatprep.subr.mxu0 %v3987
        %4391 = vmatpush1.msra.mxu0 %v3986
        %4392 = vmatprep.subr.mxu0 %v3991
        %4393 = vmatpush1.msra.mxu0 %v3990
        %4394 = vmatprep.subr.mxu0 %v3995
        %4395 = vmatpush1.msra.mxu0 %v3994
        %4396 = vmatprep.subr.mxu0 %v3999
        %4397 = vmatpush1.msra.mxu0 %v3998
        %4398 = vmatprep.subr.mxu0 %v4003
        %4399 = vmatpush1.msra.mxu0 %v4002
        %4400 = vmatprep.subr.mxu0 %v4007
        %4401 = vmatpush1.msra.mxu0 %v4006
        %4402 = vmatprep.subr.mxu0 %v4011
        %4403 = vmatpush1.msra.mxu0 %v4010
        %4404 = vmatprep.subr.mxu0 %v4015
        %4405 = vmatpush1.msra.mxu0 %v4014
        %4406 = vmatprep.subr.mxu0 %v4019
        %4407 = vmatpush1.msra.mxu0 %v4018
        %4408 = vmatprep.subr.mxu0 %v4023
        %4409 = vmatpush1.msra.mxu0 %v4022
        %4410 = vmatprep.subr.mxu0 %v4027
        %4411 = vmatpush1.msra.mxu0 %v4026
        %4412 = vmatprep.subr.mxu0 %v4031
        %4413 = vmatpush1.msra.mxu0 %v4030
        %4414 = vmatprep.subr.mxu0 %v4035
        %4415 = vmatpush1.msra.mxu0 %v4034
        %4416 = vmatprep.subr.mxu0 %v4039
        %4417 = vmatpush1.msra.mxu0 %v4038
        %4418 = vmatprep.subr.mxu0 %v4043
        %4419 = vmatpush1.msra.mxu0 %v4042
        %4420 = vmatprep.subr.mxu0 %v4047
        %4421 = vmatpush1.msra.mxu0 %v4046
        %4422 = vmatprep.subr.mxu0 %v4051
        %4423 = vmatpush1.msra.mxu0 %v4050
        %4424 = vmatprep.subr.mxu0 %v4055
        %4425 = vmatpush1.msra.mxu0 %v4054
        %4426 = vmatprep.subr.mxu0 %v4059
        %4427 = vmatpush1.msra.mxu0 %v4058
        %4428 = vmatprep.subr.mxu0 %v4063
        %4429 = vmatpush1.msra.mxu0 %v4062
        %4430 = vmatprep.subr.mxu0 %v4067
        %4431 = vmatpush1.msra.mxu0 %v4066
        %4432 = vmatprep.subr.mxu0 %v4071
        %4433 = vmatpush1.msra.mxu0 %v4070
        %4434 = vmatprep.subr.mxu0 %v4075
        %4435 = vmatpush1.msra.mxu0 %v4074
        %4436 = vmatprep.subr.mxu0 %v4079
        %4437 = vmatpush1.msra.mxu0 %v4078
        %4438 = vmatprep.mubr.f32.mxu0 %v3941
        %4439 = vmatmul.mubr.f32.gmra.mrb[0].mxu0 %v3940
        %v4440 = vpop.f32.mrb[0].mxu0
        %v4441 = vadd.f32 0.0, %v4440
        %v4442 = vpop.f32.mrb[0].mxu0
        %v4443 = vadd.f32 0.0, %v4442
        %4444 = vmatprep.mubr.f32.mxu0 %v3945
        %4445 = vmatmul.mubr.f32.gmra.mrb[0].mxu0 %v3944
        %v4446 = vpop.f32.mrb[0].mxu0
        %v4447 = vadd.f32 0.0, %v4446
        %v4448 = vpop.f32.mrb[0].mxu0
        %v4449 = vadd.f32 0.0, %v4448
        %4450 = vmatprep.mubr.f32.mxu0 %v3949
        %4451 = vmatmul.mubr.f32.gmra.mrb[0].mxu0 %v3948
        %v4452 = vpop.f32.mrb[0].mxu0
        %v4453 = vadd.f32 0.0, %v4452
        %v4454 = vpop.f32.mrb[0].mxu0
        %v4455 = vadd.f32 0.0, %v4454
        %4456 = vdwg.mxu0
        %4457 = vmatprep.subr.mxu0 %v4083
        %4458 = vmatpush1.msra.mxu0 %v4082
        %4459 = vmatprep.subr.mxu0 %v4087
        %4460 = vmatpush1.msra.mxu0 %v4086
        %4461 = vmatprep.subr.mxu0 %v4091
        %4462 = vmatpush1.msra.mxu0 %v4090
        %4463 = vmatprep.subr.mxu0 %v4095
        %4464 = vmatpush1.msra.mxu0 %v4094
        %4465 = vmatprep.subr.mxu0 %v4099
        %4466 = vmatpush1.msra.mxu0 %v4098
        %4467 = vmatprep.subr.mxu0 %v4103
        %4468 = vmatpush1.msra.mxu0 %v4102
        %4469 = vmatprep.subr.mxu0 %v4107
        %4470 = vmatpush1.msra.mxu0 %v4106
        %4471 = vmatprep.subr.mxu0 %v4111
        %4472 = vmatpush1.msra.mxu0 %v4110
        %4473 = vmatprep.subr.mxu0 %v4115
        %4474 = vmatpush1.msra.mxu0 %v4114
        %4475 = vmatprep.subr.mxu0 %v4119
        %4476 = vmatpush1.msra.mxu0 %v4118
        %4477 = vmatprep.subr.mxu0 %v4123
        %4478 = vmatpush1.msra.mxu0 %v4122
        %4479 = vmatprep.subr.mxu0 %v4127
        %4480 = vmatpush1.msra.mxu0 %v4126
        %4481 = vmatprep.subr.mxu0 %v4131
        %4482 = vmatpush1.msra.mxu0 %v4130
        %4483 = vmatprep.subr.mxu0 %v4135
        %4484 = vmatpush1.msra.mxu0 %v4134
        %4485 = vmatprep.subr.mxu0 %v4139
        %4486 = vmatpush1.msra.mxu0 %v4138
        %4487 = vmatprep.subr.mxu0 %v4143
        %4488 = vmatpush1.msra.mxu0 %v4142
        %4489 = vmatprep.subr.mxu0 %v4147
        %4490 = vmatpush1.msra.mxu0 %v4146
        %4491 = vmatprep.subr.mxu0 %v4151
        %4492 = vmatpush1.msra.mxu0 %v4150
        %4493 = vmatprep.subr.mxu0 %v4155
        %4494 = vmatpush1.msra.mxu0 %v4154
        %4495 = vmatprep.subr.mxu0 %v4159
        %4496 = vmatpush1.msra.mxu0 %v4158
        %4497 = vmatprep.subr.mxu0 %v4163
        %4498 = vmatpush1.msra.mxu0 %v4162
        %4499 = vmatprep.subr.mxu0 %v4167
        %4500 = vmatpush1.msra.mxu0 %v4166
        %4501 = vmatprep.subr.mxu0 %v4171
        %4502 = vmatpush1.msra.mxu0 %v4170
        %4503 = vmatprep.subr.mxu0 %v4175
        %4504 = vmatpush1.msra.mxu0 %v4174
        %4505 = vmatprep.subr.mxu0 %v4179
        %4506 = vmatpush1.msra.mxu0 %v4178
        %4507 = vmatprep.subr.mxu0 %v4183
        %4508 = vmatpush1.msra.mxu0 %v4182
        %4509 = vmatprep.subr.mxu0 %v4187
        %4510 = vmatpush1.msra.mxu0 %v4186
        %4511 = vmatprep.subr.mxu0 %v4191
        %4512 = vmatpush1.msra.mxu0 %v4190
        %4513 = vmatprep.subr.mxu0 %v4195
        %4514 = vmatpush1.msra.mxu0 %v4194
        %4515 = vmatprep.subr.mxu0 %v4199
        %4516 = vmatpush1.msra.mxu0 %v4198
        %4517 = vmatprep.subr.mxu0 %v4203
        %4518 = vmatpush1.msra.mxu0 %v4202
        %4519 = vmatprep.subr.mxu0 %v4207
        %4520 = vmatpush1.msra.mxu0 %v4206
        %4521 = vmatprep.mubr.f32.mxu0 %v3943
        %4522 = vmatmul.mubr.f32.gmra.mrb[0].mxu0 %v3942
        %v4523 = vpop.f32.mrb[0].mxu0
        %v4524 = vadd.f32 %v4441, %v4523
        %v4525 = vpop.f32.mrb[0].mxu0
        %v4526 = vadd.f32 %v4443, %v4525
        %4527 = vmatprep.mubr.f32.mxu0 %v3947
        %4528 = vmatmul.mubr.f32.gmra.mrb[0].mxu0 %v3946
        %v4529 = vpop.f32.mrb[0].mxu0
        %v4530 = vadd.f32 %v4447, %v4529
        %v4531 = vpop.f32.mrb[0].mxu0
        %v4532 = vadd.f32 %v4449, %v4531
        %4533 = vmatprep.mubr.f32.mxu0 %v3951
        %4534 = vmatmul.mubr.f32.gmra.mrb[0].mxu0 %v3950
        %v4535 = vpop.f32.mrb[0].mxu0
        %v4536 = vadd.f32 %v4453, %v4535
        %v4537 = vpop.f32.mrb[0].mxu0
        %v4538 = vadd.f32 %v4455, %v4537
        %4539 = vdwg.mxu0
        %v4540 = vand.u32 2147483647, %v4358
        %vm4541 = vcmp.le.f32.partialorder %v4540, 0.7853982
        %vm4542 = vcmp.lt.s32.totalorder %v4358, 0
        %v4543 = vand.u32 %v4358, 2139095040
        %v4544 = vshrl.u32 %v4543, 23
        %v4545 = vsub.s32 %v4544, 127
        %v4546 = vand.u32 2147483647, %v4358
        %v4547 = vand.u32 %v4546, 8388607
        %v4548 = vor.u32 %v4547, 8388608
        %v4549 = vsub.s32 0, %v4548
        %v4550 = vadd.s32 %v4545, 1
        %vm4551 = vcmp.gt.s32.totalorder %v4550, 0
        %v4552 = vsel %vm4551, %v4550, 0
        %v4553 = vshrl.u32 %v4552, 5
        %v4554 = vand.u32 %v4552, 31
        %v4555 = vsub.s32 32, %v4554
        %v4556 = vshrl.u32 683565275, %v4555
        %v4557 = vshll.u32 683565275, %v4554
        %v4558 = vshrl.u32 2475754826, %v4555
        %v4559 = vor.u32 %v4557, %v4558
        %v4560 = vshll.u32 2475754826, %v4554
        %v4561 = vshrl.u32 2131351028, %v4555
        %v4562 = vor.u32 %v4560, %v4561
        %v4563 = vshll.u32 2131351028, %v4554
        %v4564 = vshrl.u32 2102212464, %v4555
        %v4565 = vor.u32 %v4563, %v4564
        %v4566 = vshll.u32 2102212464, %v4554
        %v4567 = vshrl.u32 920167782, %v4555
        %v4568 = vor.u32 %v4566, %v4567
        %v4569 = vshll.u32 920167782, %v4554
        %v4570 = vshrl.u32 1326507024, %v4555
        %v4571 = vor.u32 %v4569, %v4570
        %vm4572 = vcmp.lt.s32.totalorder %v4553, 1
        %vm4573 = vcmp.lt.s32.totalorder %v4553, 2
        %vm4574 = vcmp.lt.s32.totalorder %v4553, 3
        %vm4575 = vcmp.lt.s32.totalorder %v4553, 4
        %v4576 = vsel %vm4572, %v4556, %v4559
        %v4577 = vsel %vm4575, %v4565, 2102212464
        %v4578 = vsel %vm4574, %v4562, %v4577
        %v4579 = vsel %vm4573, %v4576, %v4578
        %v4580 = vsel %vm4572, %v4559, %v4562
        %v4581 = vsel %vm4575, %v4568, 920167782
        %v4582 = vsel %vm4574, %v4565, %v4581
        %v4583 = vsel %vm4573, %v4580, %v4582
        %v4584 = vsel %vm4572, %v4562, %v4565
        %v4585 = vsel %vm4575, %v4571, 1326507024
        %v4586 = vsel %vm4574, %v4568, %v4585
        %v4587 = vsel %vm4573, %v4584, %v4586
        %v4588 = vshll.u32 %v4548, 8
        %v4589 = vmul.u32.u64.compose %v4588, %v4587
        %v4590 = vextract.low.u32 %v4589
        %v4591 = vextract.high.u32 %v4589
        %v4592 = vmul.u32.u64.compose %v4588, %v4583
        %v4593 = vextract.low.u32 %v4592
        %v4594 = vextract.high.u32 %v4592
        %v4595 = vmul.u32 %v4588, %v4579
        %v4596 = vadd.s32 %v4591, %v4593
        %vm4597 = vc.u32 %v4591, %v4593
        %v4598 = vadd.s32 %v4594, 1
        %v4599 = vsel %vm4597, %v4598, %v4594
        %v4600 = vadd.s32 %v4595, %v4599
        %v4601 = vadd.s32 %v4600, 536870912
        %v4602 = vshrl.u32 %v4601, 30
        %v4603 = vshll.u32 %v4602, 30
        %v4604 = vsub.s32 %v4600, %v4603
        %vm4605 = vcmp.lt.s32.totalorder %v4604, 0
        %v4606 = vsub.s32 0, %v4604
        %v4607 = vsel %vm4605, %v4606, %v4604
        %v4608 = vclz %v4607
        %v4609 = vsub.s32 %v4608, 2
        %vm4610 = vcmp.gt.s32.totalorder 0, %v4609
        %v4611 = vsel %vm4610, 0, %v4609
        %v4612 = vsub.s32 32, %v4611
        %v4613 = vshll.u32 %v4604, %v4611
        %v4614 = vshrl.u32 %v4596, %v4612
        %v4615 = vor.u32 %v4613, %v4614
        %v4616 = vsub.s32 4294967266, %v4611
        %v4617 = vadd.s32 %v4616, 127
        %v4618 = vshll.u32 %v4617, 23
        %v4619 = vor.u32 4788187, %v4618
        %v4620 = vand.u32 2147483647, %v4619
        %v4622 = vcvt.s32.f32 %v4615
        %v4623 = vmul.f32 %v4622, %v4620
        %v4624 = vxor.u32 %v4623, 2147483648
        %v4625 = vsel %vm4542, %v4624, %v4623
        %v4626 = vsub.s32 4, %v4602
        %v4627 = vsel %vm4542, %v4626, %v4602
        %v4628 = vsel %vm4541, %v4358, %v4625
        %v4629 = vsel %vm4541, 0, %v4627
        %v4630 = vcosq.f32.pop %v4628
        %v4631 = vsinq.f32.pop %v4628
        %vm4632 = vweird.f32 %v4358
        %v4633 = vadd.s32 %v4629, 3
        %v4634 = vand.u32 %v4633, 3
        %vm4635 = vcmp.lt.s32.totalorder %v4634, 2
        %vm4636 = vcmp.eq.s32.totalorder %v4634, 0
        %v4637 = vxor.u32 %v4631, 2147483648
        %v4638 = vsel %vm4636, %v4630, %v4637
        %vm4639 = vcmp.eq.s32.totalorder %v4634, 2
        %v4640 = vxor.u32 %v4630, 2147483648
        %v4641 = vsel %vm4639, %v4640, %v4631
        %v4642 = vsel %vm4635, %v4638, %v4641
        %v4643 = vsel %vm4632, nan, %v4642
        %v4644 = vand.u32 2147483647, %v4360
        %vm4645 = vcmp.le.f32.partialorder %v4644, 0.7853982
        %vm4646 = vcmp.lt.s32.totalorder %v4360, 0
        %v4647 = vand.u32 %v4360, 2139095040
        %v4648 = vshrl.u32 %v4647, 23
        %v4649 = vsub.s32 %v4648, 127
        %v4650 = vand.u32 2147483647, %v4360
        %v4651 = vand.u32 %v4650, 8388607
        %v4652 = vor.u32 %v4651, 8388608
        %v4653 = vsub.s32 0, %v4652
        %v4654 = vadd.s32 %v4649, 1
        %vm4655 = vcmp.gt.s32.totalorder %v4654, 0
        %v4656 = vsel %vm4655, %v4654, 0
        %v4657 = vshrl.u32 %v4656, 5
        %v4658 = vand.u32 %v4656, 31
        %v4659 = vsub.s32 32, %v4658
        %v4660 = vshrl.u32 683565275, %v4659
        %v4661 = vshll.u32 683565275, %v4658
        %v4662 = vshrl.u32 2475754826, %v4659
        %v4663 = vor.u32 %v4661, %v4662
        %v4664 = vshll.u32 2475754826, %v4658
        %v4665 = vshrl.u32 2131351028, %v4659
        %v4666 = vor.u32 %v4664, %v4665
        %v4667 = vshll.u32 2131351028, %v4658
        %v4668 = vshrl.u32 2102212464, %v4659
        %v4669 = vor.u32 %v4667, %v4668
        %v4670 = vshll.u32 2102212464, %v4658
        %v4671 = vshrl.u32 920167782, %v4659
        %v4672 = vor.u32 %v4670, %v4671
        %v4673 = vshll.u32 920167782, %v4658
        %v4674 = vshrl.u32 1326507024, %v4659
        %v4675 = vor.u32 %v4673, %v4674
        %vm4676 = vcmp.lt.s32.totalorder %v4657, 1
        %vm4677 = vcmp.lt.s32.totalorder %v4657, 2
        %vm4678 = vcmp.lt.s32.totalorder %v4657, 3
        %vm4679 = vcmp.lt.s32.totalorder %v4657, 4
        %v4680 = vsel %vm4676, %v4660, %v4663
        %v4681 = vsel %vm4679, %v4669, 2102212464
        %v4682 = vsel %vm4678, %v4666, %v4681
        %v4683 = vsel %vm4677, %v4680, %v4682
        %v4684 = vsel %vm4676, %v4663, %v4666
        %v4685 = vsel %vm4679, %v4672, 920167782
        %v4686 = vsel %vm4678, %v4669, %v4685
        %v4687 = vsel %vm4677, %v4684, %v4686
        %v4688 = vsel %vm4676, %v4666, %v4669
        %v4689 = vsel %vm4679, %v4675, 1326507024
        %v4690 = vsel %vm4678, %v4672, %v4689
        %v4691 = vsel %vm4677, %v4688, %v4690
        %v4692 = vshll.u32 %v4652, 8
        %v4693 = vmul.u32.u64.compose %v4692, %v4691
        %v4694 = vextract.low.u32 %v4693
        %v4695 = vextract.high.u32 %v4693
        %v4696 = vmul.u32.u64.compose %v4692, %v4687
        %v4697 = vextract.low.u32 %v4696
        %v4698 = vextract.high.u32 %v4696
        %v4699 = vmul.u32 %v4692, %v4683
        %v4700 = vadd.s32 %v4695, %v4697
        %vm4701 = vc.u32 %v4695, %v4697
        %v4702 = vadd.s32 %v4698, 1
        %v4703 = vsel %vm4701, %v4702, %v4698
        %v4704 = vadd.s32 %v4699, %v4703
        %v4705 = vadd.s32 %v4704, 536870912
        %v4706 = vshrl.u32 %v4705, 30
        %v4707 = vshll.u32 %v4706, 30
        %v4708 = vsub.s32 %v4704, %v4707
        %vm4709 = vcmp.lt.s32.totalorder %v4708, 0
        %v4710 = vsub.s32 0, %v4708
        %v4711 = vsel %vm4709, %v4710, %v4708
        %v4712 = vclz %v4711
        %v4713 = vsub.s32 %v4712, 2
        %vm4714 = vcmp.gt.s32.totalorder 0, %v4713
        %v4715 = vsel %vm4714, 0, %v4713
        %v4716 = vsub.s32 32, %v4715
        %v4717 = vshll.u32 %v4708, %v4715
        %v4718 = vshrl.u32 %v4700, %v4716
        %v4719 = vor.u32 %v4717, %v4718
        %v4720 = vsub.s32 4294967266, %v4715
        %v4721 = vadd.s32 %v4720, 127
        %v4722 = vshll.u32 %v4721, 23
        %v4723 = vor.u32 4788187, %v4722
        %v4724 = vand.u32 2147483647, %v4723
        %v4726 = vcvt.s32.f32 %v4719
        %v4727 = vmul.f32 %v4726, %v4724
        %v4728 = vxor.u32 %v4727, 2147483648
        %v4729 = vsel %vm4646, %v4728, %v4727
        %v4730 = vsub.s32 4, %v4706
        %v4731 = vsel %vm4646, %v4730, %v4706
        %v4732 = vsel %vm4645, %v4360, %v4729
        %v4733 = vsel %vm4645, 0, %v4731
        %v4734 = vcosq.f32.pop %v4732
        %v4735 = vsinq.f32.pop %v4732
        %vm4736 = vweird.f32 %v4360
        %v4737 = vadd.s32 %v4733, 3
        %v4738 = vand.u32 %v4737, 3
        %vm4739 = vcmp.lt.s32.totalorder %v4738, 2
        %vm4740 = vcmp.eq.s32.totalorder %v4738, 0
        %v4741 = vxor.u32 %v4735, 2147483648
        %v4742 = vsel %vm4740, %v4734, %v4741
        %vm4743 = vcmp.eq.s32.totalorder %v4738, 2
        %v4744 = vxor.u32 %v4734, 2147483648
        %v4745 = vsel %vm4743, %v4744, %v4735
        %v4746 = vsel %vm4739, %v4742, %v4745
        %v4747 = vsel %vm4736, nan, %v4746
        %v4748 = vand.u32 2147483647, %v4524
        %vm4749 = vcmp.le.f32.partialorder %v4748, 0.7853982
        %vm4750 = vcmp.lt.s32.totalorder %v4524, 0
        %v4751 = vand.u32 %v4524, 2139095040
        %v4752 = vshrl.u32 %v4751, 23
        %v4753 = vsub.s32 %v4752, 127
        %v4754 = vand.u32 2147483647, %v4524
        %v4755 = vand.u32 %v4754, 8388607
        %v4756 = vor.u32 %v4755, 8388608
        %v4757 = vsub.s32 0, %v4756
        %v4758 = vadd.s32 %v4753, 1
        %vm4759 = vcmp.gt.s32.totalorder %v4758, 0
        %v4760 = vsel %vm4759, %v4758, 0
        %v4761 = vshrl.u32 %v4760, 5
        %v4762 = vand.u32 %v4760, 31
        %v4763 = vsub.s32 32, %v4762
        %v4764 = vshrl.u32 683565275, %v4763
        %v4765 = vshll.u32 683565275, %v4762
        %v4766 = vshrl.u32 2475754826, %v4763
        %v4767 = vor.u32 %v4765, %v4766
        %v4768 = vshll.u32 2475754826, %v4762
        %v4769 = vshrl.u32 2131351028, %v4763
        %v4770 = vor.u32 %v4768, %v4769
        %v4771 = vshll.u32 2131351028, %v4762
        %v4772 = vshrl.u32 2102212464, %v4763
        %v4773 = vor.u32 %v4771, %v4772
        %v4774 = vshll.u32 2102212464, %v4762
        %v4775 = vshrl.u32 920167782, %v4763
        %v4776 = vor.u32 %v4774, %v4775
        %v4777 = vshll.u32 920167782, %v4762
        %v4778 = vshrl.u32 1326507024, %v4763
        %v4779 = vor.u32 %v4777, %v4778
        %vm4780 = vcmp.lt.s32.totalorder %v4761, 1
        %vm4781 = vcmp.lt.s32.totalorder %v4761, 2
        %vm4782 = vcmp.lt.s32.totalorder %v4761, 3
        %vm4783 = vcmp.lt.s32.totalorder %v4761, 4
        %v4784 = vsel %vm4780, %v4764, %v4767
        %v4785 = vsel %vm4783, %v4773, 2102212464
        %v4786 = vsel %vm4782, %v4770, %v4785
        %v4787 = vsel %vm4781, %v4784, %v4786
        %v4788 = vsel %vm4780, %v4767, %v4770
        %v4789 = vsel %vm4783, %v4776, 920167782
        %v4790 = vsel %vm4782, %v4773, %v4789
        %v4791 = vsel %vm4781, %v4788, %v4790
        %v4792 = vsel %vm4780, %v4770, %v4773
        %v4793 = vsel %vm4783, %v4779, 1326507024
        %v4794 = vsel %vm4782, %v4776, %v4793
        %v4795 = vsel %vm4781, %v4792, %v4794
        %v4796 = vshll.u32 %v4756, 8
        %v4797 = vmul.u32.u64.compose %v4796, %v4795
        %v4798 = vextract.low.u32 %v4797
        %v4799 = vextract.high.u32 %v4797
        %v4800 = vmul.u32.u64.compose %v4796, %v4791
        %v4801 = vextract.low.u32 %v4800
        %v4802 = vextract.high.u32 %v4800
        %v4803 = vmul.u32 %v4796, %v4787
        %v4804 = vadd.s32 %v4799, %v4801
        %vm4805 = vc.u32 %v4799, %v4801
        %v4806 = vadd.s32 %v4802, 1
        %v4807 = vsel %vm4805, %v4806, %v4802
        %v4808 = vadd.s32 %v4803, %v4807
        %v4809 = vadd.s32 %v4808, 536870912
        %v4810 = vshrl.u32 %v4809, 30
        %v4811 = vshll.u32 %v4810, 30
        %v4812 = vsub.s32 %v4808, %v4811
        %vm4813 = vcmp.lt.s32.totalorder %v4812, 0
        %v4814 = vsub.s32 0, %v4812
        %v4815 = vsel %vm4813, %v4814, %v4812
        %v4816 = vclz %v4815
        %v4817 = vsub.s32 %v4816, 2
        %vm4818 = vcmp.gt.s32.totalorder 0, %v4817
        %v4819 = vsel %vm4818, 0, %v4817
        %v4820 = vsub.s32 32, %v4819
        %v4821 = vshll.u32 %v4812, %v4819
        %v4822 = vshrl.u32 %v4804, %v4820
        %v4823 = vor.u32 %v4821, %v4822
        %v4824 = vsub.s32 4294967266, %v4819
        %v4825 = vadd.s32 %v4824, 127
        %v4826 = vshll.u32 %v4825, 23
        %v4827 = vor.u32 4788187, %v4826
        %v4828 = vand.u32 2147483647, %v4827
        %v4830 = vcvt.s32.f32 %v4823
        %v4831 = vmul.f32 %v4830, %v4828
        %v4832 = vxor.u32 %v4831, 2147483648
        %v4833 = vsel %vm4750, %v4832, %v4831
        %v4834 = vsub.s32 4, %v4810
        %v4835 = vsel %vm4750, %v4834, %v4810
        %v4836 = vsel %vm4749, %v4524, %v4833
        %v4837 = vsel %vm4749, 0, %v4835
        %v4838 = vcosq.f32.pop %v4836
        %v4839 = vsinq.f32.pop %v4836
        %vm4840 = vweird.f32 %v4524
        %v4841 = vadd.s32 %v4837, 3
        %v4842 = vand.u32 %v4841, 3
        %vm4843 = vcmp.lt.s32.totalorder %v4842, 2
        %vm4844 = vcmp.eq.s32.totalorder %v4842, 0
        %v4845 = vxor.u32 %v4839, 2147483648
        %v4846 = vsel %vm4844, %v4838, %v4845
        %vm4847 = vcmp.eq.s32.totalorder %v4842, 2
        %v4848 = vxor.u32 %v4838, 2147483648
        %v4849 = vsel %vm4847, %v4848, %v4839
        %v4850 = vsel %vm4843, %v4846, %v4849
        %v4851 = vsel %vm4840, nan, %v4850
        %v4852 = vand.u32 2147483647, %v4526
        %vm4853 = vcmp.le.f32.partialorder %v4852, 0.7853982
        %vm4854 = vcmp.lt.s32.totalorder %v4526, 0
        %v4855 = vand.u32 %v4526, 2139095040
        %v4856 = vshrl.u32 %v4855, 23
        %v4857 = vsub.s32 %v4856, 127
        %v4858 = vand.u32 2147483647, %v4526
        %v4859 = vand.u32 %v4858, 8388607
        %v4860 = vor.u32 %v4859, 8388608
        %v4861 = vsub.s32 0, %v4860
        %v4862 = vadd.s32 %v4857, 1
        %vm4863 = vcmp.gt.s32.totalorder %v4862, 0
        %v4864 = vsel %vm4863, %v4862, 0
        %v4865 = vshrl.u32 %v4864, 5
        %v4866 = vand.u32 %v4864, 31
        %v4867 = vsub.s32 32, %v4866
        %v4868 = vshrl.u32 683565275, %v4867
        %v4869 = vshll.u32 683565275, %v4866
        %v4870 = vshrl.u32 2475754826, %v4867
        %v4871 = vor.u32 %v4869, %v4870
        %v4872 = vshll.u32 2475754826, %v4866
        %v4873 = vshrl.u32 2131351028, %v4867
        %v4874 = vor.u32 %v4872, %v4873
        %v4875 = vshll.u32 2131351028, %v4866
        %v4876 = vshrl.u32 2102212464, %v4867
        %v4877 = vor.u32 %v4875, %v4876
        %v4878 = vshll.u32 2102212464, %v4866
        %v4879 = vshrl.u32 920167782, %v4867
        %v4880 = vor.u32 %v4878, %v4879
        %v4881 = vshll.u32 920167782, %v4866
        %v4882 = vshrl.u32 1326507024, %v4867
        %v4883 = vor.u32 %v4881, %v4882
        %vm4884 = vcmp.lt.s32.totalorder %v4865, 1
        %vm4885 = vcmp.lt.s32.totalorder %v4865, 2
        %vm4886 = vcmp.lt.s32.totalorder %v4865, 3
        %vm4887 = vcmp.lt.s32.totalorder %v4865, 4
        %v4888 = vsel %vm4884, %v4868, %v4871
        %v4889 = vsel %vm4887, %v4877, 2102212464
        %v4890 = vsel %vm4886, %v4874, %v4889
        %v4891 = vsel %vm4885, %v4888, %v4890
        %v4892 = vsel %vm4884, %v4871, %v4874
        %v4893 = vsel %vm4887, %v4880, 920167782
        %v4894 = vsel %vm4886, %v4877, %v4893
        %v4895 = vsel %vm4885, %v4892, %v4894
        %v4896 = vsel %vm4884, %v4874, %v4877
        %v4897 = vsel %vm4887, %v4883, 1326507024
        %v4898 = vsel %vm4886, %v4880, %v4897
        %v4899 = vsel %vm4885, %v4896, %v4898
        %v4900 = vshll.u32 %v4860, 8
        %v4901 = vmul.u32.u64.compose %v4900, %v4899
        %v4902 = vextract.low.u32 %v4901
        %v4903 = vextract.high.u32 %v4901
        %v4904 = vmul.u32.u64.compose %v4900, %v4895
        %v4905 = vextract.low.u32 %v4904
        %v4906 = vextract.high.u32 %v4904
        %v4907 = vmul.u32 %v4900, %v4891
        %v4908 = vadd.s32 %v4903, %v4905
        %vm4909 = vc.u32 %v4903, %v4905
        %v4910 = vadd.s32 %v4906, 1
        %v4911 = vsel %vm4909, %v4910, %v4906
        %v4912 = vadd.s32 %v4907, %v4911
        %v4913 = vadd.s32 %v4912, 536870912
        %v4914 = vshrl.u32 %v4913, 30
        %v4915 = vshll.u32 %v4914, 30
        %v4916 = vsub.s32 %v4912, %v4915
        %vm4917 = vcmp.lt.s32.totalorder %v4916, 0
        %v4918 = vsub.s32 0, %v4916
        %v4919 = vsel %vm4917, %v4918, %v4916
        %v4920 = vclz %v4919
        %v4921 = vsub.s32 %v4920, 2
        %vm4922 = vcmp.gt.s32.totalorder 0, %v4921
        %v4923 = vsel %vm4922, 0, %v4921
        %v4924 = vsub.s32 32, %v4923
        %v4925 = vshll.u32 %v4916, %v4923
        %v4926 = vshrl.u32 %v4908, %v4924
        %v4927 = vor.u32 %v4925, %v4926
        %v4928 = vsub.s32 4294967266, %v4923
        %v4929 = vadd.s32 %v4928, 127
        %v4930 = vshll.u32 %v4929, 23
        %v4931 = vor.u32 4788187, %v4930
        %v4932 = vand.u32 2147483647, %v4931
        %v4934 = vcvt.s32.f32 %v4927
        %v4935 = vmul.f32 %v4934, %v4932
        %v4936 = vxor.u32 %v4935, 2147483648
        %v4937 = vsel %vm4854, %v4936, %v4935
        %v4938 = vsub.s32 4, %v4914
        %v4939 = vsel %vm4854, %v4938, %v4914
        %v4940 = vsel %vm4853, %v4526, %v4937
        %v4941 = vsel %vm4853, 0, %v4939
        %v4942 = vcosq.f32.pop %v4940
        %v4943 = vsinq.f32.pop %v4940
        %vm4944 = vweird.f32 %v4526
        %v4945 = vadd.s32 %v4941, 3
        %v4946 = vand.u32 %v4945, 3
        %vm4947 = vcmp.lt.s32.totalorder %v4946, 2
        %vm4948 = vcmp.eq.s32.totalorder %v4946, 0
        %v4949 = vxor.u32 %v4943, 2147483648
        %v4950 = vsel %vm4948, %v4942, %v4949
        %vm4951 = vcmp.eq.s32.totalorder %v4946, 2
        %v4952 = vxor.u32 %v4942, 2147483648
        %v4953 = vsel %vm4951, %v4952, %v4943
        %v4954 = vsel %vm4947, %v4950, %v4953
        %v4955 = vsel %vm4944, nan, %v4954
        %v4956 = vand.u32 2147483647, %v4364
        %vm4957 = vcmp.le.f32.partialorder %v4956, 0.7853982
        %vm4958 = vcmp.lt.s32.totalorder %v4364, 0
        %v4959 = vand.u32 %v4364, 2139095040
        %v4960 = vshrl.u32 %v4959, 23
        %v4961 = vsub.s32 %v4960, 127
        %v4962 = vand.u32 2147483647, %v4364
        %v4963 = vand.u32 %v4962, 8388607
        %v4964 = vor.u32 %v4963, 8388608
        %v4965 = vsub.s32 0, %v4964
        %v4966 = vadd.s32 %v4961, 1
        %vm4967 = vcmp.gt.s32.totalorder %v4966, 0
        %v4968 = vsel %vm4967, %v4966, 0
        %v4969 = vshrl.u32 %v4968, 5
        %v4970 = vand.u32 %v4968, 31
        %v4971 = vsub.s32 32, %v4970
        %v4972 = vshrl.u32 683565275, %v4971
        %v4973 = vshll.u32 683565275, %v4970
        %v4974 = vshrl.u32 2475754826, %v4971
        %v4975 = vor.u32 %v4973, %v4974
        %v4976 = vshll.u32 2475754826, %v4970
        %v4977 = vshrl.u32 2131351028, %v4971
        %v4978 = vor.u32 %v4976, %v4977
        %v4979 = vshll.u32 2131351028, %v4970
        %v4980 = vshrl.u32 2102212464, %v4971
        %v4981 = vor.u32 %v4979, %v4980
        %v4982 = vshll.u32 2102212464, %v4970
        %v4983 = vshrl.u32 920167782, %v4971
        %v4984 = vor.u32 %v4982, %v4983
        %v4985 = vshll.u32 920167782, %v4970
        %v4986 = vshrl.u32 1326507024, %v4971
        %v4987 = vor.u32 %v4985, %v4986
        %vm4988 = vcmp.lt.s32.totalorder %v4969, 1
        %vm4989 = vcmp.lt.s32.totalorder %v4969, 2
        %vm4990 = vcmp.lt.s32.totalorder %v4969, 3
        %vm4991 = vcmp.lt.s32.totalorder %v4969, 4
        %v4992 = vsel %vm4988, %v4972, %v4975
        %v4993 = vsel %vm4991, %v4981, 2102212464
        %v4994 = vsel %vm4990, %v4978, %v4993
        %v4995 = vsel %vm4989, %v4992, %v4994
        %v4996 = vsel %vm4988, %v4975, %v4978
        %v4997 = vsel %vm4991, %v4984, 920167782
        %v4998 = vsel %vm4990, %v4981, %v4997
        %v4999 = vsel %vm4989, %v4996, %v4998
        %v5000 = vsel %vm4988, %v4978, %v4981
        %v5001 = vsel %vm4991, %v4987, 1326507024
        %v5002 = vsel %vm4990, %v4984, %v5001
        %v5003 = vsel %vm4989, %v5000, %v5002
        %v5004 = vshll.u32 %v4964, 8
        %v5005 = vmul.u32.u64.compose %v5004, %v5003
        %v5006 = vextract.low.u32 %v5005
        %v5007 = vextract.high.u32 %v5005
        %v5008 = vmul.u32.u64.compose %v5004, %v4999
        %v5009 = vextract.low.u32 %v5008
        %v5010 = vextract.high.u32 %v5008
        %v5011 = vmul.u32 %v5004, %v4995
        %v5012 = vadd.s32 %v5007, %v5009
        %vm5013 = vc.u32 %v5007, %v5009
        %v5014 = vadd.s32 %v5010, 1
        %v5015 = vsel %vm5013, %v5014, %v5010
        %v5016 = vadd.s32 %v5011, %v5015
        %v5017 = vadd.s32 %v5016, 536870912
        %v5018 = vshrl.u32 %v5017, 30
        %v5019 = vshll.u32 %v5018, 30
        %v5020 = vsub.s32 %v5016, %v5019
        %vm5021 = vcmp.lt.s32.totalorder %v5020, 0
        %v5022 = vsub.s32 0, %v5020
        %v5023 = vsel %vm5021, %v5022, %v5020
        %v5024 = vclz %v5023
        %v5025 = vsub.s32 %v5024, 2
        %vm5026 = vcmp.gt.s32.totalorder 0, %v5025
        %v5027 = vsel %vm5026, 0, %v5025
        %v5028 = vsub.s32 32, %v5027
        %v5029 = vshll.u32 %v5020, %v5027
        %v5030 = vshrl.u32 %v5012, %v5028
        %v5031 = vor.u32 %v5029, %v5030
        %v5032 = vsub.s32 4294967266, %v5027
        %v5033 = vadd.s32 %v5032, 127
        %v5034 = vshll.u32 %v5033, 23
        %v5035 = vor.u32 4788187, %v5034
        %v5036 = vand.u32 2147483647, %v5035
        %v5038 = vcvt.s32.f32 %v5031
        %v5039 = vmul.f32 %v5038, %v5036
        %v5040 = vxor.u32 %v5039, 2147483648
        %v5041 = vsel %vm4958, %v5040, %v5039
        %v5042 = vsub.s32 4, %v5018
        %v5043 = vsel %vm4958, %v5042, %v5018
        %v5044 = vsel %vm4957, %v4364, %v5041
        %v5045 = vsel %vm4957, 0, %v5043
        %v5046 = vcosq.f32.pop %v5044
        %v5047 = vsinq.f32.pop %v5044
        %vm5048 = vweird.f32 %v4364
        %v5049 = vadd.s32 %v5045, 3
        %v5050 = vand.u32 %v5049, 3
        %vm5051 = vcmp.lt.s32.totalorder %v5050, 2
        %vm5052 = vcmp.eq.s32.totalorder %v5050, 0
        %v5053 = vxor.u32 %v5047, 2147483648
        %v5054 = vsel %vm5052, %v5046, %v5053
        %vm5055 = vcmp.eq.s32.totalorder %v5050, 2
        %v5056 = vxor.u32 %v5046, 2147483648
        %v5057 = vsel %vm5055, %v5056, %v5047
        %v5058 = vsel %vm5051, %v5054, %v5057
        %v5059 = vsel %vm5048, nan, %v5058
        %v5060 = vand.u32 2147483647, %v4366
        %vm5061 = vcmp.le.f32.partialorder %v5060, 0.7853982
        %vm5062 = vcmp.lt.s32.totalorder %v4366, 0
        %v5063 = vand.u32 %v4366, 2139095040
        %v5064 = vshrl.u32 %v5063, 23
        %v5065 = vsub.s32 %v5064, 127
        %v5066 = vand.u32 2147483647, %v4366
        %v5067 = vand.u32 %v5066, 8388607
        %v5068 = vor.u32 %v5067, 8388608
        %v5069 = vsub.s32 0, %v5068
        %v5070 = vadd.s32 %v5065, 1
        %vm5071 = vcmp.gt.s32.totalorder %v5070, 0
        %v5072 = vsel %vm5071, %v5070, 0
        %v5073 = vshrl.u32 %v5072, 5
        %v5074 = vand.u32 %v5072, 31
        %v5075 = vsub.s32 32, %v5074
        %v5076 = vshrl.u32 683565275, %v5075
        %v5077 = vshll.u32 683565275, %v5074
        %v5078 = vshrl.u32 2475754826, %v5075
        %v5079 = vor.u32 %v5077, %v5078
        %v5080 = vshll.u32 2475754826, %v5074
        %v5081 = vshrl.u32 2131351028, %v5075
        %v5082 = vor.u32 %v5080, %v5081
        %v5083 = vshll.u32 2131351028, %v5074
        %v5084 = vshrl.u32 2102212464, %v5075
        %v5085 = vor.u32 %v5083, %v5084
        %v5086 = vshll.u32 2102212464, %v5074
        %v5087 = vshrl.u32 920167782, %v5075
        %v5088 = vor.u32 %v5086, %v5087
        %v5089 = vshll.u32 920167782, %v5074
        %v5090 = vshrl.u32 1326507024, %v5075
        %v5091 = vor.u32 %v5089, %v5090
        %vm5092 = vcmp.lt.s32.totalorder %v5073, 1
        %vm5093 = vcmp.lt.s32.totalorder %v5073, 2
        %vm5094 = vcmp.lt.s32.totalorder %v5073, 3
        %vm5095 = vcmp.lt.s32.totalorder %v5073, 4
        %v5096 = vsel %vm5092, %v5076, %v5079
        %v5097 = vsel %vm5095, %v5085, 2102212464
        %v5098 = vsel %vm5094, %v5082, %v5097
        %v5099 = vsel %vm5093, %v5096, %v5098
        %v5100 = vsel %vm5092, %v5079, %v5082
        %v5101 = vsel %vm5095, %v5088, 920167782
        %v5102 = vsel %vm5094, %v5085, %v5101
        %v5103 = vsel %vm5093, %v5100, %v5102
        %v5104 = vsel %vm5092, %v5082, %v5085
        %v5105 = vsel %vm5095, %v5091, 1326507024
        %v5106 = vsel %vm5094, %v5088, %v5105
        %v5107 = vsel %vm5093, %v5104, %v5106
        %v5108 = vshll.u32 %v5068, 8
        %v5109 = vmul.u32.u64.compose %v5108, %v5107
        %v5110 = vextract.low.u32 %v5109
        %v5111 = vextract.high.u32 %v5109
        %v5112 = vmul.u32.u64.compose %v5108, %v5103
        %v5113 = vextract.low.u32 %v5112
        %v5114 = vextract.high.u32 %v5112
        %v5115 = vmul.u32 %v5108, %v5099
        %v5116 = vadd.s32 %v5111, %v5113
        %vm5117 = vc.u32 %v5111, %v5113
        %v5118 = vadd.s32 %v5114, 1
        %v5119 = vsel %vm5117, %v5118, %v5114
        %v5120 = vadd.s32 %v5115, %v5119
        %v5121 = vadd.s32 %v5120, 536870912
        %v5122 = vshrl.u32 %v5121, 30
        %v5123 = vshll.u32 %v5122, 30
        %v5124 = vsub.s32 %v5120, %v5123
        %vm5125 = vcmp.lt.s32.totalorder %v5124, 0
        %v5126 = vsub.s32 0, %v5124
        %v5127 = vsel %vm5125, %v5126, %v5124
        %v5128 = vclz %v5127
        %v5129 = vsub.s32 %v5128, 2
        %vm5130 = vcmp.gt.s32.totalorder 0, %v5129
        %v5131 = vsel %vm5130, 0, %v5129
        %v5132 = vsub.s32 32, %v5131
        %v5133 = vshll.u32 %v5124, %v5131
        %v5134 = vshrl.u32 %v5116, %v5132
        %v5135 = vor.u32 %v5133, %v5134
        %v5136 = vsub.s32 4294967266, %v5131
        %v5137 = vadd.s32 %v5136, 127
        %v5138 = vshll.u32 %v5137, 23
        %v5139 = vor.u32 4788187, %v5138
        %v5140 = vand.u32 2147483647, %v5139
        %v5142 = vcvt.s32.f32 %v5135
        %v5143 = vmul.f32 %v5142, %v5140
        %v5144 = vxor.u32 %v5143, 2147483648
        %v5145 = vsel %vm5062, %v5144, %v5143
        %v5146 = vsub.s32 4, %v5122
        %v5147 = vsel %vm5062, %v5146, %v5122
        %v5148 = vsel %vm5061, %v4366, %v5145
        %v5149 = vsel %vm5061, 0, %v5147
        %v5150 = vcosq.f32.pop %v5148
        %v5151 = vsinq.f32.pop %v5148
        %vm5152 = vweird.f32 %v4366
        %v5153 = vadd.s32 %v5149, 3
        %v5154 = vand.u32 %v5153, 3
        %vm5155 = vcmp.lt.s32.totalorder %v5154, 2
        %vm5156 = vcmp.eq.s32.totalorder %v5154, 0
        %v5157 = vxor.u32 %v5151, 2147483648
        %v5158 = vsel %vm5156, %v5150, %v5157
        %vm5159 = vcmp.eq.s32.totalorder %v5154, 2
        %v5160 = vxor.u32 %v5150, 2147483648
        %v5161 = vsel %vm5159, %v5160, %v5151
        %v5162 = vsel %vm5155, %v5158, %v5161
        %v5163 = vsel %vm5152, nan, %v5162
        %v5164 = vand.u32 2147483647, %v4530
        %vm5165 = vcmp.le.f32.partialorder %v5164, 0.7853982
        %vm5166 = vcmp.lt.s32.totalorder %v4530, 0
        %v5167 = vand.u32 %v4530, 2139095040
        %v5168 = vshrl.u32 %v5167, 23
        %v5169 = vsub.s32 %v5168, 127
        %v5170 = vand.u32 2147483647, %v4530
        %v5171 = vand.u32 %v5170, 8388607
        %v5172 = vor.u32 %v5171, 8388608
        %v5173 = vsub.s32 0, %v5172
        %v5174 = vadd.s32 %v5169, 1
        %vm5175 = vcmp.gt.s32.totalorder %v5174, 0
        %v5176 = vsel %vm5175, %v5174, 0
        %v5177 = vshrl.u32 %v5176, 5
        %v5178 = vand.u32 %v5176, 31
        %v5179 = vsub.s32 32, %v5178
        %v5180 = vshrl.u32 683565275, %v5179
        %v5181 = vshll.u32 683565275, %v5178
        %v5182 = vshrl.u32 2475754826, %v5179
        %v5183 = vor.u32 %v5181, %v5182
        %v5184 = vshll.u32 2475754826, %v5178
        %v5185 = vshrl.u32 2131351028, %v5179
        %v5186 = vor.u32 %v5184, %v5185
        %v5187 = vshll.u32 2131351028, %v5178
        %v5188 = vshrl.u32 2102212464, %v5179
        %v5189 = vor.u32 %v5187, %v5188
        %v5190 = vshll.u32 2102212464, %v5178
        %v5191 = vshrl.u32 920167782, %v5179
        %v5192 = vor.u32 %v5190, %v5191
        %v5193 = vshll.u32 920167782, %v5178
        %v5194 = vshrl.u32 1326507024, %v5179
        %v5195 = vor.u32 %v5193, %v5194
        %vm5196 = vcmp.lt.s32.totalorder %v5177, 1
        %vm5197 = vcmp.lt.s32.totalorder %v5177, 2
        %vm5198 = vcmp.lt.s32.totalorder %v5177, 3
        %vm5199 = vcmp.lt.s32.totalorder %v5177, 4
        %v5200 = vsel %vm5196, %v5180, %v5183
        %v5201 = vsel %vm5199, %v5189, 2102212464
        %v5202 = vsel %vm5198, %v5186, %v5201
        %v5203 = vsel %vm5197, %v5200, %v5202
        %v5204 = vsel %vm5196, %v5183, %v5186
        %v5205 = vsel %vm5199, %v5192, 920167782
        %v5206 = vsel %vm5198, %v5189, %v5205
        %v5207 = vsel %vm5197, %v5204, %v5206
        %v5208 = vsel %vm5196, %v5186, %v5189
        %v5209 = vsel %vm5199, %v5195, 1326507024
        %v5210 = vsel %vm5198, %v5192, %v5209
        %v5211 = vsel %vm5197, %v5208, %v5210
        %v5212 = vshll.u32 %v5172, 8
        %v5213 = vmul.u32.u64.compose %v5212, %v5211
        %v5214 = vextract.low.u32 %v5213
        %v5215 = vextract.high.u32 %v5213
        %v5216 = vmul.u32.u64.compose %v5212, %v5207
        %v5217 = vextract.low.u32 %v5216
        %v5218 = vextract.high.u32 %v5216
        %v5219 = vmul.u32 %v5212, %v5203
        %v5220 = vadd.s32 %v5215, %v5217
        %vm5221 = vc.u32 %v5215, %v5217
        %v5222 = vadd.s32 %v5218, 1
        %v5223 = vsel %vm5221, %v5222, %v5218
        %v5224 = vadd.s32 %v5219, %v5223
        %v5225 = vadd.s32 %v5224, 536870912
        %v5226 = vshrl.u32 %v5225, 30
        %v5227 = vshll.u32 %v5226, 30
        %v5228 = vsub.s32 %v5224, %v5227
        %vm5229 = vcmp.lt.s32.totalorder %v5228, 0
        %v5230 = vsub.s32 0, %v5228
        %v5231 = vsel %vm5229, %v5230, %v5228
        %v5232 = vclz %v5231
        %v5233 = vsub.s32 %v5232, 2
        %vm5234 = vcmp.gt.s32.totalorder 0, %v5233
        %v5235 = vsel %vm5234, 0, %v5233
        %v5236 = vsub.s32 32, %v5235
        %v5237 = vshll.u32 %v5228, %v5235
        %v5238 = vshrl.u32 %v5220, %v5236
        %v5239 = vor.u32 %v5237, %v5238
        %v5240 = vsub.s32 4294967266, %v5235
        %v5241 = vadd.s32 %v5240, 127
        %v5242 = vshll.u32 %v5241, 23
        %v5243 = vor.u32 4788187, %v5242
        %v5244 = vand.u32 2147483647, %v5243
        %v5246 = vcvt.s32.f32 %v5239
        %v5247 = vmul.f32 %v5246, %v5244
        %v5248 = vxor.u32 %v5247, 2147483648
        %v5249 = vsel %vm5166, %v5248, %v5247
        %v5250 = vsub.s32 4, %v5226
        %v5251 = vsel %vm5166, %v5250, %v5226
        %v5252 = vsel %vm5165, %v4530, %v5249
        %v5253 = vsel %vm5165, 0, %v5251
        %v5254 = vcosq.f32.pop %v5252
        %v5255 = vsinq.f32.pop %v5252
        %vm5256 = vweird.f32 %v4530
        %v5257 = vadd.s32 %v5253, 3
        %v5258 = vand.u32 %v5257, 3
        %vm5259 = vcmp.lt.s32.totalorder %v5258, 2
        %vm5260 = vcmp.eq.s32.totalorder %v5258, 0
        %v5261 = vxor.u32 %v5255, 2147483648
        %v5262 = vsel %vm5260, %v5254, %v5261
        %vm5263 = vcmp.eq.s32.totalorder %v5258, 2
        %v5264 = vxor.u32 %v5254, 2147483648
        %v5265 = vsel %vm5263, %v5264, %v5255
        %v5266 = vsel %vm5259, %v5262, %v5265
        %v5267 = vsel %vm5256, nan, %v5266
        %v5268 = vand.u32 2147483647, %v4532
        %vm5269 = vcmp.le.f32.partialorder %v5268, 0.7853982
        %vm5270 = vcmp.lt.s32.totalorder %v4532, 0
        %v5271 = vand.u32 %v4532, 2139095040
        %v5272 = vshrl.u32 %v5271, 23
        %v5273 = vsub.s32 %v5272, 127
        %v5274 = vand.u32 2147483647, %v4532
        %v5275 = vand.u32 %v5274, 8388607
        %v5276 = vor.u32 %v5275, 8388608
        %v5277 = vsub.s32 0, %v5276
        %v5278 = vadd.s32 %v5273, 1
        %vm5279 = vcmp.gt.s32.totalorder %v5278, 0
        %v5280 = vsel %vm5279, %v5278, 0
        %v5281 = vshrl.u32 %v5280, 5
        %v5282 = vand.u32 %v5280, 31
        %v5283 = vsub.s32 32, %v5282
        %v5284 = vshrl.u32 683565275, %v5283
        %v5285 = vshll.u32 683565275, %v5282
        %v5286 = vshrl.u32 2475754826, %v5283
        %v5287 = vor.u32 %v5285, %v5286
        %v5288 = vshll.u32 2475754826, %v5282
        %v5289 = vshrl.u32 2131351028, %v5283
        %v5290 = vor.u32 %v5288, %v5289
        %v5291 = vshll.u32 2131351028, %v5282
        %v5292 = vshrl.u32 2102212464, %v5283
        %v5293 = vor.u32 %v5291, %v5292
        %v5294 = vshll.u32 2102212464, %v5282
        %v5295 = vshrl.u32 920167782, %v5283
        %v5296 = vor.u32 %v5294, %v5295
        %v5297 = vshll.u32 920167782, %v5282
        %v5298 = vshrl.u32 1326507024, %v5283
        %v5299 = vor.u32 %v5297, %v5298
        %vm5300 = vcmp.lt.s32.totalorder %v5281, 1
        %vm5301 = vcmp.lt.s32.totalorder %v5281, 2
        %vm5302 = vcmp.lt.s32.totalorder %v5281, 3
        %vm5303 = vcmp.lt.s32.totalorder %v5281, 4
        %v5304 = vsel %vm5300, %v5284, %v5287
        %v5305 = vsel %vm5303, %v5293, 2102212464
        %v5306 = vsel %vm5302, %v5290, %v5305
        %v5307 = vsel %vm5301, %v5304, %v5306
        %v5308 = vsel %vm5300, %v5287, %v5290
        %v5309 = vsel %vm5303, %v5296, 920167782
        %v5310 = vsel %vm5302, %v5293, %v5309
        %v5311 = vsel %vm5301, %v5308, %v5310
        %v5312 = vsel %vm5300, %v5290, %v5293
        %v5313 = vsel %vm5303, %v5299, 1326507024
        %v5314 = vsel %vm5302, %v5296, %v5313
        %v5315 = vsel %vm5301, %v5312, %v5314
        %v5316 = vshll.u32 %v5276, 8
        %v5317 = vmul.u32.u64.compose %v5316, %v5315
        %v5318 = vextract.low.u32 %v5317
        %v5319 = vextract.high.u32 %v5317
        %v5320 = vmul.u32.u64.compose %v5316, %v5311
        %v5321 = vextract.low.u32 %v5320
        %v5322 = vextract.high.u32 %v5320
        %v5323 = vmul.u32 %v5316, %v5307
        %v5324 = vadd.s32 %v5319, %v5321
        %vm5325 = vc.u32 %v5319, %v5321
        %v5326 = vadd.s32 %v5322, 1
        %v5327 = vsel %vm5325, %v5326, %v5322
        %v5328 = vadd.s32 %v5323, %v5327
        %v5329 = vadd.s32 %v5328, 536870912
        %v5330 = vshrl.u32 %v5329, 30
        %v5331 = vshll.u32 %v5330, 30
        %v5332 = vsub.s32 %v5328, %v5331
        %vm5333 = vcmp.lt.s32.totalorder %v5332, 0
        %v5334 = vsub.s32 0, %v5332
        %v5335 = vsel %vm5333, %v5334, %v5332
        %v5336 = vclz %v5335
        %v5337 = vsub.s32 %v5336, 2
        %vm5338 = vcmp.gt.s32.totalorder 0, %v5337
        %v5339 = vsel %vm5338, 0, %v5337
        %v5340 = vsub.s32 32, %v5339
        %v5341 = vshll.u32 %v5332, %v5339
        %v5342 = vshrl.u32 %v5324, %v5340
        %v5343 = vor.u32 %v5341, %v5342
        %v5344 = vsub.s32 4294967266, %v5339
        %v5345 = vadd.s32 %v5344, 127
        %v5346 = vshll.u32 %v5345, 23
        %v5347 = vor.u32 4788187, %v5346
        %v5348 = vand.u32 2147483647, %v5347
        %v5350 = vcvt.s32.f32 %v5343
        %v5351 = vmul.f32 %v5350, %v5348
        %v5352 = vxor.u32 %v5351, 2147483648
        %v5353 = vsel %vm5270, %v5352, %v5351
        %v5354 = vsub.s32 4, %v5330
        %v5355 = vsel %vm5270, %v5354, %v5330
        %v5356 = vsel %vm5269, %v4532, %v5353
        %v5357 = vsel %vm5269, 0, %v5355
        %v5358 = vcosq.f32.pop %v5356
        %v5359 = vsinq.f32.pop %v5356
        %vm5360 = vweird.f32 %v4532
        %v5361 = vadd.s32 %v5357, 3
        %v5362 = vand.u32 %v5361, 3
        %vm5363 = vcmp.lt.s32.totalorder %v5362, 2
        %vm5364 = vcmp.eq.s32.totalorder %v5362, 0
        %v5365 = vxor.u32 %v5359, 2147483648
        %v5366 = vsel %vm5364, %v5358, %v5365
        %vm5367 = vcmp.eq.s32.totalorder %v5362, 2
        %v5368 = vxor.u32 %v5358, 2147483648
        %v5369 = vsel %vm5367, %v5368, %v5359
        %v5370 = vsel %vm5363, %v5366, %v5369
        %v5371 = vsel %vm5360, nan, %v5370
        %v5372 = vand.u32 2147483647, %v4370
        %vm5373 = vcmp.le.f32.partialorder %v5372, 0.7853982
        %vm5374 = vcmp.lt.s32.totalorder %v4370, 0
        %v5375 = vand.u32 %v4370, 2139095040
        %v5376 = vshrl.u32 %v5375, 23
        %v5377 = vsub.s32 %v5376, 127
        %v5378 = vand.u32 2147483647, %v4370
        %v5379 = vand.u32 %v5378, 8388607
        %v5380 = vor.u32 %v5379, 8388608
        %v5381 = vsub.s32 0, %v5380
        %v5382 = vadd.s32 %v5377, 1
        %vm5383 = vcmp.gt.s32.totalorder %v5382, 0
        %v5384 = vsel %vm5383, %v5382, 0
        %v5385 = vshrl.u32 %v5384, 5
        %v5386 = vand.u32 %v5384, 31
        %v5387 = vsub.s32 32, %v5386
        %v5388 = vshrl.u32 683565275, %v5387
        %v5389 = vshll.u32 683565275, %v5386
        %v5390 = vshrl.u32 2475754826, %v5387
        %v5391 = vor.u32 %v5389, %v5390
        %v5392 = vshll.u32 2475754826, %v5386
        %v5393 = vshrl.u32 2131351028, %v5387
        %v5394 = vor.u32 %v5392, %v5393
        %v5395 = vshll.u32 2131351028, %v5386
        %v5396 = vshrl.u32 2102212464, %v5387
        %v5397 = vor.u32 %v5395, %v5396
        %v5398 = vshll.u32 2102212464, %v5386
        %v5399 = vshrl.u32 920167782, %v5387
        %v5400 = vor.u32 %v5398, %v5399
        %v5401 = vshll.u32 920167782, %v5386
        %v5402 = vshrl.u32 1326507024, %v5387
        %v5403 = vor.u32 %v5401, %v5402
        %vm5404 = vcmp.lt.s32.totalorder %v5385, 1
        %vm5405 = vcmp.lt.s32.totalorder %v5385, 2
        %vm5406 = vcmp.lt.s32.totalorder %v5385, 3
        %vm5407 = vcmp.lt.s32.totalorder %v5385, 4
        %v5408 = vsel %vm5404, %v5388, %v5391
        %v5409 = vsel %vm5407, %v5397, 2102212464
        %v5410 = vsel %vm5406, %v5394, %v5409
        %v5411 = vsel %vm5405, %v5408, %v5410
        %v5412 = vsel %vm5404, %v5391, %v5394
        %v5413 = vsel %vm5407, %v5400, 920167782
        %v5414 = vsel %vm5406, %v5397, %v5413
        %v5415 = vsel %vm5405, %v5412, %v5414
        %v5416 = vsel %vm5404, %v5394, %v5397
        %v5417 = vsel %vm5407, %v5403, 1326507024
        %v5418 = vsel %vm5406, %v5400, %v5417
        %v5419 = vsel %vm5405, %v5416, %v5418
        %v5420 = vshll.u32 %v5380, 8
        %v5421 = vmul.u32.u64.compose %v5420, %v5419
        %v5422 = vextract.low.u32 %v5421
        %v5423 = vextract.high.u32 %v5421
        %v5424 = vmul.u32.u64.compose %v5420, %v5415
        %v5425 = vextract.low.u32 %v5424
        %v5426 = vextract.high.u32 %v5424
        %v5427 = vmul.u32 %v5420, %v5411
        %v5428 = vadd.s32 %v5423, %v5425
        %vm5429 = vc.u32 %v5423, %v5425
        %v5430 = vadd.s32 %v5426, 1
        %v5431 = vsel %vm5429, %v5430, %v5426
        %v5432 = vadd.s32 %v5427, %v5431
        %v5433 = vadd.s32 %v5432, 536870912
        %v5434 = vshrl.u32 %v5433, 30
        %v5435 = vshll.u32 %v5434, 30
        %v5436 = vsub.s32 %v5432, %v5435
        %vm5437 = vcmp.lt.s32.totalorder %v5436, 0
        %v5438 = vsub.s32 0, %v5436
        %v5439 = vsel %vm5437, %v5438, %v5436
        %v5440 = vclz %v5439
        %v5441 = vsub.s32 %v5440, 2
        %vm5442 = vcmp.gt.s32.totalorder 0, %v5441
        %v5443 = vsel %vm5442, 0, %v5441
        %v5444 = vsub.s32 32, %v5443
        %v5445 = vshll.u32 %v5436, %v5443
        %v5446 = vshrl.u32 %v5428, %v5444
        %v5447 = vor.u32 %v5445, %v5446
        %v5448 = vsub.s32 4294967266, %v5443
        %v5449 = vadd.s32 %v5448, 127
        %v5450 = vshll.u32 %v5449, 23
        %v5451 = vor.u32 4788187, %v5450
        %v5452 = vand.u32 2147483647, %v5451
        %v5454 = vcvt.s32.f32 %v5447
        %v5455 = vmul.f32 %v5454, %v5452
        %v5456 = vxor.u32 %v5455, 2147483648
        %v5457 = vsel %vm5374, %v5456, %v5455
        %v5458 = vsub.s32 4, %v5434
        %v5459 = vsel %vm5374, %v5458, %v5434
        %v5460 = vsel %vm5373, %v4370, %v5457
        %v5461 = vsel %vm5373, 0, %v5459
        %v5462 = vcosq.f32.pop %v5460
        %v5463 = vsinq.f32.pop %v5460
        %vm5464 = vweird.f32 %v4370
        %v5465 = vadd.s32 %v5461, 3
        %v5466 = vand.u32 %v5465, 3
        %vm5467 = vcmp.lt.s32.totalorder %v5466, 2
        %vm5468 = vcmp.eq.s32.totalorder %v5466, 0
        %v5469 = vxor.u32 %v5463, 2147483648
        %v5470 = vsel %vm5468, %v5462, %v5469
        %vm5471 = vcmp.eq.s32.totalorder %v5466, 2
        %v5472 = vxor.u32 %v5462, 2147483648
        %v5473 = vsel %vm5471, %v5472, %v5463
        %v5474 = vsel %vm5467, %v5470, %v5473
        %v5475 = vsel %vm5464, nan, %v5474
        %v5476 = vand.u32 2147483647, %v4372
        %vm5477 = vcmp.le.f32.partialorder %v5476, 0.7853982
        %vm5478 = vcmp.lt.s32.totalorder %v4372, 0
        %v5479 = vand.u32 %v4372, 2139095040
        %v5480 = vshrl.u32 %v5479, 23
        %v5481 = vsub.s32 %v5480, 127
        %v5482 = vand.u32 2147483647, %v4372
        %v5483 = vand.u32 %v5482, 8388607
        %v5484 = vor.u32 %v5483, 8388608
        %v5485 = vsub.s32 0, %v5484
        %v5486 = vadd.s32 %v5481, 1
        %vm5487 = vcmp.gt.s32.totalorder %v5486, 0
        %v5488 = vsel %vm5487, %v5486, 0
        %v5489 = vshrl.u32 %v5488, 5
        %v5490 = vand.u32 %v5488, 31
        %v5491 = vsub.s32 32, %v5490
        %v5492 = vshrl.u32 683565275, %v5491
        %v5493 = vshll.u32 683565275, %v5490
        %v5494 = vshrl.u32 2475754826, %v5491
        %v5495 = vor.u32 %v5493, %v5494
        %v5496 = vshll.u32 2475754826, %v5490
        %v5497 = vshrl.u32 2131351028, %v5491
        %v5498 = vor.u32 %v5496, %v5497
        %v5499 = vshll.u32 2131351028, %v5490
        %v5500 = vshrl.u32 2102212464, %v5491
        %v5501 = vor.u32 %v5499, %v5500
        %v5502 = vshll.u32 2102212464, %v5490
        %v5503 = vshrl.u32 920167782, %v5491
        %v5504 = vor.u32 %v5502, %v5503
        %v5505 = vshll.u32 920167782, %v5490
        %v5506 = vshrl.u32 1326507024, %v5491
        %v5507 = vor.u32 %v5505, %v5506
        %vm5508 = vcmp.lt.s32.totalorder %v5489, 1
        %vm5509 = vcmp.lt.s32.totalorder %v5489, 2
        %vm5510 = vcmp.lt.s32.totalorder %v5489, 3
        %vm5511 = vcmp.lt.s32.totalorder %v5489, 4
        %v5512 = vsel %vm5508, %v5492, %v5495
        %v5513 = vsel %vm5511, %v5501, 2102212464
        %v5514 = vsel %vm5510, %v5498, %v5513
        %v5515 = vsel %vm5509, %v5512, %v5514
        %v5516 = vsel %vm5508, %v5495, %v5498
        %v5517 = vsel %vm5511, %v5504, 920167782
        %v5518 = vsel %vm5510, %v5501, %v5517
        %v5519 = vsel %vm5509, %v5516, %v5518
        %v5520 = vsel %vm5508, %v5498, %v5501
        %v5521 = vsel %vm5511, %v5507, 1326507024
        %v5522 = vsel %vm5510, %v5504, %v5521
        %v5523 = vsel %vm5509, %v5520, %v5522
        %v5524 = vshll.u32 %v5484, 8
        %v5525 = vmul.u32.u64.compose %v5524, %v5523
        %v5526 = vextract.low.u32 %v5525
        %v5527 = vextract.high.u32 %v5525
        %v5528 = vmul.u32.u64.compose %v5524, %v5519
        %v5529 = vextract.low.u32 %v5528
        %v5530 = vextract.high.u32 %v5528
        %v5531 = vmul.u32 %v5524, %v5515
        %v5532 = vadd.s32 %v5527, %v5529
        %vm5533 = vc.u32 %v5527, %v5529
        %v5534 = vadd.s32 %v5530, 1
        %v5535 = vsel %vm5533, %v5534, %v5530
        %v5536 = vadd.s32 %v5531, %v5535
        %v5537 = vadd.s32 %v5536, 536870912
        %v5538 = vshrl.u32 %v5537, 30
        %v5539 = vshll.u32 %v5538, 30
        %v5540 = vsub.s32 %v5536, %v5539
        %vm5541 = vcmp.lt.s32.totalorder %v5540, 0
        %v5542 = vsub.s32 0, %v5540
        %v5543 = vsel %vm5541, %v5542, %v5540
        %v5544 = vclz %v5543
        %v5545 = vsub.s32 %v5544, 2
        %vm5546 = vcmp.gt.s32.totalorder 0, %v5545
        %v5547 = vsel %vm5546, 0, %v5545
        %v5548 = vsub.s32 32, %v5547
        %v5549 = vshll.u32 %v5540, %v5547
        %v5550 = vshrl.u32 %v5532, %v5548
        %v5551 = vor.u32 %v5549, %v5550
        %v5552 = vsub.s32 4294967266, %v5547
        %v5553 = vadd.s32 %v5552, 127
        %v5554 = vshll.u32 %v5553, 23
        %v5555 = vor.u32 4788187, %v5554
        %v5556 = vand.u32 2147483647, %v5555
        %v5558 = vcvt.s32.f32 %v5551
        %v5559 = vmul.f32 %v5558, %v5556
        %v5560 = vxor.u32 %v5559, 2147483648
        %v5561 = vsel %vm5478, %v5560, %v5559
        %v5562 = vsub.s32 4, %v5538
        %v5563 = vsel %vm5478, %v5562, %v5538
        %v5564 = vsel %vm5477, %v4372, %v5561
        %v5565 = vsel %vm5477, 0, %v5563
        %v5566 = vcosq.f32.pop %v5564
        %v5567 = vsinq.f32.pop %v5564
        %vm5568 = vweird.f32 %v4372
        %v5569 = vadd.s32 %v5565, 3
        %v5570 = vand.u32 %v5569, 3
        %vm5571 = vcmp.lt.s32.totalorder %v5570, 2
        %vm5572 = vcmp.eq.s32.totalorder %v5570, 0
        %v5573 = vxor.u32 %v5567, 2147483648
        %v5574 = vsel %vm5572, %v5566, %v5573
        %vm5575 = vcmp.eq.s32.totalorder %v5570, 2
        %v5576 = vxor.u32 %v5566, 2147483648
        %v5577 = vsel %vm5575, %v5576, %v5567
        %v5578 = vsel %vm5571, %v5574, %v5577
        %v5579 = vsel %vm5568, nan, %v5578
        %v5580 = vand.u32 2147483647, %v4536
        %vm5581 = vcmp.le.f32.partialorder %v5580, 0.7853982
        %vm5582 = vcmp.lt.s32.totalorder %v4536, 0
        %v5583 = vand.u32 %v4536, 2139095040
        %v5584 = vshrl.u32 %v5583, 23
        %v5585 = vsub.s32 %v5584, 127
        %v5586 = vand.u32 2147483647, %v4536
        %v5587 = vand.u32 %v5586, 8388607
        %v5588 = vor.u32 %v5587, 8388608
        %v5589 = vsub.s32 0, %v5588
        %v5590 = vadd.s32 %v5585, 1
        %vm5591 = vcmp.gt.s32.totalorder %v5590, 0
        %v5592 = vsel %vm5591, %v5590, 0
        %v5593 = vshrl.u32 %v5592, 5
        %v5594 = vand.u32 %v5592, 31
        %v5595 = vsub.s32 32, %v5594
        %v5596 = vshrl.u32 683565275, %v5595
        %v5597 = vshll.u32 683565275, %v5594
        %v5598 = vshrl.u32 2475754826, %v5595
        %v5599 = vor.u32 %v5597, %v5598
        %v5600 = vshll.u32 2475754826, %v5594
        %v5601 = vshrl.u32 2131351028, %v5595
        %v5602 = vor.u32 %v5600, %v5601
        %v5603 = vshll.u32 2131351028, %v5594
        %v5604 = vshrl.u32 2102212464, %v5595
        %v5605 = vor.u32 %v5603, %v5604
        %v5606 = vshll.u32 2102212464, %v5594
        %v5607 = vshrl.u32 920167782, %v5595
        %v5608 = vor.u32 %v5606, %v5607
        %v5609 = vshll.u32 920167782, %v5594
        %v5610 = vshrl.u32 1326507024, %v5595
        %v5611 = vor.u32 %v5609, %v5610
        %vm5612 = vcmp.lt.s32.totalorder %v5593, 1
        %vm5613 = vcmp.lt.s32.totalorder %v5593, 2
        %vm5614 = vcmp.lt.s32.totalorder %v5593, 3
        %vm5615 = vcmp.lt.s32.totalorder %v5593, 4
        %v5616 = vsel %vm5612, %v5596, %v5599
        %v5617 = vsel %vm5615, %v5605, 2102212464
        %v5618 = vsel %vm5614, %v5602, %v5617
        %v5619 = vsel %vm5613, %v5616, %v5618
        %v5620 = vsel %vm5612, %v5599, %v5602
        %v5621 = vsel %vm5615, %v5608, 920167782
        %v5622 = vsel %vm5614, %v5605, %v5621
        %v5623 = vsel %vm5613, %v5620, %v5622
        %v5624 = vsel %vm5612, %v5602, %v5605
        %v5625 = vsel %vm5615, %v5611, 1326507024
        %v5626 = vsel %vm5614, %v5608, %v5625
        %v5627 = vsel %vm5613, %v5624, %v5626
        %v5628 = vshll.u32 %v5588, 8
        %v5629 = vmul.u32.u64.compose %v5628, %v5627
        %v5630 = vextract.low.u32 %v5629
        %v5631 = vextract.high.u32 %v5629
        %v5632 = vmul.u32.u64.compose %v5628, %v5623
        %v5633 = vextract.low.u32 %v5632
        %v5634 = vextract.high.u32 %v5632
        %v5635 = vmul.u32 %v5628, %v5619
        %v5636 = vadd.s32 %v5631, %v5633
        %vm5637 = vc.u32 %v5631, %v5633
        %v5638 = vadd.s32 %v5634, 1
        %v5639 = vsel %vm5637, %v5638, %v5634
        %v5640 = vadd.s32 %v5635, %v5639
        %v5641 = vadd.s32 %v5640, 536870912
        %v5642 = vshrl.u32 %v5641, 30
        %v5643 = vshll.u32 %v5642, 30
        %v5644 = vsub.s32 %v5640, %v5643
        %vm5645 = vcmp.lt.s32.totalorder %v5644, 0
        %v5646 = vsub.s32 0, %v5644
        %v5647 = vsel %vm5645, %v5646, %v5644
        %v5648 = vclz %v5647
        %v5649 = vsub.s32 %v5648, 2
        %vm5650 = vcmp.gt.s32.totalorder 0, %v5649
        %v5651 = vsel %vm5650, 0, %v5649
        %v5652 = vsub.s32 32, %v5651
        %v5653 = vshll.u32 %v5644, %v5651
        %v5654 = vshrl.u32 %v5636, %v5652
        %v5655 = vor.u32 %v5653, %v5654
        %v5656 = vsub.s32 4294967266, %v5651
        %v5657 = vadd.s32 %v5656, 127
        %v5658 = vshll.u32 %v5657, 23
        %v5659 = vor.u32 4788187, %v5658
        %v5660 = vand.u32 2147483647, %v5659
        %v5662 = vcvt.s32.f32 %v5655
        %v5663 = vmul.f32 %v5662, %v5660
        %v5664 = vxor.u32 %v5663, 2147483648
        %v5665 = vsel %vm5582, %v5664, %v5663
        %v5666 = vsub.s32 4, %v5642
        %v5667 = vsel %vm5582, %v5666, %v5642
        %v5668 = vsel %vm5581, %v4536, %v5665
        %v5669 = vsel %vm5581, 0, %v5667
        %v5670 = vcosq.f32.pop %v5668
        %v5671 = vsinq.f32.pop %v5668
        %vm5672 = vweird.f32 %v4536
        %v5673 = vadd.s32 %v5669, 3
        %v5674 = vand.u32 %v5673, 3
        %vm5675 = vcmp.lt.s32.totalorder %v5674, 2
        %vm5676 = vcmp.eq.s32.totalorder %v5674, 0
        %v5677 = vxor.u32 %v5671, 2147483648
        %v5678 = vsel %vm5676, %v5670, %v5677
        %vm5679 = vcmp.eq.s32.totalorder %v5674, 2
        %v5680 = vxor.u32 %v5670, 2147483648
        %v5681 = vsel %vm5679, %v5680, %v5671
        %v5682 = vsel %vm5675, %v5678, %v5681
        %v5683 = vsel %vm5672, nan, %v5682
        %v5684 = vand.u32 2147483647, %v4538
        %vm5685 = vcmp.le.f32.partialorder %v5684, 0.7853982
        %vm5686 = vcmp.lt.s32.totalorder %v4538, 0
        %v5687 = vand.u32 %v4538, 2139095040
        %v5688 = vshrl.u32 %v5687, 23
        %v5689 = vsub.s32 %v5688, 127
        %v5690 = vand.u32 2147483647, %v4538
        %v5691 = vand.u32 %v5690, 8388607
        %v5692 = vor.u32 %v5691, 8388608
        %v5693 = vsub.s32 0, %v5692
        %v5694 = vadd.s32 %v5689, 1
        %vm5695 = vcmp.gt.s32.totalorder %v5694, 0
        %v5696 = vsel %vm5695, %v5694, 0
        %v5697 = vshrl.u32 %v5696, 5
        %v5698 = vand.u32 %v5696, 31
        %v5699 = vsub.s32 32, %v5698
        %v5700 = vshrl.u32 683565275, %v5699
        %v5701 = vshll.u32 683565275, %v5698
        %v5702 = vshrl.u32 2475754826, %v5699
        %v5703 = vor.u32 %v5701, %v5702
        %v5704 = vshll.u32 2475754826, %v5698
        %v5705 = vshrl.u32 2131351028, %v5699
        %v5706 = vor.u32 %v5704, %v5705
        %v5707 = vshll.u32 2131351028, %v5698
        %v5708 = vshrl.u32 2102212464, %v5699
        %v5709 = vor.u32 %v5707, %v5708
        %v5710 = vshll.u32 2102212464, %v5698
        %v5711 = vshrl.u32 920167782, %v5699
        %v5712 = vor.u32 %v5710, %v5711
        %v5713 = vshll.u32 920167782, %v5698
        %v5714 = vshrl.u32 1326507024, %v5699
        %v5715 = vor.u32 %v5713, %v5714
        %vm5716 = vcmp.lt.s32.totalorder %v5697, 1
        %vm5717 = vcmp.lt.s32.totalorder %v5697, 2
        %vm5718 = vcmp.lt.s32.totalorder %v5697, 3
        %vm5719 = vcmp.lt.s32.totalorder %v5697, 4
        %v5720 = vsel %vm5716, %v5700, %v5703
        %v5721 = vsel %vm5719, %v5709, 2102212464
        %v5722 = vsel %vm5718, %v5706, %v5721
        %v5723 = vsel %vm5717, %v5720, %v5722
        %v5724 = vsel %vm5716, %v5703, %v5706
        %v5725 = vsel %vm5719, %v5712, 920167782
        %v5726 = vsel %vm5718, %v5709, %v5725
        %v5727 = vsel %vm5717, %v5724, %v5726
        %v5728 = vsel %vm5716, %v5706, %v5709
        %v5729 = vsel %vm5719, %v5715, 1326507024
        %v5730 = vsel %vm5718, %v5712, %v5729
        %v5731 = vsel %vm5717, %v5728, %v5730
        %v5732 = vshll.u32 %v5692, 8
        %v5733 = vmul.u32.u64.compose %v5732, %v5731
        %v5734 = vextract.low.u32 %v5733
        %v5735 = vextract.high.u32 %v5733
        %v5736 = vmul.u32.u64.compose %v5732, %v5727
        %v5737 = vextract.low.u32 %v5736
        %v5738 = vextract.high.u32 %v5736
        %v5739 = vmul.u32 %v5732, %v5723
        %v5740 = vadd.s32 %v5735, %v5737
        %vm5741 = vc.u32 %v5735, %v5737
        %v5742 = vadd.s32 %v5738, 1
        %v5743 = vsel %vm5741, %v5742, %v5738
        %v5744 = vadd.s32 %v5739, %v5743
        %v5745 = vadd.s32 %v5744, 536870912
        %v5746 = vshrl.u32 %v5745, 30
        %v5747 = vshll.u32 %v5746, 30
        %v5748 = vsub.s32 %v5744, %v5747
        %vm5749 = vcmp.lt.s32.totalorder %v5748, 0
        %v5750 = vsub.s32 0, %v5748
        %v5751 = vsel %vm5749, %v5750, %v5748
        %v5752 = vclz %v5751
        %v5753 = vsub.s32 %v5752, 2
        %vm5754 = vcmp.gt.s32.totalorder 0, %v5753
        %v5755 = vsel %vm5754, 0, %v5753
        %v5756 = vsub.s32 32, %v5755
        %v5757 = vshll.u32 %v5748, %v5755
        %v5758 = vshrl.u32 %v5740, %v5756
        %v5759 = vor.u32 %v5757, %v5758
        %v5760 = vsub.s32 4294967266, %v5755
        %v5761 = vadd.s32 %v5760, 127
        %v5762 = vshll.u32 %v5761, 23
        %v5763 = vor.u32 4788187, %v5762
        %v5764 = vand.u32 2147483647, %v5763
        %v5766 = vcvt.s32.f32 %v5759
        %v5767 = vmul.f32 %v5766, %v5764
        %v5768 = vxor.u32 %v5767, 2147483648
        %v5769 = vsel %vm5686, %v5768, %v5767
        %v5770 = vsub.s32 4, %v5746
        %v5771 = vsel %vm5686, %v5770, %v5746
        %v5772 = vsel %vm5685, %v4538, %v5769
        %v5773 = vsel %vm5685, 0, %v5771
        %v5774 = vcosq.f32.pop %v5772
        %v5775 = vsinq.f32.pop %v5772
        %vm5776 = vweird.f32 %v4538
        %v5777 = vadd.s32 %v5773, 3
        %v5778 = vand.u32 %v5777, 3
        %vm5779 = vcmp.lt.s32.totalorder %v5778, 2
        %vm5780 = vcmp.eq.s32.totalorder %v5778, 0
        %v5781 = vxor.u32 %v5775, 2147483648
        %v5782 = vsel %vm5780, %v5774, %v5781
        %vm5783 = vcmp.eq.s32.totalorder %v5778, 2
        %v5784 = vxor.u32 %v5774, 2147483648
        %v5785 = vsel %vm5783, %v5784, %v5775
        %v5786 = vsel %vm5779, %v5782, %v5785
        %v5787 = vsel %vm5776, nan, %v5786
        %v5788 = vld [vmem:[%s573] sm:$0xff]
        %v5789 = vld [vmem:[%s573 + $0x8] sm:$0xff]
        %v5790 = vld [vmem:[%s573 + $0x10] sm:$0xff]
        %v5791 = vld [vmem:[%s573 + $0x18] sm:$0xff]
        %v5792 = vld [vmem:[%s573 + $0x20] sm:$0xff]
        %v5793 = vld [vmem:[%s573 + $0x28] sm:$0xff]
        %v5794 = vld [vmem:[%s573 + $0x30] sm:$0xff]
        %v5795 = vld [vmem:[%s573 + $0x38] sm:$0xff]
        %v5796 = vld [vmem:[%s573 + $0x40] sm:$0xff]
        %v5797 = vld [vmem:[%s573 + $0x48] sm:$0xff]
        %v5798 = vld [vmem:[%s573 + $0x50] sm:$0xff]
        %v5799 = vld [vmem:[%s573 + $0x58] sm:$0xff]
        %v5800 = vld [vmem:[%s573 + $0x60] sm:$0xff]
        %v5801 = vld [vmem:[%s573 + $0x68] sm:$0xff]
        %v5802 = vld [vmem:[%s573 + $0x70] sm:$0xff]
        %v5803 = vld [vmem:[%s573 + $0x78] sm:$0xff]
        %v5804 = vld [vmem:[%s573 + $0x80] sm:$0xff]
        %v5805 = vld [vmem:[%s573 + $0x88] sm:$0xff]
        %v5806 = vld [vmem:[%s573 + $0x90] sm:$0xff]
        %v5807 = vld [vmem:[%s573 + $0x98] sm:$0xff]
        %v5808 = vld [vmem:[%s573 + $0xa0] sm:$0xff]
        %v5809 = vld [vmem:[%s573 + $0xa8] sm:$0xff]
        %v5810 = vld [vmem:[%s573 + $0xb0] sm:$0xff]
        %v5811 = vld [vmem:[%s573 + $0xb8] sm:$0xff]
        %v5812 = vld [vmem:[%s573 + $0xc0] sm:$0xff]
        %v5813 = vld [vmem:[%s573 + $0xc8] sm:$0xff]
        %v5814 = vld [vmem:[%s573 + $0xd0] sm:$0xff]
        %v5815 = vld [vmem:[%s573 + $0xd8] sm:$0xff]
        %v5816 = vld [vmem:[%s573 + $0xe0] sm:$0xff]
        %v5817 = vld [vmem:[%s573 + $0xe8] sm:$0xff]
        %v5818 = vld [vmem:[%s573 + $0xf0] sm:$0xff]
        %v5819 = vld [vmem:[%s573 + $0xf8] sm:$0xff]
        %vm5820 = vcmask 523264
        %v5822 = vsel %vm5820, %v4643, 0
        %v5825 = vsel %vm5820, %v5059, 0
        %v5828 = vsel %vm5820, %v5475, 0
        %5830 = vmatprep.subr.mxu0 %v5789
        %5831 = vmatpush1.msra.mxu0 %v5788
        %5832 = vmatprep.subr.mxu0 %v5793
        %5833 = vmatpush1.msra.mxu0 %v5792
        %5834 = vmatprep.subr.mxu0 %v5797
        %5835 = vmatpush1.msra.mxu0 %v5796
        %5836 = vmatprep.subr.mxu0 %v5801
        %5837 = vmatpush1.msra.mxu0 %v5800
        %5838 = vmatprep.subr.mxu0 %v5805
        %5839 = vmatpush1.msra.mxu0 %v5804
        %5840 = vmatprep.subr.mxu0 %v5809
        %5841 = vmatpush1.msra.mxu0 %v5808
        %5842 = vmatprep.subr.mxu0 %v5813
        %5843 = vmatpush1.msra.mxu0 %v5812
        %5844 = vmatprep.subr.mxu0 %v5817
        %5845 = vmatpush1.msra.mxu0 %v5816
        %5846 = vmatprep.subr.mxu0 0.0
        %5847 = vmatpush1.msra.mxu0 0.0
        %5848 = vmatprep.subr.mxu0 0.0
        %5849 = vmatpush1.msra.mxu0 0.0
        %5850 = vmatprep.subr.mxu0 0.0
        %5851 = vmatpush1.msra.mxu0 0.0
        %5852 = vmatprep.subr.mxu0 0.0
        %5853 = vmatpush1.msra.mxu0 0.0
        %5854 = vmatprep.subr.mxu0 0.0
        %5855 = vmatpush1.msra.mxu0 0.0
        %5856 = vmatprep.subr.mxu0 0.0
        %5857 = vmatpush1.msra.mxu0 0.0
        %5858 = vmatprep.subr.mxu0 0.0
        %5859 = vmatpush1.msra.mxu0 0.0
        %5860 = vmatprep.subr.mxu0 0.0
        %5861 = vmatpush1.msra.mxu0 0.0
        %5862 = vmatprep.subr.mxu0 0.0
        %5863 = vmatpush1.msra.mxu0 0.0
        %5864 = vmatprep.subr.mxu0 0.0
        %5865 = vmatpush1.msra.mxu0 0.0
        %5866 = vmatprep.subr.mxu0 0.0
        %5867 = vmatpush1.msra.mxu0 0.0
        %5868 = vmatprep.subr.mxu0 0.0
        %5869 = vmatpush1.msra.mxu0 0.0
        %5870 = vmatprep.subr.mxu0 0.0
        %5871 = vmatpush1.msra.mxu0 0.0
        %5872 = vmatprep.subr.mxu0 0.0
        %5873 = vmatpush1.msra.mxu0 0.0
        %5874 = vmatprep.subr.mxu0 0.0
        %5875 = vmatpush1.msra.mxu0 0.0
        %5876 = vmatprep.subr.mxu0 0.0
        %5877 = vmatpush1.msra.mxu0 0.0
        %5878 = vmatprep.subr.mxu0 0.0
        %5879 = vmatpush1.msra.mxu0 0.0
        %5880 = vmatprep.subr.mxu0 0.0
        %5881 = vmatpush1.msra.mxu0 0.0
        %5882 = vmatprep.subr.mxu0 0.0
        %5883 = vmatpush1.msra.mxu0 0.0
        %5884 = vmatprep.subr.mxu0 0.0
        %5885 = vmatpush1.msra.mxu0 0.0
        %5886 = vmatprep.subr.mxu0 0.0
        %5887 = vmatpush1.msra.mxu0 0.0
        %5888 = vmatprep.subr.mxu0 0.0
        %5889 = vmatpush1.msra.mxu0 0.0
        %5890 = vmatprep.subr.mxu0 0.0
        %5891 = vmatpush1.msra.mxu0 0.0
        %5892 = vmatprep.subr.mxu0 0.0
        %5893 = vmatpush1.msra.mxu0 0.0
        %5894 = vmatprep.mubr.f32.mxu0 0.0
        %5895 = vmatmul.mubr.f32.gmra.mrb[0].mxu0 %v5822
        %v5896 = vpop.f32.mrb[0].mxu0
        %v5897 = vadd.f32 0.0, %v5896
        %v5898 = vpop.f32.mrb[0].mxu0
        %v5899 = vadd.f32 0.0, %v5898
        %5900 = vmatprep.mubr.f32.mxu0 0.0
        %5901 = vmatmul.mubr.f32.gmra.mrb[0].mxu0 %v5825
        %v5902 = vpop.f32.mrb[0].mxu0
        %v5903 = vadd.f32 0.0, %v5902
        %v5904 = vpop.f32.mrb[0].mxu0
        %v5905 = vadd.f32 0.0, %v5904
        %5906 = vmatprep.mubr.f32.mxu0 0.0
        %5907 = vmatmul.mubr.f32.gmra.mrb[0].mxu0 %v5828
        %v5908 = vpop.f32.mrb[0].mxu0
        %v5909 = vadd.f32 0.0, %v5908
        %v5910 = vpop.f32.mrb[0].mxu0
        %v5911 = vadd.f32 0.0, %v5910
        %5912 = vdwg.mxu0
        %5913 = vmatprep.subr.mxu0 %v5791
        %5914 = vmatpush1.msra.mxu0 %v5790
        %5915 = vmatprep.subr.mxu0 %v5795
        %5916 = vmatpush1.msra.mxu0 %v5794
        %5917 = vmatprep.subr.mxu0 %v5799
        %5918 = vmatpush1.msra.mxu0 %v5798
        %5919 = vmatprep.subr.mxu0 %v5803
        %5920 = vmatpush1.msra.mxu0 %v5802
        %5921 = vmatprep.subr.mxu0 %v5807
        %5922 = vmatpush1.msra.mxu0 %v5806
        %5923 = vmatprep.subr.mxu0 %v5811
        %5924 = vmatpush1.msra.mxu0 %v5810
        %5925 = vmatprep.subr.mxu0 %v5815
        %5926 = vmatpush1.msra.mxu0 %v5814
        %5927 = vmatprep.subr.mxu0 %v5819
        %5928 = vmatpush1.msra.mxu0 %v5818
        %5929 = vmatprep.subr.mxu0 0.0
        %5930 = vmatpush1.msra.mxu0 0.0
        %5931 = vmatprep.subr.mxu0 0.0
        %5932 = vmatpush1.msra.mxu0 0.0
        %5933 = vmatprep.subr.mxu0 0.0
        %5934 = vmatpush1.msra.mxu0 0.0
        %5935 = vmatprep.subr.mxu0 0.0
        %5936 = vmatpush1.msra.mxu0 0.0
        %5937 = vmatprep.subr.mxu0 0.0
        %5938 = vmatpush1.msra.mxu0 0.0
        %5939 = vmatprep.subr.mxu0 0.0
        %5940 = vmatpush1.msra.mxu0 0.0
        %5941 = vmatprep.subr.mxu0 0.0
        %5942 = vmatpush1.msra.mxu0 0.0
        %5943 = vmatprep.subr.mxu0 0.0
        %5944 = vmatpush1.msra.mxu0 0.0
        %5945 = vmatprep.subr.mxu0 0.0
        %5946 = vmatpush1.msra.mxu0 0.0
        %5947 = vmatprep.subr.mxu0 0.0
        %5948 = vmatpush1.msra.mxu0 0.0
        %5949 = vmatprep.subr.mxu0 0.0
        %5950 = vmatpush1.msra.mxu0 0.0
        %5951 = vmatprep.subr.mxu0 0.0
        %5952 = vmatpush1.msra.mxu0 0.0
        %5953 = vmatprep.subr.mxu0 0.0
        %5954 = vmatpush1.msra.mxu0 0.0
        %5955 = vmatprep.subr.mxu0 0.0
        %5956 = vmatpush1.msra.mxu0 0.0
        %5957 = vmatprep.subr.mxu0 0.0
        %5958 = vmatpush1.msra.mxu0 0.0
        %5959 = vmatprep.subr.mxu0 0.0
        %5960 = vmatpush1.msra.mxu0 0.0
        %5961 = vmatprep.subr.mxu0 0.0
        %5962 = vmatpush1.msra.mxu0 0.0
        %5963 = vmatprep.subr.mxu0 0.0
        %5964 = vmatpush1.msra.mxu0 0.0
        %5965 = vmatprep.subr.mxu0 0.0
        %5966 = vmatpush1.msra.mxu0 0.0
        %5967 = vmatprep.subr.mxu0 0.0
        %5968 = vmatpush1.msra.mxu0 0.0
        %5969 = vmatprep.subr.mxu0 0.0
        %5970 = vmatpush1.msra.mxu0 0.0
        %5971 = vmatprep.subr.mxu0 0.0
        %5972 = vmatpush1.msra.mxu0 0.0
        %5973 = vmatprep.subr.mxu0 0.0
        %5974 = vmatpush1.msra.mxu0 0.0
        %5975 = vmatprep.subr.mxu0 0.0
        %5976 = vmatpush1.msra.mxu0 0.0
        %5977 = vmatprep.mubr.f32.mxu0 0.0
        %5978 = vmatmul.mubr.f32.gmra.mrb[0].mxu0 %v5822
        %v5979 = vpop.f32.mrb[0].mxu0
        %v5980 = vadd.f32 0.0, %v5979
        %v5981 = vpop.f32.mrb[0].mxu0
        %v5982 = vadd.f32 0.0, %v5981
        %5983 = vmatprep.mubr.f32.mxu0 0.0
        %5984 = vmatmul.mubr.f32.gmra.mrb[0].mxu0 %v5825
        %v5985 = vpop.f32.mrb[0].mxu0
        %v5986 = vadd.f32 0.0, %v5985
        %v5987 = vpop.f32.mrb[0].mxu0
        %v5988 = vadd.f32 0.0, %v5987
        %5989 = vmatprep.mubr.f32.mxu0 0.0
        %5990 = vmatmul.mubr.f32.gmra.mrb[0].mxu0 %v5828
        %v5991 = vpop.f32.mrb[0].mxu0
        %v5992 = vadd.f32 0.0, %v5991
        %v5993 = vpop.f32.mrb[0].mxu0
        %v5994 = vadd.f32 0.0, %v5993
        %5995 = vdwg.mxu0
        %v5996 = vmul.f32 %v4643, %v3811
        %v5997 = vmul.f32 %v4747, %v3813
        %v5998 = vmul.f32 %v4851, %v3918
        %v5999 = vmul.f32 %v4955, %v3920
        %v6000 = vmul.f32 %v5059, %v3817
        %v6001 = vmul.f32 %v5163, %v3819
        %v6002 = vmul.f32 %v5267, %v3924
        %v6003 = vmul.f32 %v5371, %v3926
        %v6004 = vmul.f32 %v5475, %v3823
        %v6005 = vmul.f32 %v5579, %v3825
        %v6006 = vmul.f32 %v5683, %v3930
        %v6007 = vmul.f32 %v5787, %v3932
        %v6008 = vlaneseq
        %v6009 = vshrl.u32 %v6008, 7
        %v6010 = vsub.s32 0, %v6009
        %v6011 = vrot.slane %v3829, %v6010
        %v6012 = vlaneseq
        %v6013 = vshrl.u32 %v6012, 7
        %v6014 = vsub.s32 0, %v6013
        %v6015 = vrot.slane %v3831, %v6014
        %v6016 = vlaneseq
        %v6017 = vshrl.u32 %v6016, 7
        %v6018 = vsub.s32 0, %v6017
        %v6019 = vrot.slane %v3936, %v6018
        %v6020 = vlaneseq
        %v6021 = vshrl.u32 %v6020, 7
        %v6022 = vsub.s32 0, %v6021
        %v6023 = vrot.slane %v3938, %v6022
        %v6024 = vmul.f32 %v5996, %v6011
        %v6025 = vmul.f32 %v5997, %v6015
        %v6026 = vmul.f32 %v5998, %v6019
        %v6027 = vmul.f32 %v5999, %v6023
        %v6028 = vmul.f32 %v6000, %v6011
        %v6029 = vmul.f32 %v6001, %v6015
        %v6030 = vmul.f32 %v6002, %v6019
        %v6031 = vmul.f32 %v6003, %v6023
        %v6032 = vmul.f32 %v6004, %v6011
        %v6033 = vmul.f32 %v6005, %v6015
        %v6034 = vmul.f32 %v6006, %v6019
        %v6035 = vmul.f32 %v6007, %v6023
        %v6036 = vmul.f32 %v5897, %v3811
        %v6037 = vmul.f32 %v5899, %v3813
        %v6038 = vmul.f32 %v5980, %v3918
        %v6039 = vmul.f32 %v5982, %v3920
        %v6040 = vmul.f32 %v5903, %v3817
        %v6041 = vmul.f32 %v5905, %v3819
        %v6042 = vmul.f32 %v5986, %v3924
        %v6043 = vmul.f32 %v5988, %v3926
        %v6044 = vmul.f32 %v5909, %v3823
        %v6045 = vmul.f32 %v5911, %v3825
        %v6046 = vmul.f32 %v5992, %v3930
        %v6047 = vmul.f32 %v5994, %v3932
        %v6048 = vsub.f32 1.0, %v3829
        %v6049 = vsub.f32 1.0, %v3831
        %v6050 = vsub.f32 1.0, %v3936
        %v6051 = vsub.f32 1.0, %v3938
        %v6052 = vlaneseq
        %v6053 = vshrl.u32 %v6052, 7
        %v6054 = vsub.s32 0, %v6053
        %v6055 = vrot.slane %v6048, %v6054
        %v6056 = vlaneseq
        %v6057 = vshrl.u32 %v6056, 7
        %v6058 = vsub.s32 0, %v6057
        %v6059 = vrot.slane %v6049, %v6058
        %v6060 = vlaneseq
        %v6061 = vshrl.u32 %v6060, 7
        %v6062 = vsub.s32 0, %v6061
        %v6063 = vrot.slane %v6050, %v6062
        %v6064 = vlaneseq
        %v6065 = vshrl.u32 %v6064, 7
        %v6066 = vsub.s32 0, %v6065
        %v6067 = vrot.slane %v6051, %v6066
        %v6068 = vmul.f32 %v6036, %v6055
        %v6069 = vmul.f32 %v6037, %v6059
        %v6070 = vmul.f32 %v6038, %v6063
        %v6071 = vmul.f32 %v6039, %v6067
        %v6072 = vmul.f32 %v6040, %v6055
        %v6073 = vmul.f32 %v6041, %v6059
        %v6074 = vmul.f32 %v6042, %v6063
        %v6075 = vmul.f32 %v6043, %v6067
        %v6076 = vmul.f32 %v6044, %v6055
        %v6077 = vmul.f32 %v6045, %v6059
        %v6078 = vmul.f32 %v6046, %v6063
        %v6079 = vmul.f32 %v6047, %v6067
        %v6080 = vadd.f32 %v6024, %v6068
        %v6081 = vadd.f32 %v6025, %v6069
        %v6082 = vadd.f32 %v6026, %v6070
        %v6083 = vadd.f32 %v6027, %v6071
        %v6084 = vadd.f32 %v6028, %v6072
        %v6085 = vadd.f32 %v6029, %v6073
        %v6086 = vadd.f32 %v6030, %v6074
        %v6087 = vadd.f32 %v6031, %v6075
        %v6088 = vadd.f32 %v6032, %v6076
        %v6089 = vadd.f32 %v6033, %v6077
        %v6090 = vadd.f32 %v6034, %v6078
        %v6091 = vadd.f32 %v6035, %v6079
        %vm6092 = vcmask 195584
        %v6094 = vsel %vm6092, 0.05882353, 0
        %6096 = vmatprep.subr.mxu0 %v6081
        %6097 = vmatpush1.msra.mxu0 %v6080
        %6098 = vmatprep.subr.mxu0 %v6085
        %6099 = vmatpush1.msra.mxu0 %v6084
        %6100 = vmatprep.subr.mxu0 %v6089
        %6101 = vmatpush1.msra.mxu0 %v6088
        %6102 = vmatprep.subr.mxu0 0.0
        %6103 = vmatpush1.msra.mxu0 0.0
        %6104 = vmatprep.subr.mxu0 0.0
        %6105 = vmatpush1.msra.mxu0 0.0
        %6106 = vmatprep.subr.mxu0 0.0
        %6107 = vmatpush1.msra.mxu0 0.0
        %6108 = vmatprep.subr.mxu0 0.0
        %6109 = vmatpush1.msra.mxu0 0.0
        %6110 = vmatprep.subr.mxu0 0.0
        %6111 = vmatpush1.msra.mxu0 0.0
        %6112 = vmatprep.subr.mxu0 0.0
        %6113 = vmatpush1.msra.mxu0 0.0
        %6114 = vmatprep.subr.mxu0 0.0
        %6115 = vmatpush1.msra.mxu0 0.0
        %6116 = vmatprep.subr.mxu0 0.0
        %6117 = vmatpush1.msra.mxu0 0.0
        %6118 = vmatprep.subr.mxu0 0.0
        %6119 = vmatpush1.msra.mxu0 0.0
        %6120 = vmatprep.subr.mxu0 0.0
        %6121 = vmatpush1.msra.mxu0 0.0
        %6122 = vmatprep.subr.mxu0 0.0
        %6123 = vmatpush1.msra.mxu0 0.0
        %6124 = vmatprep.subr.mxu0 0.0
        %6125 = vmatpush1.msra.mxu0 0.0
        %6126 = vmatprep.subr.mxu0 0.0
        %6127 = vmatpush1.msra.mxu0 0.0
        %6128 = vmatprep.subr.mxu0 0.0
        %6129 = vmatpush1.msra.mxu0 0.0
        %6130 = vmatprep.subr.mxu0 0.0
        %6131 = vmatpush1.msra.mxu0 0.0
        %6132 = vmatprep.subr.mxu0 0.0
        %6133 = vmatpush1.msra.mxu0 0.0
        %6134 = vmatprep.subr.mxu0 0.0
        %6135 = vmatpush1.msra.mxu0 0.0
        %6136 = vmatprep.subr.mxu0 0.0
        %6137 = vmatpush1.msra.mxu0 0.0
        %6138 = vmatprep.subr.mxu0 0.0
        %6139 = vmatpush1.msra.mxu0 0.0
        %6140 = vmatprep.subr.mxu0 0.0
        %6141 = vmatpush1.msra.mxu0 0.0
        %6142 = vmatprep.subr.mxu0 0.0
        %6143 = vmatpush1.msra.mxu0 0.0
        %6144 = vmatprep.subr.mxu0 0.0
        %6145 = vmatpush1.msra.mxu0 0.0
        %6146 = vmatprep.subr.mxu0 0.0
        %6147 = vmatpush1.msra.mxu0 0.0
        %6148 = vmatprep.subr.mxu0 0.0
        %6149 = vmatpush1.msra.mxu0 0.0
        %6150 = vmatprep.subr.mxu0 0.0
        %6151 = vmatpush1.msra.mxu0 0.0
        %6152 = vmatprep.subr.mxu0 0.0
        %6153 = vmatpush1.msra.mxu0 0.0
        %6154 = vmatprep.subr.mxu0 0.0
        %6155 = vmatpush1.msra.mxu0 0.0
        %6156 = vmatprep.subr.mxu0 0.0
        %6157 = vmatpush1.msra.mxu0 0.0
        %6158 = vmatprep.subr.mxu0 0.0
        %6159 = vmatpush1.msra.mxu0 0.0
        %6160 = vmatprep.mubr.f32.mxu0 0.0
        %6161 = vmatmul.mubr.f32.gmra.mrb[0].mxu0 %v6094
        %v6162 = vpop.f32.mrb[0].mxu0
        %v6163 = vadd.f32 0.0, %v6162
        %v6164 = vpop.f32.mrb[0].mxu0
        %v6165 = vadd.f32 0.0, %v6164
        %6166 = vdwg.mxu0
        %6167 = vmatprep.subr.mxu0 %v6083
        %6168 = vmatpush1.msra.mxu0 %v6082
        %6169 = vmatprep.subr.mxu0 %v6087
        %6170 = vmatpush1.msra.mxu0 %v6086
        %6171 = vmatprep.subr.mxu0 %v6091
        %6172 = vmatpush1.msra.mxu0 %v6090
        %6173 = vmatprep.subr.mxu0 0.0
        %6174 = vmatpush1.msra.mxu0 0.0
        %6175 = vmatprep.subr.mxu0 0.0
        %6176 = vmatpush1.msra.mxu0 0.0
        %6177 = vmatprep.subr.mxu0 0.0
        %6178 = vmatpush1.msra.mxu0 0.0
        %6179 = vmatprep.subr.mxu0 0.0
        %6180 = vmatpush1.msra.mxu0 0.0
        %6181 = vmatprep.subr.mxu0 0.0
        %6182 = vmatpush1.msra.mxu0 0.0
        %6183 = vmatprep.subr.mxu0 0.0
        %6184 = vmatpush1.msra.mxu0 0.0
        %6185 = vmatprep.subr.mxu0 0.0
        %6186 = vmatpush1.msra.mxu0 0.0
        %6187 = vmatprep.subr.mxu0 0.0
        %6188 = vmatpush1.msra.mxu0 0.0
        %6189 = vmatprep.subr.mxu0 0.0
        %6190 = vmatpush1.msra.mxu0 0.0
        %6191 = vmatprep.subr.mxu0 0.0
        %6192 = vmatpush1.msra.mxu0 0.0
        %6193 = vmatprep.subr.mxu0 0.0
        %6194 = vmatpush1.msra.mxu0 0.0
        %6195 = vmatprep.subr.mxu0 0.0
        %6196 = vmatpush1.msra.mxu0 0.0
        %6197 = vmatprep.subr.mxu0 0.0
        %6198 = vmatpush1.msra.mxu0 0.0
        %6199 = vmatprep.subr.mxu0 0.0
        %6200 = vmatpush1.msra.mxu0 0.0
        %6201 = vmatprep.subr.mxu0 0.0
        %6202 = vmatpush1.msra.mxu0 0.0
        %6203 = vmatprep.subr.mxu0 0.0
        %6204 = vmatpush1.msra.mxu0 0.0
        %6205 = vmatprep.subr.mxu0 0.0
        %6206 = vmatpush1.msra.mxu0 0.0
        %6207 = vmatprep.subr.mxu0 0.0
        %6208 = vmatpush1.msra.mxu0 0.0
        %6209 = vmatprep.subr.mxu0 0.0
        %6210 = vmatpush1.msra.mxu0 0.0
        %6211 = vmatprep.subr.mxu0 0.0
        %6212 = vmatpush1.msra.mxu0 0.0
        %6213 = vmatprep.subr.mxu0 0.0
        %6214 = vmatpush1.msra.mxu0 0.0
        %6215 = vmatprep.subr.mxu0 0.0
        %6216 = vmatpush1.msra.mxu0 0.0
        %6217 = vmatprep.subr.mxu0 0.0
        %6218 = vmatpush1.msra.mxu0 0.0
        %6219 = vmatprep.subr.mxu0 0.0
        %6220 = vmatpush1.msra.mxu0 0.0
        %6221 = vmatprep.subr.mxu0 0.0
        %6222 = vmatpush1.msra.mxu0 0.0
        %6223 = vmatprep.subr.mxu0 0.0
        %6224 = vmatpush1.msra.mxu0 0.0
        %6225 = vmatprep.subr.mxu0 0.0
        %6226 = vmatpush1.msra.mxu0 0.0
        %6227 = vmatprep.subr.mxu0 0.0
        %6228 = vmatpush1.msra.mxu0 0.0
        %6229 = vmatprep.subr.mxu0 0.0
        %6230 = vmatpush1.msra.mxu0 0.0
        %6231 = vmatprep.mubr.f32.mxu0 0.0
        %6232 = vmatmul.mubr.f32.gmra.mrb[0].mxu0 %v6094
        %v6233 = vpop.f32.mrb[0].mxu0
        %v6234 = vadd.f32 0.0, %v6233
        %v6235 = vpop.f32.mrb[0].mxu0
        %v6236 = vadd.f32 0.0, %v6235
        %6237 = vdwg.mxu0
        %v6242 = vcombine.low %v6163, %v6165
        %v6243 = vcombine.low %v6234, %v6236
        %v6245 = vunpack.c.l.s4 1966171168
        %v6246 = vunpack.c.0.s8 %v6245
        %v6247 = vlaneseq
        %v6248 = vshrl.u32 %v6247, 7
        %v6249 = vsub.s32 %v6246, %v6248
        %v6250 = vrot.slane %v6242, %v6249
        %v6252 = vunpack.c.l.s4 1966171168
        %v6253 = vunpack.c.0.s8 %v6252
        %v6254 = vlaneseq
        %v6255 = vshrl.u32 %v6254, 7
        %v6256 = vsub.s32 %v6253, %v6255
        %v6257 = vrot.slane %v6243, %v6256
        %v6258 = vcombine.low %v6250, %v6257
        %v6260 = vunpack.c.l.s4 1966171168
        %v6261 = vunpack.c.0.s8 %v6260
        %v6262 = vlaneseq
        %v6263 = vshrl.u32 %v6262, 7
        %v6264 = vsub.s32 %v6261, %v6263
        %v6265 = vrot.slane %v6258, %v6264
        %v6267 = vlaneseq
        %vm6268 = vcmp.ge.s32.totalorder %v6267, 0
        %vm6269 = vcmp.lt.s32.totalorder %v6267, 512
        %vm6270 = vmand %vm6268, %vm6269
        %6271 = vst.msk [vmem:[%s555] sm:$0xf] %vm6270, %v6265
        %s6272 = sand.u32 %s394, 1
        %s6273 = scalar_lea.sflag [#allocation3], %s6272
        %s6274 = sand.u32 %s394, 1
        %s6275 = smul.addr %s6274, 4
        %s6276 = scalar_lea.vmem [#allocation2], %s6275
        // Predicated region
        $region85: #{atoms_forward.3} parent=83 // pred_check
          %p6277 = pneg %p404
        $region86: #{atoms_forward.3} parent=83 // pred_check_branch
          %6279 = sbr.rel (%p6277) target = $region88
        $region87: #{atoms_forward.3} parent=83 // pred_region
          %s6281 = ssub.s32 64, 64
          %6282 = vsyncadd %s6273, %s6281
          %s6283 = smul.addr %s30, 4
          %s6284 = smul.addr %s6283, 16
          %s6285 = scalar_lea.hbm %s16, %s6284
          %s6287 = sshll.u32 %s6276, 4
          %s6288 = int_to_ptr.vmem [resolvable:$true] %s6287
          %6290 = dma.vmem_to_hbm [thread:$0]  %s6288, 64, %s6285, %s6273
        $region88: #{atoms_forward.3} parent=83 // pred_fallthru
          _
      $region84: #{atoms_forward.3} parent=5 // pred_fallthru
        _
      %p6291 = scmp.le.s32.totalorder 2, %s25
      // Predicated region
      $region89: #{atoms_forward.3} parent=5 // pred_check
        %p6292 = pneg %p6291
      $region90: #{atoms_forward.3} parent=5 // pred_check_branch
        %6294 = sbr.rel (%p6292) target = $region92
      $region91: #{atoms_forward.3} parent=5 // pred_region
        %s6295 = ssub.s32 %s25, 2
        // Predicated region
        $region93: #{atoms_forward.3} parent=91 // pred_check
          %p6296 = pneg %p410
        $region94: #{atoms_forward.3} parent=91 // pred_check_branch
          %6298 = sbr.rel (%p6296) target = $region96
        $region95: #{atoms_forward.3} parent=91 // pred_region
          %s6299 = sand.u32 %s395, 1
          %s6300 = scalar_lea.sflag [#allocation3], %s6299
          %s6301 = sand.u32 %s395, 1
          %s6302 = smul.addr %s6301, 4
          %s6303 = scalar_lea.vmem [#allocation2], %s6302
          %6304 = dma.done %s6300, 64
        $region96: #{atoms_forward.3} parent=91 // pred_fallthru
          _
      $region92: #{atoms_forward.3} parent=5 // pred_fallthru
        _
    $region6: #{atoms_forward.3} parent=1 // loop_footer
      %s29 = sadd.s32 1, %s25
    $region7: #{atoms_forward.3} parent=1 // loop_footer_branch
      %24 = sbr.rel target = $region3
    $region8: #{atoms_forward.3} parent=1 // loop_exit
      _
    %6305 = vsyncpa [#allocation3], 1
    %s6306 = scalar_lea.sflag [#allocation3], 1
    %6307 = vsyncpa %s6306, 1

</llo_original>
